<compile_context>
chip_gen: v5e
topology: v5e:2x2
jax: 0.10.0
libtpu: 0.0.40
codegen_flags: <defaults>
</compile_context>

<pallas_src>
import math
import functools

import jax
import jax.numpy as jnp
from jax.experimental import pallas as pl
from jax.experimental.pallas import tpu as pltpu

MAX_SEQUENCE_LENGTH = 800
LN_EPS = 1e-5                               # PyTorch LayerNorm default
MATMUL_DTYPE = jnp.bfloat16                 # MXU input dtype; jnp.float32 for exact path
VMEM_LIMIT = 40 * 1024 * 1024               # scoped VMEM ceiling (v7x-safe)
TILE_BUDGET = 24 * 1024 * 1024              # working-set budget used to size tiles
FFN_WEIGHT_RESIDENT_BYTES = 12 * 1024 * 1024


# --------------------------- tiling helpers ---------------------------

def _pick_tile(n, cap):
    """Largest divisor of n that is a multiple of 8 and <= cap; else n (full axis)."""
    cap = int(max(1, min(cap, n)))
    if cap >= n:
        return n
    start = cap - (cap % 8)
    for d in range(start, 7, -8):
        if n % d == 0:
            return d
    # TODO(synk): no multiple-of-8 divisor <= cap; fall back to the full axis.
    return n


def _rows_cap(bytes_per_row, budget, hard_cap=1024):
    budget = max(int(budget), 2 * 1024 * 1024)
    return int(max(8, min(hard_cap, budget // max(1, int(bytes_per_row)))))


# --------------------------- fused Time2Vec + embedding + pos ---------------------------

def _embed_kernel(x_ref, w_ref, b_ref, w0_ref, b0_ref,
                  we0_ref, we1_ref, be_ref, pos_ref, o_ref):
    x = x_ref[0]                                                      # (ts, D) f32
    v1 = jnp.sin(jnp.dot(x, w_ref[...], preferred_element_type=jnp.float32) + b_ref[...])
    v0 = w0_ref[...] * x + b0_ref[...]
    # embedding of cat([v0, v1], -1) == v0 @ We[:D] + v1 @ We[D:]
    emb = (jnp.dot(v0, we0_ref[...], preferred_element_type=jnp.float32)
           + jnp.dot(v1, we1_ref[...], preferred_element_type=jnp.float32)
           + be_ref[...] + pos_ref[...])
    o_ref[...] = emb[None].astype(o_ref.dtype)


def embed(x, p):
    B, S, D = x.shape
    H = p["emb_w"].shape[1]
    per_row = 16 * D + 24 * H + 256
    ts = _pick_tile(S, _rows_cap(per_row, TILE_BUDGET, hard_cap=512))
    we0 = p["emb_w"][:D]
    we1 = p["emb_w"][D:]
    pos = p["pos"][0, :S]                                             # (S, H)
    return pl.pallas_call(
        _embed_kernel,
        out_shape=jax.ShapeDtypeStruct((B, S, H), jnp.float32),
        grid=(B, S // ts),
        in_specs=[
            pl.BlockSpec((1, ts, D), lambda b, s: (b, s, 0)),   # x tile
            pl.BlockSpec((D, D), lambda b, s: (0, 0)),          # t2v w
            pl.BlockSpec((1, D), lambda b, s: (0, 0)),          # t2v b
            pl.BlockSpec((1, D), lambda b, s: (0, 0)),          # t2v w0
            pl.BlockSpec((1, 1), lambda b, s: (0, 0)),          # t2v b0
            pl.BlockSpec((D, H), lambda b, s: (0, 0)),          # We[:D]
            pl.BlockSpec((D, H), lambda b, s: (0, 0)),          # We[D:]
            pl.BlockSpec((1, H), lambda b, s: (0, 0)),          # embed bias
            pl.BlockSpec((ts, H), lambda b, s: (s, 0)),         # pos rows for this S-tile
        ],
        out_specs=pl.BlockSpec((1, ts, H), lambda b, s: (b, s, 0)),
        compiler_params=pltpu.CompilerParams(
            dimension_semantics=("parallel", "parallel"),
            vmem_limit_bytes=VMEM_LIMIT),
    )(x, p["t2v_w"], p["t2v_b"], p["t2v_w0"], p["t2v_b0"],
      we0, we1, p["emb_b"].reshape(1, H), pos)


# --------------------------- tiled matmul + bias (QKV projection) ---------------------------

def _matmul_bias_kernel(x_ref, w_ref, b_ref, o_ref):
    acc = jnp.dot(x_ref[...].astype(MATMUL_DTYPE), w_ref[...],
                  preferred_element_type=jnp.float32) + b_ref[...]
    o_ref[...] = acc.astype(o_ref.dtype)


def matmul_bias(x, w, b, out_dtype=jnp.float32):
    M, K = x.shape
    N = w.shape[1]
    ob = jnp.dtype(out_dtype).itemsize
    wb = jnp.dtype(MATMUL_DTYPE).itemsize
    weight_vmem = 2 * K * N * wb                       # double-buffered weight block
    per_row = 8 * K + (2 * ob + 4) * N + 128
    tm = _pick_tile(M, _rows_cap(per_row, TILE_BUDGET - weight_vmem, hard_cap=1024))
    return pl.pallas_call(
        _matmul_bias_kernel,
        out_shape=jax.ShapeDtypeStruct((M, N), out_dtype),
        grid=(M // tm,),
        in_specs=[
            pl.BlockSpec((tm, K), lambda i: (i, 0)),
            pl.BlockSpec((K, N), lambda i: (0, 0)),    # weight resident across M-tiles
            pl.BlockSpec((1, N), lambda i: (0, 0)),
        ],
        out_specs=pl.BlockSpec((tm, N), lambda i: (i, 0)),
        compiler_params=pltpu.CompilerParams(
            dimension_semantics=("parallel",),
            vmem_limit_bytes=VMEM_LIMIT),
    )(x, w.astype(MATMUL_DTYPE), b.reshape(1, N))


# --------------------------- attention (per-head, direct lane-slice stores) ---------------------------

def _attn_kernel(qkv_ref, o_ref, *, nh, dh):
    E = nh * dh
    qkv = qkv_ref[...]                                                # (tn, L, 3E)
    for h in range(nh):                                               # static, small
        sl = slice(h * dh, (h + 1) * dh)
        q = qkv[:, :, h * dh:(h + 1) * dh]                            # scale folded into w_in
        k = qkv[:, :, E + h * dh:E + (h + 1) * dh]
        v = qkv[:, :, 2 * E + h * dh:2 * E + (h + 1) * dh]
        s = jnp.einsum("bld,bmd->blm", q, k, preferred_element_type=jnp.float32)
        s = s - jnp.max(s, axis=-1, keepdims=True)
        p = jnp.exp(s)
        p = p * pl.reciprocal(jnp.sum(p, axis=-1, keepdims=True), approx=True)
        o_h = jnp.einsum("blm,bmd->bld", p.astype(qkv.dtype), v,
                         preferred_element_type=jnp.float32)
        o_ref[:, :, sl] = o_h.astype(o_ref.dtype)                     # no concat, one head live


def attention(qkv3, nh, dh):
    S_, L, threeE = qkv3.shape
    E = threeE // 3
    per_row = L * (24 * E + 16 * L) + 512                             # bytes per S-row
    tn = _pick_tile(S_, _rows_cap(per_row, TILE_BUDGET, hard_cap=512))
    return pl.pallas_call(
        functools.partial(_attn_kernel, nh=nh, dh=dh),
        out_shape=jax.ShapeDtypeStruct((S_, L, E), MATMUL_DTYPE),
        grid=(S_ // tn,),
        in_specs=[pl.BlockSpec((tn, L, threeE), lambda i: (i, 0, 0))],
        out_specs=pl.BlockSpec((tn, L, E), lambda i: (i, 0, 0)),
        compiler_params=pltpu.CompilerParams(
            dimension_semantics=("parallel",),
            vmem_limit_bytes=VMEM_LIMIT),
    )(qkv3)


# --------------------------- fused out-projection + residual + LayerNorm1 ---------------------------

def _outproj_ln_kernel(a_ref, h_ref, w_ref, b_ref, g_ref, bb_ref, o_ref, *, eps):
    y = jnp.dot(a_ref[...].astype(MATMUL_DTYPE), w_ref[...],
                preferred_element_type=jnp.float32) + b_ref[...]
    z = h_ref[...] + y                                                # residual (f32)
    mu = jnp.mean(z, axis=-1, keepdims=True)
    var = jnp.mean((z - mu) ** 2, axis=-1, keepdims=True)
    zn = (z - mu) * jax.lax.rsqrt(var + eps)
    o_ref[...] = (zn * g_ref[...] + bb_ref[...]).astype(o_ref.dtype)


def outproj_residual_ln(attn, resid, w, b, gamma, beta):
    M, E = resid.shape
    weight_vmem = 2 * E * E * jnp.dtype(MATMUL_DTYPE).itemsize
    per_row = 40 * E + 128
    tm = _pick_tile(M, _rows_cap(per_row, TILE_BUDGET - weight_vmem, hard_cap=1024))
    return pl.pallas_call(
        functools.partial(_outproj_ln_kernel, eps=LN_EPS),
        out_shape=jax.ShapeDtypeStruct((M, E), jnp.float32),
        grid=(M // tm,),
        in_specs=[
            pl.BlockSpec((tm, E), lambda i: (i, 0)),   # attention output
            pl.BlockSpec((tm, E), lambda i: (i, 0)),   # residual stream
            pl.BlockSpec((E, E), lambda i: (0, 0)),
            pl.BlockSpec((1, E), lambda i: (0, 0)),
            pl.BlockSpec((1, E), lambda i: (0, 0)),
            pl.BlockSpec((1, E), lambda i: (0, 0)),
        ],
        out_specs=pl.BlockSpec((tm, E), lambda i: (i, 0)),
        compiler_params=pltpu.CompilerParams(
            dimension_semantics=("parallel",),
            vmem_limit_bytes=VMEM_LIMIT),
    )(attn, resid, w.astype(MATMUL_DTYPE), b.reshape(1, E),
      gamma.reshape(1, E), beta.reshape(1, E))


# --------------------------- fused FFN (+ residual + LayerNorm2) ---------------------------

def _ffn_ln_kernel(x_ref, w1_ref, b1_ref, w2_ref, b2_ref, g_ref, bb_ref,
                   o_ref, acc_ref, *, eps):
    j = pl.program_id(1)

    @pl.when(j == 0)
    def _():
        acc_ref[...] = jnp.zeros_like(acc_ref)

    x = x_ref[...]                                                    # (tm, E) f32, resident
    h = jnp.dot(x.astype(MATMUL_DTYPE), w1_ref[...],
                preferred_element_type=jnp.float32) + b1_ref[...]
    h = jnp.maximum(h, 0.0)                                           # relu
    acc_ref[...] += jnp.dot(h.astype(MATMUL_DTYPE), w2_ref[...],
                            preferred_element_type=jnp.float32)

    @pl.when(j == pl.num_programs(1) - 1)
    def _():
        z = x + acc_ref[...] + b2_ref[...]                            # residual + bias2
        mu = jnp.mean(z, axis=-1, keepdims=True)
        var = jnp.mean((z - mu) ** 2, axis=-1, keepdims=True)
        zn = (z - mu) * jax.lax.rsqrt(var + eps)
        o_ref[...] = (zn * g_ref[...] + bb_ref[...]).astype(o_ref.dtype)


def ffn_residual_ln(x, w1, b1, w2, b2, gamma, beta, out_dtype=jnp.float32):
    M, E = x.shape
    FF = w1.shape[1]
    wb = jnp.dtype(MATMUL_DTYPE).itemsize
    # Make W1/W2 fully VMEM-resident (constant index_map -> fetched once) when they fit.
    if 2 * E * FF * wb <= FFN_WEIGHT_RESIDENT_BYTES:
        tf = FF
    else:
        tf = _pick_tile(FF, 512)
    weight_vmem = 2 * (2 * E * tf) * wb                    # double-buffered weight blocks
    per_row = 28 * E + 6 * tf + 128
    tm = _pick_tile(M, _rows_cap(per_row, TILE_BUDGET - weight_vmem, hard_cap=1024))
    return pl.pallas_call(
        functools.partial(_ffn_ln_kernel, eps=LN_EPS),
        out_shape=jax.ShapeDtypeStruct((M, E), out_dtype),
        grid=(M // tm, FF // tf),
        in_specs=[
            pl.BlockSpec((tm, E), lambda i, j: (i, 0)),   # x1 tile, resident over FF tiles
            pl.BlockSpec((E, tf), lambda i, j: (0, j)),   # W_ff1 column block
            pl.BlockSpec((1, tf), lambda i, j: (0, j)),   # b_ff1 slice
            pl.BlockSpec((tf, E), lambda i, j: (j, 0)),   # W_ff2 row block
            pl.BlockSpec((1, E), lambda i, j: (0, 0)),    # b_ff2
            pl.BlockSpec((1, E), lambda i, j: (0, 0)),    # ln2 gamma
            pl.BlockSpec((1, E), lambda i, j: (0, 0)),    # ln2 beta
        ],
        out_specs=pl.BlockSpec((tm, E), lambda i, j: (i, 0)),
        scratch_shapes=[pltpu.VMEM((tm, E), jnp.float32)],
        compiler_params=pltpu.CompilerParams(
            dimension_semantics=("parallel", "arbitrary"),
            vmem_limit_bytes=VMEM_LIMIT),
    )(x, w1.astype(MATMUL_DTYPE), b1.reshape(1, FF),
      w2.astype(MATMUL_DTYPE), b2.reshape(1, E),
      gamma.reshape(1, E), beta.reshape(1, E))


# --------------------------- fused head: mean-pool (S reduction) + fc1 + fc2 ---------------------------

def _head_kernel(h_ref, w1_ref, b1_ref, w2_ref, b2_ref, o_ref, acc_ref, *, inv_s):
    j = pl.program_id(1)

    @pl.when(j == 0)
    def _():
        acc_ref[...] = jnp.zeros_like(acc_ref)

    acc_ref[...] += jnp.sum(h_ref[...].astype(jnp.float32), axis=0)   # sum over this S tile

    @pl.when(j == pl.num_programs(1) - 1)
    def _():
        pooled = acc_ref[...] * inv_s                                  # mean over S
        z = jnp.dot(pooled.astype(MATMUL_DTYPE), w1_ref[...],
                    preferred_element_type=jnp.float32) + b1_ref[...]
        # dropout: identity (eval mode)
        o = jnp.dot(z.astype(MATMUL_DTYPE), w2_ref[...],
                    preferred_element_type=jnp.float32) + b2_ref[...]
        o_ref[...] = o.astype(o_ref.dtype)


def pooled_head(h3, w1, b1, w2, b2):
    S_, B_, H_ = h3.shape                         # encoder output in (S, B, H) layout
    H2 = w1.shape[1]
    C = w2.shape[1]
    tb = _pick_tile(B_, 256)
    in_b = jnp.dtype(h3.dtype).itemsize
    per_row = 2 * tb * H_ * in_b + 64             # bytes per S-row of the block (dbl-buffered)
    ts = _pick_tile(S_, _rows_cap(per_row, TILE_BUDGET, hard_cap=1024))
    return pl.pallas_call(
        functools.partial(_head_kernel, inv_s=1.0 / S_),
        out_shape=jax.ShapeDtypeStruct((B_, C), jnp.float32),
        grid=(B_ // tb, S_ // ts),
        in_specs=[
            pl.BlockSpec((ts, tb, H_), lambda i, j: (j, i, 0)),
            pl.BlockSpec((H_, H2), lambda i, j: (0, 0)),
            pl.BlockSpec((1, H2), lambda i, j: (0, 0)),
            pl.BlockSpec((H2, C), lambda i, j: (0, 0)),
            pl.BlockSpec((1, C), lambda i, j: (0, 0)),
        ],
        out_specs=pl.BlockSpec((tb, C), lambda i, j: (i, 0)),
        scratch_shapes=[pltpu.VMEM((tb, H_), jnp.float32)],
        compiler_params=pltpu.CompilerParams(
            dimension_semantics=("parallel", "arbitrary"),
            vmem_limit_bytes=VMEM_LIMIT),
    )(h3, w1.astype(MATMUL_DTYPE), b1.reshape(1, H2),
      w2.astype(MATMUL_DTYPE), b2.reshape(1, C))


# --------------------------- model glue ---------------------------

def encoder_layer(h2d, lp, num_heads, S, B, out_dtype):
    """One post-norm TransformerEncoderLayer (relu FFN), PyTorch defaults.

    h2d: (S*B, E) flattened view of the activations stored in (S, B, E) order, where
    S is the attention-batch axis and B is the attention length (batch_first=False).
    """
    M, E = h2d.shape
    assert E % num_heads == 0
    dh = E // num_heads

    # Fold the 1/sqrt(dh) attention scale into the Q third of the in-projection.
    scale = 1.0 / math.sqrt(dh)
    scale_vec = jnp.concatenate([jnp.full((E,), scale, jnp.float32),
                                 jnp.ones((2 * E,), jnp.float32)])
    qkv = matmul_bias(h2d, lp["w_in"] * scale_vec[None, :], lp["b_in"] * scale_vec,
                      out_dtype=MATMUL_DTYPE)                          # (S*B, 3E)

    # Free metadata reshape: rows are already (S-major, B-minor) so this is the
    # (attention-batch, length, 3E) layout the attention kernel wants — no HBM transpose.
    attn = attention(qkv.reshape(S, B, 3 * E), num_heads, dh)          # (S, B, E)

    x1 = outproj_residual_ln(attn.reshape(M, E), h2d, lp["w_out"], lp["b_out"],
                             lp["ln1_g"], lp["ln1_b"])
    return ffn_residual_ln(x1, lp["w_ff1"], lp["b_ff1"], lp["w_ff2"], lp["b_ff2"],
                           lp["ln2_g"], lp["ln2_b"], out_dtype=out_dtype)


def t2vbert_forward(x, params, num_heads):
    B, S, D = x.shape
    h = embed(x, params)                               # (B, S, H): Time2Vec + embed + pos
    H = h.shape[-1]
    # Single one-time layout change to (S, B, H): the attention batch (S) becomes the
    # major axis so no per-layer transposes are needed anywhere downstream.
    h2d = jnp.transpose(h, (1, 0, 2)).reshape(S * B, H)

    n_layers = len(params["layers"])
    for li, lp in enumerate(params["layers"]):
        out_dtype = MATMUL_DTYPE if li == n_layers - 1 else jnp.float32
        h2d = encoder_layer(h2d, lp, num_heads, S, B, out_dtype)

    return pooled_head(h2d.reshape(S, B, H), params["fc1_w"], params["fc1_b"],
                       params["fc2_w"], params["fc2_b"])


def init_params(key, D, H, num_heads, num_layers, num_classes, ff_dim):
    n_keys = 11 + 8 * num_layers
    keys = iter(jax.random.split(key, n_keys))

    def nrm(shape, scale=0.1):
        return scale * jax.random.normal(next(keys), shape, jnp.float32)

    params = {
        "t2v_w0": nrm((1, D), 1.0),
        "t2v_w": nrm((D, D), 1.0),
        "t2v_b": nrm((1, D), 1.0),
        "t2v_b0": nrm((1, 1), 1.0),
        "emb_w": nrm((2 * D, H)),
        "emb_b": nrm((H,)),
        "pos": nrm((1, MAX_SEQUENCE_LENGTH, H), 1.0),
        "fc1_w": nrm((H, H // 2)),
        "fc1_b": nrm((H // 2,)),
        "fc2_w": nrm((H // 2, num_classes)),
        "fc2_b": nrm((num_classes,)),
        "layers": [],
    }
    for _ in range(num_layers):
        params["layers"].append({
            "w_in": nrm((H, 3 * H)),
            "b_in": nrm((3 * H,)),
            "w_out": nrm((H, H)),
            "b_out": nrm((H,)),
            "ln1_g": jnp.ones((H,), jnp.float32),
            "ln1_b": jnp.zeros((H,), jnp.float32),
            "w_ff1": nrm((H, ff_dim)),
            "b_ff1": nrm((ff_dim,)),
            "w_ff2": nrm((ff_dim, H)),
            "b_ff2": nrm((H,)),
            "ln2_g": jnp.ones((H,), jnp.float32),
            "ln2_b": jnp.zeros((H,), jnp.float32),
        })
    return params


if __name__ == "__main__":
    B, S, D = 2, 8, 4
    H, num_heads, num_layers, num_classes = 32, 4, 2, 2
    FF = 2048  # nn.TransformerEncoderLayer default dim_feedforward

    key = jax.random.PRNGKey(0)
    pkey, xkey = jax.random.split(key)
    params = init_params(pkey, D, H, num_heads, num_layers, num_classes, FF)
    x = jax.random.normal(xkey, (B, S, D), jnp.float32)

    fwd = jax.jit(lambda xx, pp: t2vbert_forward(xx, pp, num_heads=num_heads))
    out = jax.block_until_ready(fwd(x, params))
    assert out.shape == (B, num_classes)
    assert bool(jnp.all(jnp.isfinite(out)))
    print("KERNEL_OK")
</pallas_src>

<mosaic_0001>
module attributes {stable_mosaic.version = 11 : i64} {
  func.func @_embed_kernel(%arg0: i32, %arg1: i32, %arg2: memref<1x8x4xf32, #tpu.memory_space<vmem>>, %arg3: memref<4x4xf32, #tpu.memory_space<vmem>>, %arg4: memref<1x4xf32, #tpu.memory_space<vmem>>, %arg5: memref<1x4xf32, #tpu.memory_space<vmem>>, %arg6: memref<1x1xf32, #tpu.memory_space<vmem>>, %arg7: memref<4x32xf32, #tpu.memory_space<vmem>>, %arg8: memref<4x32xf32, #tpu.memory_space<vmem>>, %arg9: memref<1x32xf32, #tpu.memory_space<vmem>>, %arg10: memref<8x32xf32, #tpu.memory_space<vmem>>, %arg11: memref<1x8x32xf32, #tpu.memory_space<vmem>>) attributes {dimension_semantics = [#tpu.dimension_semantics<parallel>, #tpu.dimension_semantics<parallel>], iteration_bounds = array<i64: 2, 1>, scalar_prefetch = 0 : i64, scratch_operands = 0 : i64, tpu.core_type = #tpu.core_type<tc>, window_params = [{transform_indices = @transform_0, window_bounds = array<i64: 1, 8, 4>}, {pipeline_mode = #tpu.pipeline_mode<synchronous>, transform_indices = @transform_1, window_bounds = array<i64: 4, 4>}, {pipeline_mode = #tpu.pipeline_mode<synchronous>, transform_indices = @transform_2, window_bounds = array<i64: 1, 4>}, {pipeline_mode = #tpu.pipeline_mode<synchronous>, transform_indices = @transform_3, window_bounds = array<i64: 1, 4>}, {pipeline_mode = #tpu.pipeline_mode<synchronous>, transform_indices = @transform_4, window_bounds = array<i64: 1, 1>}, {pipeline_mode = #tpu.pipeline_mode<synchronous>, transform_indices = @transform_5, window_bounds = array<i64: 4, 32>}, {pipeline_mode = #tpu.pipeline_mode<synchronous>, transform_indices = @transform_6, window_bounds = array<i64: 4, 32>}, {pipeline_mode = #tpu.pipeline_mode<synchronous>, transform_indices = @transform_7, window_bounds = array<i64: 1, 32>}, {transform_indices = @transform_8, window_bounds = array<i64: 8, 32>}, {transform_indices = @transform_9, window_bounds = array<i64: 1, 8, 32>}]} {
    %c0 = arith.constant 0 : index
    %c0_0 = arith.constant 0 : index
    %c0_1 = arith.constant 0 : index
    %0 = vector.load %arg2[%c0, %c0_0, %c0_1] : memref<1x8x4xf32, #tpu.memory_space<vmem>>, vector<1x8x4xf32>
    %1 = vector.shape_cast %0 : vector<1x8x4xf32> to vector<8x4xf32>
    %c0_2 = arith.constant 0 : index
    %c0_3 = arith.constant 0 : index
    %2 = vector.load %arg3[%c0_2, %c0_3] : memref<4x4xf32, #tpu.memory_space<vmem>>, vector<4x4xf32>
    %cst = arith.constant dense<0.000000e+00> : vector<8x4xf32>
    %3 = tpu.matmul %1, %2, %cst {dimension_numbers = #tpu.dot_dimension_numbers<[1], [0], [0], [1], [0, 0, 1, 1], [], []>} : vector<8x4xf32>, vector<4x4xf32>, vector<8x4xf32> -> vector<8x4xf32>
    %c0_4 = arith.constant 0 : index
    %c0_5 = arith.constant 0 : index
    %4 = vector.load %arg4[%c0_4, %c0_5] : memref<1x4xf32, #tpu.memory_space<vmem>>, vector<1x4xf32>
    %5 = vector.broadcast %4 : vector<1x4xf32> to vector<8x4xf32>
    %6 = arith.addf %3, %5 : vector<8x4xf32>
    %7 = math.sin %6 : vector<8x4xf32>
    %c0_6 = arith.constant 0 : index
    %c0_7 = arith.constant 0 : index
    %8 = vector.load %arg5[%c0_6, %c0_7] : memref<1x4xf32, #tpu.memory_space<vmem>>, vector<1x4xf32>
    %9 = vector.broadcast %8 : vector<1x4xf32> to vector<8x4xf32>
    %10 = arith.mulf %9, %1 : vector<8x4xf32>
    %c0_8 = arith.constant 0 : index
    %c0_9 = arith.constant 0 : index
    %11 = vector.load %arg6[%c0_8, %c0_9] : memref<1x1xf32, #tpu.memory_space<vmem>>, vector<1x1xf32>
    %12 = vector.broadcast %11 : vector<1x1xf32> to vector<8x4xf32>
    %13 = arith.addf %10, %12 : vector<8x4xf32>
    %c0_10 = arith.constant 0 : index
    %c0_11 = arith.constant 0 : index
    %14 = vector.load %arg7[%c0_10, %c0_11] : memref<4x32xf32, #tpu.memory_space<vmem>>, vector<4x32xf32>
    %cst_12 = arith.constant dense<0.000000e+00> : vector<8x32xf32>
    %15 = tpu.matmul %13, %14, %cst_12 {dimension_numbers = #tpu.dot_dimension_numbers<[1], [0], [0], [1], [0, 0, 1, 1], [], []>} : vector<8x4xf32>, vector<4x32xf32>, vector<8x32xf32> -> vector<8x32xf32>
    %c0_13 = arith.constant 0 : index
    %c0_14 = arith.constant 0 : index
    %16 = vector.load %arg8[%c0_13, %c0_14] : memref<4x32xf32, #tpu.memory_space<vmem>>, vector<4x32xf32>
    %cst_15 = arith.constant dense<0.000000e+00> : vector<8x32xf32>
    %17 = tpu.matmul %7, %16, %cst_15 {dimension_numbers = #tpu.dot_dimension_numbers<[1], [0], [0], [1], [0, 0, 1, 1], [], []>} : vector<8x4xf32>, vector<4x32xf32>, vector<8x32xf32> -> vector<8x32xf32>
    %18 = arith.addf %15, %17 : vector<8x32xf32>
    %c0_16 = arith.constant 0 : index
    %c0_17 = arith.constant 0 : index
    %19 = vector.load %arg9[%c0_16, %c0_17] : memref<1x32xf32, #tpu.memory_space<vmem>>, vector<1x32xf32>
    %20 = vector.broadcast %19 : vector<1x32xf32> to vector<8x32xf32>
    %21 = arith.addf %18, %20 : vector<8x32xf32>
    %c0_18 = arith.constant 0 : index
    %c0_19 = arith.constant 0 : index
    %22 = vector.load %arg10[%c0_18, %c0_19] : memref<8x32xf32, #tpu.memory_space<vmem>>, vector<8x32xf32>
    %23 = arith.addf %21, %22 : vector<8x32xf32>
    %24 = vector.shape_cast %23 : vector<8x32xf32> to vector<1x8x32xf32>
    %c0_20 = arith.constant 0 : index
    %c0_21 = arith.constant 0 : index
    %c0_22 = arith.constant 0 : index
    %25 = vector.load %arg11[%c0_20, %c0_21, %c0_22] : memref<1x8x32xf32, #tpu.memory_space<vmem>>, vector<1x8x32xf32>
    tpu.vector_store %arg11[%c0_20, %c0_21, %c0_22], %24 {strides = array<i32>} : memref<1x8x32xf32, #tpu.memory_space<vmem>>, vector<1x8x32xf32>,
    return
  }
  func.func @transform_0(%arg0: i32, %arg1: i32) -> (i32, i32, i32) {
    %c0_i32 = arith.constant 0 : i32
    %c0_i32_0 = arith.constant 0 : i32
    return %arg0, %arg1, %c0_i32 : i32, i32, i32
  }
  func.func @transform_1(%arg0: i32, %arg1: i32) -> (i32, i32) {
    %c0_i32 = arith.constant 0 : i32
    %c0_i32_0 = arith.constant 0 : i32
    %c0_i32_1 = arith.constant 0 : i32
    return %c0_i32, %c0_i32_0 : i32, i32
  }
  func.func @transform_2(%arg0: i32, %arg1: i32) -> (i32, i32) {
    %c0_i32 = arith.constant 0 : i32
    %c0_i32_0 = arith.constant 0 : i32
    %c0_i32_1 = arith.constant 0 : i32
    return %c0_i32, %c0_i32_0 : i32, i32
  }
  func.func @transform_3(%arg0: i32, %arg1: i32) -> (i32, i32) {
    %c0_i32 = arith.constant 0 : i32
    %c0_i32_0 = arith.constant 0 : i32
    %c0_i32_1 = arith.constant 0 : i32
    return %c0_i32, %c0_i32_0 : i32, i32
  }
  func.func @transform_4(%arg0: i32, %arg1: i32) -> (i32, i32) {
    %c0_i32 = arith.constant 0 : i32
    %c0_i32_0 = arith.constant 0 : i32
    %c0_i32_1 = arith.constant 0 : i32
    return %c0_i32, %c0_i32_0 : i32, i32
  }
  func.func @transform_5(%arg0: i32, %arg1: i32) -> (i32, i32) {
    %c0_i32 = arith.constant 0 : i32
    %c0_i32_0 = arith.constant 0 : i32
    %c0_i32_1 = arith.constant 0 : i32
    return %c0_i32, %c0_i32_0 : i32, i32
  }
  func.func @transform_6(%arg0: i32, %arg1: i32) -> (i32, i32) {
    %c0_i32 = arith.constant 0 : i32
    %c0_i32_0 = arith.constant 0 : i32
    %c0_i32_1 = arith.constant 0 : i32
    return %c0_i32, %c0_i32_0 : i32, i32
  }
  func.func @transform_7(%arg0: i32, %arg1: i32) -> (i32, i32) {
    %c0_i32 = arith.constant 0 : i32
    %c0_i32_0 = arith.constant 0 : i32
    %c0_i32_1 = arith.constant 0 : i32
    return %c0_i32, %c0_i32_0 : i32, i32
  }
  func.func @transform_8(%arg0: i32, %arg1: i32) -> (i32, i32) {
    %c0_i32 = arith.constant 0 : i32
    %c0_i32_0 = arith.constant 0 : i32
    return %arg1, %c0_i32 : i32, i32
  }
  func.func @transform_9(%arg0: i32, %arg1: i32) -> (i32, i32, i32) {
    %c0_i32 = arith.constant 0 : i32
    %c0_i32_0 = arith.constant 0 : i32
    return %arg0, %arg1, %c0_i32 : i32, i32, i32
  }
}

module attributes {stable_mosaic.version = 11 : i64} {
  func.func @_matmul_bias_kernel(%arg0: i32, %arg1: memref<16x32xf32, #tpu.memory_space<vmem>>, %arg2: memref<32x96xbf16, #tpu.memory_space<vmem>>, %arg3: memref<1x96xf32, #tpu.memory_space<vmem>>, %arg4: memref<16x96xbf16, #tpu.memory_space<vmem>>) attributes {dimension_semantics = [#tpu.dimension_semantics<parallel>], iteration_bounds = array<i64: 1>, scalar_prefetch = 0 : i64, scratch_operands = 0 : i64, tpu.core_type = #tpu.core_type<tc>, window_params = [{transform_indices = @transform_0, window_bounds = array<i64: 16, 32>}, {pipeline_mode = #tpu.pipeline_mode<synchronous>, transform_indices = @transform_1, window_bounds = array<i64: 32, 96>}, {pipeline_mode = #tpu.pipeline_mode<synchronous>, transform_indices = @transform_2, window_bounds = array<i64: 1, 96>}, {transform_indices = @transform_3, window_bounds = array<i64: 16, 96>}]} {
    %c0 = arith.constant 0 : index
    %c0_0 = arith.constant 0 : index
    %0 = vector.load %arg1[%c0, %c0_0] : memref<16x32xf32, #tpu.memory_space<vmem>>, vector<16x32xf32>
    %1 = arith.truncf %0 : vector<16x32xf32> to vector<16x32xbf16>
    %c0_1 = arith.constant 0 : index
    %c0_2 = arith.constant 0 : index
    %2 = vector.load %arg2[%c0_1, %c0_2] : memref<32x96xbf16, #tpu.memory_space<vmem>>, vector<32x96xbf16>
    %cst = arith.constant dense<0.000000e+00> : vector<16x96xf32>
    %3 = tpu.matmul %1, %2, %cst {dimension_numbers = #tpu.dot_dimension_numbers<[1], [0], [0], [1], [0, 0, 1, 1], [], []>} : vector<16x32xbf16>, vector<32x96xbf16>, vector<16x96xf32> -> vector<16x96xf32>
    %c0_3 = arith.constant 0 : index
    %c0_4 = arith.constant 0 : index
    %4 = vector.load %arg3[%c0_3, %c0_4] : memref<1x96xf32, #tpu.memory_space<vmem>>, vector<1x96xf32>
    %5 = vector.broadcast %4 : vector<1x96xf32> to vector<16x96xf32>
    %6 = arith.addf %3, %5 : vector<16x96xf32>
    %7 = arith.truncf %6 : vector<16x96xf32> to vector<16x96xbf16>
    %c0_5 = arith.constant 0 : index
    %c0_6 = arith.constant 0 : index
    %8 = vector.load %arg4[%c0_5, %c0_6] : memref<16x96xbf16, #tpu.memory_space<vmem>>, vector<16x96xbf16>
    tpu.vector_store %arg4[%c0_5, %c0_6], %7 {strides = array<i32>} : memref<16x96xbf16, #tpu.memory_space<vmem>>, vector<16x96xbf16>,
    return
  }
  func.func @transform_0(%arg0: i32) -> (i32, i32) {
    %c0_i32 = arith.constant 0 : i32
    %c0_i32_0 = arith.constant 0 : i32
    return %arg0, %c0_i32 : i32, i32
  }
  func.func @transform_1(%arg0: i32) -> (i32, i32) {
    %c0_i32 = arith.constant 0 : i32
    %c0_i32_0 = arith.constant 0 : i32
    %c0_i32_1 = arith.constant 0 : i32
    return %c0_i32, %c0_i32_0 : i32, i32
  }
  func.func @transform_2(%arg0: i32) -> (i32, i32) {
    %c0_i32 = arith.constant 0 : i32
    %c0_i32_0 = arith.constant 0 : i32
    %c0_i32_1 = arith.constant 0 : i32
    return %c0_i32, %c0_i32_0 : i32, i32
  }
  func.func @transform_3(%arg0: i32) -> (i32, i32) {
    %c0_i32 = arith.constant 0 : i32
    %c0_i32_0 = arith.constant 0 : i32
    return %arg0, %c0_i32 : i32, i32
  }
}

module attributes {stable_mosaic.version = 11 : i64} {
  func.func @_outproj_ln_kernel(%arg0: i32, %arg1: memref<16x32xbf16, #tpu.memory_space<vmem>>, %arg2: memref<16x32xf32, #tpu.memory_space<vmem>>, %arg3: memref<32x32xbf16, #tpu.memory_space<vmem>>, %arg4: memref<1x32xf32, #tpu.memory_space<vmem>>, %arg5: memref<1x32xf32, #tpu.memory_space<vmem>>, %arg6: memref<1x32xf32, #tpu.memory_space<vmem>>, %arg7: memref<16x32xf32, #tpu.memory_space<vmem>>) attributes {dimension_semantics = [#tpu.dimension_semantics<parallel>], iteration_bounds = array<i64: 1>, scalar_prefetch = 0 : i64, scratch_operands = 0 : i64, tpu.core_type = #tpu.core_type<tc>, window_params = [{transform_indices = @transform_0, window_bounds = array<i64: 16, 32>}, {transform_indices = @transform_1, window_bounds = array<i64: 16, 32>}, {pipeline_mode = #tpu.pipeline_mode<synchronous>, transform_indices = @transform_2, window_bounds = array<i64: 32, 32>}, {pipeline_mode = #tpu.pipeline_mode<synchronous>, transform_indices = @transform_3, window_bounds = array<i64: 1, 32>}, {pipeline_mode = #tpu.pipeline_mode<synchronous>, transform_indices = @transform_4, window_bounds = array<i64: 1, 32>}, {pipeline_mode = #tpu.pipeline_mode<synchronous>, transform_indices = @transform_5, window_bounds = array<i64: 1, 32>}, {transform_indices = @transform_6, window_bounds = array<i64: 16, 32>}]} {
    %c0 = arith.constant 0 : index
    %c0_0 = arith.constant 0 : index
    %0 = vector.load %arg1[%c0, %c0_0] : memref<16x32xbf16, #tpu.memory_space<vmem>>, vector<16x32xbf16>
    %c0_1 = arith.constant 0 : index
    %c0_2 = arith.constant 0 : index
    %1 = vector.load %arg3[%c0_1, %c0_2] : memref<32x32xbf16, #tpu.memory_space<vmem>>, vector<32x32xbf16>
    %cst = arith.constant dense<0.000000e+00> : vector<16x32xf32>
    %2 = tpu.matmul %0, %1, %cst {dimension_numbers = #tpu.dot_dimension_numbers<[1], [0], [0], [1], [0, 0, 1, 1], [], []>} : vector<16x32xbf16>, vector<32x32xbf16>, vector<16x32xf32> -> vector<16x32xf32>
    %c0_3 = arith.constant 0 : index
    %c0_4 = arith.constant 0 : index
    %3 = vector.load %arg4[%c0_3, %c0_4] : memref<1x32xf32, #tpu.memory_space<vmem>>, vector<1x32xf32>
    %4 = vector.broadcast %3 : vector<1x32xf32> to vector<16x32xf32>
    %5 = arith.addf %2, %4 : vector<16x32xf32>
    %c0_5 = arith.constant 0 : index
    %c0_6 = arith.constant 0 : index
    %6 = vector.load %arg2[%c0_5, %c0_6] : memref<16x32xf32, #tpu.memory_space<vmem>>, vector<16x32xf32>
    %7 = arith.addf %6, %5 : vector<16x32xf32>
    %cst_7 = arith.constant dense<0.000000e+00> : vector<16xf32>
    %8 = vector.multi_reduction <add>, %7, %cst_7 [1] : vector<16x32xf32> to vector<16xf32>
    %9 = vector.shape_cast %8 : vector<16xf32> to vector<16x1xf32>
    %cst_8 = arith.constant 3.200000e+01 : f32
    %10 = vector.broadcast %cst_8 : f32 to vector<16x1xf32>
    %11 = arith.divf %9, %10 : vector<16x1xf32>
    %12 = vector.broadcast %11 : vector<16x1xf32> to vector<16x32xf32>
    %13 = arith.subf %7, %12 : vector<16x32xf32>
    %14 = arith.mulf %13, %13 : vector<16x32xf32>
    %cst_9 = arith.constant dense<0.000000e+00> : vector<16xf32>
    %15 = vector.multi_reduction <add>, %14, %cst_9 [1] : vector<16x32xf32> to vector<16xf32>
    %16 = vector.shape_cast %15 : vector<16xf32> to vector<16x1xf32>
    %cst_10 = arith.constant 3.200000e+01 : f32
    %17 = vector.broadcast %cst_10 : f32 to vector<16x1xf32>
    %18 = arith.divf %16, %17 : vector<16x1xf32>
    %19 = vector.broadcast %11 : vector<16x1xf32> to vector<16x32xf32>
    %20 = arith.subf %7, %19 : vector<16x32xf32>
    %cst_11 = arith.constant 9.99999974E-6 : f32
    %21 = vector.broadcast %cst_11 : f32 to vector<16x1xf32>
    %22 = arith.addf %18, %21 : vector<16x1xf32>
    %23 = math.rsqrt %22 : vector<16x1xf32>
    %24 = vector.broadcast %23 : vector<16x1xf32> to vector<16x32xf32>
    %25 = arith.mulf %20, %24 : vector<16x32xf32>
    %c0_12 = arith.constant 0 : index
    %c0_13 = arith.constant 0 : index
    %26 = vector.load %arg5[%c0_12, %c0_13] : memref<1x32xf32, #tpu.memory_space<vmem>>, vector<1x32xf32>
    %27 = vector.broadcast %26 : vector<1x32xf32> to vector<16x32xf32>
    %28 = arith.mulf %25, %27 : vector<16x32xf32>
    %c0_14 = arith.constant 0 : index
    %c0_15 = arith.constant 0 : index
    %29 = vector.load %arg6[%c0_14, %c0_15] : memref<1x32xf32, #tpu.memory_space<vmem>>, vector<1x32xf32>
    %30 = vector.broadcast %29 : vector<1x32xf32> to vector<16x32xf32>
    %31 = arith.addf %28, %30 : vector<16x32xf32>
    %c0_16 = arith.constant 0 : index
    %c0_17 = arith.constant 0 : index
    %32 = vector.load %arg7[%c0_16, %c0_17] : memref<16x32xf32, #tpu.memory_space<vmem>>, vector<16x32xf32>
    tpu.vector_store %arg7[%c0_16, %c0_17], %31 {strides = array<i32>} : memref<16x32xf32, #tpu.memory_space<vmem>>, vector<16x32xf32>,
    return
  }
  func.func @transform_0(%arg0: i32) -> (i32, i32) {
    %c0_i32 = arith.constant 0 : i32
    %c0_i32_0 = arith.constant 0 : i32
    return %arg0, %c0_i32 : i32, i32
  }
  func.func @transform_1(%arg0: i32) -> (i32, i32) {
    %c0_i32 = arith.constant 0 : i32
    %c0_i32_0 = arith.constant 0 : i32
    return %arg0, %c0_i32 : i32, i32
  }
  func.func @transform_2(%arg0: i32) -> (i32, i32) {
    %c0_i32 = arith.constant 0 : i32
    %c0_i32_0 = arith.constant 0 : i32
    %c0_i32_1 = arith.constant 0 : i32
    return %c0_i32, %c0_i32_0 : i32, i32
  }
  func.func @transform_3(%arg0: i32) -> (i32, i32) {
    %c0_i32 = arith.constant 0 : i32
    %c0_i32_0 = arith.constant 0 : i32
    %c0_i32_1 = arith.constant 0 : i32
    return %c0_i32, %c0_i32_0 : i32, i32
  }
  func.func @transform_4(%arg0: i32) -> (i32, i32) {
    %c0_i32 = arith.constant 0 : i32
    %c0_i32_0 = arith.constant 0 : i32
    %c0_i32_1 = arith.constant 0 : i32
    return %c0_i32, %c0_i32_0 : i32, i32
  }
  func.func @transform_5(%arg0: i32) -> (i32, i32) {
    %c0_i32 = arith.constant 0 : i32
    %c0_i32_0 = arith.constant 0 : i32
    %c0_i32_1 = arith.constant 0 : i32
    return %c0_i32, %c0_i32_0 : i32, i32
  }
  func.func @transform_6(%arg0: i32) -> (i32, i32) {
    %c0_i32 = arith.constant 0 : i32
    %c0_i32_0 = arith.constant 0 : i32
    return %arg0, %c0_i32 : i32, i32
  }
}

module attributes {stable_mosaic.version = 11 : i64} {
  func.func @_attn_kernel(%arg0: i32, %arg1: memref<8x2x96xbf16, #tpu.memory_space<vmem>>, %arg2: memref<8x2x32xbf16, #tpu.memory_space<vmem>>) attributes {dimension_semantics = [#tpu.dimension_semantics<parallel>], iteration_bounds = array<i64: 1>, scalar_prefetch = 0 : i64, scratch_operands = 0 : i64, tpu.core_type = #tpu.core_type<tc>, window_params = [{transform_indices = @transform_0, window_bounds = array<i64: 8, 2, 96>}, {transform_indices = @transform_1, window_bounds = array<i64: 8, 2, 32>}]} {
    %c0 = arith.constant 0 : index
    %c0_0 = arith.constant 0 : index
    %c0_1 = arith.constant 0 : index
    %0 = vector.load %arg1[%c0, %c0_0, %c0_1] : memref<8x2x96xbf16, #tpu.memory_space<vmem>>, vector<8x2x96xbf16>
    %1 = vector.extract_strided_slice %0 {offsets = [0, 0, 0], sizes = [8, 2, 8], strides = [1, 1, 1]} : vector<8x2x96xbf16> to vector<8x2x8xbf16>
    %2 = vector.extract_strided_slice %0 {offsets = [0, 0, 32], sizes = [8, 2, 8], strides = [1, 1, 1]} : vector<8x2x96xbf16> to vector<8x2x8xbf16>
    %3 = vector.extract_strided_slice %0 {offsets = [0, 0, 64], sizes = [8, 2, 8], strides = [1, 1, 1]} : vector<8x2x96xbf16> to vector<8x2x8xbf16>
    "tpu.trace_start"() <{level = 10 : i32, message = "bld,bmd->blm"}> : () -> ()
    %cst = arith.constant dense<0.000000e+00> : vector<8x2x2xf32>
    %4 = tpu.matmul %1, %2, %cst {dimension_numbers = #tpu.dot_dimension_numbers<[2], [2], [1], [1], [0, 0, 0, 1, 1, 1], [0], [0]>} : vector<8x2x8xbf16>, vector<8x2x8xbf16>, vector<8x2x2xf32> -> vector<8x2x2xf32>
    "tpu.trace_stop"() : () -> ()
    %cst_2 = arith.constant dense<0xFF800000> : vector<8x2xf32>
    %5 = vector.multi_reduction <maximumf>, %4, %cst_2 [2] : vector<8x2x2xf32> to vector<8x2xf32>
    %6 = vector.shape_cast %5 : vector<8x2xf32> to vector<8x2x1xf32>
    %7 = vector.broadcast %6 : vector<8x2x1xf32> to vector<8x2x2xf32>
    %8 = arith.subf %4, %7 : vector<8x2x2xf32>
    %9 = math.exp %8 : vector<8x2x2xf32>
    %cst_3 = arith.constant dense<0.000000e+00> : vector<8x2xf32>
    %10 = vector.multi_reduction <add>, %9, %cst_3 [2] : vector<8x2x2xf32> to vector<8x2xf32>
    %11 = vector.shape_cast %10 : vector<8x2xf32> to vector<8x2x1xf32>
    %12 = tpu.reciprocal %11 {approx = true} : vector<8x2x1xf32> -> vector<8x2x1xf32>
    %13 = vector.broadcast %12 : vector<8x2x1xf32> to vector<8x2x2xf32>
    %14 = arith.mulf %9, %13 : vector<8x2x2xf32>
    %15 = arith.truncf %14 : vector<8x2x2xf32> to vector<8x2x2xbf16>
    "tpu.trace_start"() <{level = 10 : i32, message = "blm,bmd->bld"}> : () -> ()
    %cst_4 = arith.constant dense<0.000000e+00> : vector<8x2x8xf32>
    %16 = tpu.matmul %15, %3, %cst_4 {dimension_numbers = #tpu.dot_dimension_numbers<[2], [1], [1], [2], [0, 0, 0, 1, 1, 2], [0], [0]>} : vector<8x2x2xbf16>, vector<8x2x8xbf16>, vector<8x2x8xf32> -> vector<8x2x8xf32>
    "tpu.trace_stop"() : () -> ()
    %17 = arith.truncf %16 : vector<8x2x8xf32> to vector<8x2x8xbf16>
    %c0_5 = arith.constant 0 : index
    %c0_6 = arith.constant 0 : index
    %c0_7 = arith.constant 0 : index
    %18 = vector.load %arg2[%c0_5, %c0_6, %c0_7] : memref<8x2x32xbf16, #tpu.memory_space<vmem>>, vector<8x2x8xbf16>
    tpu.vector_store %arg2[%c0_5, %c0_6, %c0_7], %17 {strides = array<i32>} : memref<8x2x32xbf16, #tpu.memory_space<vmem>>, vector<8x2x8xbf16>,
    %19 = vector.extract_strided_slice %0 {offsets = [0, 0, 8], sizes = [8, 2, 8], strides = [1, 1, 1]} : vector<8x2x96xbf16> to vector<8x2x8xbf16>
    %20 = vector.extract_strided_slice %0 {offsets = [0, 0, 40], sizes = [8, 2, 8], strides = [1, 1, 1]} : vector<8x2x96xbf16> to vector<8x2x8xbf16>
    %21 = vector.extract_strided_slice %0 {offsets = [0, 0, 72], sizes = [8, 2, 8], strides = [1, 1, 1]} : vector<8x2x96xbf16> to vector<8x2x8xbf16>
    "tpu.trace_start"() <{level = 10 : i32, message = "bld,bmd->blm"}> : () -> ()
    %cst_8 = arith.constant dense<0.000000e+00> : vector<8x2x2xf32>
    %22 = tpu.matmul %19, %20, %cst_8 {dimension_numbers = #tpu.dot_dimension_numbers<[2], [2], [1], [1], [0, 0, 0, 1, 1, 1], [0], [0]>} : vector<8x2x8xbf16>, vector<8x2x8xbf16>, vector<8x2x2xf32> -> vector<8x2x2xf32>
    "tpu.trace_stop"() : () -> ()
    %cst_9 = arith.constant dense<0xFF800000> : vector<8x2xf32>
    %23 = vector.multi_reduction <maximumf>, %22, %cst_9 [2] : vector<8x2x2xf32> to vector<8x2xf32>
    %24 = vector.shape_cast %23 : vector<8x2xf32> to vector<8x2x1xf32>
    %25 = vector.broadcast %24 : vector<8x2x1xf32> to vector<8x2x2xf32>
    %26 = arith.subf %22, %25 : vector<8x2x2xf32>
    %27 = math.exp %26 : vector<8x2x2xf32>
    %cst_10 = arith.constant dense<0.000000e+00> : vector<8x2xf32>
    %28 = vector.multi_reduction <add>, %27, %cst_10 [2] : vector<8x2x2xf32> to vector<8x2xf32>
    %29 = vector.shape_cast %28 : vector<8x2xf32> to vector<8x2x1xf32>
    %30 = tpu.reciprocal %29 {approx = true} : vector<8x2x1xf32> -> vector<8x2x1xf32>
    %31 = vector.broadcast %30 : vector<8x2x1xf32> to vector<8x2x2xf32>
    %32 = arith.mulf %27, %31 : vector<8x2x2xf32>
    %33 = arith.truncf %32 : vector<8x2x2xf32> to vector<8x2x2xbf16>
    "tpu.trace_start"() <{level = 10 : i32, message = "blm,bmd->bld"}> : () -> ()
    %cst_11 = arith.constant dense<0.000000e+00> : vector<8x2x8xf32>
    %34 = tpu.matmul %33, %21, %cst_11 {dimension_numbers = #tpu.dot_dimension_numbers<[2], [1], [1], [2], [0, 0, 0, 1, 1, 2], [0], [0]>} : vector<8x2x2xbf16>, vector<8x2x8xbf16>, vector<8x2x8xf32> -> vector<8x2x8xf32>
    "tpu.trace_stop"() : () -> ()
    %35 = arith.truncf %34 : vector<8x2x8xf32> to vector<8x2x8xbf16>
    %c0_12 = arith.constant 0 : index
    %c0_13 = arith.constant 0 : index
    %c8 = arith.constant 8 : index
    %36 = vector.load %arg2[%c0_12, %c0_13, %c8] : memref<8x2x32xbf16, #tpu.memory_space<vmem>>, vector<8x2x8xbf16>
    tpu.vector_store %arg2[%c0_12, %c0_13, %c8], %35 {strides = array<i32>} : memref<8x2x32xbf16, #tpu.memory_space<vmem>>, vector<8x2x8xbf16>,
    %37 = vector.extract_strided_slice %0 {offsets = [0, 0, 16], sizes = [8, 2, 8], strides = [1, 1, 1]} : vector<8x2x96xbf16> to vector<8x2x8xbf16>
    %38 = vector.extract_strided_slice %0 {offsets = [0, 0, 48], sizes = [8, 2, 8], strides = [1, 1, 1]} : vector<8x2x96xbf16> to vector<8x2x8xbf16>
    %39 = vector.extract_strided_slice %0 {offsets = [0, 0, 80], sizes = [8, 2, 8], strides = [1, 1, 1]} : vector<8x2x96xbf16> to vector<8x2x8xbf16>
    "tpu.trace_start"() <{level = 10 : i32, message = "bld,bmd->blm"}> : () -> ()
    %cst_14 = arith.constant dense<0.000000e+00> : vector<8x2x2xf32>
    %40 = tpu.matmul %37, %38, %cst_14 {dimension_numbers = #tpu.dot_dimension_numbers<[2], [2], [1], [1], [0, 0, 0, 1, 1, 1], [0], [0]>} : vector<8x2x8xbf16>, vector<8x2x8xbf16>, vector<8x2x2xf32> -> vector<8x2x2xf32>
    "tpu.trace_stop"() : () -> ()
    %cst_15 = arith.constant dense<0xFF800000> : vector<8x2xf32>
    %41 = vector.multi_reduction <maximumf>, %40, %cst_15 [2] : vector<8x2x2xf32> to vector<8x2xf32>
    %42 = vector.shape_cast %41 : vector<8x2xf32> to vector<8x2x1xf32>
    %43 = vector.broadcast %42 : vector<8x2x1xf32> to vector<8x2x2xf32>
    %44 = arith.subf %40, %43 : vector<8x2x2xf32>
    %45 = math.exp %44 : vector<8x2x2xf32>
    %cst_16 = arith.constant dense<0.000000e+00> : vector<8x2xf32>
    %46 = vector.multi_reduction <add>, %45, %cst_16 [2] : vector<8x2x2xf32> to vector<8x2xf32>
    %47 = vector.shape_cast %46 : vector<8x2xf32> to vector<8x2x1xf32>
    %48 = tpu.reciprocal %47 {approx = true} : vector<8x2x1xf32> -> vector<8x2x1xf32>
    %49 = vector.broadcast %48 : vector<8x2x1xf32> to vector<8x2x2xf32>
    %50 = arith.mulf %45, %49 : vector<8x2x2xf32>
    %51 = arith.truncf %50 : vector<8x2x2xf32> to vector<8x2x2xbf16>
    "tpu.trace_start"() <{level = 10 : i32, message = "blm,bmd->bld"}> : () -> ()
    %cst_17 = arith.constant dense<0.000000e+00> : vector<8x2x8xf32>
    %52 = tpu.matmul %51, %39, %cst_17 {dimension_numbers = #tpu.dot_dimension_numbers<[2], [1], [1], [2], [0, 0, 0, 1, 1, 2], [0], [0]>} : vector<8x2x2xbf16>, vector<8x2x8xbf16>, vector<8x2x8xf32> -> vector<8x2x8xf32>
    "tpu.trace_stop"() : () -> ()
    %53 = arith.truncf %52 : vector<8x2x8xf32> to vector<8x2x8xbf16>
    %c0_18 = arith.constant 0 : index
    %c0_19 = arith.constant 0 : index
    %c16 = arith.constant 16 : index
    %54 = vector.load %arg2[%c0_18, %c0_19, %c16] : memref<8x2x32xbf16, #tpu.memory_space<vmem>>, vector<8x2x8xbf16>
    tpu.vector_store %arg2[%c0_18, %c0_19, %c16], %53 {strides = array<i32>} : memref<8x2x32xbf16, #tpu.memory_space<vmem>>, vector<8x2x8xbf16>,
    %55 = vector.extract_strided_slice %0 {offsets = [0, 0, 24], sizes = [8, 2, 8], strides = [1, 1, 1]} : vector<8x2x96xbf16> to vector<8x2x8xbf16>
    %56 = vector.extract_strided_slice %0 {offsets = [0, 0, 56], sizes = [8, 2, 8], strides = [1, 1, 1]} : vector<8x2x96xbf16> to vector<8x2x8xbf16>
    %57 = vector.extract_strided_slice %0 {offsets = [0, 0, 88], sizes = [8, 2, 8], strides = [1, 1, 1]} : vector<8x2x96xbf16> to vector<8x2x8xbf16>
    "tpu.trace_start"() <{level = 10 : i32, message = "bld,bmd->blm"}> : () -> ()
    %cst_20 = arith.constant dense<0.000000e+00> : vector<8x2x2xf32>
    %58 = tpu.matmul %55, %56, %cst_20 {dimension_numbers = #tpu.dot_dimension_numbers<[2], [2], [1], [1], [0, 0, 0, 1, 1, 1], [0], [0]>} : vector<8x2x8xbf16>, vector<8x2x8xbf16>, vector<8x2x2xf32> -> vector<8x2x2xf32>
    "tpu.trace_stop"() : () -> ()
    %cst_21 = arith.constant dense<0xFF800000> : vector<8x2xf32>
    %59 = vector.multi_reduction <maximumf>, %58, %cst_21 [2] : vector<8x2x2xf32> to vector<8x2xf32>
    %60 = vector.shape_cast %59 : vector<8x2xf32> to vector<8x2x1xf32>
    %61 = vector.broadcast %60 : vector<8x2x1xf32> to vector<8x2x2xf32>
    %62 = arith.subf %58, %61 : vector<8x2x2xf32>
    %63 = math.exp %62 : vector<8x2x2xf32>
    %cst_22 = arith.constant dense<0.000000e+00> : vector<8x2xf32>
    %64 = vector.multi_reduction <add>, %63, %cst_22 [2] : vector<8x2x2xf32> to vector<8x2xf32>
    %65 = vector.shape_cast %64 : vector<8x2xf32> to vector<8x2x1xf32>
    %66 = tpu.reciprocal %65 {approx = true} : vector<8x2x1xf32> -> vector<8x2x1xf32>
    %67 = vector.broadcast %66 : vector<8x2x1xf32> to vector<8x2x2xf32>
    %68 = arith.mulf %63, %67 : vector<8x2x2xf32>
    %69 = arith.truncf %68 : vector<8x2x2xf32> to vector<8x2x2xbf16>
    "tpu.trace_start"() <{level = 10 : i32, message = "blm,bmd->bld"}> : () -> ()
    %cst_23 = arith.constant dense<0.000000e+00> : vector<8x2x8xf32>
    %70 = tpu.matmul %69, %57, %cst_23 {dimension_numbers = #tpu.dot_dimension_numbers<[2], [1], [1], [2], [0, 0, 0, 1, 1, 2], [0], [0]>} : vector<8x2x2xbf16>, vector<8x2x8xbf16>, vector<8x2x8xf32> -> vector<8x2x8xf32>
    "tpu.trace_stop"() : () -> ()
    %71 = arith.truncf %70 : vector<8x2x8xf32> to vector<8x2x8xbf16>
    %c0_24 = arith.constant 0 : index
    %c0_25 = arith.constant 0 : index
    %c24 = arith.constant 24 : index
    %72 = vector.load %arg2[%c0_24, %c0_25, %c24] : memref<8x2x32xbf16, #tpu.memory_space<vmem>>, vector<8x2x8xbf16>
    tpu.vector_store %arg2[%c0_24, %c0_25, %c24], %71 {strides = array<i32>} : memref<8x2x32xbf16, #tpu.memory_space<vmem>>, vector<8x2x8xbf16>,
    return
  }
  func.func @transform_0(%arg0: i32) -> (i32, i32, i32) {
    %c0_i32 = arith.constant 0 : i32
    %c0_i32_0 = arith.constant 0 : i32
    %c0_i32_1 = arith.constant 0 : i32
    return %arg0, %c0_i32, %c0_i32_0 : i32, i32, i32
  }
  func.func @transform_1(%arg0: i32) -> (i32, i32, i32) {
    %c0_i32 = arith.constant 0 : i32
    %c0_i32_0 = arith.constant 0 : i32
    %c0_i32_1 = arith.constant 0 : i32
    return %arg0, %c0_i32, %c0_i32_0 : i32, i32, i32
  }
}

module attributes {stable_mosaic.version = 11 : i64} {
  func.func @_ffn_ln_kernel(%arg0: i32, %arg1: i32, %arg2: memref<16x32xf32, #tpu.memory_space<vmem>>, %arg3: memref<32x2048xbf16, #tpu.memory_space<vmem>>, %arg4: memref<1x2048xf32, #tpu.memory_space<vmem>>, %arg5: memref<2048x32xbf16, #tpu.memory_space<vmem>>, %arg6: memref<1x32xf32, #tpu.memory_space<vmem>>, %arg7: memref<1x32xf32, #tpu.memory_space<vmem>>, %arg8: memref<1x32xf32, #tpu.memory_space<vmem>>, %arg9: memref<16x32xf32, #tpu.memory_space<vmem>>, %arg10: memref<16x32xf32, #tpu.memory_space<vmem>>) attributes {dimension_semantics = [#tpu.dimension_semantics<parallel>, #tpu.dimension_semantics<arbitrary>], iteration_bounds = array<i64: 1, 1>, scalar_prefetch = 0 : i64, scratch_operands = 1 : i64, tpu.core_type = #tpu.core_type<tc>, window_params = [{transform_indices = @transform_0, window_bounds = array<i64: 16, 32>}, {transform_indices = @transform_1, window_bounds = array<i64: 32, 2048>}, {transform_indices = @transform_2, window_bounds = array<i64: 1, 2048>}, {transform_indices = @transform_3, window_bounds = array<i64: 2048, 32>}, {pipeline_mode = #tpu.pipeline_mode<synchronous>, transform_indices = @transform_4, window_bounds = array<i64: 1, 32>}, {pipeline_mode = #tpu.pipeline_mode<synchronous>, transform_indices = @transform_5, window_bounds = array<i64: 1, 32>}, {pipeline_mode = #tpu.pipeline_mode<synchronous>, transform_indices = @transform_6, window_bounds = array<i64: 1, 32>}, {transform_indices = @transform_7, window_bounds = array<i64: 16, 32>}]} {
    %c0_i32 = arith.constant 0 : i32
    %0 = arith.cmpi eq, %arg1, %c0_i32 : i32
    %1 = arith.extui %0 : i1 to i32
    %c0_i32_0 = arith.constant 0 : i32
    %2 = arith.cmpi ne, %1, %c0_i32_0 : i32
    scf.if %2 {
      %cst_16 = arith.constant 0.000000e+00 : f32
      %21 = vector.broadcast %cst_16 : f32 to vector<16x32xf32>
      %c0_17 = arith.constant 0 : index
      %c0_18 = arith.constant 0 : index
      %22 = vector.load %arg10[%c0_17, %c0_18] : memref<16x32xf32, #tpu.memory_space<vmem>>, vector<16x32xf32>
      tpu.vector_store %arg10[%c0_17, %c0_18], %21 {strides = array<i32>} : memref<16x32xf32, #tpu.memory_space<vmem>>, vector<16x32xf32>,
    } else {
    }
    %c0 = arith.constant 0 : index
    %c0_1 = arith.constant 0 : index
    %3 = vector.load %arg2[%c0, %c0_1] : memref<16x32xf32, #tpu.memory_space<vmem>>, vector<16x32xf32>
    %4 = arith.truncf %3 : vector<16x32xf32> to vector<16x32xbf16>
    %c0_2 = arith.constant 0 : index
    %c0_3 = arith.constant 0 : index
    %5 = vector.load %arg3[%c0_2, %c0_3] : memref<32x2048xbf16, #tpu.memory_space<vmem>>, vector<32x2048xbf16>
    %cst = arith.constant dense<0.000000e+00> : vector<16x2048xf32>
    %6 = tpu.matmul %4, %5, %cst {dimension_numbers = #tpu.dot_dimension_numbers<[1], [0], [0], [1], [0, 0, 1, 1], [], []>} : vector<16x32xbf16>, vector<32x2048xbf16>, vector<16x2048xf32> -> vector<16x2048xf32>
    %c0_4 = arith.constant 0 : index
    %c0_5 = arith.constant 0 : index
    %7 = vector.load %arg4[%c0_4, %c0_5] : memref<1x2048xf32, #tpu.memory_space<vmem>>, vector<1x2048xf32>
    %8 = vector.broadcast %7 : vector<1x2048xf32> to vector<16x2048xf32>
    %9 = arith.addf %6, %8 : vector<16x2048xf32>
    %cst_6 = arith.constant 0.000000e+00 : f32
    %10 = vector.broadcast %cst_6 : f32 to vector<16x2048xf32>
    %11 = arith.maximumf %9, %10 : vector<16x2048xf32>
    %c0_7 = arith.constant 0 : index
    %c0_8 = arith.constant 0 : index
    %12 = vector.load %arg10[%c0_7, %c0_8] : memref<16x32xf32, #tpu.memory_space<vmem>>, vector<16x32xf32>
    %13 = arith.truncf %11 : vector<16x2048xf32> to vector<16x2048xbf16>
    %c0_9 = arith.constant 0 : index
    %c0_10 = arith.constant 0 : index
    %14 = vector.load %arg5[%c0_9, %c0_10] : memref<2048x32xbf16, #tpu.memory_space<vmem>>, vector<2048x32xbf16>
    %cst_11 = arith.constant dense<0.000000e+00> : vector<16x32xf32>
    %15 = tpu.matmul %13, %14, %cst_11 {dimension_numbers = #tpu.dot_dimension_numbers<[1], [0], [0], [1], [0, 0, 1, 1], [], []>} : vector<16x2048xbf16>, vector<2048x32xbf16>, vector<16x32xf32> -> vector<16x32xf32>
    %16 = arith.addf %12, %15 : vector<16x32xf32>
    %c0_12 = arith.constant 0 : index
    %c0_13 = arith.constant 0 : index
    %17 = vector.load %arg10[%c0_12, %c0_13] : memref<16x32xf32, #tpu.memory_space<vmem>>, vector<16x32xf32>
    tpu.vector_store %arg10[%c0_12, %c0_13], %16 {strides = array<i32>} : memref<16x32xf32, #tpu.memory_space<vmem>>, vector<16x32xf32>,
    %c0_i32_14 = arith.constant 0 : i32
    %18 = arith.cmpi eq, %arg1, %c0_i32_14 : i32
    %19 = arith.extui %18 : i1 to i32
    %c0_i32_15 = arith.constant 0 : i32
    %20 = arith.cmpi ne, %19, %c0_i32_15 : i32
    scf.if %20 {
      %c0_16 = arith.constant 0 : index
      %c0_17 = arith.constant 0 : index
      %21 = vector.load %arg10[%c0_16, %c0_17] : memref<16x32xf32, #tpu.memory_space<vmem>>, vector<16x32xf32>
      %22 = arith.addf %3, %21 : vector<16x32xf32>
      %c0_18 = arith.constant 0 : index
      %c0_19 = arith.constant 0 : index
      %23 = vector.load %arg6[%c0_18, %c0_19] : memref<1x32xf32, #tpu.memory_space<vmem>>, vector<1x32xf32>
      %24 = vector.broadcast %23 : vector<1x32xf32> to vector<16x32xf32>
      %25 = arith.addf %22, %24 : vector<16x32xf32>
      %cst_20 = arith.constant dense<0.000000e+00> : vector<16xf32>
      %26 = vector.multi_reduction <add>, %25, %cst_20 [1] : vector<16x32xf32> to vector<16xf32>
      %27 = vector.shape_cast %26 : vector<16xf32> to vector<16x1xf32>
      %cst_21 = arith.constant 3.200000e+01 : f32
      %28 = vector.broadcast %cst_21 : f32 to vector<16x1xf32>
      %29 = arith.divf %27, %28 : vector<16x1xf32>
      %30 = vector.broadcast %29 : vector<16x1xf32> to vector<16x32xf32>
      %31 = arith.subf %25, %30 : vector<16x32xf32>
      %32 = arith.mulf %31, %31 : vector<16x32xf32>
      %cst_22 = arith.constant dense<0.000000e+00> : vector<16xf32>
      %33 = vector.multi_reduction <add>, %32, %cst_22 [1] : vector<16x32xf32> to vector<16xf32>
      %34 = vector.shape_cast %33 : vector<16xf32> to vector<16x1xf32>
      %cst_23 = arith.constant 3.200000e+01 : f32
      %35 = vector.broadcast %cst_23 : f32 to vector<16x1xf32>
      %36 = arith.divf %34, %35 : vector<16x1xf32>
      %37 = vector.broadcast %29 : vector<16x1xf32> to vector<16x32xf32>
      %38 = arith.subf %25, %37 : vector<16x32xf32>
      %cst_24 = arith.constant 9.99999974E-6 : f32
      %39 = vector.broadcast %cst_24 : f32 to vector<16x1xf32>
      %40 = arith.addf %36, %39 : vector<16x1xf32>
      %41 = math.rsqrt %40 : vector<16x1xf32>
      %42 = vector.broadcast %41 : vector<16x1xf32> to vector<16x32xf32>
      %43 = arith.mulf %38, %42 : vector<16x32xf32>
      %c0_25 = arith.constant 0 : index
      %c0_26 = arith.constant 0 : index
      %44 = vector.load %arg7[%c0_25, %c0_26] : memref<1x32xf32, #tpu.memory_space<vmem>>, vector<1x32xf32>
      %45 = vector.broadcast %44 : vector<1x32xf32> to vector<16x32xf32>
      %46 = arith.mulf %43, %45 : vector<16x32xf32>
      %c0_27 = arith.constant 0 : index
      %c0_28 = arith.constant 0 : index
      %47 = vector.load %arg8[%c0_27, %c0_28] : memref<1x32xf32, #tpu.memory_space<vmem>>, vector<1x32xf32>
      %48 = vector.broadcast %47 : vector<1x32xf32> to vector<16x32xf32>
      %49 = arith.addf %46, %48 : vector<16x32xf32>
      %c0_29 = arith.constant 0 : index
      %c0_30 = arith.constant 0 : index
      %50 = vector.load %arg9[%c0_29, %c0_30] : memref<16x32xf32, #tpu.memory_space<vmem>>, vector<16x32xf32>
      tpu.vector_store %arg9[%c0_29, %c0_30], %49 {strides = array<i32>} : memref<16x32xf32, #tpu.memory_space<vmem>>, vector<16x32xf32>,
    } else {
    }
    return
  }
  func.func @transform_0(%arg0: i32, %arg1: i32) -> (i32, i32) {
    %c0_i32 = arith.constant 0 : i32
    %c0_i32_0 = arith.constant 0 : i32
    return %arg0, %c0_i32 : i32, i32
  }
  func.func @transform_1(%arg0: i32, %arg1: i32) -> (i32, i32) {
    %c0_i32 = arith.constant 0 : i32
    %c0_i32_0 = arith.constant 0 : i32
    return %c0_i32, %arg1 : i32, i32
  }
  func.func @transform_2(%arg0: i32, %arg1: i32) -> (i32, i32) {
    %c0_i32 = arith.constant 0 : i32
    %c0_i32_0 = arith.constant 0 : i32
    return %c0_i32, %arg1 : i32, i32
  }
  func.func @transform_3(%arg0: i32, %arg1: i32) -> (i32, i32) {
    %c0_i32 = arith.constant 0 : i32
    %c0_i32_0 = arith.constant 0 : i32
    return %arg1, %c0_i32 : i32, i32
  }
  func.func @transform_4(%arg0: i32, %arg1: i32) -> (i32, i32) {
    %c0_i32 = arith.constant 0 : i32
    %c0_i32_0 = arith.constant 0 : i32
    %c0_i32_1 = arith.constant 0 : i32
    return %c0_i32, %c0_i32_0 : i32, i32
  }
  func.func @transform_5(%arg0: i32, %arg1: i32) -> (i32, i32) {
    %c0_i32 = arith.constant 0 : i32
    %c0_i32_0 = arith.constant 0 : i32
    %c0_i32_1 = arith.constant 0 : i32
    return %c0_i32, %c0_i32_0 : i32, i32
  }
  func.func @transform_6(%arg0: i32, %arg1: i32) -> (i32, i32) {
    %c0_i32 = arith.constant 0 : i32
    %c0_i32_0 = arith.constant 0 : i32
    %c0_i32_1 = arith.constant 0 : i32
    return %c0_i32, %c0_i32_0 : i32, i32
  }
  func.func @transform_7(%arg0: i32, %arg1: i32) -> (i32, i32) {
    %c0_i32 = arith.constant 0 : i32
    %c0_i32_0 = arith.constant 0 : i32
    return %arg0, %c0_i32 : i32, i32
  }
}

module attributes {stable_mosaic.version = 11 : i64} {
  func.func @_ffn_ln_kernel(%arg0: i32, %arg1: i32, %arg2: memref<16x32xf32, #tpu.memory_space<vmem>>, %arg3: memref<32x2048xbf16, #tpu.memory_space<vmem>>, %arg4: memref<1x2048xf32, #tpu.memory_space<vmem>>, %arg5: memref<2048x32xbf16, #tpu.memory_space<vmem>>, %arg6: memref<1x32xf32, #tpu.memory_space<vmem>>, %arg7: memref<1x32xf32, #tpu.memory_space<vmem>>, %arg8: memref<1x32xf32, #tpu.memory_space<vmem>>, %arg9: memref<16x32xbf16, #tpu.memory_space<vmem>>, %arg10: memref<16x32xf32, #tpu.memory_space<vmem>>) attributes {dimension_semantics = [#tpu.dimension_semantics<parallel>, #tpu.dimension_semantics<arbitrary>], iteration_bounds = array<i64: 1, 1>, scalar_prefetch = 0 : i64, scratch_operands = 1 : i64, tpu.core_type = #tpu.core_type<tc>, window_params = [{transform_indices = @transform_0, window_bounds = array<i64: 16, 32>}, {transform_indices = @transform_1, window_bounds = array<i64: 32, 2048>}, {transform_indices = @transform_2, window_bounds = array<i64: 1, 2048>}, {transform_indices = @transform_3, window_bounds = array<i64: 2048, 32>}, {pipeline_mode = #tpu.pipeline_mode<synchronous>, transform_indices = @transform_4, window_bounds = array<i64: 1, 32>}, {pipeline_mode = #tpu.pipeline_mode<synchronous>, transform_indices = @transform_5, window_bounds = array<i64: 1, 32>}, {pipeline_mode = #tpu.pipeline_mode<synchronous>, transform_indices = @transform_6, window_bounds = array<i64: 1, 32>}, {transform_indices = @transform_7, window_bounds = array<i64: 16, 32>}]} {
    %c0_i32 = arith.constant 0 : i32
    %0 = arith.cmpi eq, %arg1, %c0_i32 : i32
    %1 = arith.extui %0 : i1 to i32
    %c0_i32_0 = arith.constant 0 : i32
    %2 = arith.cmpi ne, %1, %c0_i32_0 : i32
    scf.if %2 {
      %cst_16 = arith.constant 0.000000e+00 : f32
      %21 = vector.broadcast %cst_16 : f32 to vector<16x32xf32>
      %c0_17 = arith.constant 0 : index
      %c0_18 = arith.constant 0 : index
      %22 = vector.load %arg10[%c0_17, %c0_18] : memref<16x32xf32, #tpu.memory_space<vmem>>, vector<16x32xf32>
      tpu.vector_store %arg10[%c0_17, %c0_18], %21 {strides = array<i32>} : memref<16x32xf32, #tpu.memory_space<vmem>>, vector<16x32xf32>,
    } else {
    }
    %c0 = arith.constant 0 : index
    %c0_1 = arith.constant 0 : index
    %3 = vector.load %arg2[%c0, %c0_1] : memref<16x32xf32, #tpu.memory_space<vmem>>, vector<16x32xf32>
    %4 = arith.truncf %3 : vector<16x32xf32> to vector<16x32xbf16>
    %c0_2 = arith.constant 0 : index
    %c0_3 = arith.constant 0 : index
    %5 = vector.load %arg3[%c0_2, %c0_3] : memref<32x2048xbf16, #tpu.memory_space<vmem>>, vector<32x2048xbf16>
    %cst = arith.constant dense<0.000000e+00> : vector<16x2048xf32>
    %6 = tpu.matmul %4, %5, %cst {dimension_numbers = #tpu.dot_dimension_numbers<[1], [0], [0], [1], [0, 0, 1, 1], [], []>} : vector<16x32xbf16>, vector<32x2048xbf16>, vector<16x2048xf32> -> vector<16x2048xf32>
    %c0_4 = arith.constant 0 : index
    %c0_5 = arith.constant 0 : index
    %7 = vector.load %arg4[%c0_4, %c0_5] : memref<1x2048xf32, #tpu.memory_space<vmem>>, vector<1x2048xf32>
    %8 = vector.broadcast %7 : vector<1x2048xf32> to vector<16x2048xf32>
    %9 = arith.addf %6, %8 : vector<16x2048xf32>
    %cst_6 = arith.constant 0.000000e+00 : f32
    %10 = vector.broadcast %cst_6 : f32 to vector<16x2048xf32>
    %11 = arith.maximumf %9, %10 : vector<16x2048xf32>
    %c0_7 = arith.constant 0 : index
    %c0_8 = arith.constant 0 : index
    %12 = vector.load %arg10[%c0_7, %c0_8] : memref<16x32xf32, #tpu.memory_space<vmem>>, vector<16x32xf32>
    %13 = arith.truncf %11 : vector<16x2048xf32> to vector<16x2048xbf16>
    %c0_9 = arith.constant 0 : index
    %c0_10 = arith.constant 0 : index
    %14 = vector.load %arg5[%c0_9, %c0_10] : memref<2048x32xbf16, #tpu.memory_space<vmem>>, vector<2048x32xbf16>
    %cst_11 = arith.constant dense<0.000000e+00> : vector<16x32xf32>
    %15 = tpu.matmul %13, %14, %cst_11 {dimension_numbers = #tpu.dot_dimension_numbers<[1], [0], [0], [1], [0, 0, 1, 1], [], []>} : vector<16x2048xbf16>, vector<2048x32xbf16>, vector<16x32xf32> -> vector<16x32xf32>
    %16 = arith.addf %12, %15 : vector<16x32xf32>
    %c0_12 = arith.constant 0 : index
    %c0_13 = arith.constant 0 : index
    %17 = vector.load %arg10[%c0_12, %c0_13] : memref<16x32xf32, #tpu.memory_space<vmem>>, vector<16x32xf32>
    tpu.vector_store %arg10[%c0_12, %c0_13], %16 {strides = array<i32>} : memref<16x32xf32, #tpu.memory_space<vmem>>, vector<16x32xf32>,
    %c0_i32_14 = arith.constant 0 : i32
    %18 = arith.cmpi eq, %arg1, %c0_i32_14 : i32
    %19 = arith.extui %18 : i1 to i32
    %c0_i32_15 = arith.constant 0 : i32
    %20 = arith.cmpi ne, %19, %c0_i32_15 : i32
    scf.if %20 {
      %c0_16 = arith.constant 0 : index
      %c0_17 = arith.constant 0 : index
      %21 = vector.load %arg10[%c0_16, %c0_17] : memref<16x32xf32, #tpu.memory_space<vmem>>, vector<16x32xf32>
      %22 = arith.addf %3, %21 : vector<16x32xf32>
      %c0_18 = arith.constant 0 : index
      %c0_19 = arith.constant 0 : index
      %23 = vector.load %arg6[%c0_18, %c0_19] : memref<1x32xf32, #tpu.memory_space<vmem>>, vector<1x32xf32>
      %24 = vector.broadcast %23 : vector<1x32xf32> to vector<16x32xf32>
      %25 = arith.addf %22, %24 : vector<16x32xf32>
      %cst_20 = arith.constant dense<0.000000e+00> : vector<16xf32>
      %26 = vector.multi_reduction <add>, %25, %cst_20 [1] : vector<16x32xf32> to vector<16xf32>
      %27 = vector.shape_cast %26 : vector<16xf32> to vector<16x1xf32>
      %cst_21 = arith.constant 3.200000e+01 : f32
      %28 = vector.broadcast %cst_21 : f32 to vector<16x1xf32>
      %29 = arith.divf %27, %28 : vector<16x1xf32>
      %30 = vector.broadcast %29 : vector<16x1xf32> to vector<16x32xf32>
      %31 = arith.subf %25, %30 : vector<16x32xf32>
      %32 = arith.mulf %31, %31 : vector<16x32xf32>
      %cst_22 = arith.constant dense<0.000000e+00> : vector<16xf32>
      %33 = vector.multi_reduction <add>, %32, %cst_22 [1] : vector<16x32xf32> to vector<16xf32>
      %34 = vector.shape_cast %33 : vector<16xf32> to vector<16x1xf32>
      %cst_23 = arith.constant 3.200000e+01 : f32
      %35 = vector.broadcast %cst_23 : f32 to vector<16x1xf32>
      %36 = arith.divf %34, %35 : vector<16x1xf32>
      %37 = vector.broadcast %29 : vector<16x1xf32> to vector<16x32xf32>
      %38 = arith.subf %25, %37 : vector<16x32xf32>
      %cst_24 = arith.constant 9.99999974E-6 : f32
      %39 = vector.broadcast %cst_24 : f32 to vector<16x1xf32>
      %40 = arith.addf %36, %39 : vector<16x1xf32>
      %41 = math.rsqrt %40 : vector<16x1xf32>
      %42 = vector.broadcast %41 : vector<16x1xf32> to vector<16x32xf32>
      %43 = arith.mulf %38, %42 : vector<16x32xf32>
      %c0_25 = arith.constant 0 : index
      %c0_26 = arith.constant 0 : index
      %44 = vector.load %arg7[%c0_25, %c0_26] : memref<1x32xf32, #tpu.memory_space<vmem>>, vector<1x32xf32>
      %45 = vector.broadcast %44 : vector<1x32xf32> to vector<16x32xf32>
      %46 = arith.mulf %43, %45 : vector<16x32xf32>
      %c0_27 = arith.constant 0 : index
      %c0_28 = arith.constant 0 : index
      %47 = vector.load %arg8[%c0_27, %c0_28] : memref<1x32xf32, #tpu.memory_space<vmem>>, vector<1x32xf32>
      %48 = vector.broadcast %47 : vector<1x32xf32> to vector<16x32xf32>
      %49 = arith.addf %46, %48 : vector<16x32xf32>
      %50 = arith.truncf %49 : vector<16x32xf32> to vector<16x32xbf16>
      %c0_29 = arith.constant 0 : index
      %c0_30 = arith.constant 0 : index
      %51 = vector.load %arg9[%c0_29, %c0_30] : memref<16x32xbf16, #tpu.memory_space<vmem>>, vector<16x32xbf16>
      tpu.vector_store %arg9[%c0_29, %c0_30], %50 {strides = array<i32>} : memref<16x32xbf16, #tpu.memory_space<vmem>>, vector<16x32xbf16>,
    } else {
    }
    return
  }
  func.func @transform_0(%arg0: i32, %arg1: i32) -> (i32, i32) {
    %c0_i32 = arith.constant 0 : i32
    %c0_i32_0 = arith.constant 0 : i32
    return %arg0, %c0_i32 : i32, i32
  }
  func.func @transform_1(%arg0: i32, %arg1: i32) -> (i32, i32) {
    %c0_i32 = arith.constant 0 : i32
    %c0_i32_0 = arith.constant 0 : i32
    return %c0_i32, %arg1 : i32, i32
  }
  func.func @transform_2(%arg0: i32, %arg1: i32) -> (i32, i32) {
    %c0_i32 = arith.constant 0 : i32
    %c0_i32_0 = arith.constant 0 : i32
    return %c0_i32, %arg1 : i32, i32
  }
  func.func @transform_3(%arg0: i32, %arg1: i32) -> (i32, i32) {
    %c0_i32 = arith.constant 0 : i32
    %c0_i32_0 = arith.constant 0 : i32
    return %arg1, %c0_i32 : i32, i32
  }
  func.func @transform_4(%arg0: i32, %arg1: i32) -> (i32, i32) {
    %c0_i32 = arith.constant 0 : i32
    %c0_i32_0 = arith.constant 0 : i32
    %c0_i32_1 = arith.constant 0 : i32
    return %c0_i32, %c0_i32_0 : i32, i32
  }
  func.func @transform_5(%arg0: i32, %arg1: i32) -> (i32, i32) {
    %c0_i32 = arith.constant 0 : i32
    %c0_i32_0 = arith.constant 0 : i32
    %c0_i32_1 = arith.constant 0 : i32
    return %c0_i32, %c0_i32_0 : i32, i32
  }
  func.func @transform_6(%arg0: i32, %arg1: i32) -> (i32, i32) {
    %c0_i32 = arith.constant 0 : i32
    %c0_i32_0 = arith.constant 0 : i32
    %c0_i32_1 = arith.constant 0 : i32
    return %c0_i32, %c0_i32_0 : i32, i32
  }
  func.func @transform_7(%arg0: i32, %arg1: i32) -> (i32, i32) {
    %c0_i32 = arith.constant 0 : i32
    %c0_i32_0 = arith.constant 0 : i32
    return %arg0, %c0_i32 : i32, i32
  }
}

module attributes {stable_mosaic.version = 11 : i64} {
  func.func @_head_kernel(%arg0: i32, %arg1: i32, %arg2: memref<8x2x32xbf16, #tpu.memory_space<vmem>>, %arg3: memref<32x16xbf16, #tpu.memory_space<vmem>>, %arg4: memref<1x16xf32, #tpu.memory_space<vmem>>, %arg5: memref<16x2xbf16, #tpu.memory_space<vmem>>, %arg6: memref<1x2xf32, #tpu.memory_space<vmem>>, %arg7: memref<2x2xf32, #tpu.memory_space<vmem>>, %arg8: memref<2x32xf32, #tpu.memory_space<vmem>>) attributes {dimension_semantics = [#tpu.dimension_semantics<parallel>, #tpu.dimension_semantics<arbitrary>], iteration_bounds = array<i64: 1, 1>, scalar_prefetch = 0 : i64, scratch_operands = 1 : i64, tpu.core_type = #tpu.core_type<tc>, window_params = [{transform_indices = @transform_0, window_bounds = array<i64: 8, 2, 32>}, {pipeline_mode = #tpu.pipeline_mode<synchronous>, transform_indices = @transform_1, window_bounds = array<i64: 32, 16>}, {pipeline_mode = #tpu.pipeline_mode<synchronous>, transform_indices = @transform_2, window_bounds = array<i64: 1, 16>}, {pipeline_mode = #tpu.pipeline_mode<synchronous>, transform_indices = @transform_3, window_bounds = array<i64: 16, 2>}, {pipeline_mode = #tpu.pipeline_mode<synchronous>, transform_indices = @transform_4, window_bounds = array<i64: 1, 2>}, {transform_indices = @transform_5, window_bounds = array<i64: 2, 2>}]} {
    %c0_i32 = arith.constant 0 : i32
    %0 = arith.cmpi eq, %arg1, %c0_i32 : i32
    %1 = arith.extui %0 : i1 to i32
    %c0_i32_0 = arith.constant 0 : i32
    %2 = arith.cmpi ne, %1, %c0_i32_0 : i32
    scf.if %2 {
      %cst_9 = arith.constant 0.000000e+00 : f32
      %12 = vector.broadcast %cst_9 : f32 to vector<2x32xf32>
      %c0_10 = arith.constant 0 : index
      %c0_11 = arith.constant 0 : index
      %13 = vector.load %arg8[%c0_10, %c0_11] : memref<2x32xf32, #tpu.memory_space<vmem>>, vector<2x32xf32>
      tpu.vector_store %arg8[%c0_10, %c0_11], %12 {strides = array<i32>} : memref<2x32xf32, #tpu.memory_space<vmem>>, vector<2x32xf32>,
    } else {
    }
    %c0 = arith.constant 0 : index
    %c0_1 = arith.constant 0 : index
    %3 = vector.load %arg8[%c0, %c0_1] : memref<2x32xf32, #tpu.memory_space<vmem>>, vector<2x32xf32>
    %c0_2 = arith.constant 0 : index
    %c0_3 = arith.constant 0 : index
    %c0_4 = arith.constant 0 : index
    %4 = vector.load %arg2[%c0_2, %c0_3, %c0_4] : memref<8x2x32xbf16, #tpu.memory_space<vmem>>, vector<8x2x32xbf16>
    %5 = arith.extf %4 : vector<8x2x32xbf16> to vector<8x2x32xf32>
    %cst = arith.constant dense<0.000000e+00> : vector<2x32xf32>
    %6 = vector.multi_reduction <add>, %5, %cst [0] : vector<8x2x32xf32> to vector<2x32xf32>
    %7 = arith.addf %3, %6 : vector<2x32xf32>
    %c0_5 = arith.constant 0 : index
    %c0_6 = arith.constant 0 : index
    %8 = vector.load %arg8[%c0_5, %c0_6] : memref<2x32xf32, #tpu.memory_space<vmem>>, vector<2x32xf32>
    tpu.vector_store %arg8[%c0_5, %c0_6], %7 {strides = array<i32>} : memref<2x32xf32, #tpu.memory_space<vmem>>, vector<2x32xf32>,
    %c0_i32_7 = arith.constant 0 : i32
    %9 = arith.cmpi eq, %arg1, %c0_i32_7 : i32
    %10 = arith.extui %9 : i1 to i32
    %c0_i32_8 = arith.constant 0 : i32
    %11 = arith.cmpi ne, %10, %c0_i32_8 : i32
    scf.if %11 {
      %c0_9 = arith.constant 0 : index
      %c0_10 = arith.constant 0 : index
      %12 = vector.load %arg8[%c0_9, %c0_10] : memref<2x32xf32, #tpu.memory_space<vmem>>, vector<2x32xf32>
      %cst_11 = arith.constant 1.250000e-01 : f32
      %13 = vector.broadcast %cst_11 : f32 to vector<2x32xf32>
      %14 = arith.mulf %12, %13 : vector<2x32xf32>
      %15 = arith.truncf %14 : vector<2x32xf32> to vector<2x32xbf16>
      %c0_12 = arith.constant 0 : index
      %c0_13 = arith.constant 0 : index
      %16 = vector.load %arg3[%c0_12, %c0_13] : memref<32x16xbf16, #tpu.memory_space<vmem>>, vector<32x16xbf16>
      %cst_14 = arith.constant dense<0.000000e+00> : vector<2x16xf32>
      %17 = tpu.matmul %15, %16, %cst_14 {dimension_numbers = #tpu.dot_dimension_numbers<[1], [0], [0], [1], [0, 0, 1, 1], [], []>} : vector<2x32xbf16>, vector<32x16xbf16>, vector<2x16xf32> -> vector<2x16xf32>
      %c0_15 = arith.constant 0 : index
      %c0_16 = arith.constant 0 : index
      %18 = vector.load %arg4[%c0_15, %c0_16] : memref<1x16xf32, #tpu.memory_space<vmem>>, vector<1x16xf32>
      %19 = vector.broadcast %18 : vector<1x16xf32> to vector<2x16xf32>
      %20 = arith.addf %17, %19 : vector<2x16xf32>
      %21 = arith.truncf %20 : vector<2x16xf32> to vector<2x16xbf16>
      %c0_17 = arith.constant 0 : index
      %c0_18 = arith.constant 0 : index
      %22 = vector.load %arg5[%c0_17, %c0_18] : memref<16x2xbf16, #tpu.memory_space<vmem>>, vector<16x2xbf16>
      %cst_19 = arith.constant dense<0.000000e+00> : vector<2x2xf32>
      %23 = tpu.matmul %21, %22, %cst_19 {dimension_numbers = #tpu.dot_dimension_numbers<[1], [0], [0], [1], [0, 0, 1, 1], [], []>} : vector<2x16xbf16>, vector<16x2xbf16>, vector<2x2xf32> -> vector<2x2xf32>
      %c0_20 = arith.constant 0 : index
      %c0_21 = arith.constant 0 : index
      %24 = vector.load %arg6[%c0_20, %c0_21] : memref<1x2xf32, #tpu.memory_space<vmem>>, vector<1x2xf32>
      %25 = vector.broadcast %24 : vector<1x2xf32> to vector<2x2xf32>
      %26 = arith.addf %23, %25 : vector<2x2xf32>
      %c0_22 = arith.constant 0 : index
      %c0_23 = arith.constant 0 : index
      %27 = vector.load %arg7[%c0_22, %c0_23] : memref<2x2xf32, #tpu.memory_space<vmem>>, vector<2x2xf32>
      tpu.vector_store %arg7[%c0_22, %c0_23], %26 {strides = array<i32>} : memref<2x2xf32, #tpu.memory_space<vmem>>, vector<2x2xf32>,
    } else {
    }
    return
  }
  func.func @transform_0(%arg0: i32, %arg1: i32) -> (i32, i32, i32) {
    %c0_i32 = arith.constant 0 : i32
    %c0_i32_0 = arith.constant 0 : i32
    return %arg1, %arg0, %c0_i32 : i32, i32, i32
  }
  func.func @transform_1(%arg0: i32, %arg1: i32) -> (i32, i32) {
    %c0_i32 = arith.constant 0 : i32
    %c0_i32_0 = arith.constant 0 : i32
    %c0_i32_1 = arith.constant 0 : i32
    return %c0_i32, %c0_i32_0 : i32, i32
  }
  func.func @transform_2(%arg0: i32, %arg1: i32) -> (i32, i32) {
    %c0_i32 = arith.constant 0 : i32
    %c0_i32_0 = arith.constant 0 : i32
    %c0_i32_1 = arith.constant 0 : i32
    return %c0_i32, %c0_i32_0 : i32, i32
  }
  func.func @transform_3(%arg0: i32, %arg1: i32) -> (i32, i32) {
    %c0_i32 = arith.constant 0 : i32
    %c0_i32_0 = arith.constant 0 : i32
    %c0_i32_1 = arith.constant 0 : i32
    return %c0_i32, %c0_i32_0 : i32, i32
  }
  func.func @transform_4(%arg0: i32, %arg1: i32) -> (i32, i32) {
    %c0_i32 = arith.constant 0 : i32
    %c0_i32_0 = arith.constant 0 : i32
    %c0_i32_1 = arith.constant 0 : i32
    return %c0_i32, %c0_i32_0 : i32, i32
  }
  func.func @transform_5(%arg0: i32, %arg1: i32) -> (i32, i32) {
    %c0_i32 = arith.constant 0 : i32
    %c0_i32_0 = arith.constant 0 : i32
    return %arg0, %c0_i32 : i32, i32
  }
}

</mosaic_0001>

<llo_original>
// kernel: _lambda_.11
$region0: #{_lambda_.11}
  #allocation0 [shape = 'u32[]', space=smem, size = 0x4, offset = 0x4, fixed_abs, tag = 'smem constant byte address 0x4 - core index']
  #allocation1 [shape = 'u32[72,128]{1,0:T(1,128)}', space=vmem, size = 0x9000, scoped, tag = 'internal scratch']
  %s0 = inlined_call_operand.vmem [shape: f32[16,32], index: 0, kind: input, shape index: {}]
  %s1 = inlined_call_operand.vmem [shape: bf16[32,96], index: 1, kind: input, shape index: {}]
  %s2 = inlined_call_operand.vmem [shape: f32[1,96], index: 2, kind: input, shape index: {}]
  %s3 = inlined_call_operand.vmem [shape: bf16[16,96], index: 3, kind: output, shape index: {}]
  %s4 = sld [smem:[#allocation0]]
  $region22: #{_lambda_.11} parent=0
    _
  %s6 = ssub.s32 1, %s4
  %s7 = scalar_select 0, %s6, %s4
  // Predicated region
  $region2: #{_lambda_.11} parent=0 // pred_check
    _
  $region3: #{_lambda_.11} parent=0 // pred_check_branch
    %9 = sbr.rel (0) target = $region5
  $region4: #{_lambda_.11} parent=0 // pred_region
    _
  $region5: #{_lambda_.11} parent=0 // pred_fallthru
    _
  // Predicated region
  $region6: #{_lambda_.11} parent=0 // pred_check
    _
  $region7: #{_lambda_.11} parent=0 // pred_check_branch
    %11 = sbr.rel (0) target = $region9
  $region8: #{_lambda_.11} parent=0 // pred_region
    _
  $region9: #{_lambda_.11} parent=0 // pred_fallthru
    _
  // Predicated region
  $region10: #{_lambda_.11} parent=0 // pred_check
    _
  $region11: #{_lambda_.11} parent=0 // pred_check_branch
    %13 = sbr.rel (0) target = $region13
  $region12: #{_lambda_.11} parent=0 // pred_region
    _
  $region13: #{_lambda_.11} parent=0 // pred_fallthru
    _
  %v15 = vld [vmem:[%s0] sm:$0xff]
  %v16 = vld [vmem:[%s0 + $0x8] sm:$0xff]
  %v17 = vpack.c.bf16 %v16, %v15
  %v18 = vld [vmem:[%s1] sm:$0xf]
  %v19 = vld [vmem:[%s1 + $0x4] sm:$0xf]
  %v20 = vld [vmem:[%s1 + $0x8] sm:$0xf]
  %v21 = vld [vmem:[%s1 + $0xc] sm:$0xf]
  %v22 = vld [vmem:[%s2] sm:$0x1]
  %v24 = vperm.slane %v22, 0
  %v30 = vunpack.c.l.b16 %v18
  %v31 = vunpack.c.l.b16 %v19
  %v32 = vunpack.c.l.b16 %v20
  %v33 = vunpack.c.l.b16 %v21
  %v34 = vpack.c.b16 %v31, %v30
  %v35 = vpack.c.b16 %v33, %v32
  %vm38 = vcmask 261120
  %v40 = vsel %vm38, %v17, 0
  %42 = vmatpush.bf16.msra.mxu0 0
  %43 = vmatpush.bf16.msra.mxu0 0
  %44 = vmatpush.bf16.msra.mxu0 0
  %45 = vmatpush.bf16.msra.mxu0 0
  %46 = vmatpush.bf16.msra.mxu0 0
  %47 = vmatpush.bf16.msra.mxu0 0
  %48 = vmatpush.bf16.msra.mxu0 %v35
  %49 = vmatpush.bf16.msra.mxu0 %v34
  %50 = vmatmul.bf16.gmra.mxu0 %v40
  %v51 = vpop.f32.mrf.mxu0
  %v52 = vadd.f32 %v24, %v51
  %v53 = vpop.f32.mrf.mxu0
  %v54 = vadd.f32 %v24, %v53
  %55 = vdwg.mxu0
  %v56 = vpack.c.bf16 %v52, %v52
  %v57 = vpack.c.bf16 %v54, %v54
  %vm58 = vcmask 781312
  %59 = vst.msk [vmem:[%s3] sm:$0xf] %vm58, %v56
  %60 = vst.msk [vmem:[%s3 + $0x4] sm:$0xf] %vm58, %v57
  // Predicated region
  $region14: #{_lambda_.11} parent=0 // pred_check
    _
  $region15: #{_lambda_.11} parent=0 // pred_check_branch
    %62 = sbr.rel (0) target = $region17
  $region16: #{_lambda_.11} parent=0 // pred_region
    _
  $region17: #{_lambda_.11} parent=0 // pred_fallthru
    _
  // Predicated region
  $region18: #{_lambda_.11} parent=0 // pred_check
    _
  $region19: #{_lambda_.11} parent=0 // pred_check_branch
    %64 = sbr.rel (0) target = $region21
  $region20: #{_lambda_.11} parent=0 // pred_region
    _
  $region21: #{_lambda_.11} parent=0 // pred_fallthru
    _

// kernel: _lambda_.13
$region0: #{_lambda_.13}
  #allocation0 [shape = 'u32[]', space=smem, size = 0x4, offset = 0x4, fixed_abs, tag = 'smem constant byte address 0x4 - core index']
  #allocation1 [shape = 'u32[72,128]{1,0:T(1,128)}', space=vmem, size = 0x9000, scoped, tag = 'internal scratch']
  %s0 = inlined_call_operand.vmem [shape: bf16[16,32], index: 0, kind: input, shape index: {}]
  %s1 = inlined_call_operand.vmem [shape: f32[16,32], index: 1, kind: input, shape index: {}]
  %s2 = inlined_call_operand.vmem [shape: bf16[32,32], index: 2, kind: input, shape index: {}]
  %s3 = inlined_call_operand.vmem [shape: f32[1,32], index: 3, kind: input, shape index: {}]
  %s4 = inlined_call_operand.vmem [shape: f32[1,32], index: 4, kind: input, shape index: {}]
  %s5 = inlined_call_operand.vmem [shape: f32[1,32], index: 5, kind: input, shape index: {}]
  %s6 = inlined_call_operand.vmem [shape: f32[16,32], index: 6, kind: output, shape index: {}]
  %s7 = sld [smem:[#allocation0]]
  $region34: #{_lambda_.13} parent=0
    _
  %s9 = ssub.s32 1, %s7
  %s10 = scalar_select 0, %s9, %s7
  // Predicated region
  $region2: #{_lambda_.13} parent=0 // pred_check
    _
  $region3: #{_lambda_.13} parent=0 // pred_check_branch
    %12 = sbr.rel (0) target = $region5
  $region4: #{_lambda_.13} parent=0 // pred_region
    _
  $region5: #{_lambda_.13} parent=0 // pred_fallthru
    _
  // Predicated region
  $region6: #{_lambda_.13} parent=0 // pred_check
    _
  $region7: #{_lambda_.13} parent=0 // pred_check_branch
    %14 = sbr.rel (0) target = $region9
  $region8: #{_lambda_.13} parent=0 // pred_region
    _
  $region9: #{_lambda_.13} parent=0 // pred_fallthru
    _
  // Predicated region
  $region10: #{_lambda_.13} parent=0 // pred_check
    _
  $region11: #{_lambda_.13} parent=0 // pred_check_branch
    %16 = sbr.rel (0) target = $region13
  $region12: #{_lambda_.13} parent=0 // pred_region
    _
  $region13: #{_lambda_.13} parent=0 // pred_fallthru
    _
  // Predicated region
  $region14: #{_lambda_.13} parent=0 // pred_check
    _
  $region15: #{_lambda_.13} parent=0 // pred_check_branch
    %18 = sbr.rel (0) target = $region17
  $region16: #{_lambda_.13} parent=0 // pred_region
    _
  $region17: #{_lambda_.13} parent=0 // pred_fallthru
    _
  // Predicated region
  $region18: #{_lambda_.13} parent=0 // pred_check
    _
  $region19: #{_lambda_.13} parent=0 // pred_check_branch
    %20 = sbr.rel (0) target = $region21
  $region20: #{_lambda_.13} parent=0 // pred_region
    _
  $region21: #{_lambda_.13} parent=0 // pred_fallthru
    _
  // Predicated region
  $region22: #{_lambda_.13} parent=0 // pred_check
    _
  $region23: #{_lambda_.13} parent=0 // pred_check_branch
    %22 = sbr.rel (0) target = $region25
  $region24: #{_lambda_.13} parent=0 // pred_region
    _
  $region25: #{_lambda_.13} parent=0 // pred_fallthru
    _
  %v24 = vld [vmem:[%s0] sm:$0xf]
  %v25 = vld [vmem:[%s0 + $0x4] sm:$0xf]
  %v26 = vld [vmem:[%s2] sm:$0xf]
  %v27 = vld [vmem:[%s2 + $0x4] sm:$0xf]
  %v28 = vld [vmem:[%s2 + $0x8] sm:$0xf]
  %v29 = vld [vmem:[%s2 + $0xc] sm:$0xf]
  %v30 = vld [vmem:[%s3] sm:$0x1]
  %v32 = vperm.slane %v30, 0
  %v36 = vunpack.c.l.b16 %v24
  %v37 = vunpack.c.l.b16 %v25
  %v38 = vpack.c.b16 %v37, %v36
  %v43 = vunpack.c.l.b16 %v26
  %v44 = vunpack.c.l.b16 %v27
  %v45 = vunpack.c.l.b16 %v28
  %v46 = vunpack.c.l.b16 %v29
  %v47 = vpack.c.b16 %v44, %v43
  %v48 = vpack.c.b16 %v46, %v45
  %vm51 = vcmask 261120
  %v53 = vsel %vm51, %v38, 0
  %55 = vmatpush.bf16.msra.mxu0 0
  %56 = vmatpush.bf16.msra.mxu0 0
  %57 = vmatpush.bf16.msra.mxu0 0
  %58 = vmatpush.bf16.msra.mxu0 0
  %59 = vmatpush.bf16.msra.mxu0 0
  %60 = vmatpush.bf16.msra.mxu0 0
  %61 = vmatpush.bf16.msra.mxu0 %v48
  %62 = vmatpush.bf16.msra.mxu0 %v47
  %63 = vmatmul.bf16.gmra.mxu0 %v53
  %v64 = vpop.f32.mrf.mxu0
  %v65 = vadd.f32 %v32, %v64
  %v66 = vpop.f32.mrf.mxu0
  %v67 = vadd.f32 %v32, %v66
  %68 = vdwg.mxu0
  %v69 = vld [vmem:[%s1] sm:$0xff]
  %v70 = vld [vmem:[%s1 + $0x8] sm:$0xff]
  %v71 = vadd.f32 %v69, %v65
  %v72 = vadd.f32 %v70, %v67
  %v73 = vsel %vm51, %v71, 0.0
  %74 = vadd.xlane.f32.xlu0 %v73
  %v75 = vpop.xlane.xlu0 %74
  %v76 = vsel %vm51, %v72, 0.0
  %77 = vadd.xlane.f32.xlu0 %v76
  %v78 = vpop.xlane.xlu0 %77
  %v79 = vrcp.pop 32.0
  %v80 = vmul.f32 32.0, %v79
  %v81 = vsub.f32 1.0, %v80
  %v82 = vmul.f32 %v79, %v81
  %v83 = vadd.f32 %v79, %v82
  %vm84 = vweird.f32 %v79
  %v85 = vsel %vm84, %v79, %v83
  %v86 = vmul.f32 %v75, %v85
  %v87 = vmul.f32 %v78, %v85
  %v88 = vsub.f32 %v71, %v86
  %v89 = vsub.f32 %v72, %v87
  %v90 = vmul.f32 %v88, %v88
  %v91 = vmul.f32 %v89, %v89
  %v92 = vsel %vm51, %v90, 0.0
  %93 = vadd.xlane.f32.xlu0 %v92
  %v94 = vpop.xlane.xlu0 %93
  %v95 = vsel %vm51, %v91, 0.0
  %96 = vadd.xlane.f32.xlu0 %v95
  %v97 = vpop.xlane.xlu0 %96
  %v98 = vmul.f32 %v94, %v85
  %v99 = vmul.f32 %v97, %v85
  %v100 = vadd.f32 %v98, 1e-05
  %v101 = vadd.f32 %v99, 1e-05
  %v102 = vrsqrt.pop %v100
  %v103 = vmul.f32 %v102, %v100
  %v104 = vmul.f32 %v103, %v102
  %v105 = vmul.f32 0.5, %v104
  %v106 = vsub.f32 1.5, %v105
  %v107 = vmul.f32 %v102, %v106
  %vm108 = vweird.f32 %v100
  %vm109 = vweird.f32 %v102
  %vm110 = vmor %vm108, %vm109
  %v111 = vsel %vm110, %v102, %v107
  %v112 = vrsqrt.pop %v101
  %v113 = vmul.f32 %v112, %v101
  %v114 = vmul.f32 %v113, %v112
  %v115 = vmul.f32 0.5, %v114
  %v116 = vsub.f32 1.5, %v115
  %v117 = vmul.f32 %v112, %v116
  %vm118 = vweird.f32 %v101
  %vm119 = vweird.f32 %v112
  %vm120 = vmor %vm118, %vm119
  %v121 = vsel %vm120, %v112, %v117
  %v122 = vmul.f32 %v88, %v111
  %v123 = vmul.f32 %v89, %v121
  %v124 = vld [vmem:[%s4] sm:$0x1]
  %v126 = vperm.slane %v124, 0
  %v128 = vmul.f32 %v122, %v126
  %v129 = vmul.f32 %v123, %v126
  %v130 = vld [vmem:[%s5] sm:$0x1]
  %v132 = vperm.slane %v130, 0
  %v134 = vadd.f32 %v128, %v132
  %v135 = vadd.f32 %v129, %v132
  %136 = vst.msk [vmem:[%s6] sm:$0xff] %vm51, %v134
  %137 = vst.msk [vmem:[%s6 + $0x8] sm:$0xff] %vm51, %v135
  // Predicated region
  $region26: #{_lambda_.13} parent=0 // pred_check
    _
  $region27: #{_lambda_.13} parent=0 // pred_check_branch
    %139 = sbr.rel (0) target = $region29
  $region28: #{_lambda_.13} parent=0 // pred_region
    _
  $region29: #{_lambda_.13} parent=0 // pred_fallthru
    _
  // Predicated region
  $region30: #{_lambda_.13} parent=0 // pred_check
    _
  $region31: #{_lambda_.13} parent=0 // pred_check_branch
    %141 = sbr.rel (0) target = $region33
  $region32: #{_lambda_.13} parent=0 // pred_region
    _
  $region33: #{_lambda_.13} parent=0 // pred_fallthru
    _

// kernel: _lambda_.10
$region0: #{_lambda_.10}
  #allocation0 [shape = 'u32[]', space=smem, size = 0x4, offset = 0x4, fixed_abs, tag = 'smem constant byte address 0x4 - core index']
  #allocation1 [shape = 'u32[72,128]{1,0:T(1,128)}', space=vmem, size = 0x9000, scoped, tag = 'internal scratch']
  #allocation2 [shape = 'f32[1,1]{1,0:T(1,128)S(1)}', space=vmem, size = 0x200, scoped, tag = 'scoped memory for _lambda_.10']
  %s0 = inlined_call_operand.vmem [shape: f32[2,8,4], index: 0, kind: input, shape index: {}]
  %s1 = inlined_call_operand.vmem [shape: f32[4,4], index: 1, kind: input, shape index: {}]
  %s2 = inlined_call_operand.vmem [shape: f32[1,4], index: 2, kind: input, shape index: {}]
  %s3 = inlined_call_operand.vmem [shape: f32[1,4], index: 3, kind: input, shape index: {}]
  %s4 = inlined_call_operand.<no memory space> [shape: f32[1,1], index: 4, kind: input, shape index: {}]
  %s5 = inlined_call_operand.vmem [shape: f32[4,32], index: 5, kind: input, shape index: {}]
  %s6 = inlined_call_operand.vmem [shape: f32[4,32], index: 6, kind: input, shape index: {}]
  %s7 = inlined_call_operand.vmem [shape: f32[1,32], index: 7, kind: input, shape index: {}]
  %s8 = inlined_call_operand.vmem [shape: f32[8,32], index: 8, kind: input, shape index: {}]
  %s9 = inlined_call_operand.vmem [shape: f32[2,8,32], index: 9, kind: output, shape index: {}]
  %s10 = sld [smem:[#allocation0]]
  $region69: #{_lambda_.10} parent=0
    _
  %s12 = ssub.s32 1, %s10
  %s13 = scalar_select 0, %s12, %s10
  %v14 = vstv %s4
  %15 = vst [vmem:[#allocation2] sm:$0x1] %v14
  loop: start=0, step=1, limit=4
  $region2: #{_lambda_.10} parent=0 // loop_pre_header
    _
  $region3: #{_lambda_.10} parent=0 // loop_header
    %s17 = sphi 0, %s21
    %p18 = scmp.ge.s32.totalorder %s17, 4
    %s24 = sphi 0, %s36
    %s25 = sphi 0, %s32
    %s26 = sphi 0, %s24
    %s27 = sphi 0, %s25
    %s28 = sphi 0, %s26
    %s29 = sphi 0, %s27
    %s41 = sphi 0, %s43
    %s44 = sphi 0, %s41
    %s45 = sphi 0, %s44
    %s61 = sphi 0, %s45
    %s65 = sphi 0, %s65
    %s67 = sphi 0, %s65
    %s68 = sphi 0, %s67
    %s82 = sphi 0, %s68
    %s86 = sphi 0, %s86
    %s88 = sphi 0, %s86
    %s89 = sphi 0, %s88
    %s103 = sphi 0, %s89
    %s107 = sphi 0, %s107
    %s109 = sphi 0, %s107
    %s110 = sphi 0, %s109
    %s124 = sphi 0, %s110
    %s128 = sphi 0, %s128
    %s130 = sphi 0, %s128
    %s131 = sphi 0, %s130
    %s145 = sphi 0, %s131
    %s149 = sphi 0, %s149
    %s151 = sphi 0, %s149
    %s152 = sphi 0, %s151
    %s166 = sphi 0, %s152
    %s170 = sphi 0, %s170
    %s172 = sphi 0, %s170
    %s173 = sphi 0, %s172
    %s187 = sphi 0, %s173
    %s191 = sphi 0, %s191
    %s193 = sphi 0, %s191
    %s194 = sphi 0, %s193
    %s208 = sphi 0, %s194
    %s214 = sphi 0, %s216
    %s217 = sphi 0, %s214
    %s218 = sphi 0, %s217
    %s234 = sphi 0, %s218
    %s242 = sphi 0, %s244
    %s245 = sphi 0, %s242
    %s246 = sphi 0, %s245
    %s262 = sphi 0, %s246
  $region4: #{_lambda_.10} parent=0 // loop_header_branch
    %20 = sbr.rel (%p18) target = $region8
  $region5: #{_lambda_.10} parent=0 // loop_body
    %s22 = ssub.s32 %s17, 1
    %s23 = ssub.s32 %s17, 2
    %s30 = sadd.s32 1, %s25
    %p31 = scmp.ge.s32.totalorder %s30, 1
    %s32 = scalar_select %p31, 0, %s30
    %s33 = sadd.s32 1, %s24
    %s34 = scalar_select %p31, %s33, %s24
    %p35 = scmp.ge.s32.totalorder %s34, 2
    %s36 = scalar_select %p35, 0, %s34
    %s37 = ssub.s32 %s24, %s36
    %s38 = ssub.s32 %s25, %s32
    %s39 = sor.u32 %s37, %s38
    %p40 = scmp.eq.s32.totalorder %s39, 0
    %s42 = sadd.s32 %s41, 1
    %s43 = scalar_select %p40, %s41, %s42
    %p46 = pneg %p40
    %p47 = scmp.eq.s32.totalorder %s17, 1
    %p48 = por %p46, %p47
    %p49 = scmp.ne.s32.totalorder %s41, %s44
    %p50 = scmp.eq.s32.totalorder %s17, 0
    %p51 = por %p49, %p50
    %p52 = scmp.ne.s32.totalorder %s41, %s44
    %p53 = scmp.eq.s32.totalorder %s22, 1
    %p54 = por %p52, %p53
    %p55 = scmp.ne.s32.totalorder %s44, %s45
    %p56 = scmp.eq.s32.totalorder %s22, 0
    %p57 = por %p55, %p56
    %p58 = scmp.ne.s32.totalorder %s44, %s45
    %p59 = scmp.eq.s32.totalorder %s23, 1
    %p60 = por %p58, %p59
    %p62 = scmp.ne.s32.totalorder %s45, %s61
    %p63 = scmp.eq.s32.totalorder %s23, 0
    %p64 = por %p62, %p63
    %s66 = sadd.s32 %s65, 1
    %p69 = scmp.eq.s32.totalorder %s17, 1
    %p70 = scmp.ne.s32.totalorder %s65, %s67
    %p71 = scmp.eq.s32.totalorder %s17, 0
    %p72 = por %p70, %p71
    %p73 = scmp.ne.s32.totalorder %s65, %s67
    %p74 = scmp.eq.s32.totalorder %s22, 1
    %p75 = por %p73, %p74
    %p76 = scmp.ne.s32.totalorder %s67, %s68
    %p77 = scmp.eq.s32.totalorder %s22, 0
    %p78 = por %p76, %p77
    %p79 = scmp.ne.s32.totalorder %s67, %s68
    %p80 = scmp.eq.s32.totalorder %s23, 1
    %p81 = por %p79, %p80
    %p83 = scmp.ne.s32.totalorder %s68, %s82
    %p84 = scmp.eq.s32.totalorder %s23, 0
    %p85 = por %p83, %p84
    %s87 = sadd.s32 %s86, 1
    %p90 = scmp.eq.s32.totalorder %s17, 1
    %p91 = scmp.ne.s32.totalorder %s86, %s88
    %p92 = scmp.eq.s32.totalorder %s17, 0
    %p93 = por %p91, %p92
    %p94 = scmp.ne.s32.totalorder %s86, %s88
    %p95 = scmp.eq.s32.totalorder %s22, 1
    %p96 = por %p94, %p95
    %p97 = scmp.ne.s32.totalorder %s88, %s89
    %p98 = scmp.eq.s32.totalorder %s22, 0
    %p99 = por %p97, %p98
    %p100 = scmp.ne.s32.totalorder %s88, %s89
    %p101 = scmp.eq.s32.totalorder %s23, 1
    %p102 = por %p100, %p101
    %p104 = scmp.ne.s32.totalorder %s89, %s103
    %p105 = scmp.eq.s32.totalorder %s23, 0
    %p106 = por %p104, %p105
    %s108 = sadd.s32 %s107, 1
    %p111 = scmp.eq.s32.totalorder %s17, 1
    %p112 = scmp.ne.s32.totalorder %s107, %s109
    %p113 = scmp.eq.s32.totalorder %s17, 0
    %p114 = por %p112, %p113
    %p115 = scmp.ne.s32.totalorder %s107, %s109
    %p116 = scmp.eq.s32.totalorder %s22, 1
    %p117 = por %p115, %p116
    %p118 = scmp.ne.s32.totalorder %s109, %s110
    %p119 = scmp.eq.s32.totalorder %s22, 0
    %p120 = por %p118, %p119
    %p121 = scmp.ne.s32.totalorder %s109, %s110
    %p122 = scmp.eq.s32.totalorder %s23, 1
    %p123 = por %p121, %p122
    %p125 = scmp.ne.s32.totalorder %s110, %s124
    %p126 = scmp.eq.s32.totalorder %s23, 0
    %p127 = por %p125, %p126
    %s129 = sadd.s32 %s128, 1
    %p132 = scmp.eq.s32.totalorder %s17, 1
    %p133 = scmp.ne.s32.totalorder %s128, %s130
    %p134 = scmp.eq.s32.totalorder %s17, 0
    %p135 = por %p133, %p134
    %p136 = scmp.ne.s32.totalorder %s128, %s130
    %p137 = scmp.eq.s32.totalorder %s22, 1
    %p138 = por %p136, %p137
    %p139 = scmp.ne.s32.totalorder %s130, %s131
    %p140 = scmp.eq.s32.totalorder %s22, 0
    %p141 = por %p139, %p140
    %p142 = scmp.ne.s32.totalorder %s130, %s131
    %p143 = scmp.eq.s32.totalorder %s23, 1
    %p144 = por %p142, %p143
    %p146 = scmp.ne.s32.totalorder %s131, %s145
    %p147 = scmp.eq.s32.totalorder %s23, 0
    %p148 = por %p146, %p147
    %s150 = sadd.s32 %s149, 1
    %p153 = scmp.eq.s32.totalorder %s17, 1
    %p154 = scmp.ne.s32.totalorder %s149, %s151
    %p155 = scmp.eq.s32.totalorder %s17, 0
    %p156 = por %p154, %p155
    %p157 = scmp.ne.s32.totalorder %s149, %s151
    %p158 = scmp.eq.s32.totalorder %s22, 1
    %p159 = por %p157, %p158
    %p160 = scmp.ne.s32.totalorder %s151, %s152
    %p161 = scmp.eq.s32.totalorder %s22, 0
    %p162 = por %p160, %p161
    %p163 = scmp.ne.s32.totalorder %s151, %s152
    %p164 = scmp.eq.s32.totalorder %s23, 1
    %p165 = por %p163, %p164
    %p167 = scmp.ne.s32.totalorder %s152, %s166
    %p168 = scmp.eq.s32.totalorder %s23, 0
    %p169 = por %p167, %p168
    %s171 = sadd.s32 %s170, 1
    %p174 = scmp.eq.s32.totalorder %s17, 1
    %p175 = scmp.ne.s32.totalorder %s170, %s172
    %p176 = scmp.eq.s32.totalorder %s17, 0
    %p177 = por %p175, %p176
    %p178 = scmp.ne.s32.totalorder %s170, %s172
    %p179 = scmp.eq.s32.totalorder %s22, 1
    %p180 = por %p178, %p179
    %p181 = scmp.ne.s32.totalorder %s172, %s173
    %p182 = scmp.eq.s32.totalorder %s22, 0
    %p183 = por %p181, %p182
    %p184 = scmp.ne.s32.totalorder %s172, %s173
    %p185 = scmp.eq.s32.totalorder %s23, 1
    %p186 = por %p184, %p185
    %p188 = scmp.ne.s32.totalorder %s173, %s187
    %p189 = scmp.eq.s32.totalorder %s23, 0
    %p190 = por %p188, %p189
    %s192 = sadd.s32 %s191, 1
    %p195 = scmp.eq.s32.totalorder %s17, 1
    %p196 = scmp.ne.s32.totalorder %s191, %s193
    %p197 = scmp.eq.s32.totalorder %s17, 0
    %p198 = por %p196, %p197
    %p199 = scmp.ne.s32.totalorder %s191, %s193
    %p200 = scmp.eq.s32.totalorder %s22, 1
    %p201 = por %p199, %p200
    %p202 = scmp.ne.s32.totalorder %s193, %s194
    %p203 = scmp.eq.s32.totalorder %s22, 0
    %p204 = por %p202, %p203
    %p205 = scmp.ne.s32.totalorder %s193, %s194
    %p206 = scmp.eq.s32.totalorder %s23, 1
    %p207 = por %p205, %p206
    %p209 = scmp.ne.s32.totalorder %s194, %s208
    %p210 = scmp.eq.s32.totalorder %s23, 0
    %p211 = por %p209, %p210
    %s212 = ssub.s32 %s25, %s32
    %p213 = scmp.eq.s32.totalorder %s212, 0
    %s215 = sadd.s32 %s214, 1
    %s216 = scalar_select %p213, %s214, %s215
    %p219 = pneg %p213
    %p220 = scmp.eq.s32.totalorder %s17, 1
    %p221 = por %p219, %p220
    %p222 = scmp.ne.s32.totalorder %s214, %s217
    %p223 = scmp.eq.s32.totalorder %s17, 0
    %p224 = por %p222, %p223
    %p225 = scmp.ne.s32.totalorder %s214, %s217
    %p226 = scmp.eq.s32.totalorder %s22, 1
    %p227 = por %p225, %p226
    %p228 = scmp.ne.s32.totalorder %s217, %s218
    %p229 = scmp.eq.s32.totalorder %s22, 0
    %p230 = por %p228, %p229
    %p231 = scmp.ne.s32.totalorder %s217, %s218
    %p232 = scmp.eq.s32.totalorder %s23, 1
    %p233 = por %p231, %p232
    %p235 = scmp.ne.s32.totalorder %s218, %s234
    %p236 = scmp.eq.s32.totalorder %s23, 0
    %p237 = por %p235, %p236
    %s238 = ssub.s32 %s24, %s36
    %s239 = ssub.s32 %s25, %s32
    %s240 = sor.u32 %s238, %s239
    %p241 = scmp.eq.s32.totalorder %s240, 0
    %s243 = sadd.s32 %s242, 1
    %s244 = scalar_select %p241, %s242, %s243
    %p247 = pneg %p241
    %p248 = scmp.eq.s32.totalorder %s17, 1
    %p249 = por %p247, %p248
    %p250 = scmp.ne.s32.totalorder %s242, %s245
    %p251 = scmp.eq.s32.totalorder %s17, 0
    %p252 = por %p250, %p251
    %p253 = scmp.ne.s32.totalorder %s242, %s245
    %p254 = scmp.eq.s32.totalorder %s22, 1
    %p255 = por %p253, %p254
    %p256 = scmp.ne.s32.totalorder %s245, %s246
    %p257 = scmp.eq.s32.totalorder %s22, 0
    %p258 = por %p256, %p257
    %p259 = scmp.ne.s32.totalorder %s245, %s246
    %p260 = scmp.eq.s32.totalorder %s23, 1
    %p261 = por %p259, %p260
    %p263 = scmp.ne.s32.totalorder %s246, %s262
    %p264 = scmp.eq.s32.totalorder %s23, 0
    %p265 = por %p263, %p264
    %p266 = scmp.le.s32.totalorder 1, %s17
    %p267 = scmp.lt.s32.totalorder %s17, 3
    %p268 = pnand %p266, %p267
    %p269 = pneg %p268
    // Predicated region
    $region9: #{_lambda_.10} parent=5 // pred_check
      _
    $region10: #{_lambda_.10} parent=5 // pred_check_branch
      %271 = sbr.rel (%p268) target = $region12
    $region11: #{_lambda_.10} parent=5 // pred_region
      %s272 = ssub.s32 %s17, 1
      // Predicated region
      $region13: #{_lambda_.10} parent=11 // pred_check
        %p273 = pneg %p78
      $region14: #{_lambda_.10} parent=11 // pred_check_branch
        %275 = sbr.rel (%p273) target = $region16
      $region15: #{_lambda_.10} parent=11 // pred_region
        _
      $region16: #{_lambda_.10} parent=11 // pred_fallthru
        _
      // Predicated region
      $region17: #{_lambda_.10} parent=11 // pred_check
        %p276 = pneg %p99
      $region18: #{_lambda_.10} parent=11 // pred_check_branch
        %278 = sbr.rel (%p276) target = $region20
      $region19: #{_lambda_.10} parent=11 // pred_region
        _
      $region20: #{_lambda_.10} parent=11 // pred_fallthru
        _
      // Predicated region
      $region21: #{_lambda_.10} parent=11 // pred_check
        %p279 = pneg %p120
      $region22: #{_lambda_.10} parent=11 // pred_check_branch
        %281 = sbr.rel (%p279) target = $region24
      $region23: #{_lambda_.10} parent=11 // pred_region
        _
      $region24: #{_lambda_.10} parent=11 // pred_fallthru
        _
      // Predicated region
      $region25: #{_lambda_.10} parent=11 // pred_check
        %p282 = pneg %p141
      $region26: #{_lambda_.10} parent=11 // pred_check_branch
        %284 = sbr.rel (%p282) target = $region28
      $region27: #{_lambda_.10} parent=11 // pred_region
        _
      $region28: #{_lambda_.10} parent=11 // pred_fallthru
        _
      // Predicated region
      $region29: #{_lambda_.10} parent=11 // pred_check
        %p285 = pneg %p162
      $region30: #{_lambda_.10} parent=11 // pred_check_branch
        %287 = sbr.rel (%p285) target = $region32
      $region31: #{_lambda_.10} parent=11 // pred_region
        _
      $region32: #{_lambda_.10} parent=11 // pred_fallthru
        _
      // Predicated region
      $region33: #{_lambda_.10} parent=11 // pred_check
        %p288 = pneg %p183
      $region34: #{_lambda_.10} parent=11 // pred_check_branch
        %290 = sbr.rel (%p288) target = $region36
      $region35: #{_lambda_.10} parent=11 // pred_region
        _
      $region36: #{_lambda_.10} parent=11 // pred_fallthru
        _
      // Predicated region
      $region37: #{_lambda_.10} parent=11 // pred_check
        %p291 = pneg %p204
      $region38: #{_lambda_.10} parent=11 // pred_check_branch
        %293 = sbr.rel (%p291) target = $region40
      $region39: #{_lambda_.10} parent=11 // pred_region
        _
      $region40: #{_lambda_.10} parent=11 // pred_fallthru
        _
      // Predicated region
      $region41: #{_lambda_.10} parent=11 // pred_check
        %p294 = pneg %p230
      $region42: #{_lambda_.10} parent=11 // pred_check_branch
        %296 = sbr.rel (%p294) target = $region44
      $region43: #{_lambda_.10} parent=11 // pred_region
        %p297 = scmp.lt.s32.totalorder %s27, 0
        %s298 = scalar_select %p297, %s27, 0
        %s299 = smul.addr %s298, 8
        %s300 = scalar_lea.vmem %s8, %s299
      $region44: #{_lambda_.10} parent=11 // pred_fallthru
        _
    $region12: #{_lambda_.10} parent=5 // pred_fallthru
      _
    %p301 = scmp.lt.s32.totalorder %s17, 2
    // Predicated region
    $region45: #{_lambda_.10} parent=5 // pred_check
      %p302 = pneg %p301
    $region46: #{_lambda_.10} parent=5 // pred_check_branch
      %304 = sbr.rel (%p302) target = $region48
    $region47: #{_lambda_.10} parent=5 // pred_region
      // Predicated region
      $region49: #{_lambda_.10} parent=47 // pred_check
        %p305 = pneg %p51
      $region50: #{_lambda_.10} parent=47 // pred_check_branch
        %307 = sbr.rel (%p305) target = $region52
      $region51: #{_lambda_.10} parent=47 // pred_region
        %p308 = scmp.lt.s32.totalorder %s24, 1
        %s309 = scalar_select %p308, %s24, 1
        %p310 = scmp.lt.s32.totalorder %s25, 0
        %s311 = scalar_select %p310, %s25, 0
        %s312 = sadd.s32 %s311, %s309
        %s313 = smul.addr %s312, 8
        %s314 = scalar_lea.vmem %s0, %s313
      $region52: #{_lambda_.10} parent=47 // pred_fallthru
        _
    $region48: #{_lambda_.10} parent=5 // pred_fallthru
      _
    %p315 = scmp.le.s32.totalorder 1, %s17
    %p316 = scmp.lt.s32.totalorder %s17, 3
    %p317 = pnand %p315, %p316
    %p318 = pneg %p317
    // Predicated region
    $region53: #{_lambda_.10} parent=5 // pred_check
      _
    $region54: #{_lambda_.10} parent=5 // pred_check_branch
      %320 = sbr.rel (%p317) target = $region56
    $region55: #{_lambda_.10} parent=5 // pred_region
      %s321 = ssub.s32 %s17, 1
      %p322 = scmp.lt.s32.totalorder %s26, 1
      %s323 = scalar_select %p322, %s26, 1
      %p324 = scmp.lt.s32.totalorder %s27, 0
      %s325 = scalar_select %p324, %s27, 0
      %s326 = sadd.s32 %s325, %s323
      %s327 = smul.addr %s326, 8
      %s328 = scalar_lea.vmem %s0, %s327
      %p329 = pneg %p57
      %p330 = pneg %p54
      %p331 = pneg %p78
      %p332 = pneg %p75
      %p333 = pneg %p99
      %p334 = pneg %p96
      %p335 = pneg %p120
      %p336 = pneg %p117
      %p337 = pneg %p141
      %p338 = pneg %p138
      %p339 = pneg %p162
      %p340 = pneg %p159
      %p341 = pneg %p183
      %p342 = pneg %p180
      %p343 = pneg %p204
      %p344 = pneg %p201
      %p345 = scmp.lt.s32.totalorder %s27, 0
      %s346 = scalar_select %p345, %s27, 0
      %s347 = smul.addr %s346, 8
      %s348 = scalar_lea.vmem %s8, %s347
      %p349 = pneg %p230
      %p350 = pneg %p227
      %p351 = pneg %p258
      %p352 = pneg %p255
      %p353 = scmp.lt.s32.totalorder %s26, 1
      %s354 = scalar_select %p353, %s26, 1
      %p355 = scmp.lt.s32.totalorder %s27, 0
      %s356 = scalar_select %p355, %s27, 0
      %s357 = sadd.s32 %s356, %s354
      %s358 = smul.addr %s357, 8
      %s359 = scalar_lea.vmem %s9, %s358
      %p360 = scmp.lt.s32.totalorder %s26, 1
      %s361 = scalar_select %p360, %s26, 1
      %p362 = scmp.lt.s32.totalorder %s27, 0
      %s363 = scalar_select %p362, %s27, 0
      %s364 = sadd.s32 %s363, %s361
      %s365 = smul.addr %s364, 8
      %s366 = scalar_lea.vmem %s0, %s365
      %p367 = scmp.lt.s32.totalorder %s27, 0
      %s368 = scalar_select %p367, %s27, 0
      %s369 = smul.addr %s368, 8
      %s370 = scalar_lea.vmem %s8, %s369
      %p371 = scmp.lt.s32.totalorder %s26, 1
      %s372 = scalar_select %p371, %s26, 1
      %p373 = scmp.lt.s32.totalorder %s27, 0
      %s374 = scalar_select %p373, %s27, 0
      %s375 = sadd.s32 %s374, %s372
      %s376 = smul.addr %s375, 8
      %s377 = scalar_lea.vmem %s9, %s376
      %v378 = vld [vmem:[%s366] sm:$0xff]
      %v379 = vld [vmem:[%s1] sm:$0xf]
      %v380 = vld [vmem:[%s2] sm:$0x1]
      %v382 = vperm.slane %v380, 0
      %vm384 = vcmask 31744
      %v386 = vsel %vm384, %v378, 0
      %vm388 = vcmask 1043456
      %v390 = vsel %vm388, %v379, 0
      %392 = vmatpush.msra.mxu0 0.0
      %393 = vmatpush.msra.mxu0 0.0
      %394 = vmatpush.msra.mxu0 0.0
      %395 = vmatpush.msra.mxu0 0.0
      %396 = vmatpush.msra.mxu0 0.0
      %397 = vmatpush.msra.mxu0 0.0
      %398 = vmatpush.msra.mxu0 0.0
      %399 = vmatpush.msra.mxu0 0.0
      %400 = vmatpush.msra.mxu0 0.0
      %401 = vmatpush.msra.mxu0 0.0
      %402 = vmatpush.msra.mxu0 0.0
      %403 = vmatpush.msra.mxu0 0.0
      %404 = vmatpush.msra.mxu0 0.0
      %405 = vmatpush.msra.mxu0 0.0
      %406 = vmatpush.msra.mxu0 0.0
      %407 = vmatpush.msra.mxu0 %v390
      %408 = vmatmul.f32.gmra.mxu0 %v386
      %v409 = vpop.f32.mrf.mxu0
      %v410 = vadd.f32 %v382, %v409
      %411 = vdwg.mxu0
      %v412 = vand.u32 2147483647, %v410
      %vm413 = vcmp.le.f32.partialorder %v412, 0.7853982
      %vm414 = vcmp.lt.s32.totalorder %v410, 0
      %v415 = vand.u32 %v410, 2139095040
      %v416 = vshrl.u32 %v415, 23
      %v417 = vsub.s32 %v416, 127
      %v418 = vand.u32 2147483647, %v410
      %v419 = vand.u32 %v418, 8388607
      %v420 = vor.u32 %v419, 8388608
      %v421 = vsub.s32 0, %v420
      %v422 = vadd.s32 %v417, 1
      %vm423 = vcmp.gt.s32.totalorder %v422, 0
      %v424 = vsel %vm423, %v422, 0
      %v425 = vshrl.u32 %v424, 5
      %v426 = vand.u32 %v424, 31
      %v427 = vsub.s32 32, %v426
      %v428 = vshrl.u32 683565275, %v427
      %v429 = vshll.u32 683565275, %v426
      %v430 = vshrl.u32 2475754826, %v427
      %v431 = vor.u32 %v429, %v430
      %v432 = vshll.u32 2475754826, %v426
      %v433 = vshrl.u32 2131351028, %v427
      %v434 = vor.u32 %v432, %v433
      %v435 = vshll.u32 2131351028, %v426
      %v436 = vshrl.u32 2102212464, %v427
      %v437 = vor.u32 %v435, %v436
      %v438 = vshll.u32 2102212464, %v426
      %v439 = vshrl.u32 920167782, %v427
      %v440 = vor.u32 %v438, %v439
      %v441 = vshll.u32 920167782, %v426
      %v442 = vshrl.u32 1326507024, %v427
      %v443 = vor.u32 %v441, %v442
      %vm444 = vcmp.lt.s32.totalorder %v425, 1
      %vm445 = vcmp.lt.s32.totalorder %v425, 2
      %vm446 = vcmp.lt.s32.totalorder %v425, 3
      %vm447 = vcmp.lt.s32.totalorder %v425, 4
      %v448 = vsel %vm444, %v428, %v431
      %v449 = vsel %vm447, %v437, 2102212464
      %v450 = vsel %vm446, %v434, %v449
      %v451 = vsel %vm445, %v448, %v450
      %v452 = vsel %vm444, %v431, %v434
      %v453 = vsel %vm447, %v440, 920167782
      %v454 = vsel %vm446, %v437, %v453
      %v455 = vsel %vm445, %v452, %v454
      %v456 = vsel %vm444, %v434, %v437
      %v457 = vsel %vm447, %v443, 1326507024
      %v458 = vsel %vm446, %v440, %v457
      %v459 = vsel %vm445, %v456, %v458
      %v460 = vshll.u32 %v420, 8
      %v461 = vand.u32 %v460, 65535
      %v462 = vshrl.u32 %v460, 16
      %v463 = vand.u32 %v459, 65535
      %v464 = vshrl.u32 %v459, 16
      %v465 = vmul.u32 %v461, %v463
      %v466 = vmul.u32 %v461, %v464
      %v467 = vmul.u32 %v462, %v463
      %v468 = vmul.u32 %v462, %v464
      %v469 = vshll.u32 %v466, 16
      %v470 = vshrl.u32 %v466, 16
      %v471 = vshll.u32 %v467, 16
      %v472 = vshrl.u32 %v467, 16
      %vm473 = vc.u32 %v465, %v469
      %v474 = vsel %vm473, 1, 0
      %v475 = vadd.s32 %v465, %v469
      %v476 = vadd.s32 %v468, %v474
      %vm477 = vc.u32 %v475, %v471
      %v478 = vsel %vm477, 1, 0
      %v479 = vadd.s32 %v475, %v471
      %v480 = vadd.s32 %v476, %v478
      %v481 = vadd.s32 %v480, %v470
      %v482 = vadd.s32 %v481, %v472
      %v483 = vand.u32 %v460, 65535
      %v484 = vshrl.u32 %v460, 16
      %v485 = vand.u32 %v455, 65535
      %v486 = vshrl.u32 %v455, 16
      %v487 = vmul.u32 %v483, %v485
      %v488 = vmul.u32 %v483, %v486
      %v489 = vmul.u32 %v484, %v485
      %v490 = vmul.u32 %v484, %v486
      %v491 = vshll.u32 %v488, 16
      %v492 = vshrl.u32 %v488, 16
      %v493 = vshll.u32 %v489, 16
      %v494 = vshrl.u32 %v489, 16
      %vm495 = vc.u32 %v487, %v491
      %v496 = vsel %vm495, 1, 0
      %v497 = vadd.s32 %v487, %v491
      %v498 = vadd.s32 %v490, %v496
      %vm499 = vc.u32 %v497, %v493
      %v500 = vsel %vm499, 1, 0
      %v501 = vadd.s32 %v497, %v493
      %v502 = vadd.s32 %v498, %v500
      %v503 = vadd.s32 %v502, %v492
      %v504 = vadd.s32 %v503, %v494
      %v505 = vmul.u32 %v460, %v451
      %v506 = vadd.s32 %v482, %v501
      %vm507 = vc.u32 %v482, %v501
      %v508 = vadd.s32 %v504, 1
      %v509 = vsel %vm507, %v508, %v504
      %v510 = vadd.s32 %v505, %v509
      %v511 = vadd.s32 %v510, 536870912
      %v512 = vshrl.u32 %v511, 30
      %v513 = vshll.u32 %v512, 30
      %v514 = vsub.s32 %v510, %v513
      %vm515 = vcmp.lt.s32.totalorder %v514, 0
      %v516 = vsub.s32 0, %v514
      %v517 = vsel %vm515, %v516, %v514
      %v518 = vclz %v517
      %v519 = vsub.s32 %v518, 2
      %vm520 = vcmp.gt.s32.totalorder 0, %v519
      %v521 = vsel %vm520, 0, %v519
      %v522 = vsub.s32 32, %v521
      %v523 = vshll.u32 %v514, %v521
      %v524 = vshrl.u32 %v506, %v522
      %v525 = vor.u32 %v523, %v524
      %v526 = vsub.s32 4294967266, %v521
      %v527 = vadd.s32 %v526, 127
      %v528 = vshll.u32 %v527, 23
      %v529 = vor.u32 4788187, %v528
      %v530 = vand.u32 2147483647, %v529
      %v532 = vcvt.s32.f32 %v525
      %v533 = vmul.f32 %v532, %v530
      %v534 = vxor.u32 %v533, 2147483648
      %v535 = vsel %vm414, %v534, %v533
      %v536 = vsub.s32 4, %v512
      %v537 = vsel %vm414, %v536, %v512
      %v538 = vsel %vm413, %v410, %v535
      %v539 = vsel %vm413, 0, %v537
      %v540 = vmul.f32 %v538, %v538
      %v541 = vmul.f32 %v540, -0.001358992
      %v542 = vadd.f32 %v541, 0.041655596
      %v543 = vmul.f32 %v540, %v542
      %v544 = vadd.f32 %v543, -0.4999988
      %v545 = vmul.f32 %v540, %v544
      %v546 = vadd.f32 1.0, %v545
      %v547 = vmul.f32 %v538, %v538
      %v548 = vmul.f32 %v547, -0.00019511016
      %v549 = vadd.f32 %v548, 0.008332121
      %v550 = vmul.f32 %v547, %v549
      %v551 = vadd.f32 %v550, -0.16666654
      %v552 = vmul.f32 %v547, %v551
      %v553 = vadd.f32 %v552, 1.0
      %v554 = vmul.f32 %v553, %v538
      %vm555 = vweird.f32 %v410
      %v556 = vadd.s32 %v539, 3
      %v557 = vand.u32 %v556, 3
      %vm558 = vcmp.lt.s32.totalorder %v557, 2
      %vm559 = vcmp.eq.s32.totalorder %v557, 0
      %v560 = vxor.u32 %v554, 2147483648
      %v561 = vsel %vm559, %v546, %v560
      %vm562 = vcmp.eq.s32.totalorder %v557, 2
      %v563 = vxor.u32 %v546, 2147483648
      %v564 = vsel %vm562, %v563, %v554
      %v565 = vsel %vm558, %v561, %v564
      %v566 = vsel %vm555, nan, %v565
      %v567 = vld [vmem:[%s3] sm:$0x1]
      %v569 = vperm.slane %v567, 0
      %v571 = vmul.f32 %v569, %v378
      %v572 = vld [vmem:[#allocation2] sm:$0x1]
      %v574 = vperm.slane %v572, 0
      %575 = vset.pattern.permute.xlu0 0
      %576 = vperm.xlu0 %575, %v574
      %v577 = vpop.permute.xlu0 %576
      %v579 = vadd.f32 %v571, %v577
      %v580 = vld [vmem:[%s5] sm:$0xf]
      %v581 = vld [vmem:[%s6] sm:$0xf]
      %v583 = vsel %vm384, %v566, 0
      %v586 = vsel %vm388, %v581, 0
      %588 = vmatpush.msra.mxu0 0.0
      %589 = vmatpush.msra.mxu0 0.0
      %590 = vmatpush.msra.mxu0 0.0
      %591 = vmatpush.msra.mxu0 0.0
      %592 = vmatpush.msra.mxu0 0.0
      %593 = vmatpush.msra.mxu0 0.0
      %594 = vmatpush.msra.mxu0 0.0
      %595 = vmatpush.msra.mxu0 0.0
      %596 = vmatpush.msra.mxu0 0.0
      %597 = vmatpush.msra.mxu0 0.0
      %598 = vmatpush.msra.mxu0 0.0
      %599 = vmatpush.msra.mxu0 0.0
      %600 = vmatpush.msra.mxu0 0.0
      %601 = vmatpush.msra.mxu0 0.0
      %602 = vmatpush.msra.mxu0 0.0
      %603 = vmatpush.msra.mxu0 %v586
      %604 = vmatmul.f32.gmra.mxu0 %v583
      %v605 = vpop.f32.mrf.mxu0
      %v606 = vadd.f32 0.0, %v605
      %607 = vdwg.mxu0
      %v609 = vsel %vm384, %v579, 0
      %v612 = vsel %vm388, %v580, 0
      %614 = vmatpush.msra.mxu0 0.0
      %615 = vmatpush.msra.mxu0 0.0
      %616 = vmatpush.msra.mxu0 0.0
      %617 = vmatpush.msra.mxu0 0.0
      %618 = vmatpush.msra.mxu0 0.0
      %619 = vmatpush.msra.mxu0 0.0
      %620 = vmatpush.msra.mxu0 0.0
      %621 = vmatpush.msra.mxu0 0.0
      %622 = vmatpush.msra.mxu0 0.0
      %623 = vmatpush.msra.mxu0 0.0
      %624 = vmatpush.msra.mxu0 0.0
      %625 = vmatpush.msra.mxu0 0.0
      %626 = vmatpush.msra.mxu0 0.0
      %627 = vmatpush.msra.mxu0 0.0
      %628 = vmatpush.msra.mxu0 0.0
      %629 = vmatpush.msra.mxu0 %v612
      %630 = vmatmul.f32.gmra.mxu0 %v609
      %v631 = vpop.f32.mrf.mxu0
      %v632 = vadd.f32 %v606, %v631
      %633 = vdwg.mxu0
      %v634 = vld [vmem:[%s7] sm:$0x1]
      %v636 = vperm.slane %v634, 0
      %v638 = vadd.f32 %v632, %v636
      %v639 = vld [vmem:[%s370] sm:$0xff]
      %v640 = vadd.f32 %v638, %v639
      %vm641 = vcmask 261120
      %642 = vst.msk [vmem:[%s377] sm:$0xff] %vm641, %v640
      %p643 = scmp.lt.s32.totalorder %s26, 1
      %s644 = scalar_select %p643, %s26, 1
      %p645 = scmp.lt.s32.totalorder %s27, 0
      %s646 = scalar_select %p645, %s27, 0
      %s647 = sadd.s32 %s646, %s644
      %s648 = smul.addr %s647, 8
      %s649 = scalar_lea.vmem %s9, %s648
      // Predicated region
      $region57: #{_lambda_.10} parent=55 // pred_check
        %p650 = pneg %p255
      $region58: #{_lambda_.10} parent=55 // pred_check_branch
        %652 = sbr.rel (%p650) target = $region60
      $region59: #{_lambda_.10} parent=55 // pred_region
        _
      $region60: #{_lambda_.10} parent=55 // pred_fallthru
        _
    $region56: #{_lambda_.10} parent=5 // pred_fallthru
      _
    %p653 = scmp.le.s32.totalorder 2, %s17
    // Predicated region
    $region61: #{_lambda_.10} parent=5 // pred_check
      %p654 = pneg %p653
    $region62: #{_lambda_.10} parent=5 // pred_check_branch
      %656 = sbr.rel (%p654) target = $region64
    $region63: #{_lambda_.10} parent=5 // pred_region
      %s657 = ssub.s32 %s17, 2
      // Predicated region
      $region65: #{_lambda_.10} parent=63 // pred_check
        %p658 = pneg %p261
      $region66: #{_lambda_.10} parent=63 // pred_check_branch
        %660 = sbr.rel (%p658) target = $region68
      $region67: #{_lambda_.10} parent=63 // pred_region
        %p661 = scmp.lt.s32.totalorder %s28, 1
        %s662 = scalar_select %p661, %s28, 1
        %p663 = scmp.lt.s32.totalorder %s29, 0
        %s664 = scalar_select %p663, %s29, 0
        %s665 = sadd.s32 %s664, %s662
        %s666 = smul.addr %s665, 8
        %s667 = scalar_lea.vmem %s9, %s666
      $region68: #{_lambda_.10} parent=63 // pred_fallthru
        _
    $region64: #{_lambda_.10} parent=5 // pred_fallthru
      _
  $region6: #{_lambda_.10} parent=0 // loop_footer
    %s21 = sadd.s32 1, %s17
  $region7: #{_lambda_.10} parent=0 // loop_footer_branch
    %16 = sbr.rel target = $region3
  $region8: #{_lambda_.10} parent=0 // loop_exit
    _

// kernel: _lambda_.12
$region0: #{_lambda_.12}
  #allocation0 [shape = 'u32[]', space=smem, size = 0x4, offset = 0x4, fixed_abs, tag = 'smem constant byte address 0x4 - core index']
  #allocation1 [shape = 'u32[72,128]{1,0:T(1,128)}', space=vmem, size = 0x9000, scoped, tag = 'internal scratch']
  %s0 = inlined_call_operand.vmem [shape: bf16[8,2,96], index: 0, kind: input, shape index: {}]
  %s1 = inlined_call_operand.vmem [shape: bf16[8,2,32], index: 1, kind: output, shape index: {}]
  %s2 = sld [smem:[#allocation0]]
  $region14: #{_lambda_.12} parent=0
    _
  %s4 = ssub.s32 1, %s2
  %s5 = scalar_select 0, %s4, %s2
  // Predicated region
  $region2: #{_lambda_.12} parent=0 // pred_check
    _
  $region3: #{_lambda_.12} parent=0 // pred_check_branch
    %7 = sbr.rel (0) target = $region5
  $region4: #{_lambda_.12} parent=0 // pred_region
    _
  $region5: #{_lambda_.12} parent=0 // pred_fallthru
    _
  %v9 = vld [vmem:[%s0] sm:$0x1]
  %v10 = vld [vmem:[%s0 + $0x1] sm:$0x1]
  %v11 = vld [vmem:[%s0 + $0x2] sm:$0x1]
  %v12 = vld [vmem:[%s0 + $0x3] sm:$0x1]
  %v13 = vld [vmem:[%s0 + $0x4] sm:$0x1]
  %v14 = vld [vmem:[%s0 + $0x5] sm:$0x1]
  %v15 = vld [vmem:[%s0 + $0x6] sm:$0x1]
  %v16 = vld [vmem:[%s0 + $0x7] sm:$0x1]
  %18 = vst [vmem:[#allocation1] ss:$9 sm:$0xff] %v9
  %v19 = vld [vmem:[#allocation1] sm:$0xff]
  %21 = vrot.lane.b32.xlu0 %v19, 96
  %v22 = vpop.permute.xlu0 %21
  %vm23 = vcmask 64512
  %v24 = vsel %vm23, %v9, 0
  %v27 = vsel %vm23, %v22, 0
  %29 = vmatpush.bf16.xpose.msra.mxu0 0
  %30 = vmatpush.bf16.xpose.msra.mxu0 0
  %31 = vmatpush.bf16.xpose.msra.mxu0 0
  %32 = vmatpush.bf16.xpose.msra.mxu0 0
  %33 = vmatpush.bf16.xpose.msra.mxu0 0
  %34 = vmatpush.bf16.xpose.msra.mxu0 0
  %35 = vmatpush.bf16.xpose.msra.mxu0 0
  %36 = vmatpush.bf16.xpose.msra.mxu0 %v27
  %37 = vmatmul.bf16.gmra.mxu0 %v24
  %v38 = vpop.f32.mrf.mxu0
  %v39 = vadd.f32 0.0, %v38
  %v40 = vpop.f32.mrf.mxu0
  %41 = vdwg.mxu0
  %43 = vst [vmem:[#allocation1] ss:$9 sm:$0xff] %v10
  %v44 = vld [vmem:[#allocation1] sm:$0xff]
  %46 = vrot.lane.b32.xlu0 %v44, 96
  %v47 = vpop.permute.xlu0 %46
  %v48 = vsel %vm23, %v10, 0
  %v51 = vsel %vm23, %v47, 0
  %53 = vmatpush.bf16.xpose.msra.mxu0 0
  %54 = vmatpush.bf16.xpose.msra.mxu0 0
  %55 = vmatpush.bf16.xpose.msra.mxu0 0
  %56 = vmatpush.bf16.xpose.msra.mxu0 0
  %57 = vmatpush.bf16.xpose.msra.mxu0 0
  %58 = vmatpush.bf16.xpose.msra.mxu0 0
  %59 = vmatpush.bf16.xpose.msra.mxu0 0
  %60 = vmatpush.bf16.xpose.msra.mxu0 %v51
  %61 = vmatmul.bf16.gmra.mxu0 %v48
  %v62 = vpop.f32.mrf.mxu0
  %v63 = vadd.f32 0.0, %v62
  %v64 = vpop.f32.mrf.mxu0
  %65 = vdwg.mxu0
  %67 = vst [vmem:[#allocation1] ss:$9 sm:$0xff] %v11
  %v68 = vld [vmem:[#allocation1] sm:$0xff]
  %70 = vrot.lane.b32.xlu0 %v68, 96
  %v71 = vpop.permute.xlu0 %70
  %v72 = vsel %vm23, %v11, 0
  %v75 = vsel %vm23, %v71, 0
  %77 = vmatpush.bf16.xpose.msra.mxu0 0
  %78 = vmatpush.bf16.xpose.msra.mxu0 0
  %79 = vmatpush.bf16.xpose.msra.mxu0 0
  %80 = vmatpush.bf16.xpose.msra.mxu0 0
  %81 = vmatpush.bf16.xpose.msra.mxu0 0
  %82 = vmatpush.bf16.xpose.msra.mxu0 0
  %83 = vmatpush.bf16.xpose.msra.mxu0 0
  %84 = vmatpush.bf16.xpose.msra.mxu0 %v75
  %85 = vmatmul.bf16.gmra.mxu0 %v72
  %v86 = vpop.f32.mrf.mxu0
  %v87 = vadd.f32 0.0, %v86
  %v88 = vpop.f32.mrf.mxu0
  %89 = vdwg.mxu0
  %91 = vst [vmem:[#allocation1] ss:$9 sm:$0xff] %v12
  %v92 = vld [vmem:[#allocation1] sm:$0xff]
  %94 = vrot.lane.b32.xlu0 %v92, 96
  %v95 = vpop.permute.xlu0 %94
  %v96 = vsel %vm23, %v12, 0
  %v99 = vsel %vm23, %v95, 0
  %101 = vmatpush.bf16.xpose.msra.mxu0 0
  %102 = vmatpush.bf16.xpose.msra.mxu0 0
  %103 = vmatpush.bf16.xpose.msra.mxu0 0
  %104 = vmatpush.bf16.xpose.msra.mxu0 0
  %105 = vmatpush.bf16.xpose.msra.mxu0 0
  %106 = vmatpush.bf16.xpose.msra.mxu0 0
  %107 = vmatpush.bf16.xpose.msra.mxu0 0
  %108 = vmatpush.bf16.xpose.msra.mxu0 %v99
  %109 = vmatmul.bf16.gmra.mxu0 %v96
  %v110 = vpop.f32.mrf.mxu0
  %v111 = vadd.f32 0.0, %v110
  %v112 = vpop.f32.mrf.mxu0
  %113 = vdwg.mxu0
  %115 = vst [vmem:[#allocation1] ss:$9 sm:$0xff] %v13
  %v116 = vld [vmem:[#allocation1] sm:$0xff]
  %118 = vrot.lane.b32.xlu0 %v116, 96
  %v119 = vpop.permute.xlu0 %118
  %v120 = vsel %vm23, %v13, 0
  %v123 = vsel %vm23, %v119, 0
  %125 = vmatpush.bf16.xpose.msra.mxu0 0
  %126 = vmatpush.bf16.xpose.msra.mxu0 0
  %127 = vmatpush.bf16.xpose.msra.mxu0 0
  %128 = vmatpush.bf16.xpose.msra.mxu0 0
  %129 = vmatpush.bf16.xpose.msra.mxu0 0
  %130 = vmatpush.bf16.xpose.msra.mxu0 0
  %131 = vmatpush.bf16.xpose.msra.mxu0 0
  %132 = vmatpush.bf16.xpose.msra.mxu0 %v123
  %133 = vmatmul.bf16.gmra.mxu0 %v120
  %v134 = vpop.f32.mrf.mxu0
  %v135 = vadd.f32 0.0, %v134
  %v136 = vpop.f32.mrf.mxu0
  %137 = vdwg.mxu0
  %139 = vst [vmem:[#allocation1] ss:$9 sm:$0xff] %v14
  %v140 = vld [vmem:[#allocation1] sm:$0xff]
  %142 = vrot.lane.b32.xlu0 %v140, 96
  %v143 = vpop.permute.xlu0 %142
  %v144 = vsel %vm23, %v14, 0
  %v147 = vsel %vm23, %v143, 0
  %149 = vmatpush.bf16.xpose.msra.mxu0 0
  %150 = vmatpush.bf16.xpose.msra.mxu0 0
  %151 = vmatpush.bf16.xpose.msra.mxu0 0
  %152 = vmatpush.bf16.xpose.msra.mxu0 0
  %153 = vmatpush.bf16.xpose.msra.mxu0 0
  %154 = vmatpush.bf16.xpose.msra.mxu0 0
  %155 = vmatpush.bf16.xpose.msra.mxu0 0
  %156 = vmatpush.bf16.xpose.msra.mxu0 %v147
  %157 = vmatmul.bf16.gmra.mxu0 %v144
  %v158 = vpop.f32.mrf.mxu0
  %v159 = vadd.f32 0.0, %v158
  %v160 = vpop.f32.mrf.mxu0
  %161 = vdwg.mxu0
  %163 = vst [vmem:[#allocation1] ss:$9 sm:$0xff] %v15
  %v164 = vld [vmem:[#allocation1] sm:$0xff]
  %166 = vrot.lane.b32.xlu0 %v164, 96
  %v167 = vpop.permute.xlu0 %166
  %v168 = vsel %vm23, %v15, 0
  %v171 = vsel %vm23, %v167, 0
  %173 = vmatpush.bf16.xpose.msra.mxu0 0
  %174 = vmatpush.bf16.xpose.msra.mxu0 0
  %175 = vmatpush.bf16.xpose.msra.mxu0 0
  %176 = vmatpush.bf16.xpose.msra.mxu0 0
  %177 = vmatpush.bf16.xpose.msra.mxu0 0
  %178 = vmatpush.bf16.xpose.msra.mxu0 0
  %179 = vmatpush.bf16.xpose.msra.mxu0 0
  %180 = vmatpush.bf16.xpose.msra.mxu0 %v171
  %181 = vmatmul.bf16.gmra.mxu0 %v168
  %v182 = vpop.f32.mrf.mxu0
  %v183 = vadd.f32 0.0, %v182
  %v184 = vpop.f32.mrf.mxu0
  %185 = vdwg.mxu0
  %187 = vst [vmem:[#allocation1] ss:$9 sm:$0xff] %v16
  %v188 = vld [vmem:[#allocation1] sm:$0xff]
  %190 = vrot.lane.b32.xlu0 %v188, 96
  %v191 = vpop.permute.xlu0 %190
  %v192 = vsel %vm23, %v16, 0
  %v195 = vsel %vm23, %v191, 0
  %197 = vmatpush.bf16.xpose.msra.mxu0 0
  %198 = vmatpush.bf16.xpose.msra.mxu0 0
  %199 = vmatpush.bf16.xpose.msra.mxu0 0
  %200 = vmatpush.bf16.xpose.msra.mxu0 0
  %201 = vmatpush.bf16.xpose.msra.mxu0 0
  %202 = vmatpush.bf16.xpose.msra.mxu0 0
  %203 = vmatpush.bf16.xpose.msra.mxu0 0
  %204 = vmatpush.bf16.xpose.msra.mxu0 %v195
  %205 = vmatmul.bf16.gmra.mxu0 %v192
  %v206 = vpop.f32.mrf.mxu0
  %v207 = vadd.f32 0.0, %v206
  %v208 = vpop.f32.mrf.mxu0
  %209 = vdwg.mxu0
  %vm210 = vcmask 9216
  %v211 = vsel %vm210, %v39, -inf
  %212 = vmax.xlane.f32.xlu0 %v211
  %v213 = vpop.xlane.xlu0 %212
  %v214 = vsel %vm210, %v63, -inf
  %215 = vmax.xlane.f32.xlu0 %v214
  %v216 = vpop.xlane.xlu0 %215
  %v217 = vsel %vm210, %v87, -inf
  %218 = vmax.xlane.f32.xlu0 %v217
  %v219 = vpop.xlane.xlu0 %218
  %v220 = vsel %vm210, %v111, -inf
  %221 = vmax.xlane.f32.xlu0 %v220
  %v222 = vpop.xlane.xlu0 %221
  %v223 = vsel %vm210, %v135, -inf
  %224 = vmax.xlane.f32.xlu0 %v223
  %v225 = vpop.xlane.xlu0 %224
  %v226 = vsel %vm210, %v159, -inf
  %227 = vmax.xlane.f32.xlu0 %v226
  %v228 = vpop.xlane.xlu0 %227
  %v229 = vsel %vm210, %v183, -inf
  %230 = vmax.xlane.f32.xlu0 %v229
  %v231 = vpop.xlane.xlu0 %230
  %v232 = vsel %vm210, %v207, -inf
  %233 = vmax.xlane.f32.xlu0 %v232
  %v234 = vpop.xlane.xlu0 %233
  %v235 = vsub.f32 %v39, %v213
  %v236 = vsub.f32 %v63, %v216
  %v237 = vsub.f32 %v87, %v219
  %v238 = vsub.f32 %v111, %v222
  %v239 = vsub.f32 %v135, %v225
  %v240 = vsub.f32 %v159, %v228
  %v241 = vsub.f32 %v183, %v231
  %v242 = vsub.f32 %v207, %v234
  %v243 = vmul.f32 %v235, 1.442695
  %v244 = vpow.pop %v243
  %v245 = vmul.f32 %v236, 1.442695
  %v246 = vpow.pop %v245
  %v247 = vmul.f32 %v237, 1.442695
  %v248 = vpow.pop %v247
  %v249 = vmul.f32 %v238, 1.442695
  %v250 = vpow.pop %v249
  %v251 = vmul.f32 %v239, 1.442695
  %v252 = vpow.pop %v251
  %v253 = vmul.f32 %v240, 1.442695
  %v254 = vpow.pop %v253
  %v255 = vmul.f32 %v241, 1.442695
  %v256 = vpow.pop %v255
  %v257 = vmul.f32 %v242, 1.442695
  %v258 = vpow.pop %v257
  %v259 = vsel %vm210, %v244, 0.0
  %260 = vadd.xlane.f32.xlu0 %v259
  %v261 = vpop.xlane.xlu0 %260
  %v262 = vsel %vm210, %v246, 0.0
  %263 = vadd.xlane.f32.xlu0 %v262
  %v264 = vpop.xlane.xlu0 %263
  %v265 = vsel %vm210, %v248, 0.0
  %266 = vadd.xlane.f32.xlu0 %v265
  %v267 = vpop.xlane.xlu0 %266
  %v268 = vsel %vm210, %v250, 0.0
  %269 = vadd.xlane.f32.xlu0 %v268
  %v270 = vpop.xlane.xlu0 %269
  %v271 = vsel %vm210, %v252, 0.0
  %272 = vadd.xlane.f32.xlu0 %v271
  %v273 = vpop.xlane.xlu0 %272
  %v274 = vsel %vm210, %v254, 0.0
  %275 = vadd.xlane.f32.xlu0 %v274
  %v276 = vpop.xlane.xlu0 %275
  %v277 = vsel %vm210, %v256, 0.0
  %278 = vadd.xlane.f32.xlu0 %v277
  %v279 = vpop.xlane.xlu0 %278
  %v280 = vsel %vm210, %v258, 0.0
  %281 = vadd.xlane.f32.xlu0 %v280
  %v282 = vpop.xlane.xlu0 %281
  %v283 = vrcp.pop %v261
  %v284 = vrcp.pop %v264
  %v285 = vrcp.pop %v267
  %v286 = vrcp.pop %v270
  %v287 = vrcp.pop %v273
  %v288 = vrcp.pop %v276
  %v289 = vrcp.pop %v279
  %v290 = vrcp.pop %v282
  %v291 = vmul.f32 %v244, %v283
  %v292 = vmul.f32 %v246, %v284
  %v293 = vmul.f32 %v248, %v285
  %v294 = vmul.f32 %v250, %v286
  %v295 = vmul.f32 %v252, %v287
  %v296 = vmul.f32 %v254, %v288
  %v297 = vmul.f32 %v256, %v289
  %v298 = vmul.f32 %v258, %v290
  %v299 = vpack.c.bf16 %v291, %v291
  %v300 = vpack.c.bf16 %v292, %v292
  %v301 = vpack.c.bf16 %v293, %v293
  %v302 = vpack.c.bf16 %v294, %v294
  %v303 = vpack.c.bf16 %v295, %v295
  %v304 = vpack.c.bf16 %v296, %v296
  %v305 = vpack.c.bf16 %v297, %v297
  %v306 = vpack.c.bf16 %v298, %v298
  %307 = vst [vmem:[#allocation1] ss:$9 sm:$0xff] %v9
  %v308 = vld [vmem:[#allocation1] sm:$0xff]
  %310 = vrot.lane.b32.xlu0 %v308, 64
  %v311 = vpop.permute.xlu0 %310
  %vm312 = vcmask 15360
  %v314 = vsel %vm312, %v299, 0
  %vm316 = vcmask 1040384
  %v318 = vsel %vm316, %v311, 0
  %320 = vmatpush.bf16.msra.mxu0 0
  %321 = vmatpush.bf16.msra.mxu0 0
  %322 = vmatpush.bf16.msra.mxu0 0
  %323 = vmatpush.bf16.msra.mxu0 0
  %324 = vmatpush.bf16.msra.mxu0 0
  %325 = vmatpush.bf16.msra.mxu0 0
  %326 = vmatpush.bf16.msra.mxu0 0
  %327 = vmatpush.bf16.msra.mxu0 %v318
  %328 = vmatmul.bf16.gmra.mxu0 %v314
  %v329 = vpop.f32.mrf.mxu0
  %v330 = vadd.f32 0.0, %v329
  %v331 = vpop.f32.mrf.mxu0
  %332 = vdwg.mxu0
  %333 = vst [vmem:[#allocation1] ss:$9 sm:$0xff] %v10
  %v334 = vld [vmem:[#allocation1] sm:$0xff]
  %336 = vrot.lane.b32.xlu0 %v334, 64
  %v337 = vpop.permute.xlu0 %336
  %v339 = vsel %vm312, %v300, 0
  %v342 = vsel %vm316, %v337, 0
  %344 = vmatpush.bf16.msra.mxu0 0
  %345 = vmatpush.bf16.msra.mxu0 0
  %346 = vmatpush.bf16.msra.mxu0 0
  %347 = vmatpush.bf16.msra.mxu0 0
  %348 = vmatpush.bf16.msra.mxu0 0
  %349 = vmatpush.bf16.msra.mxu0 0
  %350 = vmatpush.bf16.msra.mxu0 0
  %351 = vmatpush.bf16.msra.mxu0 %v342
  %352 = vmatmul.bf16.gmra.mxu0 %v339
  %v353 = vpop.f32.mrf.mxu0
  %v354 = vadd.f32 0.0, %v353
  %v355 = vpop.f32.mrf.mxu0
  %356 = vdwg.mxu0
  %357 = vst [vmem:[#allocation1] ss:$9 sm:$0xff] %v11
  %v358 = vld [vmem:[#allocation1] sm:$0xff]
  %360 = vrot.lane.b32.xlu0 %v358, 64
  %v361 = vpop.permute.xlu0 %360
  %v363 = vsel %vm312, %v301, 0
  %v366 = vsel %vm316, %v361, 0
  %368 = vmatpush.bf16.msra.mxu0 0
  %369 = vmatpush.bf16.msra.mxu0 0
  %370 = vmatpush.bf16.msra.mxu0 0
  %371 = vmatpush.bf16.msra.mxu0 0
  %372 = vmatpush.bf16.msra.mxu0 0
  %373 = vmatpush.bf16.msra.mxu0 0
  %374 = vmatpush.bf16.msra.mxu0 0
  %375 = vmatpush.bf16.msra.mxu0 %v366
  %376 = vmatmul.bf16.gmra.mxu0 %v363
  %v377 = vpop.f32.mrf.mxu0
  %v378 = vadd.f32 0.0, %v377
  %v379 = vpop.f32.mrf.mxu0
  %380 = vdwg.mxu0
  %381 = vst [vmem:[#allocation1] ss:$9 sm:$0xff] %v12
  %v382 = vld [vmem:[#allocation1] sm:$0xff]
  %384 = vrot.lane.b32.xlu0 %v382, 64
  %v385 = vpop.permute.xlu0 %384
  %v387 = vsel %vm312, %v302, 0
  %v390 = vsel %vm316, %v385, 0
  %392 = vmatpush.bf16.msra.mxu0 0
  %393 = vmatpush.bf16.msra.mxu0 0
  %394 = vmatpush.bf16.msra.mxu0 0
  %395 = vmatpush.bf16.msra.mxu0 0
  %396 = vmatpush.bf16.msra.mxu0 0
  %397 = vmatpush.bf16.msra.mxu0 0
  %398 = vmatpush.bf16.msra.mxu0 0
  %399 = vmatpush.bf16.msra.mxu0 %v390
  %400 = vmatmul.bf16.gmra.mxu0 %v387
  %v401 = vpop.f32.mrf.mxu0
  %v402 = vadd.f32 0.0, %v401
  %v403 = vpop.f32.mrf.mxu0
  %404 = vdwg.mxu0
  %405 = vst [vmem:[#allocation1] ss:$9 sm:$0xff] %v13
  %v406 = vld [vmem:[#allocation1] sm:$0xff]
  %408 = vrot.lane.b32.xlu0 %v406, 64
  %v409 = vpop.permute.xlu0 %408
  %v411 = vsel %vm312, %v303, 0
  %v414 = vsel %vm316, %v409, 0
  %416 = vmatpush.bf16.msra.mxu0 0
  %417 = vmatpush.bf16.msra.mxu0 0
  %418 = vmatpush.bf16.msra.mxu0 0
  %419 = vmatpush.bf16.msra.mxu0 0
  %420 = vmatpush.bf16.msra.mxu0 0
  %421 = vmatpush.bf16.msra.mxu0 0
  %422 = vmatpush.bf16.msra.mxu0 0
  %423 = vmatpush.bf16.msra.mxu0 %v414
  %424 = vmatmul.bf16.gmra.mxu0 %v411
  %v425 = vpop.f32.mrf.mxu0
  %v426 = vadd.f32 0.0, %v425
  %v427 = vpop.f32.mrf.mxu0
  %428 = vdwg.mxu0
  %429 = vst [vmem:[#allocation1] ss:$9 sm:$0xff] %v14
  %v430 = vld [vmem:[#allocation1] sm:$0xff]
  %432 = vrot.lane.b32.xlu0 %v430, 64
  %v433 = vpop.permute.xlu0 %432
  %v435 = vsel %vm312, %v304, 0
  %v438 = vsel %vm316, %v433, 0
  %440 = vmatpush.bf16.msra.mxu0 0
  %441 = vmatpush.bf16.msra.mxu0 0
  %442 = vmatpush.bf16.msra.mxu0 0
  %443 = vmatpush.bf16.msra.mxu0 0
  %444 = vmatpush.bf16.msra.mxu0 0
  %445 = vmatpush.bf16.msra.mxu0 0
  %446 = vmatpush.bf16.msra.mxu0 0
  %447 = vmatpush.bf16.msra.mxu0 %v438
  %448 = vmatmul.bf16.gmra.mxu0 %v435
  %v449 = vpop.f32.mrf.mxu0
  %v450 = vadd.f32 0.0, %v449
  %v451 = vpop.f32.mrf.mxu0
  %452 = vdwg.mxu0
  %453 = vst [vmem:[#allocation1] ss:$9 sm:$0xff] %v15
  %v454 = vld [vmem:[#allocation1] sm:$0xff]
  %456 = vrot.lane.b32.xlu0 %v454, 64
  %v457 = vpop.permute.xlu0 %456
  %v459 = vsel %vm312, %v305, 0
  %v462 = vsel %vm316, %v457, 0
  %464 = vmatpush.bf16.msra.mxu0 0
  %465 = vmatpush.bf16.msra.mxu0 0
  %466 = vmatpush.bf16.msra.mxu0 0
  %467 = vmatpush.bf16.msra.mxu0 0
  %468 = vmatpush.bf16.msra.mxu0 0
  %469 = vmatpush.bf16.msra.mxu0 0
  %470 = vmatpush.bf16.msra.mxu0 0
  %471 = vmatpush.bf16.msra.mxu0 %v462
  %472 = vmatmul.bf16.gmra.mxu0 %v459
  %v473 = vpop.f32.mrf.mxu0
  %v474 = vadd.f32 0.0, %v473
  %v475 = vpop.f32.mrf.mxu0
  %476 = vdwg.mxu0
  %477 = vst [vmem:[#allocation1] ss:$9 sm:$0xff] %v16
  %v478 = vld [vmem:[#allocation1] sm:$0xff]
  %480 = vrot.lane.b32.xlu0 %v478, 64
  %v481 = vpop.permute.xlu0 %480
  %v483 = vsel %vm312, %v306, 0
  %v486 = vsel %vm316, %v481, 0
  %488 = vmatpush.bf16.msra.mxu0 0
  %489 = vmatpush.bf16.msra.mxu0 0
  %490 = vmatpush.bf16.msra.mxu0 0
  %491 = vmatpush.bf16.msra.mxu0 0
  %492 = vmatpush.bf16.msra.mxu0 0
  %493 = vmatpush.bf16.msra.mxu0 0
  %494 = vmatpush.bf16.msra.mxu0 0
  %495 = vmatpush.bf16.msra.mxu0 %v486
  %496 = vmatmul.bf16.gmra.mxu0 %v483
  %v497 = vpop.f32.mrf.mxu0
  %v498 = vadd.f32 0.0, %v497
  %v499 = vpop.f32.mrf.mxu0
  %500 = vdwg.mxu0
  %v501 = vpack.c.bf16 %v330, %v330
  %v502 = vpack.c.bf16 %v354, %v354
  %v503 = vpack.c.bf16 %v378, %v378
  %v504 = vpack.c.bf16 %v402, %v402
  %v505 = vpack.c.bf16 %v426, %v426
  %v506 = vpack.c.bf16 %v450, %v450
  %v507 = vpack.c.bf16 %v474, %v474
  %v508 = vpack.c.bf16 %v498, %v498
  %vm509 = vcmask 57344
  %510 = vst.msk [vmem:[%s1] sm:$0x1] %vm509, %v501
  %511 = vst.msk [vmem:[%s1 + $0x1] sm:$0x1] %vm509, %v502
  %512 = vst.msk [vmem:[%s1 + $0x2] sm:$0x1] %vm509, %v503
  %513 = vst.msk [vmem:[%s1 + $0x3] sm:$0x1] %vm509, %v504
  %514 = vst.msk [vmem:[%s1 + $0x4] sm:$0x1] %vm509, %v505
  %515 = vst.msk [vmem:[%s1 + $0x5] sm:$0x1] %vm509, %v506
  %516 = vst.msk [vmem:[%s1 + $0x6] sm:$0x1] %vm509, %v507
  %517 = vst.msk [vmem:[%s1 + $0x7] sm:$0x1] %vm509, %v508
  %518 = vst [vmem:[#allocation1] ss:$9 sm:$0xff] %v9
  %v519 = vld [vmem:[#allocation1] sm:$0xff]
  %521 = vrot.lane.b32.xlu0 %v519, 120
  %v522 = vpop.permute.xlu0 %521
  %523 = vst [vmem:[#allocation1] ss:$9 sm:$0xff] %v9
  %v524 = vld [vmem:[#allocation1] sm:$0xff]
  %526 = vrot.lane.b32.xlu0 %v524, 88
  %v527 = vpop.permute.xlu0 %526
  %v529 = vsel %vm23, %v522, 0
  %v532 = vsel %vm23, %v527, 0
  %534 = vmatpush.bf16.xpose.msra.mxu0 0
  %535 = vmatpush.bf16.xpose.msra.mxu0 0
  %536 = vmatpush.bf16.xpose.msra.mxu0 0
  %537 = vmatpush.bf16.xpose.msra.mxu0 0
  %538 = vmatpush.bf16.xpose.msra.mxu0 0
  %539 = vmatpush.bf16.xpose.msra.mxu0 0
  %540 = vmatpush.bf16.xpose.msra.mxu0 0
  %541 = vmatpush.bf16.xpose.msra.mxu0 %v532
  %542 = vmatmul.bf16.gmra.mxu0 %v529
  %v543 = vpop.f32.mrf.mxu0
  %v544 = vadd.f32 0.0, %v543
  %v545 = vpop.f32.mrf.mxu0
  %546 = vdwg.mxu0
  %547 = vst [vmem:[#allocation1] ss:$9 sm:$0xff] %v10
  %v548 = vld [vmem:[#allocation1] sm:$0xff]
  %550 = vrot.lane.b32.xlu0 %v548, 120
  %v551 = vpop.permute.xlu0 %550
  %552 = vst [vmem:[#allocation1] ss:$9 sm:$0xff] %v10
  %v553 = vld [vmem:[#allocation1] sm:$0xff]
  %555 = vrot.lane.b32.xlu0 %v553, 88
  %v556 = vpop.permute.xlu0 %555
  %v558 = vsel %vm23, %v551, 0
  %v561 = vsel %vm23, %v556, 0
  %563 = vmatpush.bf16.xpose.msra.mxu0 0
  %564 = vmatpush.bf16.xpose.msra.mxu0 0
  %565 = vmatpush.bf16.xpose.msra.mxu0 0
  %566 = vmatpush.bf16.xpose.msra.mxu0 0
  %567 = vmatpush.bf16.xpose.msra.mxu0 0
  %568 = vmatpush.bf16.xpose.msra.mxu0 0
  %569 = vmatpush.bf16.xpose.msra.mxu0 0
  %570 = vmatpush.bf16.xpose.msra.mxu0 %v561
  %571 = vmatmul.bf16.gmra.mxu0 %v558
  %v572 = vpop.f32.mrf.mxu0
  %v573 = vadd.f32 0.0, %v572
  %v574 = vpop.f32.mrf.mxu0
  %575 = vdwg.mxu0
  %576 = vst [vmem:[#allocation1] ss:$9 sm:$0xff] %v11
  %v577 = vld [vmem:[#allocation1] sm:$0xff]
  %579 = vrot.lane.b32.xlu0 %v577, 120
  %v580 = vpop.permute.xlu0 %579
  %581 = vst [vmem:[#allocation1] ss:$9 sm:$0xff] %v11
  %v582 = vld [vmem:[#allocation1] sm:$0xff]
  %584 = vrot.lane.b32.xlu0 %v582, 88
  %v585 = vpop.permute.xlu0 %584
  %v587 = vsel %vm23, %v580, 0
  %v590 = vsel %vm23, %v585, 0
  %592 = vmatpush.bf16.xpose.msra.mxu0 0
  %593 = vmatpush.bf16.xpose.msra.mxu0 0
  %594 = vmatpush.bf16.xpose.msra.mxu0 0
  %595 = vmatpush.bf16.xpose.msra.mxu0 0
  %596 = vmatpush.bf16.xpose.msra.mxu0 0
  %597 = vmatpush.bf16.xpose.msra.mxu0 0
  %598 = vmatpush.bf16.xpose.msra.mxu0 0
  %599 = vmatpush.bf16.xpose.msra.mxu0 %v590
  %600 = vmatmul.bf16.gmra.mxu0 %v587
  %v601 = vpop.f32.mrf.mxu0
  %v602 = vadd.f32 0.0, %v601
  %v603 = vpop.f32.mrf.mxu0
  %604 = vdwg.mxu0
  %605 = vst [vmem:[#allocation1] ss:$9 sm:$0xff] %v12
  %v606 = vld [vmem:[#allocation1] sm:$0xff]
  %608 = vrot.lane.b32.xlu0 %v606, 120
  %v609 = vpop.permute.xlu0 %608
  %610 = vst [vmem:[#allocation1] ss:$9 sm:$0xff] %v12
  %v611 = vld [vmem:[#allocation1] sm:$0xff]
  %613 = vrot.lane.b32.xlu0 %v611, 88
  %v614 = vpop.permute.xlu0 %613
  %v616 = vsel %vm23, %v609, 0
  %v619 = vsel %vm23, %v614, 0
  %621 = vmatpush.bf16.xpose.msra.mxu0 0
  %622 = vmatpush.bf16.xpose.msra.mxu0 0
  %623 = vmatpush.bf16.xpose.msra.mxu0 0
  %624 = vmatpush.bf16.xpose.msra.mxu0 0
  %625 = vmatpush.bf16.xpose.msra.mxu0 0
  %626 = vmatpush.bf16.xpose.msra.mxu0 0
  %627 = vmatpush.bf16.xpose.msra.mxu0 0
  %628 = vmatpush.bf16.xpose.msra.mxu0 %v619
  %629 = vmatmul.bf16.gmra.mxu0 %v616
  %v630 = vpop.f32.mrf.mxu0
  %v631 = vadd.f32 0.0, %v630
  %v632 = vpop.f32.mrf.mxu0
  %633 = vdwg.mxu0
  %634 = vst [vmem:[#allocation1] ss:$9 sm:$0xff] %v13
  %v635 = vld [vmem:[#allocation1] sm:$0xff]
  %637 = vrot.lane.b32.xlu0 %v635, 120
  %v638 = vpop.permute.xlu0 %637
  %639 = vst [vmem:[#allocation1] ss:$9 sm:$0xff] %v13
  %v640 = vld [vmem:[#allocation1] sm:$0xff]
  %642 = vrot.lane.b32.xlu0 %v640, 88
  %v643 = vpop.permute.xlu0 %642
  %v645 = vsel %vm23, %v638, 0
  %v648 = vsel %vm23, %v643, 0
  %650 = vmatpush.bf16.xpose.msra.mxu0 0
  %651 = vmatpush.bf16.xpose.msra.mxu0 0
  %652 = vmatpush.bf16.xpose.msra.mxu0 0
  %653 = vmatpush.bf16.xpose.msra.mxu0 0
  %654 = vmatpush.bf16.xpose.msra.mxu0 0
  %655 = vmatpush.bf16.xpose.msra.mxu0 0
  %656 = vmatpush.bf16.xpose.msra.mxu0 0
  %657 = vmatpush.bf16.xpose.msra.mxu0 %v648
  %658 = vmatmul.bf16.gmra.mxu0 %v645
  %v659 = vpop.f32.mrf.mxu0
  %v660 = vadd.f32 0.0, %v659
  %v661 = vpop.f32.mrf.mxu0
  %662 = vdwg.mxu0
  %663 = vst [vmem:[#allocation1] ss:$9 sm:$0xff] %v14
  %v664 = vld [vmem:[#allocation1] sm:$0xff]
  %666 = vrot.lane.b32.xlu0 %v664, 120
  %v667 = vpop.permute.xlu0 %666
  %668 = vst [vmem:[#allocation1] ss:$9 sm:$0xff] %v14
  %v669 = vld [vmem:[#allocation1] sm:$0xff]
  %671 = vrot.lane.b32.xlu0 %v669, 88
  %v672 = vpop.permute.xlu0 %671
  %v674 = vsel %vm23, %v667, 0
  %v677 = vsel %vm23, %v672, 0
  %679 = vmatpush.bf16.xpose.msra.mxu0 0
  %680 = vmatpush.bf16.xpose.msra.mxu0 0
  %681 = vmatpush.bf16.xpose.msra.mxu0 0
  %682 = vmatpush.bf16.xpose.msra.mxu0 0
  %683 = vmatpush.bf16.xpose.msra.mxu0 0
  %684 = vmatpush.bf16.xpose.msra.mxu0 0
  %685 = vmatpush.bf16.xpose.msra.mxu0 0
  %686 = vmatpush.bf16.xpose.msra.mxu0 %v677
  %687 = vmatmul.bf16.gmra.mxu0 %v674
  %v688 = vpop.f32.mrf.mxu0
  %v689 = vadd.f32 0.0, %v688
  %v690 = vpop.f32.mrf.mxu0
  %691 = vdwg.mxu0
  %692 = vst [vmem:[#allocation1] ss:$9 sm:$0xff] %v15
  %v693 = vld [vmem:[#allocation1] sm:$0xff]
  %695 = vrot.lane.b32.xlu0 %v693, 120
  %v696 = vpop.permute.xlu0 %695
  %697 = vst [vmem:[#allocation1] ss:$9 sm:$0xff] %v15
  %v698 = vld [vmem:[#allocation1] sm:$0xff]
  %700 = vrot.lane.b32.xlu0 %v698, 88
  %v701 = vpop.permute.xlu0 %700
  %v703 = vsel %vm23, %v696, 0
  %v706 = vsel %vm23, %v701, 0
  %708 = vmatpush.bf16.xpose.msra.mxu0 0
  %709 = vmatpush.bf16.xpose.msra.mxu0 0
  %710 = vmatpush.bf16.xpose.msra.mxu0 0
  %711 = vmatpush.bf16.xpose.msra.mxu0 0
  %712 = vmatpush.bf16.xpose.msra.mxu0 0
  %713 = vmatpush.bf16.xpose.msra.mxu0 0
  %714 = vmatpush.bf16.xpose.msra.mxu0 0
  %715 = vmatpush.bf16.xpose.msra.mxu0 %v706
  %716 = vmatmul.bf16.gmra.mxu0 %v703
  %v717 = vpop.f32.mrf.mxu0
  %v718 = vadd.f32 0.0, %v717
  %v719 = vpop.f32.mrf.mxu0
  %720 = vdwg.mxu0
  %721 = vst [vmem:[#allocation1] ss:$9 sm:$0xff] %v16
  %v722 = vld [vmem:[#allocation1] sm:$0xff]
  %724 = vrot.lane.b32.xlu0 %v722, 120
  %v725 = vpop.permute.xlu0 %724
  %726 = vst [vmem:[#allocation1] ss:$9 sm:$0xff] %v16
  %v727 = vld [vmem:[#allocation1] sm:$0xff]
  %729 = vrot.lane.b32.xlu0 %v727, 88
  %v730 = vpop.permute.xlu0 %729
  %v732 = vsel %vm23, %v725, 0
  %v735 = vsel %vm23, %v730, 0
  %737 = vmatpush.bf16.xpose.msra.mxu0 0
  %738 = vmatpush.bf16.xpose.msra.mxu0 0
  %739 = vmatpush.bf16.xpose.msra.mxu0 0
  %740 = vmatpush.bf16.xpose.msra.mxu0 0
  %741 = vmatpush.bf16.xpose.msra.mxu0 0
  %742 = vmatpush.bf16.xpose.msra.mxu0 0
  %743 = vmatpush.bf16.xpose.msra.mxu0 0
  %744 = vmatpush.bf16.xpose.msra.mxu0 %v735
  %745 = vmatmul.bf16.gmra.mxu0 %v732
  %v746 = vpop.f32.mrf.mxu0
  %v747 = vadd.f32 0.0, %v746
  %v748 = vpop.f32.mrf.mxu0
  %749 = vdwg.mxu0
  %v750 = vsel %vm210, %v544, -inf
  %751 = vmax.xlane.f32.xlu0 %v750
  %v752 = vpop.xlane.xlu0 %751
  %v753 = vsel %vm210, %v573, -inf
  %754 = vmax.xlane.f32.xlu0 %v753
  %v755 = vpop.xlane.xlu0 %754
  %v756 = vsel %vm210, %v602, -inf
  %757 = vmax.xlane.f32.xlu0 %v756
  %v758 = vpop.xlane.xlu0 %757
  %v759 = vsel %vm210, %v631, -inf
  %760 = vmax.xlane.f32.xlu0 %v759
  %v761 = vpop.xlane.xlu0 %760
  %v762 = vsel %vm210, %v660, -inf
  %763 = vmax.xlane.f32.xlu0 %v762
  %v764 = vpop.xlane.xlu0 %763
  %v765 = vsel %vm210, %v689, -inf
  %766 = vmax.xlane.f32.xlu0 %v765
  %v767 = vpop.xlane.xlu0 %766
  %v768 = vsel %vm210, %v718, -inf
  %769 = vmax.xlane.f32.xlu0 %v768
  %v770 = vpop.xlane.xlu0 %769
  %v771 = vsel %vm210, %v747, -inf
  %772 = vmax.xlane.f32.xlu0 %v771
  %v773 = vpop.xlane.xlu0 %772
  %v774 = vsub.f32 %v544, %v752
  %v775 = vsub.f32 %v573, %v755
  %v776 = vsub.f32 %v602, %v758
  %v777 = vsub.f32 %v631, %v761
  %v778 = vsub.f32 %v660, %v764
  %v779 = vsub.f32 %v689, %v767
  %v780 = vsub.f32 %v718, %v770
  %v781 = vsub.f32 %v747, %v773
  %v782 = vmul.f32 %v774, 1.442695
  %v783 = vpow.pop %v782
  %v784 = vmul.f32 %v775, 1.442695
  %v785 = vpow.pop %v784
  %v786 = vmul.f32 %v776, 1.442695
  %v787 = vpow.pop %v786
  %v788 = vmul.f32 %v777, 1.442695
  %v789 = vpow.pop %v788
  %v790 = vmul.f32 %v778, 1.442695
  %v791 = vpow.pop %v790
  %v792 = vmul.f32 %v779, 1.442695
  %v793 = vpow.pop %v792
  %v794 = vmul.f32 %v780, 1.442695
  %v795 = vpow.pop %v794
  %v796 = vmul.f32 %v781, 1.442695
  %v797 = vpow.pop %v796
  %v798 = vsel %vm210, %v783, 0.0
  %799 = vadd.xlane.f32.xlu0 %v798
  %v800 = vpop.xlane.xlu0 %799
  %v801 = vsel %vm210, %v785, 0.0
  %802 = vadd.xlane.f32.xlu0 %v801
  %v803 = vpop.xlane.xlu0 %802
  %v804 = vsel %vm210, %v787, 0.0
  %805 = vadd.xlane.f32.xlu0 %v804
  %v806 = vpop.xlane.xlu0 %805
  %v807 = vsel %vm210, %v789, 0.0
  %808 = vadd.xlane.f32.xlu0 %v807
  %v809 = vpop.xlane.xlu0 %808
  %v810 = vsel %vm210, %v791, 0.0
  %811 = vadd.xlane.f32.xlu0 %v810
  %v812 = vpop.xlane.xlu0 %811
  %v813 = vsel %vm210, %v793, 0.0
  %814 = vadd.xlane.f32.xlu0 %v813
  %v815 = vpop.xlane.xlu0 %814
  %v816 = vsel %vm210, %v795, 0.0
  %817 = vadd.xlane.f32.xlu0 %v816
  %v818 = vpop.xlane.xlu0 %817
  %v819 = vsel %vm210, %v797, 0.0
  %820 = vadd.xlane.f32.xlu0 %v819
  %v821 = vpop.xlane.xlu0 %820
  %v822 = vrcp.pop %v800
  %v823 = vrcp.pop %v803
  %v824 = vrcp.pop %v806
  %v825 = vrcp.pop %v809
  %v826 = vrcp.pop %v812
  %v827 = vrcp.pop %v815
  %v828 = vrcp.pop %v818
  %v829 = vrcp.pop %v821
  %v830 = vmul.f32 %v783, %v822
  %v831 = vmul.f32 %v785, %v823
  %v832 = vmul.f32 %v787, %v824
  %v833 = vmul.f32 %v789, %v825
  %v834 = vmul.f32 %v791, %v826
  %v835 = vmul.f32 %v793, %v827
  %v836 = vmul.f32 %v795, %v828
  %v837 = vmul.f32 %v797, %v829
  %v838 = vpack.c.bf16 %v830, %v830
  %v839 = vpack.c.bf16 %v831, %v831
  %v840 = vpack.c.bf16 %v832, %v832
  %v841 = vpack.c.bf16 %v833, %v833
  %v842 = vpack.c.bf16 %v834, %v834
  %v843 = vpack.c.bf16 %v835, %v835
  %v844 = vpack.c.bf16 %v836, %v836
  %v845 = vpack.c.bf16 %v837, %v837
  %846 = vst [vmem:[#allocation1] ss:$9 sm:$0xff] %v9
  %v847 = vld [vmem:[#allocation1] sm:$0xff]
  %849 = vrot.lane.b32.xlu0 %v847, 56
  %v850 = vpop.permute.xlu0 %849
  %v852 = vsel %vm312, %v838, 0
  %v855 = vsel %vm316, %v850, 0
  %857 = vmatpush.bf16.msra.mxu0 0
  %858 = vmatpush.bf16.msra.mxu0 0
  %859 = vmatpush.bf16.msra.mxu0 0
  %860 = vmatpush.bf16.msra.mxu0 0
  %861 = vmatpush.bf16.msra.mxu0 0
  %862 = vmatpush.bf16.msra.mxu0 0
  %863 = vmatpush.bf16.msra.mxu0 0
  %864 = vmatpush.bf16.msra.mxu0 %v855
  %865 = vmatmul.bf16.gmra.mxu0 %v852
  %v866 = vpop.f32.mrf.mxu0
  %v867 = vadd.f32 0.0, %v866
  %v868 = vpop.f32.mrf.mxu0
  %869 = vdwg.mxu0
  %870 = vst [vmem:[#allocation1] ss:$9 sm:$0xff] %v10
  %v871 = vld [vmem:[#allocation1] sm:$0xff]
  %873 = vrot.lane.b32.xlu0 %v871, 56
  %v874 = vpop.permute.xlu0 %873
  %v876 = vsel %vm312, %v839, 0
  %v879 = vsel %vm316, %v874, 0
  %881 = vmatpush.bf16.msra.mxu0 0
  %882 = vmatpush.bf16.msra.mxu0 0
  %883 = vmatpush.bf16.msra.mxu0 0
  %884 = vmatpush.bf16.msra.mxu0 0
  %885 = vmatpush.bf16.msra.mxu0 0
  %886 = vmatpush.bf16.msra.mxu0 0
  %887 = vmatpush.bf16.msra.mxu0 0
  %888 = vmatpush.bf16.msra.mxu0 %v879
  %889 = vmatmul.bf16.gmra.mxu0 %v876
  %v890 = vpop.f32.mrf.mxu0
  %v891 = vadd.f32 0.0, %v890
  %v892 = vpop.f32.mrf.mxu0
  %893 = vdwg.mxu0
  %894 = vst [vmem:[#allocation1] ss:$9 sm:$0xff] %v11
  %v895 = vld [vmem:[#allocation1] sm:$0xff]
  %897 = vrot.lane.b32.xlu0 %v895, 56
  %v898 = vpop.permute.xlu0 %897
  %v900 = vsel %vm312, %v840, 0
  %v903 = vsel %vm316, %v898, 0
  %905 = vmatpush.bf16.msra.mxu0 0
  %906 = vmatpush.bf16.msra.mxu0 0
  %907 = vmatpush.bf16.msra.mxu0 0
  %908 = vmatpush.bf16.msra.mxu0 0
  %909 = vmatpush.bf16.msra.mxu0 0
  %910 = vmatpush.bf16.msra.mxu0 0
  %911 = vmatpush.bf16.msra.mxu0 0
  %912 = vmatpush.bf16.msra.mxu0 %v903
  %913 = vmatmul.bf16.gmra.mxu0 %v900
  %v914 = vpop.f32.mrf.mxu0
  %v915 = vadd.f32 0.0, %v914
  %v916 = vpop.f32.mrf.mxu0
  %917 = vdwg.mxu0
  %918 = vst [vmem:[#allocation1] ss:$9 sm:$0xff] %v12
  %v919 = vld [vmem:[#allocation1] sm:$0xff]
  %921 = vrot.lane.b32.xlu0 %v919, 56
  %v922 = vpop.permute.xlu0 %921
  %v924 = vsel %vm312, %v841, 0
  %v927 = vsel %vm316, %v922, 0
  %929 = vmatpush.bf16.msra.mxu0 0
  %930 = vmatpush.bf16.msra.mxu0 0
  %931 = vmatpush.bf16.msra.mxu0 0
  %932 = vmatpush.bf16.msra.mxu0 0
  %933 = vmatpush.bf16.msra.mxu0 0
  %934 = vmatpush.bf16.msra.mxu0 0
  %935 = vmatpush.bf16.msra.mxu0 0
  %936 = vmatpush.bf16.msra.mxu0 %v927
  %937 = vmatmul.bf16.gmra.mxu0 %v924
  %v938 = vpop.f32.mrf.mxu0
  %v939 = vadd.f32 0.0, %v938
  %v940 = vpop.f32.mrf.mxu0
  %941 = vdwg.mxu0
  %942 = vst [vmem:[#allocation1] ss:$9 sm:$0xff] %v13
  %v943 = vld [vmem:[#allocation1] sm:$0xff]
  %945 = vrot.lane.b32.xlu0 %v943, 56
  %v946 = vpop.permute.xlu0 %945
  %v948 = vsel %vm312, %v842, 0
  %v951 = vsel %vm316, %v946, 0
  %953 = vmatpush.bf16.msra.mxu0 0
  %954 = vmatpush.bf16.msra.mxu0 0
  %955 = vmatpush.bf16.msra.mxu0 0
  %956 = vmatpush.bf16.msra.mxu0 0
  %957 = vmatpush.bf16.msra.mxu0 0
  %958 = vmatpush.bf16.msra.mxu0 0
  %959 = vmatpush.bf16.msra.mxu0 0
  %960 = vmatpush.bf16.msra.mxu0 %v951
  %961 = vmatmul.bf16.gmra.mxu0 %v948
  %v962 = vpop.f32.mrf.mxu0
  %v963 = vadd.f32 0.0, %v962
  %v964 = vpop.f32.mrf.mxu0
  %965 = vdwg.mxu0
  %966 = vst [vmem:[#allocation1] ss:$9 sm:$0xff] %v14
  %v967 = vld [vmem:[#allocation1] sm:$0xff]
  %969 = vrot.lane.b32.xlu0 %v967, 56
  %v970 = vpop.permute.xlu0 %969
  %v972 = vsel %vm312, %v843, 0
  %v975 = vsel %vm316, %v970, 0
  %977 = vmatpush.bf16.msra.mxu0 0
  %978 = vmatpush.bf16.msra.mxu0 0
  %979 = vmatpush.bf16.msra.mxu0 0
  %980 = vmatpush.bf16.msra.mxu0 0
  %981 = vmatpush.bf16.msra.mxu0 0
  %982 = vmatpush.bf16.msra.mxu0 0
  %983 = vmatpush.bf16.msra.mxu0 0
  %984 = vmatpush.bf16.msra.mxu0 %v975
  %985 = vmatmul.bf16.gmra.mxu0 %v972
  %v986 = vpop.f32.mrf.mxu0
  %v987 = vadd.f32 0.0, %v986
  %v988 = vpop.f32.mrf.mxu0
  %989 = vdwg.mxu0
  %990 = vst [vmem:[#allocation1] ss:$9 sm:$0xff] %v15
  %v991 = vld [vmem:[#allocation1] sm:$0xff]
  %993 = vrot.lane.b32.xlu0 %v991, 56
  %v994 = vpop.permute.xlu0 %993
  %v996 = vsel %vm312, %v844, 0
  %v999 = vsel %vm316, %v994, 0
  %1001 = vmatpush.bf16.msra.mxu0 0
  %1002 = vmatpush.bf16.msra.mxu0 0
  %1003 = vmatpush.bf16.msra.mxu0 0
  %1004 = vmatpush.bf16.msra.mxu0 0
  %1005 = vmatpush.bf16.msra.mxu0 0
  %1006 = vmatpush.bf16.msra.mxu0 0
  %1007 = vmatpush.bf16.msra.mxu0 0
  %1008 = vmatpush.bf16.msra.mxu0 %v999
  %1009 = vmatmul.bf16.gmra.mxu0 %v996
  %v1010 = vpop.f32.mrf.mxu0
  %v1011 = vadd.f32 0.0, %v1010
  %v1012 = vpop.f32.mrf.mxu0
  %1013 = vdwg.mxu0
  %1014 = vst [vmem:[#allocation1] ss:$9 sm:$0xff] %v16
  %v1015 = vld [vmem:[#allocation1] sm:$0xff]
  %1017 = vrot.lane.b32.xlu0 %v1015, 56
  %v1018 = vpop.permute.xlu0 %1017
  %v1020 = vsel %vm312, %v845, 0
  %v1023 = vsel %vm316, %v1018, 0
  %1025 = vmatpush.bf16.msra.mxu0 0
  %1026 = vmatpush.bf16.msra.mxu0 0
  %1027 = vmatpush.bf16.msra.mxu0 0
  %1028 = vmatpush.bf16.msra.mxu0 0
  %1029 = vmatpush.bf16.msra.mxu0 0
  %1030 = vmatpush.bf16.msra.mxu0 0
  %1031 = vmatpush.bf16.msra.mxu0 0
  %1032 = vmatpush.bf16.msra.mxu0 %v1023
  %1033 = vmatmul.bf16.gmra.mxu0 %v1020
  %v1034 = vpop.f32.mrf.mxu0
  %v1035 = vadd.f32 0.0, %v1034
  %v1036 = vpop.f32.mrf.mxu0
  %1037 = vdwg.mxu0
  %v1038 = vpack.c.bf16 %v867, %v867
  %v1039 = vpack.c.bf16 %v891, %v891
  %v1040 = vpack.c.bf16 %v915, %v915
  %v1041 = vpack.c.bf16 %v939, %v939
  %v1042 = vpack.c.bf16 %v963, %v963
  %v1043 = vpack.c.bf16 %v987, %v987
  %v1044 = vpack.c.bf16 %v1011, %v1011
  %v1045 = vpack.c.bf16 %v1035, %v1035
  %v1054 = vrot.slane %v1038, 3
  %v1055 = vrot.slane %v1039, 3
  %v1056 = vrot.slane %v1040, 3
  %v1057 = vrot.slane %v1041, 3
  %v1058 = vrot.slane %v1042, 3
  %v1059 = vrot.slane %v1043, 3
  %v1060 = vrot.slane %v1044, 3
  %v1061 = vrot.slane %v1045, 3
  %v1064 = vsel %vm316, %v1038, %v1054
  %v1068 = vsel %vm316, %v1039, %v1055
  %v1072 = vsel %vm316, %v1040, %v1056
  %v1076 = vsel %vm316, %v1041, %v1057
  %v1080 = vsel %vm316, %v1042, %v1058
  %v1084 = vsel %vm316, %v1043, %v1059
  %v1088 = vsel %vm316, %v1044, %v1060
  %v1092 = vsel %vm316, %v1045, %v1061
  %1094 = vrot.lane.b32.xlu0 %v1064, 8
  %v1095 = vpop.permute.xlu0 %1094
  %1096 = vrot.lane.b32.xlu0 %v1068, 8
  %v1097 = vpop.permute.xlu0 %1096
  %1098 = vrot.lane.b32.xlu0 %v1072, 8
  %v1099 = vpop.permute.xlu0 %1098
  %1100 = vrot.lane.b32.xlu0 %v1076, 8
  %v1101 = vpop.permute.xlu0 %1100
  %1102 = vrot.lane.b32.xlu0 %v1080, 8
  %v1103 = vpop.permute.xlu0 %1102
  %1104 = vrot.lane.b32.xlu0 %v1084, 8
  %v1105 = vpop.permute.xlu0 %1104
  %1106 = vrot.lane.b32.xlu0 %v1088, 8
  %v1107 = vpop.permute.xlu0 %1106
  %1108 = vrot.lane.b32.xlu0 %v1092, 8
  %v1109 = vpop.permute.xlu0 %1108
  %vm1118 = vcmask 122944
  %1119 = vst.msk [vmem:[%s1] sm:$0x1] %vm1118, %v1095
  %1120 = vst.msk [vmem:[%s1 + $0x1] sm:$0x1] %vm1118, %v1097
  %1121 = vst.msk [vmem:[%s1 + $0x2] sm:$0x1] %vm1118, %v1099
  %1122 = vst.msk [vmem:[%s1 + $0x3] sm:$0x1] %vm1118, %v1101
  %1123 = vst.msk [vmem:[%s1 + $0x4] sm:$0x1] %vm1118, %v1103
  %1124 = vst.msk [vmem:[%s1 + $0x5] sm:$0x1] %vm1118, %v1105
  %1125 = vst.msk [vmem:[%s1 + $0x6] sm:$0x1] %vm1118, %v1107
  %1126 = vst.msk [vmem:[%s1 + $0x7] sm:$0x1] %vm1118, %v1109
  %1127 = vst [vmem:[#allocation1] ss:$9 sm:$0xff] %v9
  %v1128 = vld [vmem:[#allocation1] sm:$0xff]
  %1130 = vrot.lane.b32.xlu0 %v1128, 112
  %v1131 = vpop.permute.xlu0 %1130
  %1132 = vst [vmem:[#allocation1] ss:$9 sm:$0xff] %v9
  %v1133 = vld [vmem:[#allocation1] sm:$0xff]
  %1135 = vrot.lane.b32.xlu0 %v1133, 80
  %v1136 = vpop.permute.xlu0 %1135
  %v1138 = vsel %vm23, %v1131, 0
  %v1141 = vsel %vm23, %v1136, 0
  %1143 = vmatpush.bf16.xpose.msra.mxu0 0
  %1144 = vmatpush.bf16.xpose.msra.mxu0 0
  %1145 = vmatpush.bf16.xpose.msra.mxu0 0
  %1146 = vmatpush.bf16.xpose.msra.mxu0 0
  %1147 = vmatpush.bf16.xpose.msra.mxu0 0
  %1148 = vmatpush.bf16.xpose.msra.mxu0 0
  %1149 = vmatpush.bf16.xpose.msra.mxu0 0
  %1150 = vmatpush.bf16.xpose.msra.mxu0 %v1141
  %1151 = vmatmul.bf16.gmra.mxu0 %v1138
  %v1152 = vpop.f32.mrf.mxu0
  %v1153 = vadd.f32 0.0, %v1152
  %v1154 = vpop.f32.mrf.mxu0
  %1155 = vdwg.mxu0
  %1156 = vst [vmem:[#allocation1] ss:$9 sm:$0xff] %v10
  %v1157 = vld [vmem:[#allocation1] sm:$0xff]
  %1159 = vrot.lane.b32.xlu0 %v1157, 112
  %v1160 = vpop.permute.xlu0 %1159
  %1161 = vst [vmem:[#allocation1] ss:$9 sm:$0xff] %v10
  %v1162 = vld [vmem:[#allocation1] sm:$0xff]
  %1164 = vrot.lane.b32.xlu0 %v1162, 80
  %v1165 = vpop.permute.xlu0 %1164
  %v1167 = vsel %vm23, %v1160, 0
  %v1170 = vsel %vm23, %v1165, 0
  %1172 = vmatpush.bf16.xpose.msra.mxu0 0
  %1173 = vmatpush.bf16.xpose.msra.mxu0 0
  %1174 = vmatpush.bf16.xpose.msra.mxu0 0
  %1175 = vmatpush.bf16.xpose.msra.mxu0 0
  %1176 = vmatpush.bf16.xpose.msra.mxu0 0
  %1177 = vmatpush.bf16.xpose.msra.mxu0 0
  %1178 = vmatpush.bf16.xpose.msra.mxu0 0
  %1179 = vmatpush.bf16.xpose.msra.mxu0 %v1170
  %1180 = vmatmul.bf16.gmra.mxu0 %v1167
  %v1181 = vpop.f32.mrf.mxu0
  %v1182 = vadd.f32 0.0, %v1181
  %v1183 = vpop.f32.mrf.mxu0
  %1184 = vdwg.mxu0
  %1185 = vst [vmem:[#allocation1] ss:$9 sm:$0xff] %v11
  %v1186 = vld [vmem:[#allocation1] sm:$0xff]
  %1188 = vrot.lane.b32.xlu0 %v1186, 112
  %v1189 = vpop.permute.xlu0 %1188
  %1190 = vst [vmem:[#allocation1] ss:$9 sm:$0xff] %v11
  %v1191 = vld [vmem:[#allocation1] sm:$0xff]
  %1193 = vrot.lane.b32.xlu0 %v1191, 80
  %v1194 = vpop.permute.xlu0 %1193
  %v1196 = vsel %vm23, %v1189, 0
  %v1199 = vsel %vm23, %v1194, 0
  %1201 = vmatpush.bf16.xpose.msra.mxu0 0
  %1202 = vmatpush.bf16.xpose.msra.mxu0 0
  %1203 = vmatpush.bf16.xpose.msra.mxu0 0
  %1204 = vmatpush.bf16.xpose.msra.mxu0 0
  %1205 = vmatpush.bf16.xpose.msra.mxu0 0
  %1206 = vmatpush.bf16.xpose.msra.mxu0 0
  %1207 = vmatpush.bf16.xpose.msra.mxu0 0
  %1208 = vmatpush.bf16.xpose.msra.mxu0 %v1199
  %1209 = vmatmul.bf16.gmra.mxu0 %v1196
  %v1210 = vpop.f32.mrf.mxu0
  %v1211 = vadd.f32 0.0, %v1210
  %v1212 = vpop.f32.mrf.mxu0
  %1213 = vdwg.mxu0
  %1214 = vst [vmem:[#allocation1] ss:$9 sm:$0xff] %v12
  %v1215 = vld [vmem:[#allocation1] sm:$0xff]
  %1217 = vrot.lane.b32.xlu0 %v1215, 112
  %v1218 = vpop.permute.xlu0 %1217
  %1219 = vst [vmem:[#allocation1] ss:$9 sm:$0xff] %v12
  %v1220 = vld [vmem:[#allocation1] sm:$0xff]
  %1222 = vrot.lane.b32.xlu0 %v1220, 80
  %v1223 = vpop.permute.xlu0 %1222
  %v1225 = vsel %vm23, %v1218, 0
  %v1228 = vsel %vm23, %v1223, 0
  %1230 = vmatpush.bf16.xpose.msra.mxu0 0
  %1231 = vmatpush.bf16.xpose.msra.mxu0 0
  %1232 = vmatpush.bf16.xpose.msra.mxu0 0
  %1233 = vmatpush.bf16.xpose.msra.mxu0 0
  %1234 = vmatpush.bf16.xpose.msra.mxu0 0
  %1235 = vmatpush.bf16.xpose.msra.mxu0 0
  %1236 = vmatpush.bf16.xpose.msra.mxu0 0
  %1237 = vmatpush.bf16.xpose.msra.mxu0 %v1228
  %1238 = vmatmul.bf16.gmra.mxu0 %v1225
  %v1239 = vpop.f32.mrf.mxu0
  %v1240 = vadd.f32 0.0, %v1239
  %v1241 = vpop.f32.mrf.mxu0
  %1242 = vdwg.mxu0
  %1243 = vst [vmem:[#allocation1] ss:$9 sm:$0xff] %v13
  %v1244 = vld [vmem:[#allocation1] sm:$0xff]
  %1246 = vrot.lane.b32.xlu0 %v1244, 112
  %v1247 = vpop.permute.xlu0 %1246
  %1248 = vst [vmem:[#allocation1] ss:$9 sm:$0xff] %v13
  %v1249 = vld [vmem:[#allocation1] sm:$0xff]
  %1251 = vrot.lane.b32.xlu0 %v1249, 80
  %v1252 = vpop.permute.xlu0 %1251
  %v1254 = vsel %vm23, %v1247, 0
  %v1257 = vsel %vm23, %v1252, 0
  %1259 = vmatpush.bf16.xpose.msra.mxu0 0
  %1260 = vmatpush.bf16.xpose.msra.mxu0 0
  %1261 = vmatpush.bf16.xpose.msra.mxu0 0
  %1262 = vmatpush.bf16.xpose.msra.mxu0 0
  %1263 = vmatpush.bf16.xpose.msra.mxu0 0
  %1264 = vmatpush.bf16.xpose.msra.mxu0 0
  %1265 = vmatpush.bf16.xpose.msra.mxu0 0
  %1266 = vmatpush.bf16.xpose.msra.mxu0 %v1257
  %1267 = vmatmul.bf16.gmra.mxu0 %v1254
  %v1268 = vpop.f32.mrf.mxu0
  %v1269 = vadd.f32 0.0, %v1268
  %v1270 = vpop.f32.mrf.mxu0
  %1271 = vdwg.mxu0
  %1272 = vst [vmem:[#allocation1] ss:$9 sm:$0xff] %v14
  %v1273 = vld [vmem:[#allocation1] sm:$0xff]
  %1275 = vrot.lane.b32.xlu0 %v1273, 112
  %v1276 = vpop.permute.xlu0 %1275
  %1277 = vst [vmem:[#allocation1] ss:$9 sm:$0xff] %v14
  %v1278 = vld [vmem:[#allocation1] sm:$0xff]
  %1280 = vrot.lane.b32.xlu0 %v1278, 80
  %v1281 = vpop.permute.xlu0 %1280
  %v1283 = vsel %vm23, %v1276, 0
  %v1286 = vsel %vm23, %v1281, 0
  %1288 = vmatpush.bf16.xpose.msra.mxu0 0
  %1289 = vmatpush.bf16.xpose.msra.mxu0 0
  %1290 = vmatpush.bf16.xpose.msra.mxu0 0
  %1291 = vmatpush.bf16.xpose.msra.mxu0 0
  %1292 = vmatpush.bf16.xpose.msra.mxu0 0
  %1293 = vmatpush.bf16.xpose.msra.mxu0 0
  %1294 = vmatpush.bf16.xpose.msra.mxu0 0
  %1295 = vmatpush.bf16.xpose.msra.mxu0 %v1286
  %1296 = vmatmul.bf16.gmra.mxu0 %v1283
  %v1297 = vpop.f32.mrf.mxu0
  %v1298 = vadd.f32 0.0, %v1297
  %v1299 = vpop.f32.mrf.mxu0
  %1300 = vdwg.mxu0
  %1301 = vst [vmem:[#allocation1] ss:$9 sm:$0xff] %v15
  %v1302 = vld [vmem:[#allocation1] sm:$0xff]
  %1304 = vrot.lane.b32.xlu0 %v1302, 112
  %v1305 = vpop.permute.xlu0 %1304
  %1306 = vst [vmem:[#allocation1] ss:$9 sm:$0xff] %v15
  %v1307 = vld [vmem:[#allocation1] sm:$0xff]
  %1309 = vrot.lane.b32.xlu0 %v1307, 80
  %v1310 = vpop.permute.xlu0 %1309
  %v1312 = vsel %vm23, %v1305, 0
  %v1315 = vsel %vm23, %v1310, 0
  %1317 = vmatpush.bf16.xpose.msra.mxu0 0
  %1318 = vmatpush.bf16.xpose.msra.mxu0 0
  %1319 = vmatpush.bf16.xpose.msra.mxu0 0
  %1320 = vmatpush.bf16.xpose.msra.mxu0 0
  %1321 = vmatpush.bf16.xpose.msra.mxu0 0
  %1322 = vmatpush.bf16.xpose.msra.mxu0 0
  %1323 = vmatpush.bf16.xpose.msra.mxu0 0
  %1324 = vmatpush.bf16.xpose.msra.mxu0 %v1315
  %1325 = vmatmul.bf16.gmra.mxu0 %v1312
  %v1326 = vpop.f32.mrf.mxu0
  %v1327 = vadd.f32 0.0, %v1326
  %v1328 = vpop.f32.mrf.mxu0
  %1329 = vdwg.mxu0
  %1330 = vst [vmem:[#allocation1] ss:$9 sm:$0xff] %v16
  %v1331 = vld [vmem:[#allocation1] sm:$0xff]
  %1333 = vrot.lane.b32.xlu0 %v1331, 112
  %v1334 = vpop.permute.xlu0 %1333
  %1335 = vst [vmem:[#allocation1] ss:$9 sm:$0xff] %v16
  %v1336 = vld [vmem:[#allocation1] sm:$0xff]
  %1338 = vrot.lane.b32.xlu0 %v1336, 80
  %v1339 = vpop.permute.xlu0 %1338
  %v1341 = vsel %vm23, %v1334, 0
  %v1344 = vsel %vm23, %v1339, 0
  %1346 = vmatpush.bf16.xpose.msra.mxu0 0
  %1347 = vmatpush.bf16.xpose.msra.mxu0 0
  %1348 = vmatpush.bf16.xpose.msra.mxu0 0
  %1349 = vmatpush.bf16.xpose.msra.mxu0 0
  %1350 = vmatpush.bf16.xpose.msra.mxu0 0
  %1351 = vmatpush.bf16.xpose.msra.mxu0 0
  %1352 = vmatpush.bf16.xpose.msra.mxu0 0
  %1353 = vmatpush.bf16.xpose.msra.mxu0 %v1344
  %1354 = vmatmul.bf16.gmra.mxu0 %v1341
  %v1355 = vpop.f32.mrf.mxu0
  %v1356 = vadd.f32 0.0, %v1355
  %v1357 = vpop.f32.mrf.mxu0
  %1358 = vdwg.mxu0
  %v1359 = vsel %vm210, %v1153, -inf
  %1360 = vmax.xlane.f32.xlu0 %v1359
  %v1361 = vpop.xlane.xlu0 %1360
  %v1362 = vsel %vm210, %v1182, -inf
  %1363 = vmax.xlane.f32.xlu0 %v1362
  %v1364 = vpop.xlane.xlu0 %1363
  %v1365 = vsel %vm210, %v1211, -inf
  %1366 = vmax.xlane.f32.xlu0 %v1365
  %v1367 = vpop.xlane.xlu0 %1366
  %v1368 = vsel %vm210, %v1240, -inf
  %1369 = vmax.xlane.f32.xlu0 %v1368
  %v1370 = vpop.xlane.xlu0 %1369
  %v1371 = vsel %vm210, %v1269, -inf
  %1372 = vmax.xlane.f32.xlu0 %v1371
  %v1373 = vpop.xlane.xlu0 %1372
  %v1374 = vsel %vm210, %v1298, -inf
  %1375 = vmax.xlane.f32.xlu0 %v1374
  %v1376 = vpop.xlane.xlu0 %1375
  %v1377 = vsel %vm210, %v1327, -inf
  %1378 = vmax.xlane.f32.xlu0 %v1377
  %v1379 = vpop.xlane.xlu0 %1378
  %v1380 = vsel %vm210, %v1356, -inf
  %1381 = vmax.xlane.f32.xlu0 %v1380
  %v1382 = vpop.xlane.xlu0 %1381
  %v1383 = vsub.f32 %v1153, %v1361
  %v1384 = vsub.f32 %v1182, %v1364
  %v1385 = vsub.f32 %v1211, %v1367
  %v1386 = vsub.f32 %v1240, %v1370
  %v1387 = vsub.f32 %v1269, %v1373
  %v1388 = vsub.f32 %v1298, %v1376
  %v1389 = vsub.f32 %v1327, %v1379
  %v1390 = vsub.f32 %v1356, %v1382
  %v1391 = vmul.f32 %v1383, 1.442695
  %v1392 = vpow.pop %v1391
  %v1393 = vmul.f32 %v1384, 1.442695
  %v1394 = vpow.pop %v1393
  %v1395 = vmul.f32 %v1385, 1.442695
  %v1396 = vpow.pop %v1395
  %v1397 = vmul.f32 %v1386, 1.442695
  %v1398 = vpow.pop %v1397
  %v1399 = vmul.f32 %v1387, 1.442695
  %v1400 = vpow.pop %v1399
  %v1401 = vmul.f32 %v1388, 1.442695
  %v1402 = vpow.pop %v1401
  %v1403 = vmul.f32 %v1389, 1.442695
  %v1404 = vpow.pop %v1403
  %v1405 = vmul.f32 %v1390, 1.442695
  %v1406 = vpow.pop %v1405
  %v1407 = vsel %vm210, %v1392, 0.0
  %1408 = vadd.xlane.f32.xlu0 %v1407
  %v1409 = vpop.xlane.xlu0 %1408
  %v1410 = vsel %vm210, %v1394, 0.0
  %1411 = vadd.xlane.f32.xlu0 %v1410
  %v1412 = vpop.xlane.xlu0 %1411
  %v1413 = vsel %vm210, %v1396, 0.0
  %1414 = vadd.xlane.f32.xlu0 %v1413
  %v1415 = vpop.xlane.xlu0 %1414
  %v1416 = vsel %vm210, %v1398, 0.0
  %1417 = vadd.xlane.f32.xlu0 %v1416
  %v1418 = vpop.xlane.xlu0 %1417
  %v1419 = vsel %vm210, %v1400, 0.0
  %1420 = vadd.xlane.f32.xlu0 %v1419
  %v1421 = vpop.xlane.xlu0 %1420
  %v1422 = vsel %vm210, %v1402, 0.0
  %1423 = vadd.xlane.f32.xlu0 %v1422
  %v1424 = vpop.xlane.xlu0 %1423
  %v1425 = vsel %vm210, %v1404, 0.0
  %1426 = vadd.xlane.f32.xlu0 %v1425
  %v1427 = vpop.xlane.xlu0 %1426
  %v1428 = vsel %vm210, %v1406, 0.0
  %1429 = vadd.xlane.f32.xlu0 %v1428
  %v1430 = vpop.xlane.xlu0 %1429
  %v1431 = vrcp.pop %v1409
  %v1432 = vrcp.pop %v1412
  %v1433 = vrcp.pop %v1415
  %v1434 = vrcp.pop %v1418
  %v1435 = vrcp.pop %v1421
  %v1436 = vrcp.pop %v1424
  %v1437 = vrcp.pop %v1427
  %v1438 = vrcp.pop %v1430
  %v1439 = vmul.f32 %v1392, %v1431
  %v1440 = vmul.f32 %v1394, %v1432
  %v1441 = vmul.f32 %v1396, %v1433
  %v1442 = vmul.f32 %v1398, %v1434
  %v1443 = vmul.f32 %v1400, %v1435
  %v1444 = vmul.f32 %v1402, %v1436
  %v1445 = vmul.f32 %v1404, %v1437
  %v1446 = vmul.f32 %v1406, %v1438
  %v1447 = vpack.c.bf16 %v1439, %v1439
  %v1448 = vpack.c.bf16 %v1440, %v1440
  %v1449 = vpack.c.bf16 %v1441, %v1441
  %v1450 = vpack.c.bf16 %v1442, %v1442
  %v1451 = vpack.c.bf16 %v1443, %v1443
  %v1452 = vpack.c.bf16 %v1444, %v1444
  %v1453 = vpack.c.bf16 %v1445, %v1445
  %v1454 = vpack.c.bf16 %v1446, %v1446
  %1455 = vst [vmem:[#allocation1] ss:$9 sm:$0xff] %v9
  %v1456 = vld [vmem:[#allocation1] sm:$0xff]
  %1458 = vrot.lane.b32.xlu0 %v1456, 48
  %v1459 = vpop.permute.xlu0 %1458
  %v1461 = vsel %vm312, %v1447, 0
  %v1464 = vsel %vm316, %v1459, 0
  %1466 = vmatpush.bf16.msra.mxu0 0
  %1467 = vmatpush.bf16.msra.mxu0 0
  %1468 = vmatpush.bf16.msra.mxu0 0
  %1469 = vmatpush.bf16.msra.mxu0 0
  %1470 = vmatpush.bf16.msra.mxu0 0
  %1471 = vmatpush.bf16.msra.mxu0 0
  %1472 = vmatpush.bf16.msra.mxu0 0
  %1473 = vmatpush.bf16.msra.mxu0 %v1464
  %1474 = vmatmul.bf16.gmra.mxu0 %v1461
  %v1475 = vpop.f32.mrf.mxu0
  %v1476 = vadd.f32 0.0, %v1475
  %v1477 = vpop.f32.mrf.mxu0
  %1478 = vdwg.mxu0
  %1479 = vst [vmem:[#allocation1] ss:$9 sm:$0xff] %v10
  %v1480 = vld [vmem:[#allocation1] sm:$0xff]
  %1482 = vrot.lane.b32.xlu0 %v1480, 48
  %v1483 = vpop.permute.xlu0 %1482
  %v1485 = vsel %vm312, %v1448, 0
  %v1488 = vsel %vm316, %v1483, 0
  %1490 = vmatpush.bf16.msra.mxu0 0
  %1491 = vmatpush.bf16.msra.mxu0 0
  %1492 = vmatpush.bf16.msra.mxu0 0
  %1493 = vmatpush.bf16.msra.mxu0 0
  %1494 = vmatpush.bf16.msra.mxu0 0
  %1495 = vmatpush.bf16.msra.mxu0 0
  %1496 = vmatpush.bf16.msra.mxu0 0
  %1497 = vmatpush.bf16.msra.mxu0 %v1488
  %1498 = vmatmul.bf16.gmra.mxu0 %v1485
  %v1499 = vpop.f32.mrf.mxu0
  %v1500 = vadd.f32 0.0, %v1499
  %v1501 = vpop.f32.mrf.mxu0
  %1502 = vdwg.mxu0
  %1503 = vst [vmem:[#allocation1] ss:$9 sm:$0xff] %v11
  %v1504 = vld [vmem:[#allocation1] sm:$0xff]
  %1506 = vrot.lane.b32.xlu0 %v1504, 48
  %v1507 = vpop.permute.xlu0 %1506
  %v1509 = vsel %vm312, %v1449, 0
  %v1512 = vsel %vm316, %v1507, 0
  %1514 = vmatpush.bf16.msra.mxu0 0
  %1515 = vmatpush.bf16.msra.mxu0 0
  %1516 = vmatpush.bf16.msra.mxu0 0
  %1517 = vmatpush.bf16.msra.mxu0 0
  %1518 = vmatpush.bf16.msra.mxu0 0
  %1519 = vmatpush.bf16.msra.mxu0 0
  %1520 = vmatpush.bf16.msra.mxu0 0
  %1521 = vmatpush.bf16.msra.mxu0 %v1512
  %1522 = vmatmul.bf16.gmra.mxu0 %v1509
  %v1523 = vpop.f32.mrf.mxu0
  %v1524 = vadd.f32 0.0, %v1523
  %v1525 = vpop.f32.mrf.mxu0
  %1526 = vdwg.mxu0
  %1527 = vst [vmem:[#allocation1] ss:$9 sm:$0xff] %v12
  %v1528 = vld [vmem:[#allocation1] sm:$0xff]
  %1530 = vrot.lane.b32.xlu0 %v1528, 48
  %v1531 = vpop.permute.xlu0 %1530
  %v1533 = vsel %vm312, %v1450, 0
  %v1536 = vsel %vm316, %v1531, 0
  %1538 = vmatpush.bf16.msra.mxu0 0
  %1539 = vmatpush.bf16.msra.mxu0 0
  %1540 = vmatpush.bf16.msra.mxu0 0
  %1541 = vmatpush.bf16.msra.mxu0 0
  %1542 = vmatpush.bf16.msra.mxu0 0
  %1543 = vmatpush.bf16.msra.mxu0 0
  %1544 = vmatpush.bf16.msra.mxu0 0
  %1545 = vmatpush.bf16.msra.mxu0 %v1536
  %1546 = vmatmul.bf16.gmra.mxu0 %v1533
  %v1547 = vpop.f32.mrf.mxu0
  %v1548 = vadd.f32 0.0, %v1547
  %v1549 = vpop.f32.mrf.mxu0
  %1550 = vdwg.mxu0
  %1551 = vst [vmem:[#allocation1] ss:$9 sm:$0xff] %v13
  %v1552 = vld [vmem:[#allocation1] sm:$0xff]
  %1554 = vrot.lane.b32.xlu0 %v1552, 48
  %v1555 = vpop.permute.xlu0 %1554
  %v1557 = vsel %vm312, %v1451, 0
  %v1560 = vsel %vm316, %v1555, 0
  %1562 = vmatpush.bf16.msra.mxu0 0
  %1563 = vmatpush.bf16.msra.mxu0 0
  %1564 = vmatpush.bf16.msra.mxu0 0
  %1565 = vmatpush.bf16.msra.mxu0 0
  %1566 = vmatpush.bf16.msra.mxu0 0
  %1567 = vmatpush.bf16.msra.mxu0 0
  %1568 = vmatpush.bf16.msra.mxu0 0
  %1569 = vmatpush.bf16.msra.mxu0 %v1560
  %1570 = vmatmul.bf16.gmra.mxu0 %v1557
  %v1571 = vpop.f32.mrf.mxu0
  %v1572 = vadd.f32 0.0, %v1571
  %v1573 = vpop.f32.mrf.mxu0
  %1574 = vdwg.mxu0
  %1575 = vst [vmem:[#allocation1] ss:$9 sm:$0xff] %v14
  %v1576 = vld [vmem:[#allocation1] sm:$0xff]
  %1578 = vrot.lane.b32.xlu0 %v1576, 48
  %v1579 = vpop.permute.xlu0 %1578
  %v1581 = vsel %vm312, %v1452, 0
  %v1584 = vsel %vm316, %v1579, 0
  %1586 = vmatpush.bf16.msra.mxu0 0
  %1587 = vmatpush.bf16.msra.mxu0 0
  %1588 = vmatpush.bf16.msra.mxu0 0
  %1589 = vmatpush.bf16.msra.mxu0 0
  %1590 = vmatpush.bf16.msra.mxu0 0
  %1591 = vmatpush.bf16.msra.mxu0 0
  %1592 = vmatpush.bf16.msra.mxu0 0
  %1593 = vmatpush.bf16.msra.mxu0 %v1584
  %1594 = vmatmul.bf16.gmra.mxu0 %v1581
  %v1595 = vpop.f32.mrf.mxu0
  %v1596 = vadd.f32 0.0, %v1595
  %v1597 = vpop.f32.mrf.mxu0
  %1598 = vdwg.mxu0
  %1599 = vst [vmem:[#allocation1] ss:$9 sm:$0xff] %v15
  %v1600 = vld [vmem:[#allocation1] sm:$0xff]
  %1602 = vrot.lane.b32.xlu0 %v1600, 48
  %v1603 = vpop.permute.xlu0 %1602
  %v1605 = vsel %vm312, %v1453, 0
  %v1608 = vsel %vm316, %v1603, 0
  %1610 = vmatpush.bf16.msra.mxu0 0
  %1611 = vmatpush.bf16.msra.mxu0 0
  %1612 = vmatpush.bf16.msra.mxu0 0
  %1613 = vmatpush.bf16.msra.mxu0 0
  %1614 = vmatpush.bf16.msra.mxu0 0
  %1615 = vmatpush.bf16.msra.mxu0 0
  %1616 = vmatpush.bf16.msra.mxu0 0
  %1617 = vmatpush.bf16.msra.mxu0 %v1608
  %1618 = vmatmul.bf16.gmra.mxu0 %v1605
  %v1619 = vpop.f32.mrf.mxu0
  %v1620 = vadd.f32 0.0, %v1619
  %v1621 = vpop.f32.mrf.mxu0
  %1622 = vdwg.mxu0
  %1623 = vst [vmem:[#allocation1] ss:$9 sm:$0xff] %v16
  %v1624 = vld [vmem:[#allocation1] sm:$0xff]
  %1626 = vrot.lane.b32.xlu0 %v1624, 48
  %v1627 = vpop.permute.xlu0 %1626
  %v1629 = vsel %vm312, %v1454, 0
  %v1632 = vsel %vm316, %v1627, 0
  %1634 = vmatpush.bf16.msra.mxu0 0
  %1635 = vmatpush.bf16.msra.mxu0 0
  %1636 = vmatpush.bf16.msra.mxu0 0
  %1637 = vmatpush.bf16.msra.mxu0 0
  %1638 = vmatpush.bf16.msra.mxu0 0
  %1639 = vmatpush.bf16.msra.mxu0 0
  %1640 = vmatpush.bf16.msra.mxu0 0
  %1641 = vmatpush.bf16.msra.mxu0 %v1632
  %1642 = vmatmul.bf16.gmra.mxu0 %v1629
  %v1643 = vpop.f32.mrf.mxu0
  %v1644 = vadd.f32 0.0, %v1643
  %v1645 = vpop.f32.mrf.mxu0
  %1646 = vdwg.mxu0
  %v1647 = vpack.c.bf16 %v1476, %v1476
  %v1648 = vpack.c.bf16 %v1500, %v1500
  %v1649 = vpack.c.bf16 %v1524, %v1524
  %v1650 = vpack.c.bf16 %v1548, %v1548
  %v1651 = vpack.c.bf16 %v1572, %v1572
  %v1652 = vpack.c.bf16 %v1596, %v1596
  %v1653 = vpack.c.bf16 %v1620, %v1620
  %v1654 = vpack.c.bf16 %v1644, %v1644
  %v1663 = vrot.slane %v1647, 3
  %v1664 = vrot.slane %v1648, 3
  %v1665 = vrot.slane %v1649, 3
  %v1666 = vrot.slane %v1650, 3
  %v1667 = vrot.slane %v1651, 3
  %v1668 = vrot.slane %v1652, 3
  %v1669 = vrot.slane %v1653, 3
  %v1670 = vrot.slane %v1654, 3
  %v1673 = vsel %vm316, %v1647, %v1663
  %v1677 = vsel %vm316, %v1648, %v1664
  %v1681 = vsel %vm316, %v1649, %v1665
  %v1685 = vsel %vm316, %v1650, %v1666
  %v1689 = vsel %vm316, %v1651, %v1667
  %v1693 = vsel %vm316, %v1652, %v1668
  %v1697 = vsel %vm316, %v1653, %v1669
  %v1701 = vsel %vm316, %v1654, %v1670
  %1703 = vrot.lane.b32.xlu0 %v1673, 16
  %v1704 = vpop.permute.xlu0 %1703
  %1705 = vrot.lane.b32.xlu0 %v1677, 16
  %v1706 = vpop.permute.xlu0 %1705
  %1707 = vrot.lane.b32.xlu0 %v1681, 16
  %v1708 = vpop.permute.xlu0 %1707
  %1709 = vrot.lane.b32.xlu0 %v1685, 16
  %v1710 = vpop.permute.xlu0 %1709
  %1711 = vrot.lane.b32.xlu0 %v1689, 16
  %v1712 = vpop.permute.xlu0 %1711
  %1713 = vrot.lane.b32.xlu0 %v1693, 16
  %v1714 = vpop.permute.xlu0 %1713
  %1715 = vrot.lane.b32.xlu0 %v1697, 16
  %v1716 = vpop.permute.xlu0 %1715
  %1717 = vrot.lane.b32.xlu0 %v1701, 16
  %v1718 = vpop.permute.xlu0 %1717
  %vm1727 = vcmask 188544
  %1728 = vst.msk [vmem:[%s1] sm:$0x1] %vm1727, %v1704
  %1729 = vst.msk [vmem:[%s1 + $0x1] sm:$0x1] %vm1727, %v1706
  %1730 = vst.msk [vmem:[%s1 + $0x2] sm:$0x1] %vm1727, %v1708
  %1731 = vst.msk [vmem:[%s1 + $0x3] sm:$0x1] %vm1727, %v1710
  %1732 = vst.msk [vmem:[%s1 + $0x4] sm:$0x1] %vm1727, %v1712
  %1733 = vst.msk [vmem:[%s1 + $0x5] sm:$0x1] %vm1727, %v1714
  %1734 = vst.msk [vmem:[%s1 + $0x6] sm:$0x1] %vm1727, %v1716
  %1735 = vst.msk [vmem:[%s1 + $0x7] sm:$0x1] %vm1727, %v1718
  %1736 = vst [vmem:[#allocation1] ss:$9 sm:$0xff] %v9
  %v1737 = vld [vmem:[#allocation1] sm:$0xff]
  %1739 = vrot.lane.b32.xlu0 %v1737, 104
  %v1740 = vpop.permute.xlu0 %1739
  %1741 = vst [vmem:[#allocation1] ss:$9 sm:$0xff] %v9
  %v1742 = vld [vmem:[#allocation1] sm:$0xff]
  %1744 = vrot.lane.b32.xlu0 %v1742, 72
  %v1745 = vpop.permute.xlu0 %1744
  %v1747 = vsel %vm23, %v1740, 0
  %v1750 = vsel %vm23, %v1745, 0
  %1752 = vmatpush.bf16.xpose.msra.mxu0 0
  %1753 = vmatpush.bf16.xpose.msra.mxu0 0
  %1754 = vmatpush.bf16.xpose.msra.mxu0 0
  %1755 = vmatpush.bf16.xpose.msra.mxu0 0
  %1756 = vmatpush.bf16.xpose.msra.mxu0 0
  %1757 = vmatpush.bf16.xpose.msra.mxu0 0
  %1758 = vmatpush.bf16.xpose.msra.mxu0 0
  %1759 = vmatpush.bf16.xpose.msra.mxu0 %v1750
  %1760 = vmatmul.bf16.gmra.mxu0 %v1747
  %v1761 = vpop.f32.mrf.mxu0
  %v1762 = vadd.f32 0.0, %v1761
  %v1763 = vpop.f32.mrf.mxu0
  %1764 = vdwg.mxu0
  %1765 = vst [vmem:[#allocation1] ss:$9 sm:$0xff] %v10
  %v1766 = vld [vmem:[#allocation1] sm:$0xff]
  %1768 = vrot.lane.b32.xlu0 %v1766, 104
  %v1769 = vpop.permute.xlu0 %1768
  %1770 = vst [vmem:[#allocation1] ss:$9 sm:$0xff] %v10
  %v1771 = vld [vmem:[#allocation1] sm:$0xff]
  %1773 = vrot.lane.b32.xlu0 %v1771, 72
  %v1774 = vpop.permute.xlu0 %1773
  %v1776 = vsel %vm23, %v1769, 0
  %v1779 = vsel %vm23, %v1774, 0
  %1781 = vmatpush.bf16.xpose.msra.mxu0 0
  %1782 = vmatpush.bf16.xpose.msra.mxu0 0
  %1783 = vmatpush.bf16.xpose.msra.mxu0 0
  %1784 = vmatpush.bf16.xpose.msra.mxu0 0
  %1785 = vmatpush.bf16.xpose.msra.mxu0 0
  %1786 = vmatpush.bf16.xpose.msra.mxu0 0
  %1787 = vmatpush.bf16.xpose.msra.mxu0 0
  %1788 = vmatpush.bf16.xpose.msra.mxu0 %v1779
  %1789 = vmatmul.bf16.gmra.mxu0 %v1776
  %v1790 = vpop.f32.mrf.mxu0
  %v1791 = vadd.f32 0.0, %v1790
  %v1792 = vpop.f32.mrf.mxu0
  %1793 = vdwg.mxu0
  %1794 = vst [vmem:[#allocation1] ss:$9 sm:$0xff] %v11
  %v1795 = vld [vmem:[#allocation1] sm:$0xff]
  %1797 = vrot.lane.b32.xlu0 %v1795, 104
  %v1798 = vpop.permute.xlu0 %1797
  %1799 = vst [vmem:[#allocation1] ss:$9 sm:$0xff] %v11
  %v1800 = vld [vmem:[#allocation1] sm:$0xff]
  %1802 = vrot.lane.b32.xlu0 %v1800, 72
  %v1803 = vpop.permute.xlu0 %1802
  %v1805 = vsel %vm23, %v1798, 0
  %v1808 = vsel %vm23, %v1803, 0
  %1810 = vmatpush.bf16.xpose.msra.mxu0 0
  %1811 = vmatpush.bf16.xpose.msra.mxu0 0
  %1812 = vmatpush.bf16.xpose.msra.mxu0 0
  %1813 = vmatpush.bf16.xpose.msra.mxu0 0
  %1814 = vmatpush.bf16.xpose.msra.mxu0 0
  %1815 = vmatpush.bf16.xpose.msra.mxu0 0
  %1816 = vmatpush.bf16.xpose.msra.mxu0 0
  %1817 = vmatpush.bf16.xpose.msra.mxu0 %v1808
  %1818 = vmatmul.bf16.gmra.mxu0 %v1805
  %v1819 = vpop.f32.mrf.mxu0
  %v1820 = vadd.f32 0.0, %v1819
  %v1821 = vpop.f32.mrf.mxu0
  %1822 = vdwg.mxu0
  %1823 = vst [vmem:[#allocation1] ss:$9 sm:$0xff] %v12
  %v1824 = vld [vmem:[#allocation1] sm:$0xff]
  %1826 = vrot.lane.b32.xlu0 %v1824, 104
  %v1827 = vpop.permute.xlu0 %1826
  %1828 = vst [vmem:[#allocation1] ss:$9 sm:$0xff] %v12
  %v1829 = vld [vmem:[#allocation1] sm:$0xff]
  %1831 = vrot.lane.b32.xlu0 %v1829, 72
  %v1832 = vpop.permute.xlu0 %1831
  %v1834 = vsel %vm23, %v1827, 0
  %v1837 = vsel %vm23, %v1832, 0
  %1839 = vmatpush.bf16.xpose.msra.mxu0 0
  %1840 = vmatpush.bf16.xpose.msra.mxu0 0
  %1841 = vmatpush.bf16.xpose.msra.mxu0 0
  %1842 = vmatpush.bf16.xpose.msra.mxu0 0
  %1843 = vmatpush.bf16.xpose.msra.mxu0 0
  %1844 = vmatpush.bf16.xpose.msra.mxu0 0
  %1845 = vmatpush.bf16.xpose.msra.mxu0 0
  %1846 = vmatpush.bf16.xpose.msra.mxu0 %v1837
  %1847 = vmatmul.bf16.gmra.mxu0 %v1834
  %v1848 = vpop.f32.mrf.mxu0
  %v1849 = vadd.f32 0.0, %v1848
  %v1850 = vpop.f32.mrf.mxu0
  %1851 = vdwg.mxu0
  %1852 = vst [vmem:[#allocation1] ss:$9 sm:$0xff] %v13
  %v1853 = vld [vmem:[#allocation1] sm:$0xff]
  %1855 = vrot.lane.b32.xlu0 %v1853, 104
  %v1856 = vpop.permute.xlu0 %1855
  %1857 = vst [vmem:[#allocation1] ss:$9 sm:$0xff] %v13
  %v1858 = vld [vmem:[#allocation1] sm:$0xff]
  %1860 = vrot.lane.b32.xlu0 %v1858, 72
  %v1861 = vpop.permute.xlu0 %1860
  %v1863 = vsel %vm23, %v1856, 0
  %v1866 = vsel %vm23, %v1861, 0
  %1868 = vmatpush.bf16.xpose.msra.mxu0 0
  %1869 = vmatpush.bf16.xpose.msra.mxu0 0
  %1870 = vmatpush.bf16.xpose.msra.mxu0 0
  %1871 = vmatpush.bf16.xpose.msra.mxu0 0
  %1872 = vmatpush.bf16.xpose.msra.mxu0 0
  %1873 = vmatpush.bf16.xpose.msra.mxu0 0
  %1874 = vmatpush.bf16.xpose.msra.mxu0 0
  %1875 = vmatpush.bf16.xpose.msra.mxu0 %v1866
  %1876 = vmatmul.bf16.gmra.mxu0 %v1863
  %v1877 = vpop.f32.mrf.mxu0
  %v1878 = vadd.f32 0.0, %v1877
  %v1879 = vpop.f32.mrf.mxu0
  %1880 = vdwg.mxu0
  %1881 = vst [vmem:[#allocation1] ss:$9 sm:$0xff] %v14
  %v1882 = vld [vmem:[#allocation1] sm:$0xff]
  %1884 = vrot.lane.b32.xlu0 %v1882, 104
  %v1885 = vpop.permute.xlu0 %1884
  %1886 = vst [vmem:[#allocation1] ss:$9 sm:$0xff] %v14
  %v1887 = vld [vmem:[#allocation1] sm:$0xff]
  %1889 = vrot.lane.b32.xlu0 %v1887, 72
  %v1890 = vpop.permute.xlu0 %1889
  %v1892 = vsel %vm23, %v1885, 0
  %v1895 = vsel %vm23, %v1890, 0
  %1897 = vmatpush.bf16.xpose.msra.mxu0 0
  %1898 = vmatpush.bf16.xpose.msra.mxu0 0
  %1899 = vmatpush.bf16.xpose.msra.mxu0 0
  %1900 = vmatpush.bf16.xpose.msra.mxu0 0
  %1901 = vmatpush.bf16.xpose.msra.mxu0 0
  %1902 = vmatpush.bf16.xpose.msra.mxu0 0
  %1903 = vmatpush.bf16.xpose.msra.mxu0 0
  %1904 = vmatpush.bf16.xpose.msra.mxu0 %v1895
  %1905 = vmatmul.bf16.gmra.mxu0 %v1892
  %v1906 = vpop.f32.mrf.mxu0
  %v1907 = vadd.f32 0.0, %v1906
  %v1908 = vpop.f32.mrf.mxu0
  %1909 = vdwg.mxu0
  %1910 = vst [vmem:[#allocation1] ss:$9 sm:$0xff] %v15
  %v1911 = vld [vmem:[#allocation1] sm:$0xff]
  %1913 = vrot.lane.b32.xlu0 %v1911, 104
  %v1914 = vpop.permute.xlu0 %1913
  %1915 = vst [vmem:[#allocation1] ss:$9 sm:$0xff] %v15
  %v1916 = vld [vmem:[#allocation1] sm:$0xff]
  %1918 = vrot.lane.b32.xlu0 %v1916, 72
  %v1919 = vpop.permute.xlu0 %1918
  %v1921 = vsel %vm23, %v1914, 0
  %v1924 = vsel %vm23, %v1919, 0
  %1926 = vmatpush.bf16.xpose.msra.mxu0 0
  %1927 = vmatpush.bf16.xpose.msra.mxu0 0
  %1928 = vmatpush.bf16.xpose.msra.mxu0 0
  %1929 = vmatpush.bf16.xpose.msra.mxu0 0
  %1930 = vmatpush.bf16.xpose.msra.mxu0 0
  %1931 = vmatpush.bf16.xpose.msra.mxu0 0
  %1932 = vmatpush.bf16.xpose.msra.mxu0 0
  %1933 = vmatpush.bf16.xpose.msra.mxu0 %v1924
  %1934 = vmatmul.bf16.gmra.mxu0 %v1921
  %v1935 = vpop.f32.mrf.mxu0
  %v1936 = vadd.f32 0.0, %v1935
  %v1937 = vpop.f32.mrf.mxu0
  %1938 = vdwg.mxu0
  %1939 = vst [vmem:[#allocation1] ss:$9 sm:$0xff] %v16
  %v1940 = vld [vmem:[#allocation1] sm:$0xff]
  %1942 = vrot.lane.b32.xlu0 %v1940, 104
  %v1943 = vpop.permute.xlu0 %1942
  %1944 = vst [vmem:[#allocation1] ss:$9 sm:$0xff] %v16
  %v1945 = vld [vmem:[#allocation1] sm:$0xff]
  %1947 = vrot.lane.b32.xlu0 %v1945, 72
  %v1948 = vpop.permute.xlu0 %1947
  %v1950 = vsel %vm23, %v1943, 0
  %v1953 = vsel %vm23, %v1948, 0
  %1955 = vmatpush.bf16.xpose.msra.mxu0 0
  %1956 = vmatpush.bf16.xpose.msra.mxu0 0
  %1957 = vmatpush.bf16.xpose.msra.mxu0 0
  %1958 = vmatpush.bf16.xpose.msra.mxu0 0
  %1959 = vmatpush.bf16.xpose.msra.mxu0 0
  %1960 = vmatpush.bf16.xpose.msra.mxu0 0
  %1961 = vmatpush.bf16.xpose.msra.mxu0 0
  %1962 = vmatpush.bf16.xpose.msra.mxu0 %v1953
  %1963 = vmatmul.bf16.gmra.mxu0 %v1950
  %v1964 = vpop.f32.mrf.mxu0
  %v1965 = vadd.f32 0.0, %v1964
  %v1966 = vpop.f32.mrf.mxu0
  %1967 = vdwg.mxu0
  %v1968 = vsel %vm210, %v1762, -inf
  %1969 = vmax.xlane.f32.xlu0 %v1968
  %v1970 = vpop.xlane.xlu0 %1969
  %v1971 = vsel %vm210, %v1791, -inf
  %1972 = vmax.xlane.f32.xlu0 %v1971
  %v1973 = vpop.xlane.xlu0 %1972
  %v1974 = vsel %vm210, %v1820, -inf
  %1975 = vmax.xlane.f32.xlu0 %v1974
  %v1976 = vpop.xlane.xlu0 %1975
  %v1977 = vsel %vm210, %v1849, -inf
  %1978 = vmax.xlane.f32.xlu0 %v1977
  %v1979 = vpop.xlane.xlu0 %1978
  %v1980 = vsel %vm210, %v1878, -inf
  %1981 = vmax.xlane.f32.xlu0 %v1980
  %v1982 = vpop.xlane.xlu0 %1981
  %v1983 = vsel %vm210, %v1907, -inf
  %1984 = vmax.xlane.f32.xlu0 %v1983
  %v1985 = vpop.xlane.xlu0 %1984
  %v1986 = vsel %vm210, %v1936, -inf
  %1987 = vmax.xlane.f32.xlu0 %v1986
  %v1988 = vpop.xlane.xlu0 %1987
  %v1989 = vsel %vm210, %v1965, -inf
  %1990 = vmax.xlane.f32.xlu0 %v1989
  %v1991 = vpop.xlane.xlu0 %1990
  %v1992 = vsub.f32 %v1762, %v1970
  %v1993 = vsub.f32 %v1791, %v1973
  %v1994 = vsub.f32 %v1820, %v1976
  %v1995 = vsub.f32 %v1849, %v1979
  %v1996 = vsub.f32 %v1878, %v1982
  %v1997 = vsub.f32 %v1907, %v1985
  %v1998 = vsub.f32 %v1936, %v1988
  %v1999 = vsub.f32 %v1965, %v1991
  %v2000 = vmul.f32 %v1992, 1.442695
  %v2001 = vpow.pop %v2000
  %v2002 = vmul.f32 %v1993, 1.442695
  %v2003 = vpow.pop %v2002
  %v2004 = vmul.f32 %v1994, 1.442695
  %v2005 = vpow.pop %v2004
  %v2006 = vmul.f32 %v1995, 1.442695
  %v2007 = vpow.pop %v2006
  %v2008 = vmul.f32 %v1996, 1.442695
  %v2009 = vpow.pop %v2008
  %v2010 = vmul.f32 %v1997, 1.442695
  %v2011 = vpow.pop %v2010
  %v2012 = vmul.f32 %v1998, 1.442695
  %v2013 = vpow.pop %v2012
  %v2014 = vmul.f32 %v1999, 1.442695
  %v2015 = vpow.pop %v2014
  %v2016 = vsel %vm210, %v2001, 0.0
  %2017 = vadd.xlane.f32.xlu0 %v2016
  %v2018 = vpop.xlane.xlu0 %2017
  %v2019 = vsel %vm210, %v2003, 0.0
  %2020 = vadd.xlane.f32.xlu0 %v2019
  %v2021 = vpop.xlane.xlu0 %2020
  %v2022 = vsel %vm210, %v2005, 0.0
  %2023 = vadd.xlane.f32.xlu0 %v2022
  %v2024 = vpop.xlane.xlu0 %2023
  %v2025 = vsel %vm210, %v2007, 0.0
  %2026 = vadd.xlane.f32.xlu0 %v2025
  %v2027 = vpop.xlane.xlu0 %2026
  %v2028 = vsel %vm210, %v2009, 0.0
  %2029 = vadd.xlane.f32.xlu0 %v2028
  %v2030 = vpop.xlane.xlu0 %2029
  %v2031 = vsel %vm210, %v2011, 0.0
  %2032 = vadd.xlane.f32.xlu0 %v2031
  %v2033 = vpop.xlane.xlu0 %2032
  %v2034 = vsel %vm210, %v2013, 0.0
  %2035 = vadd.xlane.f32.xlu0 %v2034
  %v2036 = vpop.xlane.xlu0 %2035
  %v2037 = vsel %vm210, %v2015, 0.0
  %2038 = vadd.xlane.f32.xlu0 %v2037
  %v2039 = vpop.xlane.xlu0 %2038
  %v2040 = vrcp.pop %v2018
  %v2041 = vrcp.pop %v2021
  %v2042 = vrcp.pop %v2024
  %v2043 = vrcp.pop %v2027
  %v2044 = vrcp.pop %v2030
  %v2045 = vrcp.pop %v2033
  %v2046 = vrcp.pop %v2036
  %v2047 = vrcp.pop %v2039
  %v2048 = vmul.f32 %v2001, %v2040
  %v2049 = vmul.f32 %v2003, %v2041
  %v2050 = vmul.f32 %v2005, %v2042
  %v2051 = vmul.f32 %v2007, %v2043
  %v2052 = vmul.f32 %v2009, %v2044
  %v2053 = vmul.f32 %v2011, %v2045
  %v2054 = vmul.f32 %v2013, %v2046
  %v2055 = vmul.f32 %v2015, %v2047
  %v2056 = vpack.c.bf16 %v2048, %v2048
  %v2057 = vpack.c.bf16 %v2049, %v2049
  %v2058 = vpack.c.bf16 %v2050, %v2050
  %v2059 = vpack.c.bf16 %v2051, %v2051
  %v2060 = vpack.c.bf16 %v2052, %v2052
  %v2061 = vpack.c.bf16 %v2053, %v2053
  %v2062 = vpack.c.bf16 %v2054, %v2054
  %v2063 = vpack.c.bf16 %v2055, %v2055
  %2064 = vst [vmem:[#allocation1] ss:$9 sm:$0xff] %v9
  %v2065 = vld [vmem:[#allocation1] sm:$0xff]
  %2067 = vrot.lane.b32.xlu0 %v2065, 40
  %v2068 = vpop.permute.xlu0 %2067
  %v2070 = vsel %vm312, %v2056, 0
  %v2073 = vsel %vm316, %v2068, 0
  %2075 = vmatpush.bf16.msra.mxu0 0
  %2076 = vmatpush.bf16.msra.mxu0 0
  %2077 = vmatpush.bf16.msra.mxu0 0
  %2078 = vmatpush.bf16.msra.mxu0 0
  %2079 = vmatpush.bf16.msra.mxu0 0
  %2080 = vmatpush.bf16.msra.mxu0 0
  %2081 = vmatpush.bf16.msra.mxu0 0
  %2082 = vmatpush.bf16.msra.mxu0 %v2073
  %2083 = vmatmul.bf16.gmra.mxu0 %v2070
  %v2084 = vpop.f32.mrf.mxu0
  %v2085 = vadd.f32 0.0, %v2084
  %v2086 = vpop.f32.mrf.mxu0
  %2087 = vdwg.mxu0
  %2088 = vst [vmem:[#allocation1] ss:$9 sm:$0xff] %v10
  %v2089 = vld [vmem:[#allocation1] sm:$0xff]
  %2091 = vrot.lane.b32.xlu0 %v2089, 40
  %v2092 = vpop.permute.xlu0 %2091
  %v2094 = vsel %vm312, %v2057, 0
  %v2097 = vsel %vm316, %v2092, 0
  %2099 = vmatpush.bf16.msra.mxu0 0
  %2100 = vmatpush.bf16.msra.mxu0 0
  %2101 = vmatpush.bf16.msra.mxu0 0
  %2102 = vmatpush.bf16.msra.mxu0 0
  %2103 = vmatpush.bf16.msra.mxu0 0
  %2104 = vmatpush.bf16.msra.mxu0 0
  %2105 = vmatpush.bf16.msra.mxu0 0
  %2106 = vmatpush.bf16.msra.mxu0 %v2097
  %2107 = vmatmul.bf16.gmra.mxu0 %v2094
  %v2108 = vpop.f32.mrf.mxu0
  %v2109 = vadd.f32 0.0, %v2108
  %v2110 = vpop.f32.mrf.mxu0
  %2111 = vdwg.mxu0
  %2112 = vst [vmem:[#allocation1] ss:$9 sm:$0xff] %v11
  %v2113 = vld [vmem:[#allocation1] sm:$0xff]
  %2115 = vrot.lane.b32.xlu0 %v2113, 40
  %v2116 = vpop.permute.xlu0 %2115
  %v2118 = vsel %vm312, %v2058, 0
  %v2121 = vsel %vm316, %v2116, 0
  %2123 = vmatpush.bf16.msra.mxu0 0
  %2124 = vmatpush.bf16.msra.mxu0 0
  %2125 = vmatpush.bf16.msra.mxu0 0
  %2126 = vmatpush.bf16.msra.mxu0 0
  %2127 = vmatpush.bf16.msra.mxu0 0
  %2128 = vmatpush.bf16.msra.mxu0 0
  %2129 = vmatpush.bf16.msra.mxu0 0
  %2130 = vmatpush.bf16.msra.mxu0 %v2121
  %2131 = vmatmul.bf16.gmra.mxu0 %v2118
  %v2132 = vpop.f32.mrf.mxu0
  %v2133 = vadd.f32 0.0, %v2132
  %v2134 = vpop.f32.mrf.mxu0
  %2135 = vdwg.mxu0
  %2136 = vst [vmem:[#allocation1] ss:$9 sm:$0xff] %v12
  %v2137 = vld [vmem:[#allocation1] sm:$0xff]
  %2139 = vrot.lane.b32.xlu0 %v2137, 40
  %v2140 = vpop.permute.xlu0 %2139
  %v2142 = vsel %vm312, %v2059, 0
  %v2145 = vsel %vm316, %v2140, 0
  %2147 = vmatpush.bf16.msra.mxu0 0
  %2148 = vmatpush.bf16.msra.mxu0 0
  %2149 = vmatpush.bf16.msra.mxu0 0
  %2150 = vmatpush.bf16.msra.mxu0 0
  %2151 = vmatpush.bf16.msra.mxu0 0
  %2152 = vmatpush.bf16.msra.mxu0 0
  %2153 = vmatpush.bf16.msra.mxu0 0
  %2154 = vmatpush.bf16.msra.mxu0 %v2145
  %2155 = vmatmul.bf16.gmra.mxu0 %v2142
  %v2156 = vpop.f32.mrf.mxu0
  %v2157 = vadd.f32 0.0, %v2156
  %v2158 = vpop.f32.mrf.mxu0
  %2159 = vdwg.mxu0
  %2160 = vst [vmem:[#allocation1] ss:$9 sm:$0xff] %v13
  %v2161 = vld [vmem:[#allocation1] sm:$0xff]
  %2163 = vrot.lane.b32.xlu0 %v2161, 40
  %v2164 = vpop.permute.xlu0 %2163
  %v2166 = vsel %vm312, %v2060, 0
  %v2169 = vsel %vm316, %v2164, 0
  %2171 = vmatpush.bf16.msra.mxu0 0
  %2172 = vmatpush.bf16.msra.mxu0 0
  %2173 = vmatpush.bf16.msra.mxu0 0
  %2174 = vmatpush.bf16.msra.mxu0 0
  %2175 = vmatpush.bf16.msra.mxu0 0
  %2176 = vmatpush.bf16.msra.mxu0 0
  %2177 = vmatpush.bf16.msra.mxu0 0
  %2178 = vmatpush.bf16.msra.mxu0 %v2169
  %2179 = vmatmul.bf16.gmra.mxu0 %v2166
  %v2180 = vpop.f32.mrf.mxu0
  %v2181 = vadd.f32 0.0, %v2180
  %v2182 = vpop.f32.mrf.mxu0
  %2183 = vdwg.mxu0
  %2184 = vst [vmem:[#allocation1] ss:$9 sm:$0xff] %v14
  %v2185 = vld [vmem:[#allocation1] sm:$0xff]
  %2187 = vrot.lane.b32.xlu0 %v2185, 40
  %v2188 = vpop.permute.xlu0 %2187
  %v2190 = vsel %vm312, %v2061, 0
  %v2193 = vsel %vm316, %v2188, 0
  %2195 = vmatpush.bf16.msra.mxu0 0
  %2196 = vmatpush.bf16.msra.mxu0 0
  %2197 = vmatpush.bf16.msra.mxu0 0
  %2198 = vmatpush.bf16.msra.mxu0 0
  %2199 = vmatpush.bf16.msra.mxu0 0
  %2200 = vmatpush.bf16.msra.mxu0 0
  %2201 = vmatpush.bf16.msra.mxu0 0
  %2202 = vmatpush.bf16.msra.mxu0 %v2193
  %2203 = vmatmul.bf16.gmra.mxu0 %v2190
  %v2204 = vpop.f32.mrf.mxu0
  %v2205 = vadd.f32 0.0, %v2204
  %v2206 = vpop.f32.mrf.mxu0
  %2207 = vdwg.mxu0
  %2208 = vst [vmem:[#allocation1] ss:$9 sm:$0xff] %v15
  %v2209 = vld [vmem:[#allocation1] sm:$0xff]
  %2211 = vrot.lane.b32.xlu0 %v2209, 40
  %v2212 = vpop.permute.xlu0 %2211
  %v2214 = vsel %vm312, %v2062, 0
  %v2217 = vsel %vm316, %v2212, 0
  %2219 = vmatpush.bf16.msra.mxu0 0
  %2220 = vmatpush.bf16.msra.mxu0 0
  %2221 = vmatpush.bf16.msra.mxu0 0
  %2222 = vmatpush.bf16.msra.mxu0 0
  %2223 = vmatpush.bf16.msra.mxu0 0
  %2224 = vmatpush.bf16.msra.mxu0 0
  %2225 = vmatpush.bf16.msra.mxu0 0
  %2226 = vmatpush.bf16.msra.mxu0 %v2217
  %2227 = vmatmul.bf16.gmra.mxu0 %v2214
  %v2228 = vpop.f32.mrf.mxu0
  %v2229 = vadd.f32 0.0, %v2228
  %v2230 = vpop.f32.mrf.mxu0
  %2231 = vdwg.mxu0
  %2232 = vst [vmem:[#allocation1] ss:$9 sm:$0xff] %v16
  %v2233 = vld [vmem:[#allocation1] sm:$0xff]
  %2235 = vrot.lane.b32.xlu0 %v2233, 40
  %v2236 = vpop.permute.xlu0 %2235
  %v2238 = vsel %vm312, %v2063, 0
  %v2241 = vsel %vm316, %v2236, 0
  %2243 = vmatpush.bf16.msra.mxu0 0
  %2244 = vmatpush.bf16.msra.mxu0 0
  %2245 = vmatpush.bf16.msra.mxu0 0
  %2246 = vmatpush.bf16.msra.mxu0 0
  %2247 = vmatpush.bf16.msra.mxu0 0
  %2248 = vmatpush.bf16.msra.mxu0 0
  %2249 = vmatpush.bf16.msra.mxu0 0
  %2250 = vmatpush.bf16.msra.mxu0 %v2241
  %2251 = vmatmul.bf16.gmra.mxu0 %v2238
  %v2252 = vpop.f32.mrf.mxu0
  %v2253 = vadd.f32 0.0, %v2252
  %v2254 = vpop.f32.mrf.mxu0
  %2255 = vdwg.mxu0
  %v2256 = vpack.c.bf16 %v2085, %v2085
  %v2257 = vpack.c.bf16 %v2109, %v2109
  %v2258 = vpack.c.bf16 %v2133, %v2133
  %v2259 = vpack.c.bf16 %v2157, %v2157
  %v2260 = vpack.c.bf16 %v2181, %v2181
  %v2261 = vpack.c.bf16 %v2205, %v2205
  %v2262 = vpack.c.bf16 %v2229, %v2229
  %v2263 = vpack.c.bf16 %v2253, %v2253
  %v2272 = vrot.slane %v2256, 3
  %v2273 = vrot.slane %v2257, 3
  %v2274 = vrot.slane %v2258, 3
  %v2275 = vrot.slane %v2259, 3
  %v2276 = vrot.slane %v2260, 3
  %v2277 = vrot.slane %v2261, 3
  %v2278 = vrot.slane %v2262, 3
  %v2279 = vrot.slane %v2263, 3
  %v2282 = vsel %vm316, %v2256, %v2272
  %v2286 = vsel %vm316, %v2257, %v2273
  %v2290 = vsel %vm316, %v2258, %v2274
  %v2294 = vsel %vm316, %v2259, %v2275
  %v2298 = vsel %vm316, %v2260, %v2276
  %v2302 = vsel %vm316, %v2261, %v2277
  %v2306 = vsel %vm316, %v2262, %v2278
  %v2310 = vsel %vm316, %v2263, %v2279
  %2312 = vrot.lane.b32.xlu0 %v2282, 24
  %v2313 = vpop.permute.xlu0 %2312
  %2314 = vrot.lane.b32.xlu0 %v2286, 24
  %v2315 = vpop.permute.xlu0 %2314
  %2316 = vrot.lane.b32.xlu0 %v2290, 24
  %v2317 = vpop.permute.xlu0 %2316
  %2318 = vrot.lane.b32.xlu0 %v2294, 24
  %v2319 = vpop.permute.xlu0 %2318
  %2320 = vrot.lane.b32.xlu0 %v2298, 24
  %v2321 = vpop.permute.xlu0 %2320
  %2322 = vrot.lane.b32.xlu0 %v2302, 24
  %v2323 = vpop.permute.xlu0 %2322
  %2324 = vrot.lane.b32.xlu0 %v2306, 24
  %v2325 = vpop.permute.xlu0 %2324
  %2326 = vrot.lane.b32.xlu0 %v2310, 24
  %v2327 = vpop.permute.xlu0 %2326
  %vm2336 = vcmask 254144
  %2337 = vst.msk [vmem:[%s1] sm:$0x1] %vm2336, %v2313
  %2338 = vst.msk [vmem:[%s1 + $0x1] sm:$0x1] %vm2336, %v2315
  %2339 = vst.msk [vmem:[%s1 + $0x2] sm:$0x1] %vm2336, %v2317
  %2340 = vst.msk [vmem:[%s1 + $0x3] sm:$0x1] %vm2336, %v2319
  %2341 = vst.msk [vmem:[%s1 + $0x4] sm:$0x1] %vm2336, %v2321
  %2342 = vst.msk [vmem:[%s1 + $0x5] sm:$0x1] %vm2336, %v2323
  %2343 = vst.msk [vmem:[%s1 + $0x6] sm:$0x1] %vm2336, %v2325
  %2344 = vst.msk [vmem:[%s1 + $0x7] sm:$0x1] %vm2336, %v2327
  // Predicated region
  $region6: #{_lambda_.12} parent=0 // pred_check
    _
  $region7: #{_lambda_.12} parent=0 // pred_check_branch
    %2346 = sbr.rel (0) target = $region9
  $region8: #{_lambda_.12} parent=0 // pred_region
    _
  $region9: #{_lambda_.12} parent=0 // pred_fallthru
    _
  // Predicated region
  $region10: #{_lambda_.12} parent=0 // pred_check
    _
  $region11: #{_lambda_.12} parent=0 // pred_check_branch
    %2348 = sbr.rel (0) target = $region13
  $region12: #{_lambda_.12} parent=0 // pred_region
    _
  $region13: #{_lambda_.12} parent=0 // pred_fallthru
    _

// kernel: _lambda_.14
$region0: #{_lambda_.14}
  #allocation0 [shape = 'u32[]', space=smem, size = 0x4, offset = 0x4, fixed_abs, tag = 'smem constant byte address 0x4 - core index']
  #allocation1 [shape = 'u32[72,128]{1,0:T(1,128)}', space=vmem, size = 0x9000, scoped, tag = 'internal scratch']
  #allocation2 [shape = 'f32[16,32]{1,0:T(8,128)}', space=vmem, size = 0x2000, scoped, tag = 'scratch operand']
  %s0 = inlined_call_operand.vmem [shape: f32[16,32], index: 0, kind: input, shape index: {}]
  %s1 = inlined_call_operand.vmem [shape: bf16[32,2048], index: 1, kind: input, shape index: {}]
  %s2 = inlined_call_operand.vmem [shape: f32[1,2048], index: 2, kind: input, shape index: {}]
  %s3 = inlined_call_operand.vmem [shape: bf16[2048,32], index: 3, kind: input, shape index: {}]
  %s4 = inlined_call_operand.vmem [shape: f32[1,32], index: 4, kind: input, shape index: {}]
  %s5 = inlined_call_operand.vmem [shape: f32[1,32], index: 5, kind: input, shape index: {}]
  %s6 = inlined_call_operand.vmem [shape: f32[1,32], index: 6, kind: input, shape index: {}]
  %s7 = inlined_call_operand.vmem [shape: f32[16,32], index: 7, kind: output, shape index: {}]
  %s8 = sld [smem:[#allocation0]]
  $region46: #{_lambda_.14} parent=0
    _
  %s10 = ssub.s32 1, %s8
  %s11 = scalar_select 0, %s10, %s8
  // Predicated region
  $region2: #{_lambda_.14} parent=0 // pred_check
    _
  $region3: #{_lambda_.14} parent=0 // pred_check_branch
    %13 = sbr.rel (0) target = $region5
  $region4: #{_lambda_.14} parent=0 // pred_region
    _
  $region5: #{_lambda_.14} parent=0 // pred_fallthru
    _
  // Predicated region
  $region6: #{_lambda_.14} parent=0 // pred_check
    _
  $region7: #{_lambda_.14} parent=0 // pred_check_branch
    %15 = sbr.rel (0) target = $region9
  $region8: #{_lambda_.14} parent=0 // pred_region
    _
  $region9: #{_lambda_.14} parent=0 // pred_fallthru
    _
  // Predicated region
  $region10: #{_lambda_.14} parent=0 // pred_check
    _
  $region11: #{_lambda_.14} parent=0 // pred_check_branch
    %17 = sbr.rel (0) target = $region13
  $region12: #{_lambda_.14} parent=0 // pred_region
    _
  $region13: #{_lambda_.14} parent=0 // pred_fallthru
    _
  // Predicated region
  $region14: #{_lambda_.14} parent=0 // pred_check
    _
  $region15: #{_lambda_.14} parent=0 // pred_check_branch
    %19 = sbr.rel (0) target = $region17
  $region16: #{_lambda_.14} parent=0 // pred_region
    _
  $region17: #{_lambda_.14} parent=0 // pred_fallthru
    _
  // Predicated region
  $region18: #{_lambda_.14} parent=0 // pred_check
    _
  $region19: #{_lambda_.14} parent=0 // pred_check_branch
    %21 = sbr.rel (0) target = $region21
  $region20: #{_lambda_.14} parent=0 // pred_region
    _
  $region21: #{_lambda_.14} parent=0 // pred_fallthru
    _
  // Predicated region
  $region22: #{_lambda_.14} parent=0 // pred_check
    _
  $region23: #{_lambda_.14} parent=0 // pred_check_branch
    %23 = sbr.rel (0) target = $region25
  $region24: #{_lambda_.14} parent=0 // pred_region
    _
  $region25: #{_lambda_.14} parent=0 // pred_fallthru
    _
  // Predicated region
  $region26: #{_lambda_.14} parent=0 // pred_check
    _
  $region27: #{_lambda_.14} parent=0 // pred_check_branch
    %25 = sbr.rel (0) target = $region29
  $region28: #{_lambda_.14} parent=0 // pred_region
    _
  $region29: #{_lambda_.14} parent=0 // pred_fallthru
    _
  %p27 = scmp.eq.s32.totalorder 0, 0
  // Predicated region
  $region30: #{_lambda_.14} parent=0 // pred_check
    %p28 = pneg %p27
  $region31: #{_lambda_.14} parent=0 // pred_check_branch
    %30 = sbr.rel (%p28) target = $region33
  $region32: #{_lambda_.14} parent=0 // pred_region
    %vm31 = vcmask 261120
    %32 = vst.msk [vmem:[#allocation2] sm:$0xff] %vm31, 0.0
    %33 = vst.msk [vmem:[#allocation2 + $0x8] sm:$0xff] %vm31, 0.0
  $region33: #{_lambda_.14} parent=0 // pred_fallthru
    _
  %v34 = vld [vmem:[%s0] sm:$0xff]
  %v35 = vld [vmem:[%s0 + $0x8] sm:$0xff]
  %v36 = vpack.c.bf16 %v35, %v34
  %v37 = vld [vmem:[%s1] sm:$0xff]
  %v38 = vld [vmem:[%s1 + $0x8] sm:$0xff]
  %v39 = vld [vmem:[%s1 + $0x10] sm:$0xff]
  %v40 = vld [vmem:[%s1 + $0x18] sm:$0xff]
  %v41 = vld [vmem:[%s1 + $0x20] sm:$0xff]
  %v42 = vld [vmem:[%s1 + $0x28] sm:$0xff]
  %v43 = vld [vmem:[%s1 + $0x30] sm:$0xff]
  %v44 = vld [vmem:[%s1 + $0x38] sm:$0xff]
  %v45 = vld [vmem:[%s1 + $0x40] sm:$0xff]
  %v46 = vld [vmem:[%s1 + $0x48] sm:$0xff]
  %v47 = vld [vmem:[%s1 + $0x50] sm:$0xff]
  %v48 = vld [vmem:[%s1 + $0x58] sm:$0xff]
  %v49 = vld [vmem:[%s1 + $0x60] sm:$0xff]
  %v50 = vld [vmem:[%s1 + $0x68] sm:$0xff]
  %v51 = vld [vmem:[%s1 + $0x70] sm:$0xff]
  %v52 = vld [vmem:[%s1 + $0x78] sm:$0xff]
  %v53 = vld [vmem:[%s1 + $0x80] sm:$0xff]
  %v54 = vld [vmem:[%s1 + $0x88] sm:$0xff]
  %v55 = vld [vmem:[%s1 + $0x90] sm:$0xff]
  %v56 = vld [vmem:[%s1 + $0x98] sm:$0xff]
  %v57 = vld [vmem:[%s1 + $0xa0] sm:$0xff]
  %v58 = vld [vmem:[%s1 + $0xa8] sm:$0xff]
  %v59 = vld [vmem:[%s1 + $0xb0] sm:$0xff]
  %v60 = vld [vmem:[%s1 + $0xb8] sm:$0xff]
  %v61 = vld [vmem:[%s1 + $0xc0] sm:$0xff]
  %v62 = vld [vmem:[%s1 + $0xc8] sm:$0xff]
  %v63 = vld [vmem:[%s1 + $0xd0] sm:$0xff]
  %v64 = vld [vmem:[%s1 + $0xd8] sm:$0xff]
  %v65 = vld [vmem:[%s1 + $0xe0] sm:$0xff]
  %v66 = vld [vmem:[%s1 + $0xe8] sm:$0xff]
  %v67 = vld [vmem:[%s1 + $0xf0] sm:$0xff]
  %v68 = vld [vmem:[%s1 + $0xf8] sm:$0xff]
  %v69 = vld [vmem:[%s2] sm:$0xff]
  %v70 = vld [vmem:[%s2 + $0x8] sm:$0xff]
  %v73 = vperm.slane %v69, 0
  %v74 = vperm.slane %v69, 1
  %v75 = vperm.slane %v69, 2
  %v76 = vperm.slane %v69, 3
  %v77 = vperm.slane %v69, 4
  %v78 = vperm.slane %v69, 5
  %v79 = vperm.slane %v69, 6
  %v80 = vperm.slane %v69, 7
  %v81 = vperm.slane %v70, 0
  %v82 = vperm.slane %v70, 1
  %v83 = vperm.slane %v70, 2
  %v84 = vperm.slane %v70, 3
  %v85 = vperm.slane %v70, 4
  %v86 = vperm.slane %v70, 5
  %v87 = vperm.slane %v70, 6
  %v88 = vperm.slane %v70, 7
  %v137 = vunpack.c.l.b16 %v37
  %v138 = vunpack.c.h.b16 %v37
  %v139 = vunpack.c.l.b16 %v38
  %v140 = vunpack.c.h.b16 %v38
  %v141 = vunpack.c.l.b16 %v39
  %v142 = vunpack.c.h.b16 %v39
  %v143 = vunpack.c.l.b16 %v40
  %v144 = vunpack.c.h.b16 %v40
  %v145 = vunpack.c.l.b16 %v41
  %v146 = vunpack.c.h.b16 %v41
  %v147 = vunpack.c.l.b16 %v42
  %v148 = vunpack.c.h.b16 %v42
  %v149 = vunpack.c.l.b16 %v43
  %v150 = vunpack.c.h.b16 %v43
  %v151 = vunpack.c.l.b16 %v44
  %v152 = vunpack.c.h.b16 %v44
  %v153 = vunpack.c.l.b16 %v45
  %v154 = vunpack.c.h.b16 %v45
  %v155 = vunpack.c.l.b16 %v46
  %v156 = vunpack.c.h.b16 %v46
  %v157 = vunpack.c.l.b16 %v47
  %v158 = vunpack.c.h.b16 %v47
  %v159 = vunpack.c.l.b16 %v48
  %v160 = vunpack.c.h.b16 %v48
  %v161 = vunpack.c.l.b16 %v49
  %v162 = vunpack.c.h.b16 %v49
  %v163 = vunpack.c.l.b16 %v50
  %v164 = vunpack.c.h.b16 %v50
  %v165 = vunpack.c.l.b16 %v51
  %v166 = vunpack.c.h.b16 %v51
  %v167 = vunpack.c.l.b16 %v52
  %v168 = vunpack.c.h.b16 %v52
  %v169 = vunpack.c.l.b16 %v53
  %v170 = vunpack.c.h.b16 %v53
  %v171 = vunpack.c.l.b16 %v54
  %v172 = vunpack.c.h.b16 %v54
  %v173 = vunpack.c.l.b16 %v55
  %v174 = vunpack.c.h.b16 %v55
  %v175 = vunpack.c.l.b16 %v56
  %v176 = vunpack.c.h.b16 %v56
  %v177 = vunpack.c.l.b16 %v57
  %v178 = vunpack.c.h.b16 %v57
  %v179 = vunpack.c.l.b16 %v58
  %v180 = vunpack.c.h.b16 %v58
  %v181 = vunpack.c.l.b16 %v59
  %v182 = vunpack.c.h.b16 %v59
  %v183 = vunpack.c.l.b16 %v60
  %v184 = vunpack.c.h.b16 %v60
  %v185 = vunpack.c.l.b16 %v61
  %v186 = vunpack.c.h.b16 %v61
  %v187 = vunpack.c.l.b16 %v62
  %v188 = vunpack.c.h.b16 %v62
  %v189 = vunpack.c.l.b16 %v63
  %v190 = vunpack.c.h.b16 %v63
  %v191 = vunpack.c.l.b16 %v64
  %v192 = vunpack.c.h.b16 %v64
  %v193 = vunpack.c.l.b16 %v65
  %v194 = vunpack.c.h.b16 %v65
  %v195 = vunpack.c.l.b16 %v66
  %v196 = vunpack.c.h.b16 %v66
  %v197 = vunpack.c.l.b16 %v67
  %v198 = vunpack.c.h.b16 %v67
  %v199 = vunpack.c.l.b16 %v68
  %v200 = vunpack.c.h.b16 %v68
  %v201 = vpack.c.b16 %v153, %v137
  %v202 = vpack.c.b16 %v154, %v138
  %v203 = vpack.c.b16 %v155, %v139
  %v204 = vpack.c.b16 %v156, %v140
  %v205 = vpack.c.b16 %v157, %v141
  %v206 = vpack.c.b16 %v158, %v142
  %v207 = vpack.c.b16 %v159, %v143
  %v208 = vpack.c.b16 %v160, %v144
  %v209 = vpack.c.b16 %v161, %v145
  %v210 = vpack.c.b16 %v162, %v146
  %v211 = vpack.c.b16 %v163, %v147
  %v212 = vpack.c.b16 %v164, %v148
  %v213 = vpack.c.b16 %v165, %v149
  %v214 = vpack.c.b16 %v166, %v150
  %v215 = vpack.c.b16 %v167, %v151
  %v216 = vpack.c.b16 %v168, %v152
  %v217 = vpack.c.b16 %v185, %v169
  %v218 = vpack.c.b16 %v186, %v170
  %v219 = vpack.c.b16 %v187, %v171
  %v220 = vpack.c.b16 %v188, %v172
  %v221 = vpack.c.b16 %v189, %v173
  %v222 = vpack.c.b16 %v190, %v174
  %v223 = vpack.c.b16 %v191, %v175
  %v224 = vpack.c.b16 %v192, %v176
  %v225 = vpack.c.b16 %v193, %v177
  %v226 = vpack.c.b16 %v194, %v178
  %v227 = vpack.c.b16 %v195, %v179
  %v228 = vpack.c.b16 %v196, %v180
  %v229 = vpack.c.b16 %v197, %v181
  %v230 = vpack.c.b16 %v198, %v182
  %v231 = vpack.c.b16 %v199, %v183
  %v232 = vpack.c.b16 %v200, %v184
  %vm265 = vcmask 261120
  %v267 = vsel %vm265, %v36, 0
  %269 = vmatpush.bf16.msra.mxu0 0
  %270 = vmatpush.bf16.msra.mxu0 0
  %271 = vmatpush.bf16.msra.mxu0 0
  %272 = vmatpush.bf16.msra.mxu0 0
  %273 = vmatpush.bf16.msra.mxu0 0
  %274 = vmatpush.bf16.msra.mxu0 0
  %275 = vmatpush.bf16.msra.mxu0 %v217
  %276 = vmatpush.bf16.msra.mxu0 %v201
  %277 = vmatmul.bf16.gmra.mxu0 %v267
  %v278 = vpop.f32.mrf.mxu0
  %v279 = vadd.f32 %v73, %v278
  %v280 = vpop.f32.mrf.mxu0
  %v281 = vadd.f32 %v73, %v280
  %282 = vdwg.mxu0
  %283 = vmatpush.bf16.msra.mxu0 0
  %284 = vmatpush.bf16.msra.mxu0 0
  %285 = vmatpush.bf16.msra.mxu0 0
  %286 = vmatpush.bf16.msra.mxu0 0
  %287 = vmatpush.bf16.msra.mxu0 0
  %288 = vmatpush.bf16.msra.mxu0 0
  %289 = vmatpush.bf16.msra.mxu0 %v218
  %290 = vmatpush.bf16.msra.mxu0 %v202
  %291 = vmatmul.bf16.gmra.mxu0 %v267
  %v292 = vpop.f32.mrf.mxu0
  %v293 = vadd.f32 %v74, %v292
  %v294 = vpop.f32.mrf.mxu0
  %v295 = vadd.f32 %v74, %v294
  %296 = vdwg.mxu0
  %297 = vmatpush.bf16.msra.mxu0 0
  %298 = vmatpush.bf16.msra.mxu0 0
  %299 = vmatpush.bf16.msra.mxu0 0
  %300 = vmatpush.bf16.msra.mxu0 0
  %301 = vmatpush.bf16.msra.mxu0 0
  %302 = vmatpush.bf16.msra.mxu0 0
  %303 = vmatpush.bf16.msra.mxu0 %v219
  %304 = vmatpush.bf16.msra.mxu0 %v203
  %305 = vmatmul.bf16.gmra.mxu0 %v267
  %v306 = vpop.f32.mrf.mxu0
  %v307 = vadd.f32 %v75, %v306
  %v308 = vpop.f32.mrf.mxu0
  %v309 = vadd.f32 %v75, %v308
  %310 = vdwg.mxu0
  %311 = vmatpush.bf16.msra.mxu0 0
  %312 = vmatpush.bf16.msra.mxu0 0
  %313 = vmatpush.bf16.msra.mxu0 0
  %314 = vmatpush.bf16.msra.mxu0 0
  %315 = vmatpush.bf16.msra.mxu0 0
  %316 = vmatpush.bf16.msra.mxu0 0
  %317 = vmatpush.bf16.msra.mxu0 %v220
  %318 = vmatpush.bf16.msra.mxu0 %v204
  %319 = vmatmul.bf16.gmra.mxu0 %v267
  %v320 = vpop.f32.mrf.mxu0
  %v321 = vadd.f32 %v76, %v320
  %v322 = vpop.f32.mrf.mxu0
  %v323 = vadd.f32 %v76, %v322
  %324 = vdwg.mxu0
  %325 = vmatpush.bf16.msra.mxu0 0
  %326 = vmatpush.bf16.msra.mxu0 0
  %327 = vmatpush.bf16.msra.mxu0 0
  %328 = vmatpush.bf16.msra.mxu0 0
  %329 = vmatpush.bf16.msra.mxu0 0
  %330 = vmatpush.bf16.msra.mxu0 0
  %331 = vmatpush.bf16.msra.mxu0 %v221
  %332 = vmatpush.bf16.msra.mxu0 %v205
  %333 = vmatmul.bf16.gmra.mxu0 %v267
  %v334 = vpop.f32.mrf.mxu0
  %v335 = vadd.f32 %v77, %v334
  %v336 = vpop.f32.mrf.mxu0
  %v337 = vadd.f32 %v77, %v336
  %338 = vdwg.mxu0
  %339 = vmatpush.bf16.msra.mxu0 0
  %340 = vmatpush.bf16.msra.mxu0 0
  %341 = vmatpush.bf16.msra.mxu0 0
  %342 = vmatpush.bf16.msra.mxu0 0
  %343 = vmatpush.bf16.msra.mxu0 0
  %344 = vmatpush.bf16.msra.mxu0 0
  %345 = vmatpush.bf16.msra.mxu0 %v222
  %346 = vmatpush.bf16.msra.mxu0 %v206
  %347 = vmatmul.bf16.gmra.mxu0 %v267
  %v348 = vpop.f32.mrf.mxu0
  %v349 = vadd.f32 %v78, %v348
  %v350 = vpop.f32.mrf.mxu0
  %v351 = vadd.f32 %v78, %v350
  %352 = vdwg.mxu0
  %353 = vmatpush.bf16.msra.mxu0 0
  %354 = vmatpush.bf16.msra.mxu0 0
  %355 = vmatpush.bf16.msra.mxu0 0
  %356 = vmatpush.bf16.msra.mxu0 0
  %357 = vmatpush.bf16.msra.mxu0 0
  %358 = vmatpush.bf16.msra.mxu0 0
  %359 = vmatpush.bf16.msra.mxu0 %v223
  %360 = vmatpush.bf16.msra.mxu0 %v207
  %361 = vmatmul.bf16.gmra.mxu0 %v267
  %v362 = vpop.f32.mrf.mxu0
  %v363 = vadd.f32 %v79, %v362
  %v364 = vpop.f32.mrf.mxu0
  %v365 = vadd.f32 %v79, %v364
  %366 = vdwg.mxu0
  %367 = vmatpush.bf16.msra.mxu0 0
  %368 = vmatpush.bf16.msra.mxu0 0
  %369 = vmatpush.bf16.msra.mxu0 0
  %370 = vmatpush.bf16.msra.mxu0 0
  %371 = vmatpush.bf16.msra.mxu0 0
  %372 = vmatpush.bf16.msra.mxu0 0
  %373 = vmatpush.bf16.msra.mxu0 %v224
  %374 = vmatpush.bf16.msra.mxu0 %v208
  %375 = vmatmul.bf16.gmra.mxu0 %v267
  %v376 = vpop.f32.mrf.mxu0
  %v377 = vadd.f32 %v80, %v376
  %v378 = vpop.f32.mrf.mxu0
  %v379 = vadd.f32 %v80, %v378
  %380 = vdwg.mxu0
  %381 = vmatpush.bf16.msra.mxu0 0
  %382 = vmatpush.bf16.msra.mxu0 0
  %383 = vmatpush.bf16.msra.mxu0 0
  %384 = vmatpush.bf16.msra.mxu0 0
  %385 = vmatpush.bf16.msra.mxu0 0
  %386 = vmatpush.bf16.msra.mxu0 0
  %387 = vmatpush.bf16.msra.mxu0 %v225
  %388 = vmatpush.bf16.msra.mxu0 %v209
  %389 = vmatmul.bf16.gmra.mxu0 %v267
  %v390 = vpop.f32.mrf.mxu0
  %v391 = vadd.f32 %v81, %v390
  %v392 = vpop.f32.mrf.mxu0
  %v393 = vadd.f32 %v81, %v392
  %394 = vdwg.mxu0
  %395 = vmatpush.bf16.msra.mxu0 0
  %396 = vmatpush.bf16.msra.mxu0 0
  %397 = vmatpush.bf16.msra.mxu0 0
  %398 = vmatpush.bf16.msra.mxu0 0
  %399 = vmatpush.bf16.msra.mxu0 0
  %400 = vmatpush.bf16.msra.mxu0 0
  %401 = vmatpush.bf16.msra.mxu0 %v226
  %402 = vmatpush.bf16.msra.mxu0 %v210
  %403 = vmatmul.bf16.gmra.mxu0 %v267
  %v404 = vpop.f32.mrf.mxu0
  %v405 = vadd.f32 %v82, %v404
  %v406 = vpop.f32.mrf.mxu0
  %v407 = vadd.f32 %v82, %v406
  %408 = vdwg.mxu0
  %409 = vmatpush.bf16.msra.mxu0 0
  %410 = vmatpush.bf16.msra.mxu0 0
  %411 = vmatpush.bf16.msra.mxu0 0
  %412 = vmatpush.bf16.msra.mxu0 0
  %413 = vmatpush.bf16.msra.mxu0 0
  %414 = vmatpush.bf16.msra.mxu0 0
  %415 = vmatpush.bf16.msra.mxu0 %v227
  %416 = vmatpush.bf16.msra.mxu0 %v211
  %417 = vmatmul.bf16.gmra.mxu0 %v267
  %v418 = vpop.f32.mrf.mxu0
  %v419 = vadd.f32 %v83, %v418
  %v420 = vpop.f32.mrf.mxu0
  %v421 = vadd.f32 %v83, %v420
  %422 = vdwg.mxu0
  %423 = vmatpush.bf16.msra.mxu0 0
  %424 = vmatpush.bf16.msra.mxu0 0
  %425 = vmatpush.bf16.msra.mxu0 0
  %426 = vmatpush.bf16.msra.mxu0 0
  %427 = vmatpush.bf16.msra.mxu0 0
  %428 = vmatpush.bf16.msra.mxu0 0
  %429 = vmatpush.bf16.msra.mxu0 %v228
  %430 = vmatpush.bf16.msra.mxu0 %v212
  %431 = vmatmul.bf16.gmra.mxu0 %v267
  %v432 = vpop.f32.mrf.mxu0
  %v433 = vadd.f32 %v84, %v432
  %v434 = vpop.f32.mrf.mxu0
  %v435 = vadd.f32 %v84, %v434
  %436 = vdwg.mxu0
  %437 = vmatpush.bf16.msra.mxu0 0
  %438 = vmatpush.bf16.msra.mxu0 0
  %439 = vmatpush.bf16.msra.mxu0 0
  %440 = vmatpush.bf16.msra.mxu0 0
  %441 = vmatpush.bf16.msra.mxu0 0
  %442 = vmatpush.bf16.msra.mxu0 0
  %443 = vmatpush.bf16.msra.mxu0 %v229
  %444 = vmatpush.bf16.msra.mxu0 %v213
  %445 = vmatmul.bf16.gmra.mxu0 %v267
  %v446 = vpop.f32.mrf.mxu0
  %v447 = vadd.f32 %v85, %v446
  %v448 = vpop.f32.mrf.mxu0
  %v449 = vadd.f32 %v85, %v448
  %450 = vdwg.mxu0
  %451 = vmatpush.bf16.msra.mxu0 0
  %452 = vmatpush.bf16.msra.mxu0 0
  %453 = vmatpush.bf16.msra.mxu0 0
  %454 = vmatpush.bf16.msra.mxu0 0
  %455 = vmatpush.bf16.msra.mxu0 0
  %456 = vmatpush.bf16.msra.mxu0 0
  %457 = vmatpush.bf16.msra.mxu0 %v230
  %458 = vmatpush.bf16.msra.mxu0 %v214
  %459 = vmatmul.bf16.gmra.mxu0 %v267
  %v460 = vpop.f32.mrf.mxu0
  %v461 = vadd.f32 %v86, %v460
  %v462 = vpop.f32.mrf.mxu0
  %v463 = vadd.f32 %v86, %v462
  %464 = vdwg.mxu0
  %465 = vmatpush.bf16.msra.mxu0 0
  %466 = vmatpush.bf16.msra.mxu0 0
  %467 = vmatpush.bf16.msra.mxu0 0
  %468 = vmatpush.bf16.msra.mxu0 0
  %469 = vmatpush.bf16.msra.mxu0 0
  %470 = vmatpush.bf16.msra.mxu0 0
  %471 = vmatpush.bf16.msra.mxu0 %v231
  %472 = vmatpush.bf16.msra.mxu0 %v215
  %473 = vmatmul.bf16.gmra.mxu0 %v267
  %v474 = vpop.f32.mrf.mxu0
  %v475 = vadd.f32 %v87, %v474
  %v476 = vpop.f32.mrf.mxu0
  %v477 = vadd.f32 %v87, %v476
  %478 = vdwg.mxu0
  %479 = vmatpush.bf16.msra.mxu0 0
  %480 = vmatpush.bf16.msra.mxu0 0
  %481 = vmatpush.bf16.msra.mxu0 0
  %482 = vmatpush.bf16.msra.mxu0 0
  %483 = vmatpush.bf16.msra.mxu0 0
  %484 = vmatpush.bf16.msra.mxu0 0
  %485 = vmatpush.bf16.msra.mxu0 %v232
  %486 = vmatpush.bf16.msra.mxu0 %v216
  %487 = vmatmul.bf16.gmra.mxu0 %v267
  %v488 = vpop.f32.mrf.mxu0
  %v489 = vadd.f32 %v88, %v488
  %v490 = vpop.f32.mrf.mxu0
  %v491 = vadd.f32 %v88, %v490
  %492 = vdwg.mxu0
  %v493 = vmax.f32 %v279, 0.0
  %v494 = vmax.f32 %v293, 0.0
  %v495 = vmax.f32 %v307, 0.0
  %v496 = vmax.f32 %v321, 0.0
  %v497 = vmax.f32 %v335, 0.0
  %v498 = vmax.f32 %v349, 0.0
  %v499 = vmax.f32 %v363, 0.0
  %v500 = vmax.f32 %v377, 0.0
  %v501 = vmax.f32 %v391, 0.0
  %v502 = vmax.f32 %v405, 0.0
  %v503 = vmax.f32 %v419, 0.0
  %v504 = vmax.f32 %v433, 0.0
  %v505 = vmax.f32 %v447, 0.0
  %v506 = vmax.f32 %v461, 0.0
  %v507 = vmax.f32 %v475, 0.0
  %v508 = vmax.f32 %v489, 0.0
  %v509 = vmax.f32 %v281, 0.0
  %v510 = vmax.f32 %v295, 0.0
  %v511 = vmax.f32 %v309, 0.0
  %v512 = vmax.f32 %v323, 0.0
  %v513 = vmax.f32 %v337, 0.0
  %v514 = vmax.f32 %v351, 0.0
  %v515 = vmax.f32 %v365, 0.0
  %v516 = vmax.f32 %v379, 0.0
  %v517 = vmax.f32 %v393, 0.0
  %v518 = vmax.f32 %v407, 0.0
  %v519 = vmax.f32 %v421, 0.0
  %v520 = vmax.f32 %v435, 0.0
  %v521 = vmax.f32 %v449, 0.0
  %v522 = vmax.f32 %v463, 0.0
  %v523 = vmax.f32 %v477, 0.0
  %v524 = vmax.f32 %v491, 0.0
  %v525 = vld [vmem:[#allocation2] sm:$0xff]
  %v526 = vld [vmem:[#allocation2 + $0x8] sm:$0xff]
  %v527 = vpack.c.bf16 %v509, %v493
  %v528 = vpack.c.bf16 %v510, %v494
  %v529 = vpack.c.bf16 %v511, %v495
  %v530 = vpack.c.bf16 %v512, %v496
  %v531 = vpack.c.bf16 %v513, %v497
  %v532 = vpack.c.bf16 %v514, %v498
  %v533 = vpack.c.bf16 %v515, %v499
  %v534 = vpack.c.bf16 %v516, %v500
  %v535 = vpack.c.bf16 %v517, %v501
  %v536 = vpack.c.bf16 %v518, %v502
  %v537 = vpack.c.bf16 %v519, %v503
  %v538 = vpack.c.bf16 %v520, %v504
  %v539 = vpack.c.bf16 %v521, %v505
  %v540 = vpack.c.bf16 %v522, %v506
  %v541 = vpack.c.bf16 %v523, %v507
  %v542 = vpack.c.bf16 %v524, %v508
  %v543 = vld [vmem:[%s3] sm:$0xf]
  %v544 = vld [vmem:[%s3 + $0x4] sm:$0xf]
  %v545 = vld [vmem:[%s3 + $0x8] sm:$0xf]
  %v546 = vld [vmem:[%s3 + $0xc] sm:$0xf]
  %v547 = vld [vmem:[%s3 + $0x10] sm:$0xf]
  %v548 = vld [vmem:[%s3 + $0x14] sm:$0xf]
  %v549 = vld [vmem:[%s3 + $0x18] sm:$0xf]
  %v550 = vld [vmem:[%s3 + $0x1c] sm:$0xf]
  %v551 = vld [vmem:[%s3 + $0x20] sm:$0xf]
  %v552 = vld [vmem:[%s3 + $0x24] sm:$0xf]
  %v553 = vld [vmem:[%s3 + $0x28] sm:$0xf]
  %v554 = vld [vmem:[%s3 + $0x2c] sm:$0xf]
  %v555 = vld [vmem:[%s3 + $0x30] sm:$0xf]
  %v556 = vld [vmem:[%s3 + $0x34] sm:$0xf]
  %v557 = vld [vmem:[%s3 + $0x38] sm:$0xf]
  %v558 = vld [vmem:[%s3 + $0x3c] sm:$0xf]
  %v559 = vld [vmem:[%s3 + $0x40] sm:$0xf]
  %v560 = vld [vmem:[%s3 + $0x44] sm:$0xf]
  %v561 = vld [vmem:[%s3 + $0x48] sm:$0xf]
  %v562 = vld [vmem:[%s3 + $0x4c] sm:$0xf]
  %v563 = vld [vmem:[%s3 + $0x50] sm:$0xf]
  %v564 = vld [vmem:[%s3 + $0x54] sm:$0xf]
  %v565 = vld [vmem:[%s3 + $0x58] sm:$0xf]
  %v566 = vld [vmem:[%s3 + $0x5c] sm:$0xf]
  %v567 = vld [vmem:[%s3 + $0x60] sm:$0xf]
  %v568 = vld [vmem:[%s3 + $0x64] sm:$0xf]
  %v569 = vld [vmem:[%s3 + $0x68] sm:$0xf]
  %v570 = vld [vmem:[%s3 + $0x6c] sm:$0xf]
  %v571 = vld [vmem:[%s3 + $0x70] sm:$0xf]
  %v572 = vld [vmem:[%s3 + $0x74] sm:$0xf]
  %v573 = vld [vmem:[%s3 + $0x78] sm:$0xf]
  %v574 = vld [vmem:[%s3 + $0x7c] sm:$0xf]
  %v575 = vld [vmem:[%s3 + $0x80] sm:$0xf]
  %v576 = vld [vmem:[%s3 + $0x84] sm:$0xf]
  %v577 = vld [vmem:[%s3 + $0x88] sm:$0xf]
  %v578 = vld [vmem:[%s3 + $0x8c] sm:$0xf]
  %v579 = vld [vmem:[%s3 + $0x90] sm:$0xf]
  %v580 = vld [vmem:[%s3 + $0x94] sm:$0xf]
  %v581 = vld [vmem:[%s3 + $0x98] sm:$0xf]
  %v582 = vld [vmem:[%s3 + $0x9c] sm:$0xf]
  %v583 = vld [vmem:[%s3 + $0xa0] sm:$0xf]
  %v584 = vld [vmem:[%s3 + $0xa4] sm:$0xf]
  %v585 = vld [vmem:[%s3 + $0xa8] sm:$0xf]
  %v586 = vld [vmem:[%s3 + $0xac] sm:$0xf]
  %v587 = vld [vmem:[%s3 + $0xb0] sm:$0xf]
  %v588 = vld [vmem:[%s3 + $0xb4] sm:$0xf]
  %v589 = vld [vmem:[%s3 + $0xb8] sm:$0xf]
  %v590 = vld [vmem:[%s3 + $0xbc] sm:$0xf]
  %v591 = vld [vmem:[%s3 + $0xc0] sm:$0xf]
  %v592 = vld [vmem:[%s3 + $0xc4] sm:$0xf]
  %v593 = vld [vmem:[%s3 + $0xc8] sm:$0xf]
  %v594 = vld [vmem:[%s3 + $0xcc] sm:$0xf]
  %v595 = vld [vmem:[%s3 + $0xd0] sm:$0xf]
  %v596 = vld [vmem:[%s3 + $0xd4] sm:$0xf]
  %v597 = vld [vmem:[%s3 + $0xd8] sm:$0xf]
  %v598 = vld [vmem:[%s3 + $0xdc] sm:$0xf]
  %v599 = vld [vmem:[%s3 + $0xe0] sm:$0xf]
  %v600 = vld [vmem:[%s3 + $0xe4] sm:$0xf]
  %v601 = vld [vmem:[%s3 + $0xe8] sm:$0xf]
  %v602 = vld [vmem:[%s3 + $0xec] sm:$0xf]
  %v603 = vld [vmem:[%s3 + $0xf0] sm:$0xf]
  %v604 = vld [vmem:[%s3 + $0xf4] sm:$0xf]
  %v605 = vld [vmem:[%s3 + $0xf8] sm:$0xf]
  %v606 = vld [vmem:[%s3 + $0xfc] sm:$0xf]
  %v607 = vld [vmem:[%s3 + $0x100] sm:$0xf]
  %v608 = vld [vmem:[%s3 + $0x104] sm:$0xf]
  %v609 = vld [vmem:[%s3 + $0x108] sm:$0xf]
  %v610 = vld [vmem:[%s3 + $0x10c] sm:$0xf]
  %v611 = vld [vmem:[%s3 + $0x110] sm:$0xf]
  %v612 = vld [vmem:[%s3 + $0x114] sm:$0xf]
  %v613 = vld [vmem:[%s3 + $0x118] sm:$0xf]
  %v614 = vld [vmem:[%s3 + $0x11c] sm:$0xf]
  %v615 = vld [vmem:[%s3 + $0x120] sm:$0xf]
  %v616 = vld [vmem:[%s3 + $0x124] sm:$0xf]
  %v617 = vld [vmem:[%s3 + $0x128] sm:$0xf]
  %v618 = vld [vmem:[%s3 + $0x12c] sm:$0xf]
  %v619 = vld [vmem:[%s3 + $0x130] sm:$0xf]
  %v620 = vld [vmem:[%s3 + $0x134] sm:$0xf]
  %v621 = vld [vmem:[%s3 + $0x138] sm:$0xf]
  %v622 = vld [vmem:[%s3 + $0x13c] sm:$0xf]
  %v623 = vld [vmem:[%s3 + $0x140] sm:$0xf]
  %v624 = vld [vmem:[%s3 + $0x144] sm:$0xf]
  %v625 = vld [vmem:[%s3 + $0x148] sm:$0xf]
  %v626 = vld [vmem:[%s3 + $0x14c] sm:$0xf]
  %v627 = vld [vmem:[%s3 + $0x150] sm:$0xf]
  %v628 = vld [vmem:[%s3 + $0x154] sm:$0xf]
  %v629 = vld [vmem:[%s3 + $0x158] sm:$0xf]
  %v630 = vld [vmem:[%s3 + $0x15c] sm:$0xf]
  %v631 = vld [vmem:[%s3 + $0x160] sm:$0xf]
  %v632 = vld [vmem:[%s3 + $0x164] sm:$0xf]
  %v633 = vld [vmem:[%s3 + $0x168] sm:$0xf]
  %v634 = vld [vmem:[%s3 + $0x16c] sm:$0xf]
  %v635 = vld [vmem:[%s3 + $0x170] sm:$0xf]
  %v636 = vld [vmem:[%s3 + $0x174] sm:$0xf]
  %v637 = vld [vmem:[%s3 + $0x178] sm:$0xf]
  %v638 = vld [vmem:[%s3 + $0x17c] sm:$0xf]
  %v639 = vld [vmem:[%s3 + $0x180] sm:$0xf]
  %v640 = vld [vmem:[%s3 + $0x184] sm:$0xf]
  %v641 = vld [vmem:[%s3 + $0x188] sm:$0xf]
  %v642 = vld [vmem:[%s3 + $0x18c] sm:$0xf]
  %v643 = vld [vmem:[%s3 + $0x190] sm:$0xf]
  %v644 = vld [vmem:[%s3 + $0x194] sm:$0xf]
  %v645 = vld [vmem:[%s3 + $0x198] sm:$0xf]
  %v646 = vld [vmem:[%s3 + $0x19c] sm:$0xf]
  %v647 = vld [vmem:[%s3 + $0x1a0] sm:$0xf]
  %v648 = vld [vmem:[%s3 + $0x1a4] sm:$0xf]
  %v649 = vld [vmem:[%s3 + $0x1a8] sm:$0xf]
  %v650 = vld [vmem:[%s3 + $0x1ac] sm:$0xf]
  %v651 = vld [vmem:[%s3 + $0x1b0] sm:$0xf]
  %v652 = vld [vmem:[%s3 + $0x1b4] sm:$0xf]
  %v653 = vld [vmem:[%s3 + $0x1b8] sm:$0xf]
  %v654 = vld [vmem:[%s3 + $0x1bc] sm:$0xf]
  %v655 = vld [vmem:[%s3 + $0x1c0] sm:$0xf]
  %v656 = vld [vmem:[%s3 + $0x1c4] sm:$0xf]
  %v657 = vld [vmem:[%s3 + $0x1c8] sm:$0xf]
  %v658 = vld [vmem:[%s3 + $0x1cc] sm:$0xf]
  %v659 = vld [vmem:[%s3 + $0x1d0] sm:$0xf]
  %v660 = vld [vmem:[%s3 + $0x1d4] sm:$0xf]
  %v661 = vld [vmem:[%s3 + $0x1d8] sm:$0xf]
  %v662 = vld [vmem:[%s3 + $0x1dc] sm:$0xf]
  %v663 = vld [vmem:[%s3 + $0x1e0] sm:$0xf]
  %v664 = vld [vmem:[%s3 + $0x1e4] sm:$0xf]
  %v665 = vld [vmem:[%s3 + $0x1e8] sm:$0xf]
  %v666 = vld [vmem:[%s3 + $0x1ec] sm:$0xf]
  %v667 = vld [vmem:[%s3 + $0x1f0] sm:$0xf]
  %v668 = vld [vmem:[%s3 + $0x1f4] sm:$0xf]
  %v669 = vld [vmem:[%s3 + $0x1f8] sm:$0xf]
  %v670 = vld [vmem:[%s3 + $0x1fc] sm:$0xf]
  %v671 = vld [vmem:[%s3 + $0x200] sm:$0xf]
  %v672 = vld [vmem:[%s3 + $0x204] sm:$0xf]
  %v673 = vld [vmem:[%s3 + $0x208] sm:$0xf]
  %v674 = vld [vmem:[%s3 + $0x20c] sm:$0xf]
  %v675 = vld [vmem:[%s3 + $0x210] sm:$0xf]
  %v676 = vld [vmem:[%s3 + $0x214] sm:$0xf]
  %v677 = vld [vmem:[%s3 + $0x218] sm:$0xf]
  %v678 = vld [vmem:[%s3 + $0x21c] sm:$0xf]
  %v679 = vld [vmem:[%s3 + $0x220] sm:$0xf]
  %v680 = vld [vmem:[%s3 + $0x224] sm:$0xf]
  %v681 = vld [vmem:[%s3 + $0x228] sm:$0xf]
  %v682 = vld [vmem:[%s3 + $0x22c] sm:$0xf]
  %v683 = vld [vmem:[%s3 + $0x230] sm:$0xf]
  %v684 = vld [vmem:[%s3 + $0x234] sm:$0xf]
  %v685 = vld [vmem:[%s3 + $0x238] sm:$0xf]
  %v686 = vld [vmem:[%s3 + $0x23c] sm:$0xf]
  %v687 = vld [vmem:[%s3 + $0x240] sm:$0xf]
  %v688 = vld [vmem:[%s3 + $0x244] sm:$0xf]
  %v689 = vld [vmem:[%s3 + $0x248] sm:$0xf]
  %v690 = vld [vmem:[%s3 + $0x24c] sm:$0xf]
  %v691 = vld [vmem:[%s3 + $0x250] sm:$0xf]
  %v692 = vld [vmem:[%s3 + $0x254] sm:$0xf]
  %v693 = vld [vmem:[%s3 + $0x258] sm:$0xf]
  %v694 = vld [vmem:[%s3 + $0x25c] sm:$0xf]
  %v695 = vld [vmem:[%s3 + $0x260] sm:$0xf]
  %v696 = vld [vmem:[%s3 + $0x264] sm:$0xf]
  %v697 = vld [vmem:[%s3 + $0x268] sm:$0xf]
  %v698 = vld [vmem:[%s3 + $0x26c] sm:$0xf]
  %v699 = vld [vmem:[%s3 + $0x270] sm:$0xf]
  %v700 = vld [vmem:[%s3 + $0x274] sm:$0xf]
  %v701 = vld [vmem:[%s3 + $0x278] sm:$0xf]
  %v702 = vld [vmem:[%s3 + $0x27c] sm:$0xf]
  %v703 = vld [vmem:[%s3 + $0x280] sm:$0xf]
  %v704 = vld [vmem:[%s3 + $0x284] sm:$0xf]
  %v705 = vld [vmem:[%s3 + $0x288] sm:$0xf]
  %v706 = vld [vmem:[%s3 + $0x28c] sm:$0xf]
  %v707 = vld [vmem:[%s3 + $0x290] sm:$0xf]
  %v708 = vld [vmem:[%s3 + $0x294] sm:$0xf]
  %v709 = vld [vmem:[%s3 + $0x298] sm:$0xf]
  %v710 = vld [vmem:[%s3 + $0x29c] sm:$0xf]
  %v711 = vld [vmem:[%s3 + $0x2a0] sm:$0xf]
  %v712 = vld [vmem:[%s3 + $0x2a4] sm:$0xf]
  %v713 = vld [vmem:[%s3 + $0x2a8] sm:$0xf]
  %v714 = vld [vmem:[%s3 + $0x2ac] sm:$0xf]
  %v715 = vld [vmem:[%s3 + $0x2b0] sm:$0xf]
  %v716 = vld [vmem:[%s3 + $0x2b4] sm:$0xf]
  %v717 = vld [vmem:[%s3 + $0x2b8] sm:$0xf]
  %v718 = vld [vmem:[%s3 + $0x2bc] sm:$0xf]
  %v719 = vld [vmem:[%s3 + $0x2c0] sm:$0xf]
  %v720 = vld [vmem:[%s3 + $0x2c4] sm:$0xf]
  %v721 = vld [vmem:[%s3 + $0x2c8] sm:$0xf]
  %v722 = vld [vmem:[%s3 + $0x2cc] sm:$0xf]
  %v723 = vld [vmem:[%s3 + $0x2d0] sm:$0xf]
  %v724 = vld [vmem:[%s3 + $0x2d4] sm:$0xf]
  %v725 = vld [vmem:[%s3 + $0x2d8] sm:$0xf]
  %v726 = vld [vmem:[%s3 + $0x2dc] sm:$0xf]
  %v727 = vld [vmem:[%s3 + $0x2e0] sm:$0xf]
  %v728 = vld [vmem:[%s3 + $0x2e4] sm:$0xf]
  %v729 = vld [vmem:[%s3 + $0x2e8] sm:$0xf]
  %v730 = vld [vmem:[%s3 + $0x2ec] sm:$0xf]
  %v731 = vld [vmem:[%s3 + $0x2f0] sm:$0xf]
  %v732 = vld [vmem:[%s3 + $0x2f4] sm:$0xf]
  %v733 = vld [vmem:[%s3 + $0x2f8] sm:$0xf]
  %v734 = vld [vmem:[%s3 + $0x2fc] sm:$0xf]
  %v735 = vld [vmem:[%s3 + $0x300] sm:$0xf]
  %v736 = vld [vmem:[%s3 + $0x304] sm:$0xf]
  %v737 = vld [vmem:[%s3 + $0x308] sm:$0xf]
  %v738 = vld [vmem:[%s3 + $0x30c] sm:$0xf]
  %v739 = vld [vmem:[%s3 + $0x310] sm:$0xf]
  %v740 = vld [vmem:[%s3 + $0x314] sm:$0xf]
  %v741 = vld [vmem:[%s3 + $0x318] sm:$0xf]
  %v742 = vld [vmem:[%s3 + $0x31c] sm:$0xf]
  %v743 = vld [vmem:[%s3 + $0x320] sm:$0xf]
  %v744 = vld [vmem:[%s3 + $0x324] sm:$0xf]
  %v745 = vld [vmem:[%s3 + $0x328] sm:$0xf]
  %v746 = vld [vmem:[%s3 + $0x32c] sm:$0xf]
  %v747 = vld [vmem:[%s3 + $0x330] sm:$0xf]
  %v748 = vld [vmem:[%s3 + $0x334] sm:$0xf]
  %v749 = vld [vmem:[%s3 + $0x338] sm:$0xf]
  %v750 = vld [vmem:[%s3 + $0x33c] sm:$0xf]
  %v751 = vld [vmem:[%s3 + $0x340] sm:$0xf]
  %v752 = vld [vmem:[%s3 + $0x344] sm:$0xf]
  %v753 = vld [vmem:[%s3 + $0x348] sm:$0xf]
  %v754 = vld [vmem:[%s3 + $0x34c] sm:$0xf]
  %v755 = vld [vmem:[%s3 + $0x350] sm:$0xf]
  %v756 = vld [vmem:[%s3 + $0x354] sm:$0xf]
  %v757 = vld [vmem:[%s3 + $0x358] sm:$0xf]
  %v758 = vld [vmem:[%s3 + $0x35c] sm:$0xf]
  %v759 = vld [vmem:[%s3 + $0x360] sm:$0xf]
  %v760 = vld [vmem:[%s3 + $0x364] sm:$0xf]
  %v761 = vld [vmem:[%s3 + $0x368] sm:$0xf]
  %v762 = vld [vmem:[%s3 + $0x36c] sm:$0xf]
  %v763 = vld [vmem:[%s3 + $0x370] sm:$0xf]
  %v764 = vld [vmem:[%s3 + $0x374] sm:$0xf]
  %v765 = vld [vmem:[%s3 + $0x378] sm:$0xf]
  %v766 = vld [vmem:[%s3 + $0x37c] sm:$0xf]
  %v767 = vld [vmem:[%s3 + $0x380] sm:$0xf]
  %v768 = vld [vmem:[%s3 + $0x384] sm:$0xf]
  %v769 = vld [vmem:[%s3 + $0x388] sm:$0xf]
  %v770 = vld [vmem:[%s3 + $0x38c] sm:$0xf]
  %v771 = vld [vmem:[%s3 + $0x390] sm:$0xf]
  %v772 = vld [vmem:[%s3 + $0x394] sm:$0xf]
  %v773 = vld [vmem:[%s3 + $0x398] sm:$0xf]
  %v774 = vld [vmem:[%s3 + $0x39c] sm:$0xf]
  %v775 = vld [vmem:[%s3 + $0x3a0] sm:$0xf]
  %v776 = vld [vmem:[%s3 + $0x3a4] sm:$0xf]
  %v777 = vld [vmem:[%s3 + $0x3a8] sm:$0xf]
  %v778 = vld [vmem:[%s3 + $0x3ac] sm:$0xf]
  %v779 = vld [vmem:[%s3 + $0x3b0] sm:$0xf]
  %v780 = vld [vmem:[%s3 + $0x3b4] sm:$0xf]
  %v781 = vld [vmem:[%s3 + $0x3b8] sm:$0xf]
  %v782 = vld [vmem:[%s3 + $0x3bc] sm:$0xf]
  %v783 = vld [vmem:[%s3 + $0x3c0] sm:$0xf]
  %v784 = vld [vmem:[%s3 + $0x3c4] sm:$0xf]
  %v785 = vld [vmem:[%s3 + $0x3c8] sm:$0xf]
  %v786 = vld [vmem:[%s3 + $0x3cc] sm:$0xf]
  %v787 = vld [vmem:[%s3 + $0x3d0] sm:$0xf]
  %v788 = vld [vmem:[%s3 + $0x3d4] sm:$0xf]
  %v789 = vld [vmem:[%s3 + $0x3d8] sm:$0xf]
  %v790 = vld [vmem:[%s3 + $0x3dc] sm:$0xf]
  %v791 = vld [vmem:[%s3 + $0x3e0] sm:$0xf]
  %v792 = vld [vmem:[%s3 + $0x3e4] sm:$0xf]
  %v793 = vld [vmem:[%s3 + $0x3e8] sm:$0xf]
  %v794 = vld [vmem:[%s3 + $0x3ec] sm:$0xf]
  %v795 = vld [vmem:[%s3 + $0x3f0] sm:$0xf]
  %v796 = vld [vmem:[%s3 + $0x3f4] sm:$0xf]
  %v797 = vld [vmem:[%s3 + $0x3f8] sm:$0xf]
  %v798 = vld [vmem:[%s3 + $0x3fc] sm:$0xf]
  %v1055 = vunpack.c.l.b16 %v543
  %v1056 = vunpack.c.l.b16 %v544
  %v1057 = vunpack.c.l.b16 %v545
  %v1058 = vunpack.c.l.b16 %v546
  %v1059 = vunpack.c.l.b16 %v547
  %v1060 = vunpack.c.l.b16 %v548
  %v1061 = vunpack.c.l.b16 %v549
  %v1062 = vunpack.c.l.b16 %v550
  %v1063 = vunpack.c.l.b16 %v551
  %v1064 = vunpack.c.l.b16 %v552
  %v1065 = vunpack.c.l.b16 %v553
  %v1066 = vunpack.c.l.b16 %v554
  %v1067 = vunpack.c.l.b16 %v555
  %v1068 = vunpack.c.l.b16 %v556
  %v1069 = vunpack.c.l.b16 %v557
  %v1070 = vunpack.c.l.b16 %v558
  %v1071 = vunpack.c.l.b16 %v559
  %v1072 = vunpack.c.l.b16 %v560
  %v1073 = vunpack.c.l.b16 %v561
  %v1074 = vunpack.c.l.b16 %v562
  %v1075 = vunpack.c.l.b16 %v563
  %v1076 = vunpack.c.l.b16 %v564
  %v1077 = vunpack.c.l.b16 %v565
  %v1078 = vunpack.c.l.b16 %v566
  %v1079 = vunpack.c.l.b16 %v567
  %v1080 = vunpack.c.l.b16 %v568
  %v1081 = vunpack.c.l.b16 %v569
  %v1082 = vunpack.c.l.b16 %v570
  %v1083 = vunpack.c.l.b16 %v571
  %v1084 = vunpack.c.l.b16 %v572
  %v1085 = vunpack.c.l.b16 %v573
  %v1086 = vunpack.c.l.b16 %v574
  %v1087 = vunpack.c.l.b16 %v575
  %v1088 = vunpack.c.l.b16 %v576
  %v1089 = vunpack.c.l.b16 %v577
  %v1090 = vunpack.c.l.b16 %v578
  %v1091 = vunpack.c.l.b16 %v579
  %v1092 = vunpack.c.l.b16 %v580
  %v1093 = vunpack.c.l.b16 %v581
  %v1094 = vunpack.c.l.b16 %v582
  %v1095 = vunpack.c.l.b16 %v583
  %v1096 = vunpack.c.l.b16 %v584
  %v1097 = vunpack.c.l.b16 %v585
  %v1098 = vunpack.c.l.b16 %v586
  %v1099 = vunpack.c.l.b16 %v587
  %v1100 = vunpack.c.l.b16 %v588
  %v1101 = vunpack.c.l.b16 %v589
  %v1102 = vunpack.c.l.b16 %v590
  %v1103 = vunpack.c.l.b16 %v591
  %v1104 = vunpack.c.l.b16 %v592
  %v1105 = vunpack.c.l.b16 %v593
  %v1106 = vunpack.c.l.b16 %v594
  %v1107 = vunpack.c.l.b16 %v595
  %v1108 = vunpack.c.l.b16 %v596
  %v1109 = vunpack.c.l.b16 %v597
  %v1110 = vunpack.c.l.b16 %v598
  %v1111 = vunpack.c.l.b16 %v599
  %v1112 = vunpack.c.l.b16 %v600
  %v1113 = vunpack.c.l.b16 %v601
  %v1114 = vunpack.c.l.b16 %v602
  %v1115 = vunpack.c.l.b16 %v603
  %v1116 = vunpack.c.l.b16 %v604
  %v1117 = vunpack.c.l.b16 %v605
  %v1118 = vunpack.c.l.b16 %v606
  %v1119 = vunpack.c.l.b16 %v607
  %v1120 = vunpack.c.l.b16 %v608
  %v1121 = vunpack.c.l.b16 %v609
  %v1122 = vunpack.c.l.b16 %v610
  %v1123 = vunpack.c.l.b16 %v611
  %v1124 = vunpack.c.l.b16 %v612
  %v1125 = vunpack.c.l.b16 %v613
  %v1126 = vunpack.c.l.b16 %v614
  %v1127 = vunpack.c.l.b16 %v615
  %v1128 = vunpack.c.l.b16 %v616
  %v1129 = vunpack.c.l.b16 %v617
  %v1130 = vunpack.c.l.b16 %v618
  %v1131 = vunpack.c.l.b16 %v619
  %v1132 = vunpack.c.l.b16 %v620
  %v1133 = vunpack.c.l.b16 %v621
  %v1134 = vunpack.c.l.b16 %v622
  %v1135 = vunpack.c.l.b16 %v623
  %v1136 = vunpack.c.l.b16 %v624
  %v1137 = vunpack.c.l.b16 %v625
  %v1138 = vunpack.c.l.b16 %v626
  %v1139 = vunpack.c.l.b16 %v627
  %v1140 = vunpack.c.l.b16 %v628
  %v1141 = vunpack.c.l.b16 %v629
  %v1142 = vunpack.c.l.b16 %v630
  %v1143 = vunpack.c.l.b16 %v631
  %v1144 = vunpack.c.l.b16 %v632
  %v1145 = vunpack.c.l.b16 %v633
  %v1146 = vunpack.c.l.b16 %v634
  %v1147 = vunpack.c.l.b16 %v635
  %v1148 = vunpack.c.l.b16 %v636
  %v1149 = vunpack.c.l.b16 %v637
  %v1150 = vunpack.c.l.b16 %v638
  %v1151 = vunpack.c.l.b16 %v639
  %v1152 = vunpack.c.l.b16 %v640
  %v1153 = vunpack.c.l.b16 %v641
  %v1154 = vunpack.c.l.b16 %v642
  %v1155 = vunpack.c.l.b16 %v643
  %v1156 = vunpack.c.l.b16 %v644
  %v1157 = vunpack.c.l.b16 %v645
  %v1158 = vunpack.c.l.b16 %v646
  %v1159 = vunpack.c.l.b16 %v647
  %v1160 = vunpack.c.l.b16 %v648
  %v1161 = vunpack.c.l.b16 %v649
  %v1162 = vunpack.c.l.b16 %v650
  %v1163 = vunpack.c.l.b16 %v651
  %v1164 = vunpack.c.l.b16 %v652
  %v1165 = vunpack.c.l.b16 %v653
  %v1166 = vunpack.c.l.b16 %v654
  %v1167 = vunpack.c.l.b16 %v655
  %v1168 = vunpack.c.l.b16 %v656
  %v1169 = vunpack.c.l.b16 %v657
  %v1170 = vunpack.c.l.b16 %v658
  %v1171 = vunpack.c.l.b16 %v659
  %v1172 = vunpack.c.l.b16 %v660
  %v1173 = vunpack.c.l.b16 %v661
  %v1174 = vunpack.c.l.b16 %v662
  %v1175 = vunpack.c.l.b16 %v663
  %v1176 = vunpack.c.l.b16 %v664
  %v1177 = vunpack.c.l.b16 %v665
  %v1178 = vunpack.c.l.b16 %v666
  %v1179 = vunpack.c.l.b16 %v667
  %v1180 = vunpack.c.l.b16 %v668
  %v1181 = vunpack.c.l.b16 %v669
  %v1182 = vunpack.c.l.b16 %v670
  %v1183 = vunpack.c.l.b16 %v671
  %v1184 = vunpack.c.l.b16 %v672
  %v1185 = vunpack.c.l.b16 %v673
  %v1186 = vunpack.c.l.b16 %v674
  %v1187 = vunpack.c.l.b16 %v675
  %v1188 = vunpack.c.l.b16 %v676
  %v1189 = vunpack.c.l.b16 %v677
  %v1190 = vunpack.c.l.b16 %v678
  %v1191 = vunpack.c.l.b16 %v679
  %v1192 = vunpack.c.l.b16 %v680
  %v1193 = vunpack.c.l.b16 %v681
  %v1194 = vunpack.c.l.b16 %v682
  %v1195 = vunpack.c.l.b16 %v683
  %v1196 = vunpack.c.l.b16 %v684
  %v1197 = vunpack.c.l.b16 %v685
  %v1198 = vunpack.c.l.b16 %v686
  %v1199 = vunpack.c.l.b16 %v687
  %v1200 = vunpack.c.l.b16 %v688
  %v1201 = vunpack.c.l.b16 %v689
  %v1202 = vunpack.c.l.b16 %v690
  %v1203 = vunpack.c.l.b16 %v691
  %v1204 = vunpack.c.l.b16 %v692
  %v1205 = vunpack.c.l.b16 %v693
  %v1206 = vunpack.c.l.b16 %v694
  %v1207 = vunpack.c.l.b16 %v695
  %v1208 = vunpack.c.l.b16 %v696
  %v1209 = vunpack.c.l.b16 %v697
  %v1210 = vunpack.c.l.b16 %v698
  %v1211 = vunpack.c.l.b16 %v699
  %v1212 = vunpack.c.l.b16 %v700
  %v1213 = vunpack.c.l.b16 %v701
  %v1214 = vunpack.c.l.b16 %v702
  %v1215 = vunpack.c.l.b16 %v703
  %v1216 = vunpack.c.l.b16 %v704
  %v1217 = vunpack.c.l.b16 %v705
  %v1218 = vunpack.c.l.b16 %v706
  %v1219 = vunpack.c.l.b16 %v707
  %v1220 = vunpack.c.l.b16 %v708
  %v1221 = vunpack.c.l.b16 %v709
  %v1222 = vunpack.c.l.b16 %v710
  %v1223 = vunpack.c.l.b16 %v711
  %v1224 = vunpack.c.l.b16 %v712
  %v1225 = vunpack.c.l.b16 %v713
  %v1226 = vunpack.c.l.b16 %v714
  %v1227 = vunpack.c.l.b16 %v715
  %v1228 = vunpack.c.l.b16 %v716
  %v1229 = vunpack.c.l.b16 %v717
  %v1230 = vunpack.c.l.b16 %v718
  %v1231 = vunpack.c.l.b16 %v719
  %v1232 = vunpack.c.l.b16 %v720
  %v1233 = vunpack.c.l.b16 %v721
  %v1234 = vunpack.c.l.b16 %v722
  %v1235 = vunpack.c.l.b16 %v723
  %v1236 = vunpack.c.l.b16 %v724
  %v1237 = vunpack.c.l.b16 %v725
  %v1238 = vunpack.c.l.b16 %v726
  %v1239 = vunpack.c.l.b16 %v727
  %v1240 = vunpack.c.l.b16 %v728
  %v1241 = vunpack.c.l.b16 %v729
  %v1242 = vunpack.c.l.b16 %v730
  %v1243 = vunpack.c.l.b16 %v731
  %v1244 = vunpack.c.l.b16 %v732
  %v1245 = vunpack.c.l.b16 %v733
  %v1246 = vunpack.c.l.b16 %v734
  %v1247 = vunpack.c.l.b16 %v735
  %v1248 = vunpack.c.l.b16 %v736
  %v1249 = vunpack.c.l.b16 %v737
  %v1250 = vunpack.c.l.b16 %v738
  %v1251 = vunpack.c.l.b16 %v739
  %v1252 = vunpack.c.l.b16 %v740
  %v1253 = vunpack.c.l.b16 %v741
  %v1254 = vunpack.c.l.b16 %v742
  %v1255 = vunpack.c.l.b16 %v743
  %v1256 = vunpack.c.l.b16 %v744
  %v1257 = vunpack.c.l.b16 %v745
  %v1258 = vunpack.c.l.b16 %v746
  %v1259 = vunpack.c.l.b16 %v747
  %v1260 = vunpack.c.l.b16 %v748
  %v1261 = vunpack.c.l.b16 %v749
  %v1262 = vunpack.c.l.b16 %v750
  %v1263 = vunpack.c.l.b16 %v751
  %v1264 = vunpack.c.l.b16 %v752
  %v1265 = vunpack.c.l.b16 %v753
  %v1266 = vunpack.c.l.b16 %v754
  %v1267 = vunpack.c.l.b16 %v755
  %v1268 = vunpack.c.l.b16 %v756
  %v1269 = vunpack.c.l.b16 %v757
  %v1270 = vunpack.c.l.b16 %v758
  %v1271 = vunpack.c.l.b16 %v759
  %v1272 = vunpack.c.l.b16 %v760
  %v1273 = vunpack.c.l.b16 %v761
  %v1274 = vunpack.c.l.b16 %v762
  %v1275 = vunpack.c.l.b16 %v763
  %v1276 = vunpack.c.l.b16 %v764
  %v1277 = vunpack.c.l.b16 %v765
  %v1278 = vunpack.c.l.b16 %v766
  %v1279 = vunpack.c.l.b16 %v767
  %v1280 = vunpack.c.l.b16 %v768
  %v1281 = vunpack.c.l.b16 %v769
  %v1282 = vunpack.c.l.b16 %v770
  %v1283 = vunpack.c.l.b16 %v771
  %v1284 = vunpack.c.l.b16 %v772
  %v1285 = vunpack.c.l.b16 %v773
  %v1286 = vunpack.c.l.b16 %v774
  %v1287 = vunpack.c.l.b16 %v775
  %v1288 = vunpack.c.l.b16 %v776
  %v1289 = vunpack.c.l.b16 %v777
  %v1290 = vunpack.c.l.b16 %v778
  %v1291 = vunpack.c.l.b16 %v779
  %v1292 = vunpack.c.l.b16 %v780
  %v1293 = vunpack.c.l.b16 %v781
  %v1294 = vunpack.c.l.b16 %v782
  %v1295 = vunpack.c.l.b16 %v783
  %v1296 = vunpack.c.l.b16 %v784
  %v1297 = vunpack.c.l.b16 %v785
  %v1298 = vunpack.c.l.b16 %v786
  %v1299 = vunpack.c.l.b16 %v787
  %v1300 = vunpack.c.l.b16 %v788
  %v1301 = vunpack.c.l.b16 %v789
  %v1302 = vunpack.c.l.b16 %v790
  %v1303 = vunpack.c.l.b16 %v791
  %v1304 = vunpack.c.l.b16 %v792
  %v1305 = vunpack.c.l.b16 %v793
  %v1306 = vunpack.c.l.b16 %v794
  %v1307 = vunpack.c.l.b16 %v795
  %v1308 = vunpack.c.l.b16 %v796
  %v1309 = vunpack.c.l.b16 %v797
  %v1310 = vunpack.c.l.b16 %v798
  %v1311 = vpack.c.b16 %v1056, %v1055
  %v1312 = vpack.c.b16 %v1058, %v1057
  %v1313 = vpack.c.b16 %v1060, %v1059
  %v1314 = vpack.c.b16 %v1062, %v1061
  %v1315 = vpack.c.b16 %v1064, %v1063
  %v1316 = vpack.c.b16 %v1066, %v1065
  %v1317 = vpack.c.b16 %v1068, %v1067
  %v1318 = vpack.c.b16 %v1070, %v1069
  %v1319 = vpack.c.b16 %v1072, %v1071
  %v1320 = vpack.c.b16 %v1074, %v1073
  %v1321 = vpack.c.b16 %v1076, %v1075
  %v1322 = vpack.c.b16 %v1078, %v1077
  %v1323 = vpack.c.b16 %v1080, %v1079
  %v1324 = vpack.c.b16 %v1082, %v1081
  %v1325 = vpack.c.b16 %v1084, %v1083
  %v1326 = vpack.c.b16 %v1086, %v1085
  %v1327 = vpack.c.b16 %v1088, %v1087
  %v1328 = vpack.c.b16 %v1090, %v1089
  %v1329 = vpack.c.b16 %v1092, %v1091
  %v1330 = vpack.c.b16 %v1094, %v1093
  %v1331 = vpack.c.b16 %v1096, %v1095
  %v1332 = vpack.c.b16 %v1098, %v1097
  %v1333 = vpack.c.b16 %v1100, %v1099
  %v1334 = vpack.c.b16 %v1102, %v1101
  %v1335 = vpack.c.b16 %v1104, %v1103
  %v1336 = vpack.c.b16 %v1106, %v1105
  %v1337 = vpack.c.b16 %v1108, %v1107
  %v1338 = vpack.c.b16 %v1110, %v1109
  %v1339 = vpack.c.b16 %v1112, %v1111
  %v1340 = vpack.c.b16 %v1114, %v1113
  %v1341 = vpack.c.b16 %v1116, %v1115
  %v1342 = vpack.c.b16 %v1118, %v1117
  %v1343 = vpack.c.b16 %v1120, %v1119
  %v1344 = vpack.c.b16 %v1122, %v1121
  %v1345 = vpack.c.b16 %v1124, %v1123
  %v1346 = vpack.c.b16 %v1126, %v1125
  %v1347 = vpack.c.b16 %v1128, %v1127
  %v1348 = vpack.c.b16 %v1130, %v1129
  %v1349 = vpack.c.b16 %v1132, %v1131
  %v1350 = vpack.c.b16 %v1134, %v1133
  %v1351 = vpack.c.b16 %v1136, %v1135
  %v1352 = vpack.c.b16 %v1138, %v1137
  %v1353 = vpack.c.b16 %v1140, %v1139
  %v1354 = vpack.c.b16 %v1142, %v1141
  %v1355 = vpack.c.b16 %v1144, %v1143
  %v1356 = vpack.c.b16 %v1146, %v1145
  %v1357 = vpack.c.b16 %v1148, %v1147
  %v1358 = vpack.c.b16 %v1150, %v1149
  %v1359 = vpack.c.b16 %v1152, %v1151
  %v1360 = vpack.c.b16 %v1154, %v1153
  %v1361 = vpack.c.b16 %v1156, %v1155
  %v1362 = vpack.c.b16 %v1158, %v1157
  %v1363 = vpack.c.b16 %v1160, %v1159
  %v1364 = vpack.c.b16 %v1162, %v1161
  %v1365 = vpack.c.b16 %v1164, %v1163
  %v1366 = vpack.c.b16 %v1166, %v1165
  %v1367 = vpack.c.b16 %v1168, %v1167
  %v1368 = vpack.c.b16 %v1170, %v1169
  %v1369 = vpack.c.b16 %v1172, %v1171
  %v1370 = vpack.c.b16 %v1174, %v1173
  %v1371 = vpack.c.b16 %v1176, %v1175
  %v1372 = vpack.c.b16 %v1178, %v1177
  %v1373 = vpack.c.b16 %v1180, %v1179
  %v1374 = vpack.c.b16 %v1182, %v1181
  %v1375 = vpack.c.b16 %v1184, %v1183
  %v1376 = vpack.c.b16 %v1186, %v1185
  %v1377 = vpack.c.b16 %v1188, %v1187
  %v1378 = vpack.c.b16 %v1190, %v1189
  %v1379 = vpack.c.b16 %v1192, %v1191
  %v1380 = vpack.c.b16 %v1194, %v1193
  %v1381 = vpack.c.b16 %v1196, %v1195
  %v1382 = vpack.c.b16 %v1198, %v1197
  %v1383 = vpack.c.b16 %v1200, %v1199
  %v1384 = vpack.c.b16 %v1202, %v1201
  %v1385 = vpack.c.b16 %v1204, %v1203
  %v1386 = vpack.c.b16 %v1206, %v1205
  %v1387 = vpack.c.b16 %v1208, %v1207
  %v1388 = vpack.c.b16 %v1210, %v1209
  %v1389 = vpack.c.b16 %v1212, %v1211
  %v1390 = vpack.c.b16 %v1214, %v1213
  %v1391 = vpack.c.b16 %v1216, %v1215
  %v1392 = vpack.c.b16 %v1218, %v1217
  %v1393 = vpack.c.b16 %v1220, %v1219
  %v1394 = vpack.c.b16 %v1222, %v1221
  %v1395 = vpack.c.b16 %v1224, %v1223
  %v1396 = vpack.c.b16 %v1226, %v1225
  %v1397 = vpack.c.b16 %v1228, %v1227
  %v1398 = vpack.c.b16 %v1230, %v1229
  %v1399 = vpack.c.b16 %v1232, %v1231
  %v1400 = vpack.c.b16 %v1234, %v1233
  %v1401 = vpack.c.b16 %v1236, %v1235
  %v1402 = vpack.c.b16 %v1238, %v1237
  %v1403 = vpack.c.b16 %v1240, %v1239
  %v1404 = vpack.c.b16 %v1242, %v1241
  %v1405 = vpack.c.b16 %v1244, %v1243
  %v1406 = vpack.c.b16 %v1246, %v1245
  %v1407 = vpack.c.b16 %v1248, %v1247
  %v1408 = vpack.c.b16 %v1250, %v1249
  %v1409 = vpack.c.b16 %v1252, %v1251
  %v1410 = vpack.c.b16 %v1254, %v1253
  %v1411 = vpack.c.b16 %v1256, %v1255
  %v1412 = vpack.c.b16 %v1258, %v1257
  %v1413 = vpack.c.b16 %v1260, %v1259
  %v1414 = vpack.c.b16 %v1262, %v1261
  %v1415 = vpack.c.b16 %v1264, %v1263
  %v1416 = vpack.c.b16 %v1266, %v1265
  %v1417 = vpack.c.b16 %v1268, %v1267
  %v1418 = vpack.c.b16 %v1270, %v1269
  %v1419 = vpack.c.b16 %v1272, %v1271
  %v1420 = vpack.c.b16 %v1274, %v1273
  %v1421 = vpack.c.b16 %v1276, %v1275
  %v1422 = vpack.c.b16 %v1278, %v1277
  %v1423 = vpack.c.b16 %v1280, %v1279
  %v1424 = vpack.c.b16 %v1282, %v1281
  %v1425 = vpack.c.b16 %v1284, %v1283
  %v1426 = vpack.c.b16 %v1286, %v1285
  %v1427 = vpack.c.b16 %v1288, %v1287
  %v1428 = vpack.c.b16 %v1290, %v1289
  %v1429 = vpack.c.b16 %v1292, %v1291
  %v1430 = vpack.c.b16 %v1294, %v1293
  %v1431 = vpack.c.b16 %v1296, %v1295
  %v1432 = vpack.c.b16 %v1298, %v1297
  %v1433 = vpack.c.b16 %v1300, %v1299
  %v1434 = vpack.c.b16 %v1302, %v1301
  %v1435 = vpack.c.b16 %v1304, %v1303
  %v1436 = vpack.c.b16 %v1306, %v1305
  %v1437 = vpack.c.b16 %v1308, %v1307
  %v1438 = vpack.c.b16 %v1310, %v1309
  %1567 = vmatpush.bf16.msra.mxu0 %v1318
  %1568 = vmatpush.bf16.msra.mxu0 %v1317
  %1569 = vmatpush.bf16.msra.mxu0 %v1316
  %1570 = vmatpush.bf16.msra.mxu0 %v1315
  %1571 = vmatpush.bf16.msra.mxu0 %v1314
  %1572 = vmatpush.bf16.msra.mxu0 %v1313
  %1573 = vmatpush.bf16.msra.mxu0 %v1312
  %1574 = vmatpush.bf16.msra.mxu0 %v1311
  %1575 = vmatmul.bf16.gmra.mxu0 %v527
  %v1576 = vpop.f32.mrf.mxu0
  %v1577 = vadd.f32 0.0, %v1576
  %v1578 = vpop.f32.mrf.mxu0
  %v1579 = vadd.f32 0.0, %v1578
  %1580 = vdwg.mxu0
  %1581 = vmatpush.bf16.msra.mxu0 %v1326
  %1582 = vmatpush.bf16.msra.mxu0 %v1325
  %1583 = vmatpush.bf16.msra.mxu0 %v1324
  %1584 = vmatpush.bf16.msra.mxu0 %v1323
  %1585 = vmatpush.bf16.msra.mxu0 %v1322
  %1586 = vmatpush.bf16.msra.mxu0 %v1321
  %1587 = vmatpush.bf16.msra.mxu0 %v1320
  %1588 = vmatpush.bf16.msra.mxu0 %v1319
  %1589 = vmatmul.bf16.gmra.mxu0 %v528
  %v1590 = vpop.f32.mrf.mxu0
  %v1591 = vadd.f32 %v1577, %v1590
  %v1592 = vpop.f32.mrf.mxu0
  %v1593 = vadd.f32 %v1579, %v1592
  %1594 = vdwg.mxu0
  %1595 = vmatpush.bf16.msra.mxu0 %v1334
  %1596 = vmatpush.bf16.msra.mxu0 %v1333
  %1597 = vmatpush.bf16.msra.mxu0 %v1332
  %1598 = vmatpush.bf16.msra.mxu0 %v1331
  %1599 = vmatpush.bf16.msra.mxu0 %v1330
  %1600 = vmatpush.bf16.msra.mxu0 %v1329
  %1601 = vmatpush.bf16.msra.mxu0 %v1328
  %1602 = vmatpush.bf16.msra.mxu0 %v1327
  %1603 = vmatmul.bf16.gmra.mxu0 %v529
  %v1604 = vpop.f32.mrf.mxu0
  %v1605 = vadd.f32 %v1591, %v1604
  %v1606 = vpop.f32.mrf.mxu0
  %v1607 = vadd.f32 %v1593, %v1606
  %1608 = vdwg.mxu0
  %1609 = vmatpush.bf16.msra.mxu0 %v1342
  %1610 = vmatpush.bf16.msra.mxu0 %v1341
  %1611 = vmatpush.bf16.msra.mxu0 %v1340
  %1612 = vmatpush.bf16.msra.mxu0 %v1339
  %1613 = vmatpush.bf16.msra.mxu0 %v1338
  %1614 = vmatpush.bf16.msra.mxu0 %v1337
  %1615 = vmatpush.bf16.msra.mxu0 %v1336
  %1616 = vmatpush.bf16.msra.mxu0 %v1335
  %1617 = vmatmul.bf16.gmra.mxu0 %v530
  %v1618 = vpop.f32.mrf.mxu0
  %v1619 = vadd.f32 %v1605, %v1618
  %v1620 = vpop.f32.mrf.mxu0
  %v1621 = vadd.f32 %v1607, %v1620
  %1622 = vdwg.mxu0
  %1623 = vmatpush.bf16.msra.mxu0 %v1350
  %1624 = vmatpush.bf16.msra.mxu0 %v1349
  %1625 = vmatpush.bf16.msra.mxu0 %v1348
  %1626 = vmatpush.bf16.msra.mxu0 %v1347
  %1627 = vmatpush.bf16.msra.mxu0 %v1346
  %1628 = vmatpush.bf16.msra.mxu0 %v1345
  %1629 = vmatpush.bf16.msra.mxu0 %v1344
  %1630 = vmatpush.bf16.msra.mxu0 %v1343
  %1631 = vmatmul.bf16.gmra.mxu0 %v531
  %v1632 = vpop.f32.mrf.mxu0
  %v1633 = vadd.f32 %v1619, %v1632
  %v1634 = vpop.f32.mrf.mxu0
  %v1635 = vadd.f32 %v1621, %v1634
  %1636 = vdwg.mxu0
  %1637 = vmatpush.bf16.msra.mxu0 %v1358
  %1638 = vmatpush.bf16.msra.mxu0 %v1357
  %1639 = vmatpush.bf16.msra.mxu0 %v1356
  %1640 = vmatpush.bf16.msra.mxu0 %v1355
  %1641 = vmatpush.bf16.msra.mxu0 %v1354
  %1642 = vmatpush.bf16.msra.mxu0 %v1353
  %1643 = vmatpush.bf16.msra.mxu0 %v1352
  %1644 = vmatpush.bf16.msra.mxu0 %v1351
  %1645 = vmatmul.bf16.gmra.mxu0 %v532
  %v1646 = vpop.f32.mrf.mxu0
  %v1647 = vadd.f32 %v1633, %v1646
  %v1648 = vpop.f32.mrf.mxu0
  %v1649 = vadd.f32 %v1635, %v1648
  %1650 = vdwg.mxu0
  %1651 = vmatpush.bf16.msra.mxu0 %v1366
  %1652 = vmatpush.bf16.msra.mxu0 %v1365
  %1653 = vmatpush.bf16.msra.mxu0 %v1364
  %1654 = vmatpush.bf16.msra.mxu0 %v1363
  %1655 = vmatpush.bf16.msra.mxu0 %v1362
  %1656 = vmatpush.bf16.msra.mxu0 %v1361
  %1657 = vmatpush.bf16.msra.mxu0 %v1360
  %1658 = vmatpush.bf16.msra.mxu0 %v1359
  %1659 = vmatmul.bf16.gmra.mxu0 %v533
  %v1660 = vpop.f32.mrf.mxu0
  %v1661 = vadd.f32 %v1647, %v1660
  %v1662 = vpop.f32.mrf.mxu0
  %v1663 = vadd.f32 %v1649, %v1662
  %1664 = vdwg.mxu0
  %1665 = vmatpush.bf16.msra.mxu0 %v1374
  %1666 = vmatpush.bf16.msra.mxu0 %v1373
  %1667 = vmatpush.bf16.msra.mxu0 %v1372
  %1668 = vmatpush.bf16.msra.mxu0 %v1371
  %1669 = vmatpush.bf16.msra.mxu0 %v1370
  %1670 = vmatpush.bf16.msra.mxu0 %v1369
  %1671 = vmatpush.bf16.msra.mxu0 %v1368
  %1672 = vmatpush.bf16.msra.mxu0 %v1367
  %1673 = vmatmul.bf16.gmra.mxu0 %v534
  %v1674 = vpop.f32.mrf.mxu0
  %v1675 = vadd.f32 %v1661, %v1674
  %v1676 = vpop.f32.mrf.mxu0
  %v1677 = vadd.f32 %v1663, %v1676
  %1678 = vdwg.mxu0
  %1679 = vmatpush.bf16.msra.mxu0 %v1382
  %1680 = vmatpush.bf16.msra.mxu0 %v1381
  %1681 = vmatpush.bf16.msra.mxu0 %v1380
  %1682 = vmatpush.bf16.msra.mxu0 %v1379
  %1683 = vmatpush.bf16.msra.mxu0 %v1378
  %1684 = vmatpush.bf16.msra.mxu0 %v1377
  %1685 = vmatpush.bf16.msra.mxu0 %v1376
  %1686 = vmatpush.bf16.msra.mxu0 %v1375
  %1687 = vmatmul.bf16.gmra.mxu0 %v535
  %v1688 = vpop.f32.mrf.mxu0
  %v1689 = vadd.f32 %v1675, %v1688
  %v1690 = vpop.f32.mrf.mxu0
  %v1691 = vadd.f32 %v1677, %v1690
  %1692 = vdwg.mxu0
  %1693 = vmatpush.bf16.msra.mxu0 %v1390
  %1694 = vmatpush.bf16.msra.mxu0 %v1389
  %1695 = vmatpush.bf16.msra.mxu0 %v1388
  %1696 = vmatpush.bf16.msra.mxu0 %v1387
  %1697 = vmatpush.bf16.msra.mxu0 %v1386
  %1698 = vmatpush.bf16.msra.mxu0 %v1385
  %1699 = vmatpush.bf16.msra.mxu0 %v1384
  %1700 = vmatpush.bf16.msra.mxu0 %v1383
  %1701 = vmatmul.bf16.gmra.mxu0 %v536
  %v1702 = vpop.f32.mrf.mxu0
  %v1703 = vadd.f32 %v1689, %v1702
  %v1704 = vpop.f32.mrf.mxu0
  %v1705 = vadd.f32 %v1691, %v1704
  %1706 = vdwg.mxu0
  %1707 = vmatpush.bf16.msra.mxu0 %v1398
  %1708 = vmatpush.bf16.msra.mxu0 %v1397
  %1709 = vmatpush.bf16.msra.mxu0 %v1396
  %1710 = vmatpush.bf16.msra.mxu0 %v1395
  %1711 = vmatpush.bf16.msra.mxu0 %v1394
  %1712 = vmatpush.bf16.msra.mxu0 %v1393
  %1713 = vmatpush.bf16.msra.mxu0 %v1392
  %1714 = vmatpush.bf16.msra.mxu0 %v1391
  %1715 = vmatmul.bf16.gmra.mxu0 %v537
  %v1716 = vpop.f32.mrf.mxu0
  %v1717 = vadd.f32 %v1703, %v1716
  %v1718 = vpop.f32.mrf.mxu0
  %v1719 = vadd.f32 %v1705, %v1718
  %1720 = vdwg.mxu0
  %1721 = vmatpush.bf16.msra.mxu0 %v1406
  %1722 = vmatpush.bf16.msra.mxu0 %v1405
  %1723 = vmatpush.bf16.msra.mxu0 %v1404
  %1724 = vmatpush.bf16.msra.mxu0 %v1403
  %1725 = vmatpush.bf16.msra.mxu0 %v1402
  %1726 = vmatpush.bf16.msra.mxu0 %v1401
  %1727 = vmatpush.bf16.msra.mxu0 %v1400
  %1728 = vmatpush.bf16.msra.mxu0 %v1399
  %1729 = vmatmul.bf16.gmra.mxu0 %v538
  %v1730 = vpop.f32.mrf.mxu0
  %v1731 = vadd.f32 %v1717, %v1730
  %v1732 = vpop.f32.mrf.mxu0
  %v1733 = vadd.f32 %v1719, %v1732
  %1734 = vdwg.mxu0
  %1735 = vmatpush.bf16.msra.mxu0 %v1414
  %1736 = vmatpush.bf16.msra.mxu0 %v1413
  %1737 = vmatpush.bf16.msra.mxu0 %v1412
  %1738 = vmatpush.bf16.msra.mxu0 %v1411
  %1739 = vmatpush.bf16.msra.mxu0 %v1410
  %1740 = vmatpush.bf16.msra.mxu0 %v1409
  %1741 = vmatpush.bf16.msra.mxu0 %v1408
  %1742 = vmatpush.bf16.msra.mxu0 %v1407
  %1743 = vmatmul.bf16.gmra.mxu0 %v539
  %v1744 = vpop.f32.mrf.mxu0
  %v1745 = vadd.f32 %v1731, %v1744
  %v1746 = vpop.f32.mrf.mxu0
  %v1747 = vadd.f32 %v1733, %v1746
  %1748 = vdwg.mxu0
  %1749 = vmatpush.bf16.msra.mxu0 %v1422
  %1750 = vmatpush.bf16.msra.mxu0 %v1421
  %1751 = vmatpush.bf16.msra.mxu0 %v1420
  %1752 = vmatpush.bf16.msra.mxu0 %v1419
  %1753 = vmatpush.bf16.msra.mxu0 %v1418
  %1754 = vmatpush.bf16.msra.mxu0 %v1417
  %1755 = vmatpush.bf16.msra.mxu0 %v1416
  %1756 = vmatpush.bf16.msra.mxu0 %v1415
  %1757 = vmatmul.bf16.gmra.mxu0 %v540
  %v1758 = vpop.f32.mrf.mxu0
  %v1759 = vadd.f32 %v1745, %v1758
  %v1760 = vpop.f32.mrf.mxu0
  %v1761 = vadd.f32 %v1747, %v1760
  %1762 = vdwg.mxu0
  %1763 = vmatpush.bf16.msra.mxu0 %v1430
  %1764 = vmatpush.bf16.msra.mxu0 %v1429
  %1765 = vmatpush.bf16.msra.mxu0 %v1428
  %1766 = vmatpush.bf16.msra.mxu0 %v1427
  %1767 = vmatpush.bf16.msra.mxu0 %v1426
  %1768 = vmatpush.bf16.msra.mxu0 %v1425
  %1769 = vmatpush.bf16.msra.mxu0 %v1424
  %1770 = vmatpush.bf16.msra.mxu0 %v1423
  %1771 = vmatmul.bf16.gmra.mxu0 %v541
  %v1772 = vpop.f32.mrf.mxu0
  %v1773 = vadd.f32 %v1759, %v1772
  %v1774 = vpop.f32.mrf.mxu0
  %v1775 = vadd.f32 %v1761, %v1774
  %1776 = vdwg.mxu0
  %1777 = vmatpush.bf16.msra.mxu0 %v1438
  %1778 = vmatpush.bf16.msra.mxu0 %v1437
  %1779 = vmatpush.bf16.msra.mxu0 %v1436
  %1780 = vmatpush.bf16.msra.mxu0 %v1435
  %1781 = vmatpush.bf16.msra.mxu0 %v1434
  %1782 = vmatpush.bf16.msra.mxu0 %v1433
  %1783 = vmatpush.bf16.msra.mxu0 %v1432
  %1784 = vmatpush.bf16.msra.mxu0 %v1431
  %1785 = vmatmul.bf16.gmra.mxu0 %v542
  %v1786 = vpop.f32.mrf.mxu0
  %v1787 = vadd.f32 %v1773, %v1786
  %v1788 = vpop.f32.mrf.mxu0
  %v1789 = vadd.f32 %v1775, %v1788
  %1790 = vdwg.mxu0
  %v1791 = vadd.f32 %v525, %v1787
  %v1792 = vadd.f32 %v526, %v1789
  %1793 = vst.msk [vmem:[#allocation2] sm:$0xff] %vm265, %v1791
  %1794 = vst.msk [vmem:[#allocation2 + $0x8] sm:$0xff] %vm265, %v1792
  // Predicated region
  $region34: #{_lambda_.14} parent=0 // pred_check
    %p1795 = pneg %p27
  $region35: #{_lambda_.14} parent=0 // pred_check_branch
    %1797 = sbr.rel (%p1795) target = $region37
  $region36: #{_lambda_.14} parent=0 // pred_region
    %v1798 = vld [vmem:[#allocation2] sm:$0xff]
    %v1799 = vld [vmem:[#allocation2 + $0x8] sm:$0xff]
    %v1800 = vadd.f32 %v34, %v1798
    %v1801 = vadd.f32 %v35, %v1799
    %v1802 = vld [vmem:[%s4] sm:$0x1]
    %v1804 = vperm.slane %v1802, 0
    %v1806 = vadd.f32 %v1800, %v1804
    %v1807 = vadd.f32 %v1801, %v1804
    %v1808 = vsel %vm265, %v1806, 0.0
    %1809 = vadd.xlane.f32.xlu0 %v1808
    %v1810 = vpop.xlane.xlu0 %1809
    %v1811 = vsel %vm265, %v1807, 0.0
    %1812 = vadd.xlane.f32.xlu0 %v1811
    %v1813 = vpop.xlane.xlu0 %1812
    %v1814 = vrcp.pop 32.0
    %v1815 = vmul.f32 32.0, %v1814
    %v1816 = vsub.f32 1.0, %v1815
    %v1817 = vmul.f32 %v1814, %v1816
    %v1818 = vadd.f32 %v1814, %v1817
    %vm1819 = vweird.f32 %v1814
    %v1820 = vsel %vm1819, %v1814, %v1818
    %v1821 = vmul.f32 %v1810, %v1820
    %v1822 = vmul.f32 %v1813, %v1820
    %v1823 = vsub.f32 %v1806, %v1821
    %v1824 = vsub.f32 %v1807, %v1822
    %v1825 = vmul.f32 %v1823, %v1823
    %v1826 = vmul.f32 %v1824, %v1824
    %v1827 = vsel %vm265, %v1825, 0.0
    %1828 = vadd.xlane.f32.xlu0 %v1827
    %v1829 = vpop.xlane.xlu0 %1828
    %v1830 = vsel %vm265, %v1826, 0.0
    %1831 = vadd.xlane.f32.xlu0 %v1830
    %v1832 = vpop.xlane.xlu0 %1831
    %v1833 = vmul.f32 %v1829, %v1820
    %v1834 = vmul.f32 %v1832, %v1820
    %v1835 = vadd.f32 %v1833, 1e-05
    %v1836 = vadd.f32 %v1834, 1e-05
    %v1837 = vrsqrt.pop %v1835
    %v1838 = vmul.f32 %v1837, %v1835
    %v1839 = vmul.f32 %v1838, %v1837
    %v1840 = vmul.f32 0.5, %v1839
    %v1841 = vsub.f32 1.5, %v1840
    %v1842 = vmul.f32 %v1837, %v1841
    %vm1843 = vweird.f32 %v1835
    %vm1844 = vweird.f32 %v1837
    %vm1845 = vmor %vm1843, %vm1844
    %v1846 = vsel %vm1845, %v1837, %v1842
    %v1847 = vrsqrt.pop %v1836
    %v1848 = vmul.f32 %v1847, %v1836
    %v1849 = vmul.f32 %v1848, %v1847
    %v1850 = vmul.f32 0.5, %v1849
    %v1851 = vsub.f32 1.5, %v1850
    %v1852 = vmul.f32 %v1847, %v1851
    %vm1853 = vweird.f32 %v1836
    %vm1854 = vweird.f32 %v1847
    %vm1855 = vmor %vm1853, %vm1854
    %v1856 = vsel %vm1855, %v1847, %v1852
    %v1857 = vmul.f32 %v1823, %v1846
    %v1858 = vmul.f32 %v1824, %v1856
    %v1859 = vld [vmem:[%s5] sm:$0x1]
    %v1861 = vperm.slane %v1859, 0
    %v1863 = vmul.f32 %v1857, %v1861
    %v1864 = vmul.f32 %v1858, %v1861
    %v1865 = vld [vmem:[%s6] sm:$0x1]
    %v1867 = vperm.slane %v1865, 0
    %v1869 = vadd.f32 %v1863, %v1867
    %v1870 = vadd.f32 %v1864, %v1867
    %1871 = vst.msk [vmem:[%s7] sm:$0xff] %vm265, %v1869
    %1872 = vst.msk [vmem:[%s7 + $0x8] sm:$0xff] %vm265, %v1870
  $region37: #{_lambda_.14} parent=0 // pred_fallthru
    _
  // Predicated region
  $region38: #{_lambda_.14} parent=0 // pred_check
    _
  $region39: #{_lambda_.14} parent=0 // pred_check_branch
    %1874 = sbr.rel (0) target = $region41
  $region40: #{_lambda_.14} parent=0 // pred_region
    _
  $region41: #{_lambda_.14} parent=0 // pred_fallthru
    _
  // Predicated region
  $region42: #{_lambda_.14} parent=0 // pred_check
    _
  $region43: #{_lambda_.14} parent=0 // pred_check_branch
    %1876 = sbr.rel (0) target = $region45
  $region44: #{_lambda_.14} parent=0 // pred_region
    _
  $region45: #{_lambda_.14} parent=0 // pred_fallthru
    _

// kernel: _lambda_.19
$region0: #{_lambda_.19}
  #allocation0 [shape = 'u32[]', space=smem, size = 0x4, offset = 0x4, fixed_abs, tag = 'smem constant byte address 0x4 - core index']
  #allocation1 [shape = 'u32[72,128]{1,0:T(1,128)}', space=vmem, size = 0x9000, scoped, tag = 'internal scratch']
  #allocation2 [shape = 'f32[2,32]{1,0:T(2,128)}', space=vmem, size = 0x400, scoped, tag = 'scratch operand']
  %s0 = inlined_call_operand.vmem [shape: bf16[8,2,32], index: 0, kind: input, shape index: {}]
  %s1 = inlined_call_operand.vmem [shape: bf16[32,16], index: 1, kind: input, shape index: {}]
  %s2 = inlined_call_operand.vmem [shape: f32[1,16], index: 2, kind: input, shape index: {}]
  %s3 = inlined_call_operand.vmem [shape: bf16[16,2], index: 3, kind: input, shape index: {}]
  %s4 = inlined_call_operand.vmem [shape: f32[1,2], index: 4, kind: input, shape index: {}]
  %s5 = inlined_call_operand.hbm [shape: f32[2,2], index: 5, kind: output, shape index: {}]
  %s6 = sld [smem:[#allocation0]]
  $region38: #{_lambda_.19} parent=0
    _
  %s8 = ssub.s32 1, %s6
  %s9 = scalar_select 0, %s8, %s6
  $region1: #{_lambda_.19} parent=0
    #allocation3 [shape = 'u8[1024]{0}', space=vmem, size = 0x400, scoped, tag = 'output window, operand 0, single buffered']
    #allocation4 [shape = 's32[1]{0}', space=sflag, size = 0x4, scoped, tag = 'scoped memory for _lambda_.19']
    %10 = vsyncpa [#allocation4], 0
    // Predicated region
    $region2: #{_lambda_.19} parent=1 // pred_check
      _
    $region3: #{_lambda_.19} parent=1 // pred_check_branch
      %12 = sbr.rel (0) target = $region5
    $region4: #{_lambda_.19} parent=1 // pred_region
      _
    $region5: #{_lambda_.19} parent=1 // pred_fallthru
      _
    // Predicated region
    $region6: #{_lambda_.19} parent=1 // pred_check
      _
    $region7: #{_lambda_.19} parent=1 // pred_check_branch
      %14 = sbr.rel (0) target = $region9
    $region8: #{_lambda_.19} parent=1 // pred_region
      _
    $region9: #{_lambda_.19} parent=1 // pred_fallthru
      _
    // Predicated region
    $region10: #{_lambda_.19} parent=1 // pred_check
      _
    $region11: #{_lambda_.19} parent=1 // pred_check_branch
      %16 = sbr.rel (0) target = $region13
    $region12: #{_lambda_.19} parent=1 // pred_region
      _
    $region13: #{_lambda_.19} parent=1 // pred_fallthru
      _
    // Predicated region
    $region14: #{_lambda_.19} parent=1 // pred_check
      _
    $region15: #{_lambda_.19} parent=1 // pred_check_branch
      %18 = sbr.rel (0) target = $region17
    $region16: #{_lambda_.19} parent=1 // pred_region
      _
    $region17: #{_lambda_.19} parent=1 // pred_fallthru
      _
    // Predicated region
    $region18: #{_lambda_.19} parent=1 // pred_check
      _
    $region19: #{_lambda_.19} parent=1 // pred_check_branch
      %20 = sbr.rel (0) target = $region21
    $region20: #{_lambda_.19} parent=1 // pred_region
      _
    $region21: #{_lambda_.19} parent=1 // pred_fallthru
      _
    %p22 = scmp.eq.s32.totalorder 0, 0
    // Predicated region
    $region22: #{_lambda_.19} parent=1 // pred_check
      %p23 = pneg %p22
    $region23: #{_lambda_.19} parent=1 // pred_check_branch
      %25 = sbr.rel (%p23) target = $region25
    $region24: #{_lambda_.19} parent=1 // pred_region
      %vm26 = vcmask 254976
      %27 = vst.msk [vmem:[#allocation2] sm:$0x3] %vm26, 0.0
    $region25: #{_lambda_.19} parent=1 // pred_fallthru
      _
    %v28 = vld [vmem:[#allocation2] sm:$0x3]
    %v29 = vld [vmem:[%s0] sm:$0x1]
    %v30 = vld [vmem:[%s0 + $0x1] sm:$0x1]
    %v31 = vld [vmem:[%s0 + $0x2] sm:$0x1]
    %v32 = vld [vmem:[%s0 + $0x3] sm:$0x1]
    %v33 = vld [vmem:[%s0 + $0x4] sm:$0x1]
    %v34 = vld [vmem:[%s0 + $0x5] sm:$0x1]
    %v35 = vld [vmem:[%s0 + $0x6] sm:$0x1]
    %v36 = vld [vmem:[%s0 + $0x7] sm:$0x1]
    %v37 = vunpack.c.l.bf16 %v29
    %v38 = vunpack.c.l.bf16 %v30
    %v39 = vunpack.c.l.bf16 %v31
    %v40 = vunpack.c.l.bf16 %v32
    %v41 = vunpack.c.l.bf16 %v33
    %v42 = vunpack.c.l.bf16 %v34
    %v43 = vunpack.c.l.bf16 %v35
    %v44 = vunpack.c.l.bf16 %v36
    %vm45 = vcmask 254976
    %v46 = vsel %vm45, %v37, 0.0
    %v47 = vsel %vm45, %v38, 0.0
    %v48 = vadd.f32 %v46, %v47
    %v49 = vsel %vm45, %v39, 0.0
    %v50 = vadd.f32 %v48, %v49
    %v51 = vsel %vm45, %v40, 0.0
    %v52 = vadd.f32 %v50, %v51
    %v53 = vsel %vm45, %v41, 0.0
    %v54 = vadd.f32 %v52, %v53
    %v55 = vsel %vm45, %v42, 0.0
    %v56 = vadd.f32 %v54, %v55
    %v57 = vsel %vm45, %v43, 0.0
    %v58 = vadd.f32 %v56, %v57
    %v59 = vsel %vm45, %v44, 0.0
    %v60 = vadd.f32 %v58, %v59
    %v61 = vadd.f32 %v28, %v60
    %62 = vst.msk [vmem:[#allocation2] sm:$0x3] %vm45, %v61
    // Predicated region
    $region26: #{_lambda_.19} parent=1 // pred_check
      %p63 = pneg %p22
    $region27: #{_lambda_.19} parent=1 // pred_check_branch
      %65 = sbr.rel (%p63) target = $region29
    $region28: #{_lambda_.19} parent=1 // pred_region
      %v66 = vld [vmem:[#allocation2] sm:$0x3]
      %v67 = vmul.f32 %v66, 0.125
      %v68 = vpack.c.bf16 %v67, %v67
      %v69 = vld [vmem:[%s1] sm:$0xf]
      %v70 = vld [vmem:[%s1 + $0x4] sm:$0xf]
      %v71 = vld [vmem:[%s1 + $0x8] sm:$0xf]
      %v72 = vld [vmem:[%s1 + $0xc] sm:$0xf]
      %v73 = vld [vmem:[%s2] sm:$0x1]
      %v75 = vperm.slane %v73, 0
      %v81 = vunpack.c.l.b16 %v69
      %v82 = vunpack.c.l.b16 %v70
      %v83 = vunpack.c.l.b16 %v71
      %v84 = vunpack.c.l.b16 %v72
      %v85 = vpack.c.b16 %v82, %v81
      %v86 = vpack.c.b16 %v84, %v83
      %vm89 = vcmask 261120
      %v91 = vsel %vm89, %v68, 0
      %93 = vmatpush.bf16.msra.mxu0 0
      %94 = vmatpush.bf16.msra.mxu0 0
      %95 = vmatpush.bf16.msra.mxu0 0
      %96 = vmatpush.bf16.msra.mxu0 0
      %97 = vmatpush.bf16.msra.mxu0 0
      %98 = vmatpush.bf16.msra.mxu0 0
      %99 = vmatpush.bf16.msra.mxu0 %v86
      %100 = vmatpush.bf16.msra.mxu0 %v85
      %101 = vmatmul.bf16.gmra.mxu0 %v91
      %v102 = vpop.f32.mrf.mxu0
      %v103 = vadd.f32 %v75, %v102
      %v104 = vpop.f32.mrf.mxu0
      %105 = vdwg.mxu0
      %v106 = vpack.c.bf16 %v103, %v103
      %v107 = vld [vmem:[%s3] sm:$0xf]
      %v108 = vld [vmem:[%s3 + $0x4] sm:$0xf]
      %v109 = vld [vmem:[%s4] sm:$0x1]
      %v111 = vperm.slane %v109, 0
      %v115 = vunpack.c.l.b16 %v107
      %v116 = vunpack.c.l.b16 %v108
      %v117 = vpack.c.b16 %v116, %v115
      %vm119 = vcmask 130048
      %v121 = vsel %vm119, %v106, 0
      %123 = vmatpush.bf16.msra.mxu0 0
      %124 = vmatpush.bf16.msra.mxu0 0
      %125 = vmatpush.bf16.msra.mxu0 0
      %126 = vmatpush.bf16.msra.mxu0 0
      %127 = vmatpush.bf16.msra.mxu0 0
      %128 = vmatpush.bf16.msra.mxu0 0
      %129 = vmatpush.bf16.msra.mxu0 0
      %130 = vmatpush.bf16.msra.mxu0 %v117
      %131 = vmatmul.bf16.gmra.mxu0 %v121
      %v132 = vpop.f32.mrf.mxu0
      %v133 = vadd.f32 %v111, %v132
      %v134 = vpop.f32.mrf.mxu0
      %135 = vdwg.mxu0
      %vm136 = vcmask 9216
      %137 = vst.msk [vmem:[#allocation3] sm:$0x3] %vm136, %v133
    $region29: #{_lambda_.19} parent=1 // pred_fallthru
      _
    // Predicated region
    $region30: #{_lambda_.19} parent=1 // pred_check
      _
    $region31: #{_lambda_.19} parent=1 // pred_check_branch
      %139 = sbr.rel (0) target = $region33
    $region32: #{_lambda_.19} parent=1 // pred_region
      %141 = vsyncadd [#allocation4], 0
      %s143 = sshll.u32 [#allocation3], 4
      %s144 = int_to_ptr.vmem [resolvable:$true] %s143
      %s145 = sshll.u32 %s5, 4
      %s146 = int_to_ptr.hbm [resolvable:$true] %s145
      %148 = dma.vmem_to_hbm [thread:$0]  %s144, 32, %s146, [#allocation4]
    $region33: #{_lambda_.19} parent=1 // pred_fallthru
      _
    // Predicated region
    $region34: #{_lambda_.19} parent=1 // pred_check
      _
    $region35: #{_lambda_.19} parent=1 // pred_check_branch
      %150 = sbr.rel (0) target = $region37
    $region36: #{_lambda_.19} parent=1 // pred_region
      %152 = dma.done [#allocation4], 32
    $region37: #{_lambda_.19} parent=1 // pred_fallthru
      _
    %153 = vsyncpa [#allocation4], 1

// kernel: _lambda_.18
$region0: #{_lambda_.18}
  #allocation0 [shape = 'u32[]', space=smem, size = 0x4, offset = 0x4, fixed_abs, tag = 'smem constant byte address 0x4 - core index']
  #allocation1 [shape = 'u32[72,128]{1,0:T(1,128)}', space=vmem, size = 0x9000, scoped, tag = 'internal scratch']
  #allocation2 [shape = 'f32[16,32]{1,0:T(8,128)}', space=vmem, size = 0x2000, scoped, tag = 'scratch operand']
  %s0 = inlined_call_operand.vmem [shape: f32[16,32], index: 0, kind: input, shape index: {}]
  %s1 = inlined_call_operand.vmem [shape: bf16[32,2048], index: 1, kind: input, shape index: {}]
  %s2 = inlined_call_operand.vmem [shape: f32[1,2048], index: 2, kind: input, shape index: {}]
  %s3 = inlined_call_operand.vmem [shape: bf16[2048,32], index: 3, kind: input, shape index: {}]
  %s4 = inlined_call_operand.vmem [shape: f32[1,32], index: 4, kind: input, shape index: {}]
  %s5 = inlined_call_operand.vmem [shape: f32[1,32], index: 5, kind: input, shape index: {}]
  %s6 = inlined_call_operand.vmem [shape: f32[1,32], index: 6, kind: input, shape index: {}]
  %s7 = inlined_call_operand.vmem [shape: bf16[16,32], index: 7, kind: output, shape index: {}]
  %s8 = sld [smem:[#allocation0]]
  $region46: #{_lambda_.18} parent=0
    _
  %s10 = ssub.s32 1, %s8
  %s11 = scalar_select 0, %s10, %s8
  // Predicated region
  $region2: #{_lambda_.18} parent=0 // pred_check
    _
  $region3: #{_lambda_.18} parent=0 // pred_check_branch
    %13 = sbr.rel (0) target = $region5
  $region4: #{_lambda_.18} parent=0 // pred_region
    _
  $region5: #{_lambda_.18} parent=0 // pred_fallthru
    _
  // Predicated region
  $region6: #{_lambda_.18} parent=0 // pred_check
    _
  $region7: #{_lambda_.18} parent=0 // pred_check_branch
    %15 = sbr.rel (0) target = $region9
  $region8: #{_lambda_.18} parent=0 // pred_region
    _
  $region9: #{_lambda_.18} parent=0 // pred_fallthru
    _
  // Predicated region
  $region10: #{_lambda_.18} parent=0 // pred_check
    _
  $region11: #{_lambda_.18} parent=0 // pred_check_branch
    %17 = sbr.rel (0) target = $region13
  $region12: #{_lambda_.18} parent=0 // pred_region
    _
  $region13: #{_lambda_.18} parent=0 // pred_fallthru
    _
  // Predicated region
  $region14: #{_lambda_.18} parent=0 // pred_check
    _
  $region15: #{_lambda_.18} parent=0 // pred_check_branch
    %19 = sbr.rel (0) target = $region17
  $region16: #{_lambda_.18} parent=0 // pred_region
    _
  $region17: #{_lambda_.18} parent=0 // pred_fallthru
    _
  // Predicated region
  $region18: #{_lambda_.18} parent=0 // pred_check
    _
  $region19: #{_lambda_.18} parent=0 // pred_check_branch
    %21 = sbr.rel (0) target = $region21
  $region20: #{_lambda_.18} parent=0 // pred_region
    _
  $region21: #{_lambda_.18} parent=0 // pred_fallthru
    _
  // Predicated region
  $region22: #{_lambda_.18} parent=0 // pred_check
    _
  $region23: #{_lambda_.18} parent=0 // pred_check_branch
    %23 = sbr.rel (0) target = $region25
  $region24: #{_lambda_.18} parent=0 // pred_region
    _
  $region25: #{_lambda_.18} parent=0 // pred_fallthru
    _
  // Predicated region
  $region26: #{_lambda_.18} parent=0 // pred_check
    _
  $region27: #{_lambda_.18} parent=0 // pred_check_branch
    %25 = sbr.rel (0) target = $region29
  $region28: #{_lambda_.18} parent=0 // pred_region
    _
  $region29: #{_lambda_.18} parent=0 // pred_fallthru
    _
  %p27 = scmp.eq.s32.totalorder 0, 0
  // Predicated region
  $region30: #{_lambda_.18} parent=0 // pred_check
    %p28 = pneg %p27
  $region31: #{_lambda_.18} parent=0 // pred_check_branch
    %30 = sbr.rel (%p28) target = $region33
  $region32: #{_lambda_.18} parent=0 // pred_region
    %vm31 = vcmask 261120
    %32 = vst.msk [vmem:[#allocation2] sm:$0xff] %vm31, 0.0
    %33 = vst.msk [vmem:[#allocation2 + $0x8] sm:$0xff] %vm31, 0.0
  $region33: #{_lambda_.18} parent=0 // pred_fallthru
    _
  %v34 = vld [vmem:[%s0] sm:$0xff]
  %v35 = vld [vmem:[%s0 + $0x8] sm:$0xff]
  %v36 = vpack.c.bf16 %v35, %v34
  %v37 = vld [vmem:[%s1] sm:$0xff]
  %v38 = vld [vmem:[%s1 + $0x8] sm:$0xff]
  %v39 = vld [vmem:[%s1 + $0x10] sm:$0xff]
  %v40 = vld [vmem:[%s1 + $0x18] sm:$0xff]
  %v41 = vld [vmem:[%s1 + $0x20] sm:$0xff]
  %v42 = vld [vmem:[%s1 + $0x28] sm:$0xff]
  %v43 = vld [vmem:[%s1 + $0x30] sm:$0xff]
  %v44 = vld [vmem:[%s1 + $0x38] sm:$0xff]
  %v45 = vld [vmem:[%s1 + $0x40] sm:$0xff]
  %v46 = vld [vmem:[%s1 + $0x48] sm:$0xff]
  %v47 = vld [vmem:[%s1 + $0x50] sm:$0xff]
  %v48 = vld [vmem:[%s1 + $0x58] sm:$0xff]
  %v49 = vld [vmem:[%s1 + $0x60] sm:$0xff]
  %v50 = vld [vmem:[%s1 + $0x68] sm:$0xff]
  %v51 = vld [vmem:[%s1 + $0x70] sm:$0xff]
  %v52 = vld [vmem:[%s1 + $0x78] sm:$0xff]
  %v53 = vld [vmem:[%s1 + $0x80] sm:$0xff]
  %v54 = vld [vmem:[%s1 + $0x88] sm:$0xff]
  %v55 = vld [vmem:[%s1 + $0x90] sm:$0xff]
  %v56 = vld [vmem:[%s1 + $0x98] sm:$0xff]
  %v57 = vld [vmem:[%s1 + $0xa0] sm:$0xff]
  %v58 = vld [vmem:[%s1 + $0xa8] sm:$0xff]
  %v59 = vld [vmem:[%s1 + $0xb0] sm:$0xff]
  %v60 = vld [vmem:[%s1 + $0xb8] sm:$0xff]
  %v61 = vld [vmem:[%s1 + $0xc0] sm:$0xff]
  %v62 = vld [vmem:[%s1 + $0xc8] sm:$0xff]
  %v63 = vld [vmem:[%s1 + $0xd0] sm:$0xff]
  %v64 = vld [vmem:[%s1 + $0xd8] sm:$0xff]
  %v65 = vld [vmem:[%s1 + $0xe0] sm:$0xff]
  %v66 = vld [vmem:[%s1 + $0xe8] sm:$0xff]
  %v67 = vld [vmem:[%s1 + $0xf0] sm:$0xff]
  %v68 = vld [vmem:[%s1 + $0xf8] sm:$0xff]
  %v69 = vld [vmem:[%s2] sm:$0xff]
  %v70 = vld [vmem:[%s2 + $0x8] sm:$0xff]
  %v73 = vperm.slane %v69, 0
  %v74 = vperm.slane %v69, 1
  %v75 = vperm.slane %v69, 2
  %v76 = vperm.slane %v69, 3
  %v77 = vperm.slane %v69, 4
  %v78 = vperm.slane %v69, 5
  %v79 = vperm.slane %v69, 6
  %v80 = vperm.slane %v69, 7
  %v81 = vperm.slane %v70, 0
  %v82 = vperm.slane %v70, 1
  %v83 = vperm.slane %v70, 2
  %v84 = vperm.slane %v70, 3
  %v85 = vperm.slane %v70, 4
  %v86 = vperm.slane %v70, 5
  %v87 = vperm.slane %v70, 6
  %v88 = vperm.slane %v70, 7
  %v137 = vunpack.c.l.b16 %v37
  %v138 = vunpack.c.h.b16 %v37
  %v139 = vunpack.c.l.b16 %v38
  %v140 = vunpack.c.h.b16 %v38
  %v141 = vunpack.c.l.b16 %v39
  %v142 = vunpack.c.h.b16 %v39
  %v143 = vunpack.c.l.b16 %v40
  %v144 = vunpack.c.h.b16 %v40
  %v145 = vunpack.c.l.b16 %v41
  %v146 = vunpack.c.h.b16 %v41
  %v147 = vunpack.c.l.b16 %v42
  %v148 = vunpack.c.h.b16 %v42
  %v149 = vunpack.c.l.b16 %v43
  %v150 = vunpack.c.h.b16 %v43
  %v151 = vunpack.c.l.b16 %v44
  %v152 = vunpack.c.h.b16 %v44
  %v153 = vunpack.c.l.b16 %v45
  %v154 = vunpack.c.h.b16 %v45
  %v155 = vunpack.c.l.b16 %v46
  %v156 = vunpack.c.h.b16 %v46
  %v157 = vunpack.c.l.b16 %v47
  %v158 = vunpack.c.h.b16 %v47
  %v159 = vunpack.c.l.b16 %v48
  %v160 = vunpack.c.h.b16 %v48
  %v161 = vunpack.c.l.b16 %v49
  %v162 = vunpack.c.h.b16 %v49
  %v163 = vunpack.c.l.b16 %v50
  %v164 = vunpack.c.h.b16 %v50
  %v165 = vunpack.c.l.b16 %v51
  %v166 = vunpack.c.h.b16 %v51
  %v167 = vunpack.c.l.b16 %v52
  %v168 = vunpack.c.h.b16 %v52
  %v169 = vunpack.c.l.b16 %v53
  %v170 = vunpack.c.h.b16 %v53
  %v171 = vunpack.c.l.b16 %v54
  %v172 = vunpack.c.h.b16 %v54
  %v173 = vunpack.c.l.b16 %v55
  %v174 = vunpack.c.h.b16 %v55
  %v175 = vunpack.c.l.b16 %v56
  %v176 = vunpack.c.h.b16 %v56
  %v177 = vunpack.c.l.b16 %v57
  %v178 = vunpack.c.h.b16 %v57
  %v179 = vunpack.c.l.b16 %v58
  %v180 = vunpack.c.h.b16 %v58
  %v181 = vunpack.c.l.b16 %v59
  %v182 = vunpack.c.h.b16 %v59
  %v183 = vunpack.c.l.b16 %v60
  %v184 = vunpack.c.h.b16 %v60
  %v185 = vunpack.c.l.b16 %v61
  %v186 = vunpack.c.h.b16 %v61
  %v187 = vunpack.c.l.b16 %v62
  %v188 = vunpack.c.h.b16 %v62
  %v189 = vunpack.c.l.b16 %v63
  %v190 = vunpack.c.h.b16 %v63
  %v191 = vunpack.c.l.b16 %v64
  %v192 = vunpack.c.h.b16 %v64
  %v193 = vunpack.c.l.b16 %v65
  %v194 = vunpack.c.h.b16 %v65
  %v195 = vunpack.c.l.b16 %v66
  %v196 = vunpack.c.h.b16 %v66
  %v197 = vunpack.c.l.b16 %v67
  %v198 = vunpack.c.h.b16 %v67
  %v199 = vunpack.c.l.b16 %v68
  %v200 = vunpack.c.h.b16 %v68
  %v201 = vpack.c.b16 %v153, %v137
  %v202 = vpack.c.b16 %v154, %v138
  %v203 = vpack.c.b16 %v155, %v139
  %v204 = vpack.c.b16 %v156, %v140
  %v205 = vpack.c.b16 %v157, %v141
  %v206 = vpack.c.b16 %v158, %v142
  %v207 = vpack.c.b16 %v159, %v143
  %v208 = vpack.c.b16 %v160, %v144
  %v209 = vpack.c.b16 %v161, %v145
  %v210 = vpack.c.b16 %v162, %v146
  %v211 = vpack.c.b16 %v163, %v147
  %v212 = vpack.c.b16 %v164, %v148
  %v213 = vpack.c.b16 %v165, %v149
  %v214 = vpack.c.b16 %v166, %v150
  %v215 = vpack.c.b16 %v167, %v151
  %v216 = vpack.c.b16 %v168, %v152
  %v217 = vpack.c.b16 %v185, %v169
  %v218 = vpack.c.b16 %v186, %v170
  %v219 = vpack.c.b16 %v187, %v171
  %v220 = vpack.c.b16 %v188, %v172
  %v221 = vpack.c.b16 %v189, %v173
  %v222 = vpack.c.b16 %v190, %v174
  %v223 = vpack.c.b16 %v191, %v175
  %v224 = vpack.c.b16 %v192, %v176
  %v225 = vpack.c.b16 %v193, %v177
  %v226 = vpack.c.b16 %v194, %v178
  %v227 = vpack.c.b16 %v195, %v179
  %v228 = vpack.c.b16 %v196, %v180
  %v229 = vpack.c.b16 %v197, %v181
  %v230 = vpack.c.b16 %v198, %v182
  %v231 = vpack.c.b16 %v199, %v183
  %v232 = vpack.c.b16 %v200, %v184
  %vm265 = vcmask 261120
  %v267 = vsel %vm265, %v36, 0
  %269 = vmatpush.bf16.msra.mxu0 0
  %270 = vmatpush.bf16.msra.mxu0 0
  %271 = vmatpush.bf16.msra.mxu0 0
  %272 = vmatpush.bf16.msra.mxu0 0
  %273 = vmatpush.bf16.msra.mxu0 0
  %274 = vmatpush.bf16.msra.mxu0 0
  %275 = vmatpush.bf16.msra.mxu0 %v217
  %276 = vmatpush.bf16.msra.mxu0 %v201
  %277 = vmatmul.bf16.gmra.mxu0 %v267
  %v278 = vpop.f32.mrf.mxu0
  %v279 = vadd.f32 %v73, %v278
  %v280 = vpop.f32.mrf.mxu0
  %v281 = vadd.f32 %v73, %v280
  %282 = vdwg.mxu0
  %283 = vmatpush.bf16.msra.mxu0 0
  %284 = vmatpush.bf16.msra.mxu0 0
  %285 = vmatpush.bf16.msra.mxu0 0
  %286 = vmatpush.bf16.msra.mxu0 0
  %287 = vmatpush.bf16.msra.mxu0 0
  %288 = vmatpush.bf16.msra.mxu0 0
  %289 = vmatpush.bf16.msra.mxu0 %v218
  %290 = vmatpush.bf16.msra.mxu0 %v202
  %291 = vmatmul.bf16.gmra.mxu0 %v267
  %v292 = vpop.f32.mrf.mxu0
  %v293 = vadd.f32 %v74, %v292
  %v294 = vpop.f32.mrf.mxu0
  %v295 = vadd.f32 %v74, %v294
  %296 = vdwg.mxu0
  %297 = vmatpush.bf16.msra.mxu0 0
  %298 = vmatpush.bf16.msra.mxu0 0
  %299 = vmatpush.bf16.msra.mxu0 0
  %300 = vmatpush.bf16.msra.mxu0 0
  %301 = vmatpush.bf16.msra.mxu0 0
  %302 = vmatpush.bf16.msra.mxu0 0
  %303 = vmatpush.bf16.msra.mxu0 %v219
  %304 = vmatpush.bf16.msra.mxu0 %v203
  %305 = vmatmul.bf16.gmra.mxu0 %v267
  %v306 = vpop.f32.mrf.mxu0
  %v307 = vadd.f32 %v75, %v306
  %v308 = vpop.f32.mrf.mxu0
  %v309 = vadd.f32 %v75, %v308
  %310 = vdwg.mxu0
  %311 = vmatpush.bf16.msra.mxu0 0
  %312 = vmatpush.bf16.msra.mxu0 0
  %313 = vmatpush.bf16.msra.mxu0 0
  %314 = vmatpush.bf16.msra.mxu0 0
  %315 = vmatpush.bf16.msra.mxu0 0
  %316 = vmatpush.bf16.msra.mxu0 0
  %317 = vmatpush.bf16.msra.mxu0 %v220
  %318 = vmatpush.bf16.msra.mxu0 %v204
  %319 = vmatmul.bf16.gmra.mxu0 %v267
  %v320 = vpop.f32.mrf.mxu0
  %v321 = vadd.f32 %v76, %v320
  %v322 = vpop.f32.mrf.mxu0
  %v323 = vadd.f32 %v76, %v322
  %324 = vdwg.mxu0
  %325 = vmatpush.bf16.msra.mxu0 0
  %326 = vmatpush.bf16.msra.mxu0 0
  %327 = vmatpush.bf16.msra.mxu0 0
  %328 = vmatpush.bf16.msra.mxu0 0
  %329 = vmatpush.bf16.msra.mxu0 0
  %330 = vmatpush.bf16.msra.mxu0 0
  %331 = vmatpush.bf16.msra.mxu0 %v221
  %332 = vmatpush.bf16.msra.mxu0 %v205
  %333 = vmatmul.bf16.gmra.mxu0 %v267
  %v334 = vpop.f32.mrf.mxu0
  %v335 = vadd.f32 %v77, %v334
  %v336 = vpop.f32.mrf.mxu0
  %v337 = vadd.f32 %v77, %v336
  %338 = vdwg.mxu0
  %339 = vmatpush.bf16.msra.mxu0 0
  %340 = vmatpush.bf16.msra.mxu0 0
  %341 = vmatpush.bf16.msra.mxu0 0
  %342 = vmatpush.bf16.msra.mxu0 0
  %343 = vmatpush.bf16.msra.mxu0 0
  %344 = vmatpush.bf16.msra.mxu0 0
  %345 = vmatpush.bf16.msra.mxu0 %v222
  %346 = vmatpush.bf16.msra.mxu0 %v206
  %347 = vmatmul.bf16.gmra.mxu0 %v267
  %v348 = vpop.f32.mrf.mxu0
  %v349 = vadd.f32 %v78, %v348
  %v350 = vpop.f32.mrf.mxu0
  %v351 = vadd.f32 %v78, %v350
  %352 = vdwg.mxu0
  %353 = vmatpush.bf16.msra.mxu0 0
  %354 = vmatpush.bf16.msra.mxu0 0
  %355 = vmatpush.bf16.msra.mxu0 0
  %356 = vmatpush.bf16.msra.mxu0 0
  %357 = vmatpush.bf16.msra.mxu0 0
  %358 = vmatpush.bf16.msra.mxu0 0
  %359 = vmatpush.bf16.msra.mxu0 %v223
  %360 = vmatpush.bf16.msra.mxu0 %v207
  %361 = vmatmul.bf16.gmra.mxu0 %v267
  %v362 = vpop.f32.mrf.mxu0
  %v363 = vadd.f32 %v79, %v362
  %v364 = vpop.f32.mrf.mxu0
  %v365 = vadd.f32 %v79, %v364
  %366 = vdwg.mxu0
  %367 = vmatpush.bf16.msra.mxu0 0
  %368 = vmatpush.bf16.msra.mxu0 0
  %369 = vmatpush.bf16.msra.mxu0 0
  %370 = vmatpush.bf16.msra.mxu0 0
  %371 = vmatpush.bf16.msra.mxu0 0
  %372 = vmatpush.bf16.msra.mxu0 0
  %373 = vmatpush.bf16.msra.mxu0 %v224
  %374 = vmatpush.bf16.msra.mxu0 %v208
  %375 = vmatmul.bf16.gmra.mxu0 %v267
  %v376 = vpop.f32.mrf.mxu0
  %v377 = vadd.f32 %v80, %v376
  %v378 = vpop.f32.mrf.mxu0
  %v379 = vadd.f32 %v80, %v378
  %380 = vdwg.mxu0
  %381 = vmatpush.bf16.msra.mxu0 0
  %382 = vmatpush.bf16.msra.mxu0 0
  %383 = vmatpush.bf16.msra.mxu0 0
  %384 = vmatpush.bf16.msra.mxu0 0
  %385 = vmatpush.bf16.msra.mxu0 0
  %386 = vmatpush.bf16.msra.mxu0 0
  %387 = vmatpush.bf16.msra.mxu0 %v225
  %388 = vmatpush.bf16.msra.mxu0 %v209
  %389 = vmatmul.bf16.gmra.mxu0 %v267
  %v390 = vpop.f32.mrf.mxu0
  %v391 = vadd.f32 %v81, %v390
  %v392 = vpop.f32.mrf.mxu0
  %v393 = vadd.f32 %v81, %v392
  %394 = vdwg.mxu0
  %395 = vmatpush.bf16.msra.mxu0 0
  %396 = vmatpush.bf16.msra.mxu0 0
  %397 = vmatpush.bf16.msra.mxu0 0
  %398 = vmatpush.bf16.msra.mxu0 0
  %399 = vmatpush.bf16.msra.mxu0 0
  %400 = vmatpush.bf16.msra.mxu0 0
  %401 = vmatpush.bf16.msra.mxu0 %v226
  %402 = vmatpush.bf16.msra.mxu0 %v210
  %403 = vmatmul.bf16.gmra.mxu0 %v267
  %v404 = vpop.f32.mrf.mxu0
  %v405 = vadd.f32 %v82, %v404
  %v406 = vpop.f32.mrf.mxu0
  %v407 = vadd.f32 %v82, %v406
  %408 = vdwg.mxu0
  %409 = vmatpush.bf16.msra.mxu0 0
  %410 = vmatpush.bf16.msra.mxu0 0
  %411 = vmatpush.bf16.msra.mxu0 0
  %412 = vmatpush.bf16.msra.mxu0 0
  %413 = vmatpush.bf16.msra.mxu0 0
  %414 = vmatpush.bf16.msra.mxu0 0
  %415 = vmatpush.bf16.msra.mxu0 %v227
  %416 = vmatpush.bf16.msra.mxu0 %v211
  %417 = vmatmul.bf16.gmra.mxu0 %v267
  %v418 = vpop.f32.mrf.mxu0
  %v419 = vadd.f32 %v83, %v418
  %v420 = vpop.f32.mrf.mxu0
  %v421 = vadd.f32 %v83, %v420
  %422 = vdwg.mxu0
  %423 = vmatpush.bf16.msra.mxu0 0
  %424 = vmatpush.bf16.msra.mxu0 0
  %425 = vmatpush.bf16.msra.mxu0 0
  %426 = vmatpush.bf16.msra.mxu0 0
  %427 = vmatpush.bf16.msra.mxu0 0
  %428 = vmatpush.bf16.msra.mxu0 0
  %429 = vmatpush.bf16.msra.mxu0 %v228
  %430 = vmatpush.bf16.msra.mxu0 %v212
  %431 = vmatmul.bf16.gmra.mxu0 %v267
  %v432 = vpop.f32.mrf.mxu0
  %v433 = vadd.f32 %v84, %v432
  %v434 = vpop.f32.mrf.mxu0
  %v435 = vadd.f32 %v84, %v434
  %436 = vdwg.mxu0
  %437 = vmatpush.bf16.msra.mxu0 0
  %438 = vmatpush.bf16.msra.mxu0 0
  %439 = vmatpush.bf16.msra.mxu0 0
  %440 = vmatpush.bf16.msra.mxu0 0
  %441 = vmatpush.bf16.msra.mxu0 0
  %442 = vmatpush.bf16.msra.mxu0 0
  %443 = vmatpush.bf16.msra.mxu0 %v229
  %444 = vmatpush.bf16.msra.mxu0 %v213
  %445 = vmatmul.bf16.gmra.mxu0 %v267
  %v446 = vpop.f32.mrf.mxu0
  %v447 = vadd.f32 %v85, %v446
  %v448 = vpop.f32.mrf.mxu0
  %v449 = vadd.f32 %v85, %v448
  %450 = vdwg.mxu0
  %451 = vmatpush.bf16.msra.mxu0 0
  %452 = vmatpush.bf16.msra.mxu0 0
  %453 = vmatpush.bf16.msra.mxu0 0
  %454 = vmatpush.bf16.msra.mxu0 0
  %455 = vmatpush.bf16.msra.mxu0 0
  %456 = vmatpush.bf16.msra.mxu0 0
  %457 = vmatpush.bf16.msra.mxu0 %v230
  %458 = vmatpush.bf16.msra.mxu0 %v214
  %459 = vmatmul.bf16.gmra.mxu0 %v267
  %v460 = vpop.f32.mrf.mxu0
  %v461 = vadd.f32 %v86, %v460
  %v462 = vpop.f32.mrf.mxu0
  %v463 = vadd.f32 %v86, %v462
  %464 = vdwg.mxu0
  %465 = vmatpush.bf16.msra.mxu0 0
  %466 = vmatpush.bf16.msra.mxu0 0
  %467 = vmatpush.bf16.msra.mxu0 0
  %468 = vmatpush.bf16.msra.mxu0 0
  %469 = vmatpush.bf16.msra.mxu0 0
  %470 = vmatpush.bf16.msra.mxu0 0
  %471 = vmatpush.bf16.msra.mxu0 %v231
  %472 = vmatpush.bf16.msra.mxu0 %v215
  %473 = vmatmul.bf16.gmra.mxu0 %v267
  %v474 = vpop.f32.mrf.mxu0
  %v475 = vadd.f32 %v87, %v474
  %v476 = vpop.f32.mrf.mxu0
  %v477 = vadd.f32 %v87, %v476
  %478 = vdwg.mxu0
  %479 = vmatpush.bf16.msra.mxu0 0
  %480 = vmatpush.bf16.msra.mxu0 0
  %481 = vmatpush.bf16.msra.mxu0 0
  %482 = vmatpush.bf16.msra.mxu0 0
  %483 = vmatpush.bf16.msra.mxu0 0
  %484 = vmatpush.bf16.msra.mxu0 0
  %485 = vmatpush.bf16.msra.mxu0 %v232
  %486 = vmatpush.bf16.msra.mxu0 %v216
  %487 = vmatmul.bf16.gmra.mxu0 %v267
  %v488 = vpop.f32.mrf.mxu0
  %v489 = vadd.f32 %v88, %v488
  %v490 = vpop.f32.mrf.mxu0
  %v491 = vadd.f32 %v88, %v490
  %492 = vdwg.mxu0
  %v493 = vmax.f32 %v279, 0.0
  %v494 = vmax.f32 %v293, 0.0
  %v495 = vmax.f32 %v307, 0.0
  %v496 = vmax.f32 %v321, 0.0
  %v497 = vmax.f32 %v335, 0.0
  %v498 = vmax.f32 %v349, 0.0
  %v499 = vmax.f32 %v363, 0.0
  %v500 = vmax.f32 %v377, 0.0
  %v501 = vmax.f32 %v391, 0.0
  %v502 = vmax.f32 %v405, 0.0
  %v503 = vmax.f32 %v419, 0.0
  %v504 = vmax.f32 %v433, 0.0
  %v505 = vmax.f32 %v447, 0.0
  %v506 = vmax.f32 %v461, 0.0
  %v507 = vmax.f32 %v475, 0.0
  %v508 = vmax.f32 %v489, 0.0
  %v509 = vmax.f32 %v281, 0.0
  %v510 = vmax.f32 %v295, 0.0
  %v511 = vmax.f32 %v309, 0.0
  %v512 = vmax.f32 %v323, 0.0
  %v513 = vmax.f32 %v337, 0.0
  %v514 = vmax.f32 %v351, 0.0
  %v515 = vmax.f32 %v365, 0.0
  %v516 = vmax.f32 %v379, 0.0
  %v517 = vmax.f32 %v393, 0.0
  %v518 = vmax.f32 %v407, 0.0
  %v519 = vmax.f32 %v421, 0.0
  %v520 = vmax.f32 %v435, 0.0
  %v521 = vmax.f32 %v449, 0.0
  %v522 = vmax.f32 %v463, 0.0
  %v523 = vmax.f32 %v477, 0.0
  %v524 = vmax.f32 %v491, 0.0
  %v525 = vld [vmem:[#allocation2] sm:$0xff]
  %v526 = vld [vmem:[#allocation2 + $0x8] sm:$0xff]
  %v527 = vpack.c.bf16 %v509, %v493
  %v528 = vpack.c.bf16 %v510, %v494
  %v529 = vpack.c.bf16 %v511, %v495
  %v530 = vpack.c.bf16 %v512, %v496
  %v531 = vpack.c.bf16 %v513, %v497
  %v532 = vpack.c.bf16 %v514, %v498
  %v533 = vpack.c.bf16 %v515, %v499
  %v534 = vpack.c.bf16 %v516, %v500
  %v535 = vpack.c.bf16 %v517, %v501
  %v536 = vpack.c.bf16 %v518, %v502
  %v537 = vpack.c.bf16 %v519, %v503
  %v538 = vpack.c.bf16 %v520, %v504
  %v539 = vpack.c.bf16 %v521, %v505
  %v540 = vpack.c.bf16 %v522, %v506
  %v541 = vpack.c.bf16 %v523, %v507
  %v542 = vpack.c.bf16 %v524, %v508
  %v543 = vld [vmem:[%s3] sm:$0xf]
  %v544 = vld [vmem:[%s3 + $0x4] sm:$0xf]
  %v545 = vld [vmem:[%s3 + $0x8] sm:$0xf]
  %v546 = vld [vmem:[%s3 + $0xc] sm:$0xf]
  %v547 = vld [vmem:[%s3 + $0x10] sm:$0xf]
  %v548 = vld [vmem:[%s3 + $0x14] sm:$0xf]
  %v549 = vld [vmem:[%s3 + $0x18] sm:$0xf]
  %v550 = vld [vmem:[%s3 + $0x1c] sm:$0xf]
  %v551 = vld [vmem:[%s3 + $0x20] sm:$0xf]
  %v552 = vld [vmem:[%s3 + $0x24] sm:$0xf]
  %v553 = vld [vmem:[%s3 + $0x28] sm:$0xf]
  %v554 = vld [vmem:[%s3 + $0x2c] sm:$0xf]
  %v555 = vld [vmem:[%s3 + $0x30] sm:$0xf]
  %v556 = vld [vmem:[%s3 + $0x34] sm:$0xf]
  %v557 = vld [vmem:[%s3 + $0x38] sm:$0xf]
  %v558 = vld [vmem:[%s3 + $0x3c] sm:$0xf]
  %v559 = vld [vmem:[%s3 + $0x40] sm:$0xf]
  %v560 = vld [vmem:[%s3 + $0x44] sm:$0xf]
  %v561 = vld [vmem:[%s3 + $0x48] sm:$0xf]
  %v562 = vld [vmem:[%s3 + $0x4c] sm:$0xf]
  %v563 = vld [vmem:[%s3 + $0x50] sm:$0xf]
  %v564 = vld [vmem:[%s3 + $0x54] sm:$0xf]
  %v565 = vld [vmem:[%s3 + $0x58] sm:$0xf]
  %v566 = vld [vmem:[%s3 + $0x5c] sm:$0xf]
  %v567 = vld [vmem:[%s3 + $0x60] sm:$0xf]
  %v568 = vld [vmem:[%s3 + $0x64] sm:$0xf]
  %v569 = vld [vmem:[%s3 + $0x68] sm:$0xf]
  %v570 = vld [vmem:[%s3 + $0x6c] sm:$0xf]
  %v571 = vld [vmem:[%s3 + $0x70] sm:$0xf]
  %v572 = vld [vmem:[%s3 + $0x74] sm:$0xf]
  %v573 = vld [vmem:[%s3 + $0x78] sm:$0xf]
  %v574 = vld [vmem:[%s3 + $0x7c] sm:$0xf]
  %v575 = vld [vmem:[%s3 + $0x80] sm:$0xf]
  %v576 = vld [vmem:[%s3 + $0x84] sm:$0xf]
  %v577 = vld [vmem:[%s3 + $0x88] sm:$0xf]
  %v578 = vld [vmem:[%s3 + $0x8c] sm:$0xf]
  %v579 = vld [vmem:[%s3 + $0x90] sm:$0xf]
  %v580 = vld [vmem:[%s3 + $0x94] sm:$0xf]
  %v581 = vld [vmem:[%s3 + $0x98] sm:$0xf]
  %v582 = vld [vmem:[%s3 + $0x9c] sm:$0xf]
  %v583 = vld [vmem:[%s3 + $0xa0] sm:$0xf]
  %v584 = vld [vmem:[%s3 + $0xa4] sm:$0xf]
  %v585 = vld [vmem:[%s3 + $0xa8] sm:$0xf]
  %v586 = vld [vmem:[%s3 + $0xac] sm:$0xf]
  %v587 = vld [vmem:[%s3 + $0xb0] sm:$0xf]
  %v588 = vld [vmem:[%s3 + $0xb4] sm:$0xf]
  %v589 = vld [vmem:[%s3 + $0xb8] sm:$0xf]
  %v590 = vld [vmem:[%s3 + $0xbc] sm:$0xf]
  %v591 = vld [vmem:[%s3 + $0xc0] sm:$0xf]
  %v592 = vld [vmem:[%s3 + $0xc4] sm:$0xf]
  %v593 = vld [vmem:[%s3 + $0xc8] sm:$0xf]
  %v594 = vld [vmem:[%s3 + $0xcc] sm:$0xf]
  %v595 = vld [vmem:[%s3 + $0xd0] sm:$0xf]
  %v596 = vld [vmem:[%s3 + $0xd4] sm:$0xf]
  %v597 = vld [vmem:[%s3 + $0xd8] sm:$0xf]
  %v598 = vld [vmem:[%s3 + $0xdc] sm:$0xf]
  %v599 = vld [vmem:[%s3 + $0xe0] sm:$0xf]
  %v600 = vld [vmem:[%s3 + $0xe4] sm:$0xf]
  %v601 = vld [vmem:[%s3 + $0xe8] sm:$0xf]
  %v602 = vld [vmem:[%s3 + $0xec] sm:$0xf]
  %v603 = vld [vmem:[%s3 + $0xf0] sm:$0xf]
  %v604 = vld [vmem:[%s3 + $0xf4] sm:$0xf]
  %v605 = vld [vmem:[%s3 + $0xf8] sm:$0xf]
  %v606 = vld [vmem:[%s3 + $0xfc] sm:$0xf]
  %v607 = vld [vmem:[%s3 + $0x100] sm:$0xf]
  %v608 = vld [vmem:[%s3 + $0x104] sm:$0xf]
  %v609 = vld [vmem:[%s3 + $0x108] sm:$0xf]
  %v610 = vld [vmem:[%s3 + $0x10c] sm:$0xf]
  %v611 = vld [vmem:[%s3 + $0x110] sm:$0xf]
  %v612 = vld [vmem:[%s3 + $0x114] sm:$0xf]
  %v613 = vld [vmem:[%s3 + $0x118] sm:$0xf]
  %v614 = vld [vmem:[%s3 + $0x11c] sm:$0xf]
  %v615 = vld [vmem:[%s3 + $0x120] sm:$0xf]
  %v616 = vld [vmem:[%s3 + $0x124] sm:$0xf]
  %v617 = vld [vmem:[%s3 + $0x128] sm:$0xf]
  %v618 = vld [vmem:[%s3 + $0x12c] sm:$0xf]
  %v619 = vld [vmem:[%s3 + $0x130] sm:$0xf]
  %v620 = vld [vmem:[%s3 + $0x134] sm:$0xf]
  %v621 = vld [vmem:[%s3 + $0x138] sm:$0xf]
  %v622 = vld [vmem:[%s3 + $0x13c] sm:$0xf]
  %v623 = vld [vmem:[%s3 + $0x140] sm:$0xf]
  %v624 = vld [vmem:[%s3 + $0x144] sm:$0xf]
  %v625 = vld [vmem:[%s3 + $0x148] sm:$0xf]
  %v626 = vld [vmem:[%s3 + $0x14c] sm:$0xf]
  %v627 = vld [vmem:[%s3 + $0x150] sm:$0xf]
  %v628 = vld [vmem:[%s3 + $0x154] sm:$0xf]
  %v629 = vld [vmem:[%s3 + $0x158] sm:$0xf]
  %v630 = vld [vmem:[%s3 + $0x15c] sm:$0xf]
  %v631 = vld [vmem:[%s3 + $0x160] sm:$0xf]
  %v632 = vld [vmem:[%s3 + $0x164] sm:$0xf]
  %v633 = vld [vmem:[%s3 + $0x168] sm:$0xf]
  %v634 = vld [vmem:[%s3 + $0x16c] sm:$0xf]
  %v635 = vld [vmem:[%s3 + $0x170] sm:$0xf]
  %v636 = vld [vmem:[%s3 + $0x174] sm:$0xf]
  %v637 = vld [vmem:[%s3 + $0x178] sm:$0xf]
  %v638 = vld [vmem:[%s3 + $0x17c] sm:$0xf]
  %v639 = vld [vmem:[%s3 + $0x180] sm:$0xf]
  %v640 = vld [vmem:[%s3 + $0x184] sm:$0xf]
  %v641 = vld [vmem:[%s3 + $0x188] sm:$0xf]
  %v642 = vld [vmem:[%s3 + $0x18c] sm:$0xf]
  %v643 = vld [vmem:[%s3 + $0x190] sm:$0xf]
  %v644 = vld [vmem:[%s3 + $0x194] sm:$0xf]
  %v645 = vld [vmem:[%s3 + $0x198] sm:$0xf]
  %v646 = vld [vmem:[%s3 + $0x19c] sm:$0xf]
  %v647 = vld [vmem:[%s3 + $0x1a0] sm:$0xf]
  %v648 = vld [vmem:[%s3 + $0x1a4] sm:$0xf]
  %v649 = vld [vmem:[%s3 + $0x1a8] sm:$0xf]
  %v650 = vld [vmem:[%s3 + $0x1ac] sm:$0xf]
  %v651 = vld [vmem:[%s3 + $0x1b0] sm:$0xf]
  %v652 = vld [vmem:[%s3 + $0x1b4] sm:$0xf]
  %v653 = vld [vmem:[%s3 + $0x1b8] sm:$0xf]
  %v654 = vld [vmem:[%s3 + $0x1bc] sm:$0xf]
  %v655 = vld [vmem:[%s3 + $0x1c0] sm:$0xf]
  %v656 = vld [vmem:[%s3 + $0x1c4] sm:$0xf]
  %v657 = vld [vmem:[%s3 + $0x1c8] sm:$0xf]
  %v658 = vld [vmem:[%s3 + $0x1cc] sm:$0xf]
  %v659 = vld [vmem:[%s3 + $0x1d0] sm:$0xf]
  %v660 = vld [vmem:[%s3 + $0x1d4] sm:$0xf]
  %v661 = vld [vmem:[%s3 + $0x1d8] sm:$0xf]
  %v662 = vld [vmem:[%s3 + $0x1dc] sm:$0xf]
  %v663 = vld [vmem:[%s3 + $0x1e0] sm:$0xf]
  %v664 = vld [vmem:[%s3 + $0x1e4] sm:$0xf]
  %v665 = vld [vmem:[%s3 + $0x1e8] sm:$0xf]
  %v666 = vld [vmem:[%s3 + $0x1ec] sm:$0xf]
  %v667 = vld [vmem:[%s3 + $0x1f0] sm:$0xf]
  %v668 = vld [vmem:[%s3 + $0x1f4] sm:$0xf]
  %v669 = vld [vmem:[%s3 + $0x1f8] sm:$0xf]
  %v670 = vld [vmem:[%s3 + $0x1fc] sm:$0xf]
  %v671 = vld [vmem:[%s3 + $0x200] sm:$0xf]
  %v672 = vld [vmem:[%s3 + $0x204] sm:$0xf]
  %v673 = vld [vmem:[%s3 + $0x208] sm:$0xf]
  %v674 = vld [vmem:[%s3 + $0x20c] sm:$0xf]
  %v675 = vld [vmem:[%s3 + $0x210] sm:$0xf]
  %v676 = vld [vmem:[%s3 + $0x214] sm:$0xf]
  %v677 = vld [vmem:[%s3 + $0x218] sm:$0xf]
  %v678 = vld [vmem:[%s3 + $0x21c] sm:$0xf]
  %v679 = vld [vmem:[%s3 + $0x220] sm:$0xf]
  %v680 = vld [vmem:[%s3 + $0x224] sm:$0xf]
  %v681 = vld [vmem:[%s3 + $0x228] sm:$0xf]
  %v682 = vld [vmem:[%s3 + $0x22c] sm:$0xf]
  %v683 = vld [vmem:[%s3 + $0x230] sm:$0xf]
  %v684 = vld [vmem:[%s3 + $0x234] sm:$0xf]
  %v685 = vld [vmem:[%s3 + $0x238] sm:$0xf]
  %v686 = vld [vmem:[%s3 + $0x23c] sm:$0xf]
  %v687 = vld [vmem:[%s3 + $0x240] sm:$0xf]
  %v688 = vld [vmem:[%s3 + $0x244] sm:$0xf]
  %v689 = vld [vmem:[%s3 + $0x248] sm:$0xf]
  %v690 = vld [vmem:[%s3 + $0x24c] sm:$0xf]
  %v691 = vld [vmem:[%s3 + $0x250] sm:$0xf]
  %v692 = vld [vmem:[%s3 + $0x254] sm:$0xf]
  %v693 = vld [vmem:[%s3 + $0x258] sm:$0xf]
  %v694 = vld [vmem:[%s3 + $0x25c] sm:$0xf]
  %v695 = vld [vmem:[%s3 + $0x260] sm:$0xf]
  %v696 = vld [vmem:[%s3 + $0x264] sm:$0xf]
  %v697 = vld [vmem:[%s3 + $0x268] sm:$0xf]
  %v698 = vld [vmem:[%s3 + $0x26c] sm:$0xf]
  %v699 = vld [vmem:[%s3 + $0x270] sm:$0xf]
  %v700 = vld [vmem:[%s3 + $0x274] sm:$0xf]
  %v701 = vld [vmem:[%s3 + $0x278] sm:$0xf]
  %v702 = vld [vmem:[%s3 + $0x27c] sm:$0xf]
  %v703 = vld [vmem:[%s3 + $0x280] sm:$0xf]
  %v704 = vld [vmem:[%s3 + $0x284] sm:$0xf]
  %v705 = vld [vmem:[%s3 + $0x288] sm:$0xf]
  %v706 = vld [vmem:[%s3 + $0x28c] sm:$0xf]
  %v707 = vld [vmem:[%s3 + $0x290] sm:$0xf]
  %v708 = vld [vmem:[%s3 + $0x294] sm:$0xf]
  %v709 = vld [vmem:[%s3 + $0x298] sm:$0xf]
  %v710 = vld [vmem:[%s3 + $0x29c] sm:$0xf]
  %v711 = vld [vmem:[%s3 + $0x2a0] sm:$0xf]
  %v712 = vld [vmem:[%s3 + $0x2a4] sm:$0xf]
  %v713 = vld [vmem:[%s3 + $0x2a8] sm:$0xf]
  %v714 = vld [vmem:[%s3 + $0x2ac] sm:$0xf]
  %v715 = vld [vmem:[%s3 + $0x2b0] sm:$0xf]
  %v716 = vld [vmem:[%s3 + $0x2b4] sm:$0xf]
  %v717 = vld [vmem:[%s3 + $0x2b8] sm:$0xf]
  %v718 = vld [vmem:[%s3 + $0x2bc] sm:$0xf]
  %v719 = vld [vmem:[%s3 + $0x2c0] sm:$0xf]
  %v720 = vld [vmem:[%s3 + $0x2c4] sm:$0xf]
  %v721 = vld [vmem:[%s3 + $0x2c8] sm:$0xf]
  %v722 = vld [vmem:[%s3 + $0x2cc] sm:$0xf]
  %v723 = vld [vmem:[%s3 + $0x2d0] sm:$0xf]
  %v724 = vld [vmem:[%s3 + $0x2d4] sm:$0xf]
  %v725 = vld [vmem:[%s3 + $0x2d8] sm:$0xf]
  %v726 = vld [vmem:[%s3 + $0x2dc] sm:$0xf]
  %v727 = vld [vmem:[%s3 + $0x2e0] sm:$0xf]
  %v728 = vld [vmem:[%s3 + $0x2e4] sm:$0xf]
  %v729 = vld [vmem:[%s3 + $0x2e8] sm:$0xf]
  %v730 = vld [vmem:[%s3 + $0x2ec] sm:$0xf]
  %v731 = vld [vmem:[%s3 + $0x2f0] sm:$0xf]
  %v732 = vld [vmem:[%s3 + $0x2f4] sm:$0xf]
  %v733 = vld [vmem:[%s3 + $0x2f8] sm:$0xf]
  %v734 = vld [vmem:[%s3 + $0x2fc] sm:$0xf]
  %v735 = vld [vmem:[%s3 + $0x300] sm:$0xf]
  %v736 = vld [vmem:[%s3 + $0x304] sm:$0xf]
  %v737 = vld [vmem:[%s3 + $0x308] sm:$0xf]
  %v738 = vld [vmem:[%s3 + $0x30c] sm:$0xf]
  %v739 = vld [vmem:[%s3 + $0x310] sm:$0xf]
  %v740 = vld [vmem:[%s3 + $0x314] sm:$0xf]
  %v741 = vld [vmem:[%s3 + $0x318] sm:$0xf]
  %v742 = vld [vmem:[%s3 + $0x31c] sm:$0xf]
  %v743 = vld [vmem:[%s3 + $0x320] sm:$0xf]
  %v744 = vld [vmem:[%s3 + $0x324] sm:$0xf]
  %v745 = vld [vmem:[%s3 + $0x328] sm:$0xf]
  %v746 = vld [vmem:[%s3 + $0x32c] sm:$0xf]
  %v747 = vld [vmem:[%s3 + $0x330] sm:$0xf]
  %v748 = vld [vmem:[%s3 + $0x334] sm:$0xf]
  %v749 = vld [vmem:[%s3 + $0x338] sm:$0xf]
  %v750 = vld [vmem:[%s3 + $0x33c] sm:$0xf]
  %v751 = vld [vmem:[%s3 + $0x340] sm:$0xf]
  %v752 = vld [vmem:[%s3 + $0x344] sm:$0xf]
  %v753 = vld [vmem:[%s3 + $0x348] sm:$0xf]
  %v754 = vld [vmem:[%s3 + $0x34c] sm:$0xf]
  %v755 = vld [vmem:[%s3 + $0x350] sm:$0xf]
  %v756 = vld [vmem:[%s3 + $0x354] sm:$0xf]
  %v757 = vld [vmem:[%s3 + $0x358] sm:$0xf]
  %v758 = vld [vmem:[%s3 + $0x35c] sm:$0xf]
  %v759 = vld [vmem:[%s3 + $0x360] sm:$0xf]
  %v760 = vld [vmem:[%s3 + $0x364] sm:$0xf]
  %v761 = vld [vmem:[%s3 + $0x368] sm:$0xf]
  %v762 = vld [vmem:[%s3 + $0x36c] sm:$0xf]
  %v763 = vld [vmem:[%s3 + $0x370] sm:$0xf]
  %v764 = vld [vmem:[%s3 + $0x374] sm:$0xf]
  %v765 = vld [vmem:[%s3 + $0x378] sm:$0xf]
  %v766 = vld [vmem:[%s3 + $0x37c] sm:$0xf]
  %v767 = vld [vmem:[%s3 + $0x380] sm:$0xf]
  %v768 = vld [vmem:[%s3 + $0x384] sm:$0xf]
  %v769 = vld [vmem:[%s3 + $0x388] sm:$0xf]
  %v770 = vld [vmem:[%s3 + $0x38c] sm:$0xf]
  %v771 = vld [vmem:[%s3 + $0x390] sm:$0xf]
  %v772 = vld [vmem:[%s3 + $0x394] sm:$0xf]
  %v773 = vld [vmem:[%s3 + $0x398] sm:$0xf]
  %v774 = vld [vmem:[%s3 + $0x39c] sm:$0xf]
  %v775 = vld [vmem:[%s3 + $0x3a0] sm:$0xf]
  %v776 = vld [vmem:[%s3 + $0x3a4] sm:$0xf]
  %v777 = vld [vmem:[%s3 + $0x3a8] sm:$0xf]
  %v778 = vld [vmem:[%s3 + $0x3ac] sm:$0xf]
  %v779 = vld [vmem:[%s3 + $0x3b0] sm:$0xf]
  %v780 = vld [vmem:[%s3 + $0x3b4] sm:$0xf]
  %v781 = vld [vmem:[%s3 + $0x3b8] sm:$0xf]
  %v782 = vld [vmem:[%s3 + $0x3bc] sm:$0xf]
  %v783 = vld [vmem:[%s3 + $0x3c0] sm:$0xf]
  %v784 = vld [vmem:[%s3 + $0x3c4] sm:$0xf]
  %v785 = vld [vmem:[%s3 + $0x3c8] sm:$0xf]
  %v786 = vld [vmem:[%s3 + $0x3cc] sm:$0xf]
  %v787 = vld [vmem:[%s3 + $0x3d0] sm:$0xf]
  %v788 = vld [vmem:[%s3 + $0x3d4] sm:$0xf]
  %v789 = vld [vmem:[%s3 + $0x3d8] sm:$0xf]
  %v790 = vld [vmem:[%s3 + $0x3dc] sm:$0xf]
  %v791 = vld [vmem:[%s3 + $0x3e0] sm:$0xf]
  %v792 = vld [vmem:[%s3 + $0x3e4] sm:$0xf]
  %v793 = vld [vmem:[%s3 + $0x3e8] sm:$0xf]
  %v794 = vld [vmem:[%s3 + $0x3ec] sm:$0xf]
  %v795 = vld [vmem:[%s3 + $0x3f0] sm:$0xf]
  %v796 = vld [vmem:[%s3 + $0x3f4] sm:$0xf]
  %v797 = vld [vmem:[%s3 + $0x3f8] sm:$0xf]
  %v798 = vld [vmem:[%s3 + $0x3fc] sm:$0xf]
  %v1055 = vunpack.c.l.b16 %v543
  %v1056 = vunpack.c.l.b16 %v544
  %v1057 = vunpack.c.l.b16 %v545
  %v1058 = vunpack.c.l.b16 %v546
  %v1059 = vunpack.c.l.b16 %v547
  %v1060 = vunpack.c.l.b16 %v548
  %v1061 = vunpack.c.l.b16 %v549
  %v1062 = vunpack.c.l.b16 %v550
  %v1063 = vunpack.c.l.b16 %v551
  %v1064 = vunpack.c.l.b16 %v552
  %v1065 = vunpack.c.l.b16 %v553
  %v1066 = vunpack.c.l.b16 %v554
  %v1067 = vunpack.c.l.b16 %v555
  %v1068 = vunpack.c.l.b16 %v556
  %v1069 = vunpack.c.l.b16 %v557
  %v1070 = vunpack.c.l.b16 %v558
  %v1071 = vunpack.c.l.b16 %v559
  %v1072 = vunpack.c.l.b16 %v560
  %v1073 = vunpack.c.l.b16 %v561
  %v1074 = vunpack.c.l.b16 %v562
  %v1075 = vunpack.c.l.b16 %v563
  %v1076 = vunpack.c.l.b16 %v564
  %v1077 = vunpack.c.l.b16 %v565
  %v1078 = vunpack.c.l.b16 %v566
  %v1079 = vunpack.c.l.b16 %v567
  %v1080 = vunpack.c.l.b16 %v568
  %v1081 = vunpack.c.l.b16 %v569
  %v1082 = vunpack.c.l.b16 %v570
  %v1083 = vunpack.c.l.b16 %v571
  %v1084 = vunpack.c.l.b16 %v572
  %v1085 = vunpack.c.l.b16 %v573
  %v1086 = vunpack.c.l.b16 %v574
  %v1087 = vunpack.c.l.b16 %v575
  %v1088 = vunpack.c.l.b16 %v576
  %v1089 = vunpack.c.l.b16 %v577
  %v1090 = vunpack.c.l.b16 %v578
  %v1091 = vunpack.c.l.b16 %v579
  %v1092 = vunpack.c.l.b16 %v580
  %v1093 = vunpack.c.l.b16 %v581
  %v1094 = vunpack.c.l.b16 %v582
  %v1095 = vunpack.c.l.b16 %v583
  %v1096 = vunpack.c.l.b16 %v584
  %v1097 = vunpack.c.l.b16 %v585
  %v1098 = vunpack.c.l.b16 %v586
  %v1099 = vunpack.c.l.b16 %v587
  %v1100 = vunpack.c.l.b16 %v588
  %v1101 = vunpack.c.l.b16 %v589
  %v1102 = vunpack.c.l.b16 %v590
  %v1103 = vunpack.c.l.b16 %v591
  %v1104 = vunpack.c.l.b16 %v592
  %v1105 = vunpack.c.l.b16 %v593
  %v1106 = vunpack.c.l.b16 %v594
  %v1107 = vunpack.c.l.b16 %v595
  %v1108 = vunpack.c.l.b16 %v596
  %v1109 = vunpack.c.l.b16 %v597
  %v1110 = vunpack.c.l.b16 %v598
  %v1111 = vunpack.c.l.b16 %v599
  %v1112 = vunpack.c.l.b16 %v600
  %v1113 = vunpack.c.l.b16 %v601
  %v1114 = vunpack.c.l.b16 %v602
  %v1115 = vunpack.c.l.b16 %v603
  %v1116 = vunpack.c.l.b16 %v604
  %v1117 = vunpack.c.l.b16 %v605
  %v1118 = vunpack.c.l.b16 %v606
  %v1119 = vunpack.c.l.b16 %v607
  %v1120 = vunpack.c.l.b16 %v608
  %v1121 = vunpack.c.l.b16 %v609
  %v1122 = vunpack.c.l.b16 %v610
  %v1123 = vunpack.c.l.b16 %v611
  %v1124 = vunpack.c.l.b16 %v612
  %v1125 = vunpack.c.l.b16 %v613
  %v1126 = vunpack.c.l.b16 %v614
  %v1127 = vunpack.c.l.b16 %v615
  %v1128 = vunpack.c.l.b16 %v616
  %v1129 = vunpack.c.l.b16 %v617
  %v1130 = vunpack.c.l.b16 %v618
  %v1131 = vunpack.c.l.b16 %v619
  %v1132 = vunpack.c.l.b16 %v620
  %v1133 = vunpack.c.l.b16 %v621
  %v1134 = vunpack.c.l.b16 %v622
  %v1135 = vunpack.c.l.b16 %v623
  %v1136 = vunpack.c.l.b16 %v624
  %v1137 = vunpack.c.l.b16 %v625
  %v1138 = vunpack.c.l.b16 %v626
  %v1139 = vunpack.c.l.b16 %v627
  %v1140 = vunpack.c.l.b16 %v628
  %v1141 = vunpack.c.l.b16 %v629
  %v1142 = vunpack.c.l.b16 %v630
  %v1143 = vunpack.c.l.b16 %v631
  %v1144 = vunpack.c.l.b16 %v632
  %v1145 = vunpack.c.l.b16 %v633
  %v1146 = vunpack.c.l.b16 %v634
  %v1147 = vunpack.c.l.b16 %v635
  %v1148 = vunpack.c.l.b16 %v636
  %v1149 = vunpack.c.l.b16 %v637
  %v1150 = vunpack.c.l.b16 %v638
  %v1151 = vunpack.c.l.b16 %v639
  %v1152 = vunpack.c.l.b16 %v640
  %v1153 = vunpack.c.l.b16 %v641
  %v1154 = vunpack.c.l.b16 %v642
  %v1155 = vunpack.c.l.b16 %v643
  %v1156 = vunpack.c.l.b16 %v644
  %v1157 = vunpack.c.l.b16 %v645
  %v1158 = vunpack.c.l.b16 %v646
  %v1159 = vunpack.c.l.b16 %v647
  %v1160 = vunpack.c.l.b16 %v648
  %v1161 = vunpack.c.l.b16 %v649
  %v1162 = vunpack.c.l.b16 %v650
  %v1163 = vunpack.c.l.b16 %v651
  %v1164 = vunpack.c.l.b16 %v652
  %v1165 = vunpack.c.l.b16 %v653
  %v1166 = vunpack.c.l.b16 %v654
  %v1167 = vunpack.c.l.b16 %v655
  %v1168 = vunpack.c.l.b16 %v656
  %v1169 = vunpack.c.l.b16 %v657
  %v1170 = vunpack.c.l.b16 %v658
  %v1171 = vunpack.c.l.b16 %v659
  %v1172 = vunpack.c.l.b16 %v660
  %v1173 = vunpack.c.l.b16 %v661
  %v1174 = vunpack.c.l.b16 %v662
  %v1175 = vunpack.c.l.b16 %v663
  %v1176 = vunpack.c.l.b16 %v664
  %v1177 = vunpack.c.l.b16 %v665
  %v1178 = vunpack.c.l.b16 %v666
  %v1179 = vunpack.c.l.b16 %v667
  %v1180 = vunpack.c.l.b16 %v668
  %v1181 = vunpack.c.l.b16 %v669
  %v1182 = vunpack.c.l.b16 %v670
  %v1183 = vunpack.c.l.b16 %v671
  %v1184 = vunpack.c.l.b16 %v672
  %v1185 = vunpack.c.l.b16 %v673
  %v1186 = vunpack.c.l.b16 %v674
  %v1187 = vunpack.c.l.b16 %v675
  %v1188 = vunpack.c.l.b16 %v676
  %v1189 = vunpack.c.l.b16 %v677
  %v1190 = vunpack.c.l.b16 %v678
  %v1191 = vunpack.c.l.b16 %v679
  %v1192 = vunpack.c.l.b16 %v680
  %v1193 = vunpack.c.l.b16 %v681
  %v1194 = vunpack.c.l.b16 %v682
  %v1195 = vunpack.c.l.b16 %v683
  %v1196 = vunpack.c.l.b16 %v684
  %v1197 = vunpack.c.l.b16 %v685
  %v1198 = vunpack.c.l.b16 %v686
  %v1199 = vunpack.c.l.b16 %v687
  %v1200 = vunpack.c.l.b16 %v688
  %v1201 = vunpack.c.l.b16 %v689
  %v1202 = vunpack.c.l.b16 %v690
  %v1203 = vunpack.c.l.b16 %v691
  %v1204 = vunpack.c.l.b16 %v692
  %v1205 = vunpack.c.l.b16 %v693
  %v1206 = vunpack.c.l.b16 %v694
  %v1207 = vunpack.c.l.b16 %v695
  %v1208 = vunpack.c.l.b16 %v696
  %v1209 = vunpack.c.l.b16 %v697
  %v1210 = vunpack.c.l.b16 %v698
  %v1211 = vunpack.c.l.b16 %v699
  %v1212 = vunpack.c.l.b16 %v700
  %v1213 = vunpack.c.l.b16 %v701
  %v1214 = vunpack.c.l.b16 %v702
  %v1215 = vunpack.c.l.b16 %v703
  %v1216 = vunpack.c.l.b16 %v704
  %v1217 = vunpack.c.l.b16 %v705
  %v1218 = vunpack.c.l.b16 %v706
  %v1219 = vunpack.c.l.b16 %v707
  %v1220 = vunpack.c.l.b16 %v708
  %v1221 = vunpack.c.l.b16 %v709
  %v1222 = vunpack.c.l.b16 %v710
  %v1223 = vunpack.c.l.b16 %v711
  %v1224 = vunpack.c.l.b16 %v712
  %v1225 = vunpack.c.l.b16 %v713
  %v1226 = vunpack.c.l.b16 %v714
  %v1227 = vunpack.c.l.b16 %v715
  %v1228 = vunpack.c.l.b16 %v716
  %v1229 = vunpack.c.l.b16 %v717
  %v1230 = vunpack.c.l.b16 %v718
  %v1231 = vunpack.c.l.b16 %v719
  %v1232 = vunpack.c.l.b16 %v720
  %v1233 = vunpack.c.l.b16 %v721
  %v1234 = vunpack.c.l.b16 %v722
  %v1235 = vunpack.c.l.b16 %v723
  %v1236 = vunpack.c.l.b16 %v724
  %v1237 = vunpack.c.l.b16 %v725
  %v1238 = vunpack.c.l.b16 %v726
  %v1239 = vunpack.c.l.b16 %v727
  %v1240 = vunpack.c.l.b16 %v728
  %v1241 = vunpack.c.l.b16 %v729
  %v1242 = vunpack.c.l.b16 %v730
  %v1243 = vunpack.c.l.b16 %v731
  %v1244 = vunpack.c.l.b16 %v732
  %v1245 = vunpack.c.l.b16 %v733
  %v1246 = vunpack.c.l.b16 %v734
  %v1247 = vunpack.c.l.b16 %v735
  %v1248 = vunpack.c.l.b16 %v736
  %v1249 = vunpack.c.l.b16 %v737
  %v1250 = vunpack.c.l.b16 %v738
  %v1251 = vunpack.c.l.b16 %v739
  %v1252 = vunpack.c.l.b16 %v740
  %v1253 = vunpack.c.l.b16 %v741
  %v1254 = vunpack.c.l.b16 %v742
  %v1255 = vunpack.c.l.b16 %v743
  %v1256 = vunpack.c.l.b16 %v744
  %v1257 = vunpack.c.l.b16 %v745
  %v1258 = vunpack.c.l.b16 %v746
  %v1259 = vunpack.c.l.b16 %v747
  %v1260 = vunpack.c.l.b16 %v748
  %v1261 = vunpack.c.l.b16 %v749
  %v1262 = vunpack.c.l.b16 %v750
  %v1263 = vunpack.c.l.b16 %v751
  %v1264 = vunpack.c.l.b16 %v752
  %v1265 = vunpack.c.l.b16 %v753
  %v1266 = vunpack.c.l.b16 %v754
  %v1267 = vunpack.c.l.b16 %v755
  %v1268 = vunpack.c.l.b16 %v756
  %v1269 = vunpack.c.l.b16 %v757
  %v1270 = vunpack.c.l.b16 %v758
  %v1271 = vunpack.c.l.b16 %v759
  %v1272 = vunpack.c.l.b16 %v760
  %v1273 = vunpack.c.l.b16 %v761
  %v1274 = vunpack.c.l.b16 %v762
  %v1275 = vunpack.c.l.b16 %v763
  %v1276 = vunpack.c.l.b16 %v764
  %v1277 = vunpack.c.l.b16 %v765
  %v1278 = vunpack.c.l.b16 %v766
  %v1279 = vunpack.c.l.b16 %v767
  %v1280 = vunpack.c.l.b16 %v768
  %v1281 = vunpack.c.l.b16 %v769
  %v1282 = vunpack.c.l.b16 %v770
  %v1283 = vunpack.c.l.b16 %v771
  %v1284 = vunpack.c.l.b16 %v772
  %v1285 = vunpack.c.l.b16 %v773
  %v1286 = vunpack.c.l.b16 %v774
  %v1287 = vunpack.c.l.b16 %v775
  %v1288 = vunpack.c.l.b16 %v776
  %v1289 = vunpack.c.l.b16 %v777
  %v1290 = vunpack.c.l.b16 %v778
  %v1291 = vunpack.c.l.b16 %v779
  %v1292 = vunpack.c.l.b16 %v780
  %v1293 = vunpack.c.l.b16 %v781
  %v1294 = vunpack.c.l.b16 %v782
  %v1295 = vunpack.c.l.b16 %v783
  %v1296 = vunpack.c.l.b16 %v784
  %v1297 = vunpack.c.l.b16 %v785
  %v1298 = vunpack.c.l.b16 %v786
  %v1299 = vunpack.c.l.b16 %v787
  %v1300 = vunpack.c.l.b16 %v788
  %v1301 = vunpack.c.l.b16 %v789
  %v1302 = vunpack.c.l.b16 %v790
  %v1303 = vunpack.c.l.b16 %v791
  %v1304 = vunpack.c.l.b16 %v792
  %v1305 = vunpack.c.l.b16 %v793
  %v1306 = vunpack.c.l.b16 %v794
  %v1307 = vunpack.c.l.b16 %v795
  %v1308 = vunpack.c.l.b16 %v796
  %v1309 = vunpack.c.l.b16 %v797
  %v1310 = vunpack.c.l.b16 %v798
  %v1311 = vpack.c.b16 %v1056, %v1055
  %v1312 = vpack.c.b16 %v1058, %v1057
  %v1313 = vpack.c.b16 %v1060, %v1059
  %v1314 = vpack.c.b16 %v1062, %v1061
  %v1315 = vpack.c.b16 %v1064, %v1063
  %v1316 = vpack.c.b16 %v1066, %v1065
  %v1317 = vpack.c.b16 %v1068, %v1067
  %v1318 = vpack.c.b16 %v1070, %v1069
  %v1319 = vpack.c.b16 %v1072, %v1071
  %v1320 = vpack.c.b16 %v1074, %v1073
  %v1321 = vpack.c.b16 %v1076, %v1075
  %v1322 = vpack.c.b16 %v1078, %v1077
  %v1323 = vpack.c.b16 %v1080, %v1079
  %v1324 = vpack.c.b16 %v1082, %v1081
  %v1325 = vpack.c.b16 %v1084, %v1083
  %v1326 = vpack.c.b16 %v1086, %v1085
  %v1327 = vpack.c.b16 %v1088, %v1087
  %v1328 = vpack.c.b16 %v1090, %v1089
  %v1329 = vpack.c.b16 %v1092, %v1091
  %v1330 = vpack.c.b16 %v1094, %v1093
  %v1331 = vpack.c.b16 %v1096, %v1095
  %v1332 = vpack.c.b16 %v1098, %v1097
  %v1333 = vpack.c.b16 %v1100, %v1099
  %v1334 = vpack.c.b16 %v1102, %v1101
  %v1335 = vpack.c.b16 %v1104, %v1103
  %v1336 = vpack.c.b16 %v1106, %v1105
  %v1337 = vpack.c.b16 %v1108, %v1107
  %v1338 = vpack.c.b16 %v1110, %v1109
  %v1339 = vpack.c.b16 %v1112, %v1111
  %v1340 = vpack.c.b16 %v1114, %v1113
  %v1341 = vpack.c.b16 %v1116, %v1115
  %v1342 = vpack.c.b16 %v1118, %v1117
  %v1343 = vpack.c.b16 %v1120, %v1119
  %v1344 = vpack.c.b16 %v1122, %v1121
  %v1345 = vpack.c.b16 %v1124, %v1123
  %v1346 = vpack.c.b16 %v1126, %v1125
  %v1347 = vpack.c.b16 %v1128, %v1127
  %v1348 = vpack.c.b16 %v1130, %v1129
  %v1349 = vpack.c.b16 %v1132, %v1131
  %v1350 = vpack.c.b16 %v1134, %v1133
  %v1351 = vpack.c.b16 %v1136, %v1135
  %v1352 = vpack.c.b16 %v1138, %v1137
  %v1353 = vpack.c.b16 %v1140, %v1139
  %v1354 = vpack.c.b16 %v1142, %v1141
  %v1355 = vpack.c.b16 %v1144, %v1143
  %v1356 = vpack.c.b16 %v1146, %v1145
  %v1357 = vpack.c.b16 %v1148, %v1147
  %v1358 = vpack.c.b16 %v1150, %v1149
  %v1359 = vpack.c.b16 %v1152, %v1151
  %v1360 = vpack.c.b16 %v1154, %v1153
  %v1361 = vpack.c.b16 %v1156, %v1155
  %v1362 = vpack.c.b16 %v1158, %v1157
  %v1363 = vpack.c.b16 %v1160, %v1159
  %v1364 = vpack.c.b16 %v1162, %v1161
  %v1365 = vpack.c.b16 %v1164, %v1163
  %v1366 = vpack.c.b16 %v1166, %v1165
  %v1367 = vpack.c.b16 %v1168, %v1167
  %v1368 = vpack.c.b16 %v1170, %v1169
  %v1369 = vpack.c.b16 %v1172, %v1171
  %v1370 = vpack.c.b16 %v1174, %v1173
  %v1371 = vpack.c.b16 %v1176, %v1175
  %v1372 = vpack.c.b16 %v1178, %v1177
  %v1373 = vpack.c.b16 %v1180, %v1179
  %v1374 = vpack.c.b16 %v1182, %v1181
  %v1375 = vpack.c.b16 %v1184, %v1183
  %v1376 = vpack.c.b16 %v1186, %v1185
  %v1377 = vpack.c.b16 %v1188, %v1187
  %v1378 = vpack.c.b16 %v1190, %v1189
  %v1379 = vpack.c.b16 %v1192, %v1191
  %v1380 = vpack.c.b16 %v1194, %v1193
  %v1381 = vpack.c.b16 %v1196, %v1195
  %v1382 = vpack.c.b16 %v1198, %v1197
  %v1383 = vpack.c.b16 %v1200, %v1199
  %v1384 = vpack.c.b16 %v1202, %v1201
  %v1385 = vpack.c.b16 %v1204, %v1203
  %v1386 = vpack.c.b16 %v1206, %v1205
  %v1387 = vpack.c.b16 %v1208, %v1207
  %v1388 = vpack.c.b16 %v1210, %v1209
  %v1389 = vpack.c.b16 %v1212, %v1211
  %v1390 = vpack.c.b16 %v1214, %v1213
  %v1391 = vpack.c.b16 %v1216, %v1215
  %v1392 = vpack.c.b16 %v1218, %v1217
  %v1393 = vpack.c.b16 %v1220, %v1219
  %v1394 = vpack.c.b16 %v1222, %v1221
  %v1395 = vpack.c.b16 %v1224, %v1223
  %v1396 = vpack.c.b16 %v1226, %v1225
  %v1397 = vpack.c.b16 %v1228, %v1227
  %v1398 = vpack.c.b16 %v1230, %v1229
  %v1399 = vpack.c.b16 %v1232, %v1231
  %v1400 = vpack.c.b16 %v1234, %v1233
  %v1401 = vpack.c.b16 %v1236, %v1235
  %v1402 = vpack.c.b16 %v1238, %v1237
  %v1403 = vpack.c.b16 %v1240, %v1239
  %v1404 = vpack.c.b16 %v1242, %v1241
  %v1405 = vpack.c.b16 %v1244, %v1243
  %v1406 = vpack.c.b16 %v1246, %v1245
  %v1407 = vpack.c.b16 %v1248, %v1247
  %v1408 = vpack.c.b16 %v1250, %v1249
  %v1409 = vpack.c.b16 %v1252, %v1251
  %v1410 = vpack.c.b16 %v1254, %v1253
  %v1411 = vpack.c.b16 %v1256, %v1255
  %v1412 = vpack.c.b16 %v1258, %v1257
  %v1413 = vpack.c.b16 %v1260, %v1259
  %v1414 = vpack.c.b16 %v1262, %v1261
  %v1415 = vpack.c.b16 %v1264, %v1263
  %v1416 = vpack.c.b16 %v1266, %v1265
  %v1417 = vpack.c.b16 %v1268, %v1267
  %v1418 = vpack.c.b16 %v1270, %v1269
  %v1419 = vpack.c.b16 %v1272, %v1271
  %v1420 = vpack.c.b16 %v1274, %v1273
  %v1421 = vpack.c.b16 %v1276, %v1275
  %v1422 = vpack.c.b16 %v1278, %v1277
  %v1423 = vpack.c.b16 %v1280, %v1279
  %v1424 = vpack.c.b16 %v1282, %v1281
  %v1425 = vpack.c.b16 %v1284, %v1283
  %v1426 = vpack.c.b16 %v1286, %v1285
  %v1427 = vpack.c.b16 %v1288, %v1287
  %v1428 = vpack.c.b16 %v1290, %v1289
  %v1429 = vpack.c.b16 %v1292, %v1291
  %v1430 = vpack.c.b16 %v1294, %v1293
  %v1431 = vpack.c.b16 %v1296, %v1295
  %v1432 = vpack.c.b16 %v1298, %v1297
  %v1433 = vpack.c.b16 %v1300, %v1299
  %v1434 = vpack.c.b16 %v1302, %v1301
  %v1435 = vpack.c.b16 %v1304, %v1303
  %v1436 = vpack.c.b16 %v1306, %v1305
  %v1437 = vpack.c.b16 %v1308, %v1307
  %v1438 = vpack.c.b16 %v1310, %v1309
  %1567 = vmatpush.bf16.msra.mxu0 %v1318
  %1568 = vmatpush.bf16.msra.mxu0 %v1317
  %1569 = vmatpush.bf16.msra.mxu0 %v1316
  %1570 = vmatpush.bf16.msra.mxu0 %v1315
  %1571 = vmatpush.bf16.msra.mxu0 %v1314
  %1572 = vmatpush.bf16.msra.mxu0 %v1313
  %1573 = vmatpush.bf16.msra.mxu0 %v1312
  %1574 = vmatpush.bf16.msra.mxu0 %v1311
  %1575 = vmatmul.bf16.gmra.mxu0 %v527
  %v1576 = vpop.f32.mrf.mxu0
  %v1577 = vadd.f32 0.0, %v1576
  %v1578 = vpop.f32.mrf.mxu0
  %v1579 = vadd.f32 0.0, %v1578
  %1580 = vdwg.mxu0
  %1581 = vmatpush.bf16.msra.mxu0 %v1326
  %1582 = vmatpush.bf16.msra.mxu0 %v1325
  %1583 = vmatpush.bf16.msra.mxu0 %v1324
  %1584 = vmatpush.bf16.msra.mxu0 %v1323
  %1585 = vmatpush.bf16.msra.mxu0 %v1322
  %1586 = vmatpush.bf16.msra.mxu0 %v1321
  %1587 = vmatpush.bf16.msra.mxu0 %v1320
  %1588 = vmatpush.bf16.msra.mxu0 %v1319
  %1589 = vmatmul.bf16.gmra.mxu0 %v528
  %v1590 = vpop.f32.mrf.mxu0
  %v1591 = vadd.f32 %v1577, %v1590
  %v1592 = vpop.f32.mrf.mxu0
  %v1593 = vadd.f32 %v1579, %v1592
  %1594 = vdwg.mxu0
  %1595 = vmatpush.bf16.msra.mxu0 %v1334
  %1596 = vmatpush.bf16.msra.mxu0 %v1333
  %1597 = vmatpush.bf16.msra.mxu0 %v1332
  %1598 = vmatpush.bf16.msra.mxu0 %v1331
  %1599 = vmatpush.bf16.msra.mxu0 %v1330
  %1600 = vmatpush.bf16.msra.mxu0 %v1329
  %1601 = vmatpush.bf16.msra.mxu0 %v1328
  %1602 = vmatpush.bf16.msra.mxu0 %v1327
  %1603 = vmatmul.bf16.gmra.mxu0 %v529
  %v1604 = vpop.f32.mrf.mxu0
  %v1605 = vadd.f32 %v1591, %v1604
  %v1606 = vpop.f32.mrf.mxu0
  %v1607 = vadd.f32 %v1593, %v1606
  %1608 = vdwg.mxu0
  %1609 = vmatpush.bf16.msra.mxu0 %v1342
  %1610 = vmatpush.bf16.msra.mxu0 %v1341
  %1611 = vmatpush.bf16.msra.mxu0 %v1340
  %1612 = vmatpush.bf16.msra.mxu0 %v1339
  %1613 = vmatpush.bf16.msra.mxu0 %v1338
  %1614 = vmatpush.bf16.msra.mxu0 %v1337
  %1615 = vmatpush.bf16.msra.mxu0 %v1336
  %1616 = vmatpush.bf16.msra.mxu0 %v1335
  %1617 = vmatmul.bf16.gmra.mxu0 %v530
  %v1618 = vpop.f32.mrf.mxu0
  %v1619 = vadd.f32 %v1605, %v1618
  %v1620 = vpop.f32.mrf.mxu0
  %v1621 = vadd.f32 %v1607, %v1620
  %1622 = vdwg.mxu0
  %1623 = vmatpush.bf16.msra.mxu0 %v1350
  %1624 = vmatpush.bf16.msra.mxu0 %v1349
  %1625 = vmatpush.bf16.msra.mxu0 %v1348
  %1626 = vmatpush.bf16.msra.mxu0 %v1347
  %1627 = vmatpush.bf16.msra.mxu0 %v1346
  %1628 = vmatpush.bf16.msra.mxu0 %v1345
  %1629 = vmatpush.bf16.msra.mxu0 %v1344
  %1630 = vmatpush.bf16.msra.mxu0 %v1343
  %1631 = vmatmul.bf16.gmra.mxu0 %v531
  %v1632 = vpop.f32.mrf.mxu0
  %v1633 = vadd.f32 %v1619, %v1632
  %v1634 = vpop.f32.mrf.mxu0
  %v1635 = vadd.f32 %v1621, %v1634
  %1636 = vdwg.mxu0
  %1637 = vmatpush.bf16.msra.mxu0 %v1358
  %1638 = vmatpush.bf16.msra.mxu0 %v1357
  %1639 = vmatpush.bf16.msra.mxu0 %v1356
  %1640 = vmatpush.bf16.msra.mxu0 %v1355
  %1641 = vmatpush.bf16.msra.mxu0 %v1354
  %1642 = vmatpush.bf16.msra.mxu0 %v1353
  %1643 = vmatpush.bf16.msra.mxu0 %v1352
  %1644 = vmatpush.bf16.msra.mxu0 %v1351
  %1645 = vmatmul.bf16.gmra.mxu0 %v532
  %v1646 = vpop.f32.mrf.mxu0
  %v1647 = vadd.f32 %v1633, %v1646
  %v1648 = vpop.f32.mrf.mxu0
  %v1649 = vadd.f32 %v1635, %v1648
  %1650 = vdwg.mxu0
  %1651 = vmatpush.bf16.msra.mxu0 %v1366
  %1652 = vmatpush.bf16.msra.mxu0 %v1365
  %1653 = vmatpush.bf16.msra.mxu0 %v1364
  %1654 = vmatpush.bf16.msra.mxu0 %v1363
  %1655 = vmatpush.bf16.msra.mxu0 %v1362
  %1656 = vmatpush.bf16.msra.mxu0 %v1361
  %1657 = vmatpush.bf16.msra.mxu0 %v1360
  %1658 = vmatpush.bf16.msra.mxu0 %v1359
  %1659 = vmatmul.bf16.gmra.mxu0 %v533
  %v1660 = vpop.f32.mrf.mxu0
  %v1661 = vadd.f32 %v1647, %v1660
  %v1662 = vpop.f32.mrf.mxu0
  %v1663 = vadd.f32 %v1649, %v1662
  %1664 = vdwg.mxu0
  %1665 = vmatpush.bf16.msra.mxu0 %v1374
  %1666 = vmatpush.bf16.msra.mxu0 %v1373
  %1667 = vmatpush.bf16.msra.mxu0 %v1372
  %1668 = vmatpush.bf16.msra.mxu0 %v1371
  %1669 = vmatpush.bf16.msra.mxu0 %v1370
  %1670 = vmatpush.bf16.msra.mxu0 %v1369
  %1671 = vmatpush.bf16.msra.mxu0 %v1368
  %1672 = vmatpush.bf16.msra.mxu0 %v1367
  %1673 = vmatmul.bf16.gmra.mxu0 %v534
  %v1674 = vpop.f32.mrf.mxu0
  %v1675 = vadd.f32 %v1661, %v1674
  %v1676 = vpop.f32.mrf.mxu0
  %v1677 = vadd.f32 %v1663, %v1676
  %1678 = vdwg.mxu0
  %1679 = vmatpush.bf16.msra.mxu0 %v1382
  %1680 = vmatpush.bf16.msra.mxu0 %v1381
  %1681 = vmatpush.bf16.msra.mxu0 %v1380
  %1682 = vmatpush.bf16.msra.mxu0 %v1379
  %1683 = vmatpush.bf16.msra.mxu0 %v1378
  %1684 = vmatpush.bf16.msra.mxu0 %v1377
  %1685 = vmatpush.bf16.msra.mxu0 %v1376
  %1686 = vmatpush.bf16.msra.mxu0 %v1375
  %1687 = vmatmul.bf16.gmra.mxu0 %v535
  %v1688 = vpop.f32.mrf.mxu0
  %v1689 = vadd.f32 %v1675, %v1688
  %v1690 = vpop.f32.mrf.mxu0
  %v1691 = vadd.f32 %v1677, %v1690
  %1692 = vdwg.mxu0
  %1693 = vmatpush.bf16.msra.mxu0 %v1390
  %1694 = vmatpush.bf16.msra.mxu0 %v1389
  %1695 = vmatpush.bf16.msra.mxu0 %v1388
  %1696 = vmatpush.bf16.msra.mxu0 %v1387
  %1697 = vmatpush.bf16.msra.mxu0 %v1386
  %1698 = vmatpush.bf16.msra.mxu0 %v1385
  %1699 = vmatpush.bf16.msra.mxu0 %v1384
  %1700 = vmatpush.bf16.msra.mxu0 %v1383
  %1701 = vmatmul.bf16.gmra.mxu0 %v536
  %v1702 = vpop.f32.mrf.mxu0
  %v1703 = vadd.f32 %v1689, %v1702
  %v1704 = vpop.f32.mrf.mxu0
  %v1705 = vadd.f32 %v1691, %v1704
  %1706 = vdwg.mxu0
  %1707 = vmatpush.bf16.msra.mxu0 %v1398
  %1708 = vmatpush.bf16.msra.mxu0 %v1397
  %1709 = vmatpush.bf16.msra.mxu0 %v1396
  %1710 = vmatpush.bf16.msra.mxu0 %v1395
  %1711 = vmatpush.bf16.msra.mxu0 %v1394
  %1712 = vmatpush.bf16.msra.mxu0 %v1393
  %1713 = vmatpush.bf16.msra.mxu0 %v1392
  %1714 = vmatpush.bf16.msra.mxu0 %v1391
  %1715 = vmatmul.bf16.gmra.mxu0 %v537
  %v1716 = vpop.f32.mrf.mxu0
  %v1717 = vadd.f32 %v1703, %v1716
  %v1718 = vpop.f32.mrf.mxu0
  %v1719 = vadd.f32 %v1705, %v1718
  %1720 = vdwg.mxu0
  %1721 = vmatpush.bf16.msra.mxu0 %v1406
  %1722 = vmatpush.bf16.msra.mxu0 %v1405
  %1723 = vmatpush.bf16.msra.mxu0 %v1404
  %1724 = vmatpush.bf16.msra.mxu0 %v1403
  %1725 = vmatpush.bf16.msra.mxu0 %v1402
  %1726 = vmatpush.bf16.msra.mxu0 %v1401
  %1727 = vmatpush.bf16.msra.mxu0 %v1400
  %1728 = vmatpush.bf16.msra.mxu0 %v1399
  %1729 = vmatmul.bf16.gmra.mxu0 %v538
  %v1730 = vpop.f32.mrf.mxu0
  %v1731 = vadd.f32 %v1717, %v1730
  %v1732 = vpop.f32.mrf.mxu0
  %v1733 = vadd.f32 %v1719, %v1732
  %1734 = vdwg.mxu0
  %1735 = vmatpush.bf16.msra.mxu0 %v1414
  %1736 = vmatpush.bf16.msra.mxu0 %v1413
  %1737 = vmatpush.bf16.msra.mxu0 %v1412
  %1738 = vmatpush.bf16.msra.mxu0 %v1411
  %1739 = vmatpush.bf16.msra.mxu0 %v1410
  %1740 = vmatpush.bf16.msra.mxu0 %v1409
  %1741 = vmatpush.bf16.msra.mxu0 %v1408
  %1742 = vmatpush.bf16.msra.mxu0 %v1407
  %1743 = vmatmul.bf16.gmra.mxu0 %v539
  %v1744 = vpop.f32.mrf.mxu0
  %v1745 = vadd.f32 %v1731, %v1744
  %v1746 = vpop.f32.mrf.mxu0
  %v1747 = vadd.f32 %v1733, %v1746
  %1748 = vdwg.mxu0
  %1749 = vmatpush.bf16.msra.mxu0 %v1422
  %1750 = vmatpush.bf16.msra.mxu0 %v1421
  %1751 = vmatpush.bf16.msra.mxu0 %v1420
  %1752 = vmatpush.bf16.msra.mxu0 %v1419
  %1753 = vmatpush.bf16.msra.mxu0 %v1418
  %1754 = vmatpush.bf16.msra.mxu0 %v1417
  %1755 = vmatpush.bf16.msra.mxu0 %v1416
  %1756 = vmatpush.bf16.msra.mxu0 %v1415
  %1757 = vmatmul.bf16.gmra.mxu0 %v540
  %v1758 = vpop.f32.mrf.mxu0
  %v1759 = vadd.f32 %v1745, %v1758
  %v1760 = vpop.f32.mrf.mxu0
  %v1761 = vadd.f32 %v1747, %v1760
  %1762 = vdwg.mxu0
  %1763 = vmatpush.bf16.msra.mxu0 %v1430
  %1764 = vmatpush.bf16.msra.mxu0 %v1429
  %1765 = vmatpush.bf16.msra.mxu0 %v1428
  %1766 = vmatpush.bf16.msra.mxu0 %v1427
  %1767 = vmatpush.bf16.msra.mxu0 %v1426
  %1768 = vmatpush.bf16.msra.mxu0 %v1425
  %1769 = vmatpush.bf16.msra.mxu0 %v1424
  %1770 = vmatpush.bf16.msra.mxu0 %v1423
  %1771 = vmatmul.bf16.gmra.mxu0 %v541
  %v1772 = vpop.f32.mrf.mxu0
  %v1773 = vadd.f32 %v1759, %v1772
  %v1774 = vpop.f32.mrf.mxu0
  %v1775 = vadd.f32 %v1761, %v1774
  %1776 = vdwg.mxu0
  %1777 = vmatpush.bf16.msra.mxu0 %v1438
  %1778 = vmatpush.bf16.msra.mxu0 %v1437
  %1779 = vmatpush.bf16.msra.mxu0 %v1436
  %1780 = vmatpush.bf16.msra.mxu0 %v1435
  %1781 = vmatpush.bf16.msra.mxu0 %v1434
  %1782 = vmatpush.bf16.msra.mxu0 %v1433
  %1783 = vmatpush.bf16.msra.mxu0 %v1432
  %1784 = vmatpush.bf16.msra.mxu0 %v1431
  %1785 = vmatmul.bf16.gmra.mxu0 %v542
  %v1786 = vpop.f32.mrf.mxu0
  %v1787 = vadd.f32 %v1773, %v1786
  %v1788 = vpop.f32.mrf.mxu0
  %v1789 = vadd.f32 %v1775, %v1788
  %1790 = vdwg.mxu0
  %v1791 = vadd.f32 %v525, %v1787
  %v1792 = vadd.f32 %v526, %v1789
  %1793 = vst.msk [vmem:[#allocation2] sm:$0xff] %vm265, %v1791
  %1794 = vst.msk [vmem:[#allocation2 + $0x8] sm:$0xff] %vm265, %v1792
  // Predicated region
  $region34: #{_lambda_.18} parent=0 // pred_check
    %p1795 = pneg %p27
  $region35: #{_lambda_.18} parent=0 // pred_check_branch
    %1797 = sbr.rel (%p1795) target = $region37
  $region36: #{_lambda_.18} parent=0 // pred_region
    %v1798 = vld [vmem:[#allocation2] sm:$0xff]
    %v1799 = vld [vmem:[#allocation2 + $0x8] sm:$0xff]
    %v1800 = vadd.f32 %v34, %v1798
    %v1801 = vadd.f32 %v35, %v1799
    %v1802 = vld [vmem:[%s4] sm:$0x1]
    %v1804 = vperm.slane %v1802, 0
    %v1806 = vadd.f32 %v1800, %v1804
    %v1807 = vadd.f32 %v1801, %v1804
    %v1808 = vsel %vm265, %v1806, 0.0
    %1809 = vadd.xlane.f32.xlu0 %v1808
    %v1810 = vpop.xlane.xlu0 %1809
    %v1811 = vsel %vm265, %v1807, 0.0
    %1812 = vadd.xlane.f32.xlu0 %v1811
    %v1813 = vpop.xlane.xlu0 %1812
    %v1814 = vrcp.pop 32.0
    %v1815 = vmul.f32 32.0, %v1814
    %v1816 = vsub.f32 1.0, %v1815
    %v1817 = vmul.f32 %v1814, %v1816
    %v1818 = vadd.f32 %v1814, %v1817
    %vm1819 = vweird.f32 %v1814
    %v1820 = vsel %vm1819, %v1814, %v1818
    %v1821 = vmul.f32 %v1810, %v1820
    %v1822 = vmul.f32 %v1813, %v1820
    %v1823 = vsub.f32 %v1806, %v1821
    %v1824 = vsub.f32 %v1807, %v1822
    %v1825 = vmul.f32 %v1823, %v1823
    %v1826 = vmul.f32 %v1824, %v1824
    %v1827 = vsel %vm265, %v1825, 0.0
    %1828 = vadd.xlane.f32.xlu0 %v1827
    %v1829 = vpop.xlane.xlu0 %1828
    %v1830 = vsel %vm265, %v1826, 0.0
    %1831 = vadd.xlane.f32.xlu0 %v1830
    %v1832 = vpop.xlane.xlu0 %1831
    %v1833 = vmul.f32 %v1829, %v1820
    %v1834 = vmul.f32 %v1832, %v1820
    %v1835 = vadd.f32 %v1833, 1e-05
    %v1836 = vadd.f32 %v1834, 1e-05
    %v1837 = vrsqrt.pop %v1835
    %v1838 = vmul.f32 %v1837, %v1835
    %v1839 = vmul.f32 %v1838, %v1837
    %v1840 = vmul.f32 0.5, %v1839
    %v1841 = vsub.f32 1.5, %v1840
    %v1842 = vmul.f32 %v1837, %v1841
    %vm1843 = vweird.f32 %v1835
    %vm1844 = vweird.f32 %v1837
    %vm1845 = vmor %vm1843, %vm1844
    %v1846 = vsel %vm1845, %v1837, %v1842
    %v1847 = vrsqrt.pop %v1836
    %v1848 = vmul.f32 %v1847, %v1836
    %v1849 = vmul.f32 %v1848, %v1847
    %v1850 = vmul.f32 0.5, %v1849
    %v1851 = vsub.f32 1.5, %v1850
    %v1852 = vmul.f32 %v1847, %v1851
    %vm1853 = vweird.f32 %v1836
    %vm1854 = vweird.f32 %v1847
    %vm1855 = vmor %vm1853, %vm1854
    %v1856 = vsel %vm1855, %v1847, %v1852
    %v1857 = vmul.f32 %v1823, %v1846
    %v1858 = vmul.f32 %v1824, %v1856
    %v1859 = vld [vmem:[%s5] sm:$0x1]
    %v1861 = vperm.slane %v1859, 0
    %v1863 = vmul.f32 %v1857, %v1861
    %v1864 = vmul.f32 %v1858, %v1861
    %v1865 = vld [vmem:[%s6] sm:$0x1]
    %v1867 = vperm.slane %v1865, 0
    %v1869 = vadd.f32 %v1863, %v1867
    %v1870 = vadd.f32 %v1864, %v1867
    %v1871 = vpack.c.bf16 %v1869, %v1869
    %v1872 = vpack.c.bf16 %v1870, %v1870
    %vm1873 = vcmask 257024
    %1874 = vst.msk [vmem:[%s7] sm:$0xf] %vm1873, %v1871
    %1875 = vst.msk [vmem:[%s7 + $0x4] sm:$0xf] %vm1873, %v1872
  $region37: #{_lambda_.18} parent=0 // pred_fallthru
    _
  // Predicated region
  $region38: #{_lambda_.18} parent=0 // pred_check
    _
  $region39: #{_lambda_.18} parent=0 // pred_check_branch
    %1877 = sbr.rel (0) target = $region41
  $region40: #{_lambda_.18} parent=0 // pred_region
    _
  $region41: #{_lambda_.18} parent=0 // pred_fallthru
    _
  // Predicated region
  $region42: #{_lambda_.18} parent=0 // pred_check
    _
  $region43: #{_lambda_.18} parent=0 // pred_check_branch
    %1879 = sbr.rel (0) target = $region45
  $region44: #{_lambda_.18} parent=0 // pred_region
    _
  $region45: #{_lambda_.18} parent=0 // pred_fallthru
    _

</llo_original>
